<compile_context>
chip_gen: v6e
topology: v6e:2x2x1
jax: 0.10.0
libtpu: 0.0.40
codegen_flags: <defaults>
</compile_context>

<pallas_src>
import functools

import jax
import jax.numpy as jnp
from jax.experimental import pallas as pl
from jax.experimental.pallas import tpu as pltpu


def _round_up(x, m):
    return (x + m - 1) // m * m


def _vmem_limit(need_bytes):
    """Scoped-VMEM limit derived from the actual tile footprint (v7x-safe)."""
    return int(min(max(2 * need_bytes, 16 * 1024 * 1024), 40 * 1024 * 1024))


# ----------------------------------------------------------------------------
# Generic tiled matmul + bias + activation kernel
# ----------------------------------------------------------------------------
def _mm_kernel(a_ref, w_ref, b_ref, o_ref, acc_ref, *, act, nk):
    k = pl.program_id(2)

    @pl.when(k == 0)
    def _init():
        acc_ref[...] = jnp.zeros_like(acc_ref)

    acc_ref[...] += jnp.dot(a_ref[...], w_ref[...],
                            preferred_element_type=jnp.float32)

    @pl.when(k == nk - 1)
    def _finalize():
        acc = acc_ref[...] + b_ref[...]          # (1, tn) bias broadcasts
        if act == "relu":
            acc = jnp.maximum(acc, 0.0)
        elif act == "sigmoid":
            acc = 1.0 / (1.0 + jnp.exp(-acc))    # exact sigmoid, f32 epilogue
        o_ref[...] = acc.astype(o_ref.dtype)


def matmul_bias_act(a, w_p, b_p, act="none", out_dtype=jnp.float32):
    """a:(M,K); w_p:(Kp,Np) bf16 pre-padded; b_p:(1,Np) f32.

    Returns (Mp,Np) in out_dtype; caller slices the real rows/cols.
    """
    M, K = a.shape
    Kp, Np = w_p.shape

    if a.dtype != jnp.bfloat16:
        a = a.astype(jnp.bfloat16)
    if Kp > K:
        a = jnp.pad(a, ((0, 0), (0, Kp - K)))

    # Big blocks so grid steps stream MiB-scale DMAs instead of being
    # per-step-overhead bound at production sizes.
    tn = Np if Np <= 4096 else 4096
    tk = Kp if Kp <= 2048 else 2048
    nk = Kp // tk

    # Large M tiles when the weight tile is narrow (conv im2col matmuls);
    # smaller M tiles when N is wide (decoder Linear) to bound VMEM on v7x.
    tm_cap = 1024 if tn <= 512 else 256
    if M <= tm_cap:
        Mp = _round_up(M, 16)                    # bf16 sublane pack
        tm = Mp
    else:
        tm = tm_cap                              # multiple of 256
        Mp = _round_up(M, tm)
    if Mp > M:
        a = jnp.pad(a, ((0, Mp - M), (0, 0)))

    out_bytes = jnp.dtype(out_dtype).itemsize
    need = (2 * tm * tk * 2 + 2 * tk * tn * 2 + 2 * tn * 4
            + 2 * tm * tn * out_bytes + tm * tn * 4)

    grid = (Mp // tm, Np // tn, nk)

    return pl.pallas_call(
        functools.partial(_mm_kernel, act=act, nk=nk),
        out_shape=jax.ShapeDtypeStruct((Mp, Np), out_dtype),
        grid_spec=pltpu.PrefetchScalarGridSpec(
            num_scalar_prefetch=0,
            grid=grid,
            in_specs=[
                pl.BlockSpec((tm, tk), lambda i, j, k: (i, k)),
                pl.BlockSpec((tk, tn), lambda i, j, k: (k, j)),
                pl.BlockSpec((1, tn), lambda i, j, k: (0, j)),
            ],
            out_specs=pl.BlockSpec((tm, tn), lambda i, j, k: (i, j)),
            scratch_shapes=[pltpu.VMEM((tm, tn), jnp.float32)],
        ),
        compiler_params=pltpu.CompilerParams(
            dimension_semantics=("parallel", "parallel", "arbitrary"),
            vmem_limit_bytes=_vmem_limit(need),
        ),
        cost_estimate=pl.CostEstimate(
            flops=2 * Mp * Np * Kp,
            transcendentals=Mp * Np if act == "sigmoid" else 0,
            bytes_accessed=Mp * Kp * 2 + Kp * Np * 2 + Mp * Np * out_bytes,
        ),
    )(a, w_p, b_p)


# ----------------------------------------------------------------------------
# Fused fc_mu + fc_logvar kernel (single pallas_call, 2-way parallel N split)
# ----------------------------------------------------------------------------
def _fc_kernel(a_ref, w_ref, b_ref, o_ref, acc_ref, *, nk):
    k = pl.program_id(1)

    @pl.when(k == 0)
    def _init():
        acc_ref[...] = jnp.zeros_like(acc_ref)

    acc_ref[...] += jnp.dot(a_ref[...], w_ref[...],
                            preferred_element_type=jnp.float32)

    @pl.when(k == nk - 1)
    def _finalize():
        o_ref[...] = (acc_ref[...] + b_ref[...]).astype(o_ref.dtype)


def fc_mu_logvar_z(h_flat, w_cat, b_cat, eps, latent):
    """h_flat:(B,feat) bf16; w_cat:(Kp, 2*Lp) bf16; b_cat:(1,2*Lp) f32."""
    B, K = h_flat.shape
    Kp, ncat = w_cat.shape
    Lp = ncat // 2

    a = h_flat
    if a.dtype != jnp.bfloat16:
        a = a.astype(jnp.bfloat16)
    if Kp > K:
        a = jnp.pad(a, ((0, 0), (0, Kp - K)))

    tk = Kp if Kp <= 4096 else 4096              # big K tiles: few grid steps
    nk = Kp // tk

    need = (2 * B * tk * 2 + 2 * tk * Lp * 2 + 2 * Lp * 4
            + 2 * B * Lp * 4 + B * Lp * 4)

    out = pl.pallas_call(
        functools.partial(_fc_kernel, nk=nk),
        out_shape=jax.ShapeDtypeStruct((B, ncat), jnp.float32),
        grid_spec=pltpu.PrefetchScalarGridSpec(
            num_scalar_prefetch=0,
            grid=(2, nk),                        # j: {mu, logvar} halves
            in_specs=[
                pl.BlockSpec((B, tk), lambda j, k: (0, k)),
                pl.BlockSpec((tk, Lp), lambda j, k: (k, j)),
                pl.BlockSpec((1, Lp), lambda j, k: (0, j)),
            ],
            out_specs=pl.BlockSpec((B, Lp), lambda j, k: (0, j)),
            scratch_shapes=[pltpu.VMEM((B, Lp), jnp.float32)],
        ),
        compiler_params=pltpu.CompilerParams(
            dimension_semantics=("parallel", "arbitrary"),
            vmem_limit_bytes=_vmem_limit(need),
        ),
        cost_estimate=pl.CostEstimate(
            flops=2 * B * ncat * Kp,
            transcendentals=0,
            bytes_accessed=2 * B * Kp * 2 + Kp * ncat * 2 + B * ncat * 4,
        ),
    )(a, w_cat, b_cat)

    mu = out[:, :latent]
    logvar = out[:, Lp:Lp + latent]
    # Tiny (B, latent) elementwise epilogue in XLA; keeping it out of the
    # kernel lets the mu/logvar halves run on separate TensorCores on v7x.
    z = mu + eps.astype(jnp.float32) * jnp.exp(0.5 * logvar)
    return mu, logvar, z


# ----------------------------------------------------------------------------
# Parameter preprocessing (one-time, at init): pre-transposed / padded / bf16
# ----------------------------------------------------------------------------
def _prep_linear(w_kn, b_n):
    """w_kn:(K,N), b:(N,) -> bf16 (Kp,Np) weight, f32 (1,Np) bias (lane-dense)."""
    K, N = w_kn.shape
    Kp = K if K <= 2048 else _round_up(K, 2048)
    Np = _round_up(N, 128) if N <= 2048 else _round_up(N, 4096)
    w = jnp.pad(w_kn, ((0, Kp - K), (0, Np - N))).astype(jnp.bfloat16)
    b = jnp.pad(b_n, (0, Np - N)).astype(jnp.float32).reshape(1, Np)
    return w, b


def _prep_conv(w_oihw, b):
    """PyTorch Conv2d weight (Cout,Cin,kh,kw) -> im2col matmul weight."""
    Cout, Cin, kh, kw = w_oihw.shape
    w_mat = jnp.transpose(w_oihw, (2, 3, 1, 0)).reshape(kh * kw * Cin, Cout)
    return _prep_linear(w_mat, b)


def _prep_convt_poly(w_iohw, b):
    """PyTorch ConvTranspose2d weight (Cin,Cout,4,4), stride=2, pad=1 ->
    polyphase weight for a stride-1 3x3 im2col over the (un-dilated) input.
    Output columns hold the 4 phases [(rh,rw) -> cols ph*Cout:(ph+1)*Cout]."""
    Cin, Cout, kh, kw = w_iohw.shape
    assert kh == 4 and kw == 4
    # window offset a in {0,1,2} over input padded by 1 -> original kernel index
    kmap = {0: (3, 1, None), 1: (None, 2, 0)}
    wbig = jnp.zeros((3, 3, Cin, 4 * Cout), jnp.float32)
    for rh in (0, 1):
        for rw in (0, 1):
            ph = 2 * rh + rw
            for a in range(3):
                ka = kmap[rh][a]
                if ka is None:
                    continue
                for c in range(3):
                    kb = kmap[rw][c]
                    if kb is None:
                        continue
                    wbig = wbig.at[a, c, :, ph * Cout:(ph + 1) * Cout].set(
                        w_iohw[:, :, ka, kb])
    w_mat = wbig.reshape(9 * Cin, 4 * Cout)
    b_big = jnp.tile(b, 4)
    return _prep_linear(w_mat, b_big)


def _chw_cols_to_hwc(w_lf, C, H, W):
    """Reorder Linear-weight columns from PyTorch CHW flatten to HWC flatten."""
    L = w_lf.shape[0]
    return w_lf.reshape(L, C, H, W).transpose(0, 2, 3, 1).reshape(L, C * H * W)


# ----------------------------------------------------------------------------
# Conv / ConvTranspose wrappers (host-side im2col in bf16 + Pallas matmul)
# ----------------------------------------------------------------------------
def _im2col(x_nhwc, kh, kw, stride, pad):
    x = jnp.pad(x_nhwc, ((0, 0), (pad, pad), (pad, pad), (0, 0)))
    B, Hp, Wp, C = x.shape
    Ho = (Hp - kh) // stride + 1
    Wo = (Wp - kw) // stride + 1
    cols = []
    for i in range(kh):
        for j in range(kw):
            cols.append(x[:, i:i + stride * Ho:stride, j:j + stride * Wo:stride, :])
    patches = jnp.stack(cols, axis=3)                       # (B,Ho,Wo,kh*kw,C)
    return patches.reshape(B * Ho * Wo, kh * kw * C), (B, Ho, Wo)


def conv2d(x_nhwc, w_p, b_p, cout, stride, pad, act, out_dtype=jnp.bfloat16):
    a, (B, Ho, Wo) = _im2col(x_nhwc, 4, 4, stride, pad)     # bf16 patches
    out = matmul_bias_act(a, w_p, b_p, act=act, out_dtype=out_dtype)
    return out[:B * Ho * Wo, :cout].reshape(B, Ho, Wo, cout)


def conv_transpose2d_poly(x_nhwc, w_p, b_p, cout, act, out_dtype=jnp.bfloat16):
    """k=4, s=2, p=1 transposed conv via polyphase: one 3x3 stride-1 im2col,
    one matmul producing 4 phases, then interleave to (B, 2H, 2W, Cout)."""
    B, H, W, _ = x_nhwc.shape
    a, _ = _im2col(x_nhwc, 3, 3, 1, 1)                      # (B*H*W, 9*Cin)
    out = matmul_bias_act(a, w_p, b_p, act=act, out_dtype=out_dtype)
    out = out[:B * H * W, :4 * cout].reshape(B, H, W, 2, 2, cout)
    # TODO(synk): fold this phase interleave into the matmul out_specs to
    # remove one extra HBM pass per transposed conv (bf16 here for convt1).
    out = jnp.transpose(out, (0, 1, 3, 2, 4, 5)).reshape(B, 2 * H, 2 * W, cout)
    return out


# ----------------------------------------------------------------------------
# Pure-JAX f32 reference of the PyTorch forward (for validation only)
# ----------------------------------------------------------------------------
def _reference_forward(raw, x_nchw, eps, latent_dim, fh):
    def conv(x, w, b, stride, pad):
        y = jax.lax.conv_general_dilated(
            x, w, window_strides=(stride, stride),
            padding=[(pad, pad), (pad, pad)],
            dimension_numbers=("NCHW", "OIHW", "NCHW"))
        return y + b[None, :, None, None]

    def convt(x, w_t, b, stride, pad):
        # ConvTranspose2d == dilated conv with spatially flipped, io-swapped W.
        w = jnp.flip(w_t, (2, 3)).transpose(1, 0, 2, 3)
        k = w.shape[-1]
        y = jax.lax.conv_general_dilated(
            x, w, window_strides=(1, 1),
            padding=[(k - 1 - pad, k - 1 - pad)] * 2,
            lhs_dilation=(stride, stride),
            dimension_numbers=("NCHW", "OIHW", "NCHW"))
        return y + b[None, :, None, None]

    h = jax.nn.relu(conv(x_nchw, raw["conv1_w"], raw["conv1_b"], 2, 1))
    h = jax.nn.relu(conv(h, raw["conv2_w"], raw["conv2_b"], 2, 1))
    hf = h.reshape(h.shape[0], -1)                           # CHW flatten
    mu = hf @ raw["fc_mu_w"].T + raw["fc_mu_b"]
    lv = hf @ raw["fc_lv_w"].T + raw["fc_lv_b"]
    z = mu + eps * jnp.exp(0.5 * lv)
    d = jax.nn.relu(z @ raw["dec_w"].T + raw["dec_b"])
    d = d.reshape(z.shape[0], 128, fh, fh)
    d = jax.nn.relu(convt(d, raw["convt1_w"], raw["convt1_b"], 2, 1))
    d = jax.nn.sigmoid(convt(d, raw["convt2_w"], raw["convt2_b"], 2, 1))
    return d, mu, lv


# ----------------------------------------------------------------------------
# Lars VAE
# ----------------------------------------------------------------------------
class LarsPallas:
    def __init__(self, latent_dim, image_hw=16, key=jax.random.PRNGKey(42)):
        self.latent_dim = latent_dim
        self.hw = image_hw
        self.fh = image_hw // 4
        C = 128
        self.feat = C * self.fh * self.fh        # analogue of 128*64*64
        self.lat_pad = max(128, _round_up(latent_dim, 128))

        ks = jax.random.split(key, 14)

        def w(k, shape, scale=0.05):
            return (scale * jax.random.normal(k, shape)).astype(jnp.float32)

        # raw PyTorch-layout parameters (kept for the reference check)
        raw = {
            "conv1_w": w(ks[0], (64, 3, 4, 4)), "conv1_b": w(ks[1], (64,)),
            "conv2_w": w(ks[2], (128, 64, 4, 4)), "conv2_b": w(ks[3], (128,)),
            "fc_mu_w": w(ks[4], (latent_dim, self.feat)), "fc_mu_b": w(ks[5], (latent_dim,)),
            "fc_lv_w": w(ks[6], (latent_dim, self.feat)), "fc_lv_b": w(ks[7], (latent_dim,)),
            "dec_w": w(ks[8], (self.feat, latent_dim)), "dec_b": w(ks[9], (self.feat,)),
            "convt1_w": w(ks[10], (128, 64, 4, 4)), "convt1_b": w(ks[11], (64,)),
            "convt2_w": w(ks[12], (64, 3, 4, 4)), "convt2_b": w(ks[13], (3,)),
        }
        self.raw = raw

        # --- one-time preprocessing into kernel-friendly layouts -------------
        p = {}
        p["conv1_w"], p["conv1_b"] = _prep_conv(raw["conv1_w"], raw["conv1_b"])
        p["conv2_w"], p["conv2_b"] = _prep_conv(raw["conv2_w"], raw["conv2_b"])

        # fused mu/logvar weight: columns reordered CHW->HWC, transposed to
        # (feat, latent), each half lane-padded to 128, concatenated, K-padded
        # to a multiple of 4096 (the fc kernel's K tile).
        Lp = self.lat_pad
        w_mu = _chw_cols_to_hwc(raw["fc_mu_w"], C, self.fh, self.fh).T
        w_lv = _chw_cols_to_hwc(raw["fc_lv_w"], C, self.fh, self.fh).T
        w_cat = jnp.concatenate(
            [jnp.pad(w_mu, ((0, 0), (0, Lp - latent_dim))),
             jnp.pad(w_lv, ((0, 0), (0, Lp - latent_dim)))], axis=1)
        Kp = self.feat if self.feat <= 4096 else _round_up(self.feat, 4096)
        w_cat = jnp.pad(w_cat, ((0, Kp - self.feat), (0, 0))).astype(jnp.bfloat16)
        b_cat = jnp.zeros((1, 2 * Lp), jnp.float32)
        b_cat = b_cat.at[0, :latent_dim].set(raw["fc_mu_b"])
        b_cat = b_cat.at[0, Lp:Lp + latent_dim].set(raw["fc_lv_b"])
        p["fc_w"], p["fc_b"] = w_cat, b_cat

        # decoder Linear: rows reordered CHW->HWC so its output is already NHWC
        dec_w_hwc = raw["dec_w"].reshape(C, self.fh, self.fh, latent_dim) \
                                .transpose(1, 2, 0, 3).reshape(self.feat, latent_dim)
        dec_b_hwc = raw["dec_b"].reshape(C, self.fh, self.fh) \
                                .transpose(1, 2, 0).reshape(-1)
        p["dec_w"], p["dec_b"] = _prep_linear(dec_w_hwc.T, dec_b_hwc)

        p["convt1_w"], p["convt1_b"] = _prep_convt_poly(raw["convt1_w"], raw["convt1_b"])
        p["convt2_w"], p["convt2_b"] = _prep_convt_poly(raw["convt2_w"], raw["convt2_b"])

        self.p = p
        self._fwd = jax.jit(self._forward)

    def _forward(self, p, x_nchw, eps):
        # NCHW -> NHWC, cast once to bf16 so im2col patches are bf16 directly.
        x = jnp.transpose(x_nchw, (0, 2, 3, 1)).astype(jnp.bfloat16)
        B = x.shape[0]

        # encoder (bf16 intermediates)
        h = conv2d(x, p["conv1_w"], p["conv1_b"], 64, stride=2, pad=1, act="relu")
        h = conv2d(h, p["conv2_w"], p["conv2_b"], 128, stride=2, pad=1, act="relu")
        h_flat = h.reshape(B, -1)            # HWC flatten (fc weights reordered)

        # fused fc_mu / fc_logvar (one pallas_call, megacore-splittable) + z
        mu, logvar, z = fc_mu_logvar_z(h_flat, p["fc_w"], p["fc_b"],
                                       eps, self.latent_dim)

        # decoder
        d = matmul_bias_act(z, p["dec_w"], p["dec_b"], act="relu",
                            out_dtype=jnp.bfloat16)
        d = d[:B, :self.feat].reshape(B, self.fh, self.fh, 128)   # already NHWC
        d = conv_transpose2d_poly(d, p["convt1_w"], p["convt1_b"], 64, "relu",
                                  out_dtype=jnp.bfloat16)
        d = conv_transpose2d_poly(d, p["convt2_w"], p["convt2_b"], 3, "sigmoid",
                                  out_dtype=jnp.float32)
        recon = jnp.transpose(d, (0, 3, 1, 2))              # back to NCHW
        return recon, mu, logvar

    def __call__(self, x_nchw, eps):
        return self._fwd(self.p, x_nchw, eps)


if __name__ == "__main__":
    latent_dim = 32
    batch, hw = 2, 16
    model = LarsPallas(latent_dim, image_hw=hw)

    key = jax.random.PRNGKey(0)
    x_key, eps_key = jax.random.split(key)
    x = jax.random.uniform(x_key, (batch, 3, hw, hw), dtype=jnp.float32)
    eps = jax.random.normal(eps_key, (batch, latent_dim), dtype=jnp.float32)

    recon, mu, logvar = model(x, eps)
    jax.block_until_ready((recon, mu, logvar))

    assert recon.shape == (batch, 3, hw, hw)
    assert mu.shape == (batch, latent_dim)
    assert logvar.shape == (batch, latent_dim)
    assert bool(jnp.all(jnp.isfinite(recon)))
    assert bool(jnp.all(jnp.isfinite(mu))) and bool(jnp.all(jnp.isfinite(logvar)))
    assert bool(jnp.all((recon >= 0.0) & (recon <= 1.0)))  # sigmoid output range

    # Validate against a pure-JAX f32 reference of the PyTorch forward
    # (checks the polyphase ConvTranspose mapping and all layout reorders;
    #  tolerance accounts for the intentional bf16 matmul/activation path).
    r_recon, r_mu, r_lv = _reference_forward(model.raw, x, eps,
                                             latent_dim, model.fh)
    assert float(jnp.max(jnp.abs(mu - r_mu))) < 5e-2
    assert float(jnp.max(jnp.abs(logvar - r_lv))) < 5e-2
    assert float(jnp.max(jnp.abs(recon - r_recon))) < 3e-2

    print("KERNEL_OK")
</pallas_src>

<mosaic_0001>
module attributes {stable_mosaic.version = 11 : i64} {
  func.func @_mm_kernel(%arg0: i32, %arg1: i32, %arg2: i32, %arg3: memref<128x48xbf16, #tpu.memory_space<vmem>>, %arg4: memref<48x128xbf16, #tpu.memory_space<vmem>>, %arg5: memref<1x128xf32, #tpu.memory_space<vmem>>, %arg6: memref<128x128xbf16, #tpu.memory_space<vmem>>, %arg7: memref<128x128xf32, #tpu.memory_space<vmem>>) attributes {dimension_semantics = [#tpu.dimension_semantics<parallel>, #tpu.dimension_semantics<parallel>, #tpu.dimension_semantics<arbitrary>], iteration_bounds = array<i64: 1, 1, 1>, scalar_prefetch = 0 : i64, scratch_operands = 1 : i64, tpu.core_type = #tpu.core_type<tc>, window_params = [{transform_indices = @transform_0, window_bounds = array<i64: 128, 48>}, {transform_indices = @transform_1, window_bounds = array<i64: 48, 128>}, {transform_indices = @transform_2, window_bounds = array<i64: 1, 128>}, {transform_indices = @transform_3, window_bounds = array<i64: 128, 128>}]} {
    %c0_i32 = arith.constant 0 : i32
    %0 = arith.cmpi eq, %arg2, %c0_i32 : i32
    %1 = arith.extui %0 : i1 to i32
    %c0_i32_0 = arith.constant 0 : i32
    %2 = arith.cmpi ne, %1, %c0_i32_0 : i32
    scf.if %2 {
      %cst_10 = arith.constant 0.000000e+00 : f32
      %12 = vector.broadcast %cst_10 : f32 to vector<128x128xf32>
      %c0_11 = arith.constant 0 : index
      %c0_12 = arith.constant 0 : index
      %13 = vector.load %arg7[%c0_11, %c0_12] : memref<128x128xf32, #tpu.memory_space<vmem>>, vector<128x128xf32>
      tpu.vector_store %arg7[%c0_11, %c0_12], %12 {strides = array<i32>} : memref<128x128xf32, #tpu.memory_space<vmem>>, vector<128x128xf32>,
    } else {
    }
    %c0 = arith.constant 0 : index
    %c0_1 = arith.constant 0 : index
    %3 = vector.load %arg7[%c0, %c0_1] : memref<128x128xf32, #tpu.memory_space<vmem>>, vector<128x128xf32>
    %c0_2 = arith.constant 0 : index
    %c0_3 = arith.constant 0 : index
    %4 = vector.load %arg3[%c0_2, %c0_3] : memref<128x48xbf16, #tpu.memory_space<vmem>>, vector<128x48xbf16>
    %c0_4 = arith.constant 0 : index
    %c0_5 = arith.constant 0 : index
    %5 = vector.load %arg4[%c0_4, %c0_5] : memref<48x128xbf16, #tpu.memory_space<vmem>>, vector<48x128xbf16>
    %cst = arith.constant dense<0.000000e+00> : vector<128x128xf32>
    %6 = tpu.matmul %4, %5, %cst {dimension_numbers = #tpu.dot_dimension_numbers<[1], [0], [0], [1], [0, 0, 1, 1], [], []>} : vector<128x48xbf16>, vector<48x128xbf16>, vector<128x128xf32> -> vector<128x128xf32>
    %7 = arith.addf %3, %6 : vector<128x128xf32>
    %c0_6 = arith.constant 0 : index
    %c0_7 = arith.constant 0 : index
    %8 = vector.load %arg7[%c0_6, %c0_7] : memref<128x128xf32, #tpu.memory_space<vmem>>, vector<128x128xf32>
    tpu.vector_store %arg7[%c0_6, %c0_7], %7 {strides = array<i32>} : memref<128x128xf32, #tpu.memory_space<vmem>>, vector<128x128xf32>,
    %c0_i32_8 = arith.constant 0 : i32
    %9 = arith.cmpi eq, %arg2, %c0_i32_8 : i32
    %10 = arith.extui %9 : i1 to i32
    %c0_i32_9 = arith.constant 0 : i32
    %11 = arith.cmpi ne, %10, %c0_i32_9 : i32
    scf.if %11 {
      %c0_10 = arith.constant 0 : index
      %c0_11 = arith.constant 0 : index
      %12 = vector.load %arg7[%c0_10, %c0_11] : memref<128x128xf32, #tpu.memory_space<vmem>>, vector<128x128xf32>
      %c0_12 = arith.constant 0 : index
      %c0_13 = arith.constant 0 : index
      %13 = vector.load %arg5[%c0_12, %c0_13] : memref<1x128xf32, #tpu.memory_space<vmem>>, vector<1x128xf32>
      %14 = vector.broadcast %13 : vector<1x128xf32> to vector<128x128xf32>
      %15 = arith.addf %12, %14 : vector<128x128xf32>
      %cst_14 = arith.constant 0.000000e+00 : f32
      %16 = vector.broadcast %cst_14 : f32 to vector<128x128xf32>
      %17 = arith.maximumf %15, %16 : vector<128x128xf32>
      %18 = arith.truncf %17 : vector<128x128xf32> to vector<128x128xbf16>
      %c0_15 = arith.constant 0 : index
      %c0_16 = arith.constant 0 : index
      %19 = vector.load %arg6[%c0_15, %c0_16] : memref<128x128xbf16, #tpu.memory_space<vmem>>, vector<128x128xbf16>
      tpu.vector_store %arg6[%c0_15, %c0_16], %18 {strides = array<i32>} : memref<128x128xbf16, #tpu.memory_space<vmem>>, vector<128x128xbf16>,
    } else {
    }
    return
  }
  func.func @transform_0(%arg0: i32, %arg1: i32, %arg2: i32) -> (i32, i32) {
    %c0_i32 = arith.constant 0 : i32
    return %arg0, %arg2 : i32, i32
  }
  func.func @transform_1(%arg0: i32, %arg1: i32, %arg2: i32) -> (i32, i32) {
    %c0_i32 = arith.constant 0 : i32
    return %arg2, %arg1 : i32, i32
  }
  func.func @transform_2(%arg0: i32, %arg1: i32, %arg2: i32) -> (i32, i32) {
    %c0_i32 = arith.constant 0 : i32
    %c0_i32_0 = arith.constant 0 : i32
    return %c0_i32, %arg1 : i32, i32
  }
  func.func @transform_3(%arg0: i32, %arg1: i32, %arg2: i32) -> (i32, i32) {
    %c0_i32 = arith.constant 0 : i32
    return %arg0, %arg1 : i32, i32
  }
}

module attributes {stable_mosaic.version = 11 : i64} {
  func.func @_mm_kernel(%arg0: i32, %arg1: i32, %arg2: i32, %arg3: memref<32x1024xbf16, #tpu.memory_space<vmem>>, %arg4: memref<1024x128xbf16, #tpu.memory_space<vmem>>, %arg5: memref<1x128xf32, #tpu.memory_space<vmem>>, %arg6: memref<32x128xbf16, #tpu.memory_space<vmem>>, %arg7: memref<32x128xf32, #tpu.memory_space<vmem>>) attributes {dimension_semantics = [#tpu.dimension_semantics<parallel>, #tpu.dimension_semantics<parallel>, #tpu.dimension_semantics<arbitrary>], iteration_bounds = array<i64: 1, 1, 1>, scalar_prefetch = 0 : i64, scratch_operands = 1 : i64, tpu.core_type = #tpu.core_type<tc>, window_params = [{transform_indices = @transform_0, window_bounds = array<i64: 32, 1024>}, {transform_indices = @transform_1, window_bounds = array<i64: 1024, 128>}, {transform_indices = @transform_2, window_bounds = array<i64: 1, 128>}, {transform_indices = @transform_3, window_bounds = array<i64: 32, 128>}]} {
    %c0_i32 = arith.constant 0 : i32
    %0 = arith.cmpi eq, %arg2, %c0_i32 : i32
    %1 = arith.extui %0 : i1 to i32
    %c0_i32_0 = arith.constant 0 : i32
    %2 = arith.cmpi ne, %1, %c0_i32_0 : i32
    scf.if %2 {
      %cst_10 = arith.constant 0.000000e+00 : f32
      %12 = vector.broadcast %cst_10 : f32 to vector<32x128xf32>
      %c0_11 = arith.constant 0 : index
      %c0_12 = arith.constant 0 : index
      %13 = vector.load %arg7[%c0_11, %c0_12] : memref<32x128xf32, #tpu.memory_space<vmem>>, vector<32x128xf32>
      tpu.vector_store %arg7[%c0_11, %c0_12], %12 {strides = array<i32>} : memref<32x128xf32, #tpu.memory_space<vmem>>, vector<32x128xf32>,
    } else {
    }
    %c0 = arith.constant 0 : index
    %c0_1 = arith.constant 0 : index
    %3 = vector.load %arg7[%c0, %c0_1] : memref<32x128xf32, #tpu.memory_space<vmem>>, vector<32x128xf32>
    %c0_2 = arith.constant 0 : index
    %c0_3 = arith.constant 0 : index
    %4 = vector.load %arg3[%c0_2, %c0_3] : memref<32x1024xbf16, #tpu.memory_space<vmem>>, vector<32x1024xbf16>
    %c0_4 = arith.constant 0 : index
    %c0_5 = arith.constant 0 : index
    %5 = vector.load %arg4[%c0_4, %c0_5] : memref<1024x128xbf16, #tpu.memory_space<vmem>>, vector<1024x128xbf16>
    %cst = arith.constant dense<0.000000e+00> : vector<32x128xf32>
    %6 = tpu.matmul %4, %5, %cst {dimension_numbers = #tpu.dot_dimension_numbers<[1], [0], [0], [1], [0, 0, 1, 1], [], []>} : vector<32x1024xbf16>, vector<1024x128xbf16>, vector<32x128xf32> -> vector<32x128xf32>
    %7 = arith.addf %3, %6 : vector<32x128xf32>
    %c0_6 = arith.constant 0 : index
    %c0_7 = arith.constant 0 : index
    %8 = vector.load %arg7[%c0_6, %c0_7] : memref<32x128xf32, #tpu.memory_space<vmem>>, vector<32x128xf32>
    tpu.vector_store %arg7[%c0_6, %c0_7], %7 {strides = array<i32>} : memref<32x128xf32, #tpu.memory_space<vmem>>, vector<32x128xf32>,
    %c0_i32_8 = arith.constant 0 : i32
    %9 = arith.cmpi eq, %arg2, %c0_i32_8 : i32
    %10 = arith.extui %9 : i1 to i32
    %c0_i32_9 = arith.constant 0 : i32
    %11 = arith.cmpi ne, %10, %c0_i32_9 : i32
    scf.if %11 {
      %c0_10 = arith.constant 0 : index
      %c0_11 = arith.constant 0 : index
      %12 = vector.load %arg7[%c0_10, %c0_11] : memref<32x128xf32, #tpu.memory_space<vmem>>, vector<32x128xf32>
      %c0_12 = arith.constant 0 : index
      %c0_13 = arith.constant 0 : index
      %13 = vector.load %arg5[%c0_12, %c0_13] : memref<1x128xf32, #tpu.memory_space<vmem>>, vector<1x128xf32>
      %14 = vector.broadcast %13 : vector<1x128xf32> to vector<32x128xf32>
      %15 = arith.addf %12, %14 : vector<32x128xf32>
      %cst_14 = arith.constant 0.000000e+00 : f32
      %16 = vector.broadcast %cst_14 : f32 to vector<32x128xf32>
      %17 = arith.maximumf %15, %16 : vector<32x128xf32>
      %18 = arith.truncf %17 : vector<32x128xf32> to vector<32x128xbf16>
      %c0_15 = arith.constant 0 : index
      %c0_16 = arith.constant 0 : index
      %19 = vector.load %arg6[%c0_15, %c0_16] : memref<32x128xbf16, #tpu.memory_space<vmem>>, vector<32x128xbf16>
      tpu.vector_store %arg6[%c0_15, %c0_16], %18 {strides = array<i32>} : memref<32x128xbf16, #tpu.memory_space<vmem>>, vector<32x128xbf16>,
    } else {
    }
    return
  }
  func.func @transform_0(%arg0: i32, %arg1: i32, %arg2: i32) -> (i32, i32) {
    %c0_i32 = arith.constant 0 : i32
    return %arg0, %arg2 : i32, i32
  }
  func.func @transform_1(%arg0: i32, %arg1: i32, %arg2: i32) -> (i32, i32) {
    %c0_i32 = arith.constant 0 : i32
    return %arg2, %arg1 : i32, i32
  }
  func.func @transform_2(%arg0: i32, %arg1: i32, %arg2: i32) -> (i32, i32) {
    %c0_i32 = arith.constant 0 : i32
    %c0_i32_0 = arith.constant 0 : i32
    return %c0_i32, %arg1 : i32, i32
  }
  func.func @transform_3(%arg0: i32, %arg1: i32, %arg2: i32) -> (i32, i32) {
    %c0_i32 = arith.constant 0 : i32
    return %arg0, %arg1 : i32, i32
  }
}

module attributes {stable_mosaic.version = 11 : i64} {
  func.func @_mm_kernel(%arg0: i32, %arg1: i32, %arg2: i32, %arg3: memref<16x32xbf16, #tpu.memory_space<vmem>>, %arg4: memref<32x2048xbf16, #tpu.memory_space<vmem>>, %arg5: memref<1x2048xf32, #tpu.memory_space<vmem>>, %arg6: memref<16x2048xbf16, #tpu.memory_space<vmem>>, %arg7: memref<16x2048xf32, #tpu.memory_space<vmem>>) attributes {dimension_semantics = [#tpu.dimension_semantics<parallel>, #tpu.dimension_semantics<parallel>, #tpu.dimension_semantics<arbitrary>], iteration_bounds = array<i64: 1, 1, 1>, scalar_prefetch = 0 : i64, scratch_operands = 1 : i64, tpu.core_type = #tpu.core_type<tc>, window_params = [{transform_indices = @transform_0, window_bounds = array<i64: 16, 32>}, {transform_indices = @transform_1, window_bounds = array<i64: 32, 2048>}, {transform_indices = @transform_2, window_bounds = array<i64: 1, 2048>}, {transform_indices = @transform_3, window_bounds = array<i64: 16, 2048>}]} {
    %c0_i32 = arith.constant 0 : i32
    %0 = arith.cmpi eq, %arg2, %c0_i32 : i32
    %1 = arith.extui %0 : i1 to i32
    %c0_i32_0 = arith.constant 0 : i32
    %2 = arith.cmpi ne, %1, %c0_i32_0 : i32
    scf.if %2 {
      %cst_10 = arith.constant 0.000000e+00 : f32
      %12 = vector.broadcast %cst_10 : f32 to vector<16x2048xf32>
      %c0_11 = arith.constant 0 : index
      %c0_12 = arith.constant 0 : index
      %13 = vector.load %arg7[%c0_11, %c0_12] : memref<16x2048xf32, #tpu.memory_space<vmem>>, vector<16x2048xf32>
      tpu.vector_store %arg7[%c0_11, %c0_12], %12 {strides = array<i32>} : memref<16x2048xf32, #tpu.memory_space<vmem>>, vector<16x2048xf32>,
    } else {
    }
    %c0 = arith.constant 0 : index
    %c0_1 = arith.constant 0 : index
    %3 = vector.load %arg7[%c0, %c0_1] : memref<16x2048xf32, #tpu.memory_space<vmem>>, vector<16x2048xf32>
    %c0_2 = arith.constant 0 : index
    %c0_3 = arith.constant 0 : index
    %4 = vector.load %arg3[%c0_2, %c0_3] : memref<16x32xbf16, #tpu.memory_space<vmem>>, vector<16x32xbf16>
    %c0_4 = arith.constant 0 : index
    %c0_5 = arith.constant 0 : index
    %5 = vector.load %arg4[%c0_4, %c0_5] : memref<32x2048xbf16, #tpu.memory_space<vmem>>, vector<32x2048xbf16>
    %cst = arith.constant dense<0.000000e+00> : vector<16x2048xf32>
    %6 = tpu.matmul %4, %5, %cst {dimension_numbers = #tpu.dot_dimension_numbers<[1], [0], [0], [1], [0, 0, 1, 1], [], []>} : vector<16x32xbf16>, vector<32x2048xbf16>, vector<16x2048xf32> -> vector<16x2048xf32>
    %7 = arith.addf %3, %6 : vector<16x2048xf32>
    %c0_6 = arith.constant 0 : index
    %c0_7 = arith.constant 0 : index
    %8 = vector.load %arg7[%c0_6, %c0_7] : memref<16x2048xf32, #tpu.memory_space<vmem>>, vector<16x2048xf32>
    tpu.vector_store %arg7[%c0_6, %c0_7], %7 {strides = array<i32>} : memref<16x2048xf32, #tpu.memory_space<vmem>>, vector<16x2048xf32>,
    %c0_i32_8 = arith.constant 0 : i32
    %9 = arith.cmpi eq, %arg2, %c0_i32_8 : i32
    %10 = arith.extui %9 : i1 to i32
    %c0_i32_9 = arith.constant 0 : i32
    %11 = arith.cmpi ne, %10, %c0_i32_9 : i32
    scf.if %11 {
      %c0_10 = arith.constant 0 : index
      %c0_11 = arith.constant 0 : index
      %12 = vector.load %arg7[%c0_10, %c0_11] : memref<16x2048xf32, #tpu.memory_space<vmem>>, vector<16x2048xf32>
      %c0_12 = arith.constant 0 : index
      %c0_13 = arith.constant 0 : index
      %13 = vector.load %arg5[%c0_12, %c0_13] : memref<1x2048xf32, #tpu.memory_space<vmem>>, vector<1x2048xf32>
      %14 = vector.broadcast %13 : vector<1x2048xf32> to vector<16x2048xf32>
      %15 = arith.addf %12, %14 : vector<16x2048xf32>
      %cst_14 = arith.constant 0.000000e+00 : f32
      %16 = vector.broadcast %cst_14 : f32 to vector<16x2048xf32>
      %17 = arith.maximumf %15, %16 : vector<16x2048xf32>
      %18 = arith.truncf %17 : vector<16x2048xf32> to vector<16x2048xbf16>
      %c0_15 = arith.constant 0 : index
      %c0_16 = arith.constant 0 : index
      %19 = vector.load %arg6[%c0_15, %c0_16] : memref<16x2048xbf16, #tpu.memory_space<vmem>>, vector<16x2048xbf16>
      tpu.vector_store %arg6[%c0_15, %c0_16], %18 {strides = array<i32>} : memref<16x2048xbf16, #tpu.memory_space<vmem>>, vector<16x2048xbf16>,
    } else {
    }
    return
  }
  func.func @transform_0(%arg0: i32, %arg1: i32, %arg2: i32) -> (i32, i32) {
    %c0_i32 = arith.constant 0 : i32
    return %arg0, %arg2 : i32, i32
  }
  func.func @transform_1(%arg0: i32, %arg1: i32, %arg2: i32) -> (i32, i32) {
    %c0_i32 = arith.constant 0 : i32
    return %arg2, %arg1 : i32, i32
  }
  func.func @transform_2(%arg0: i32, %arg1: i32, %arg2: i32) -> (i32, i32) {
    %c0_i32 = arith.constant 0 : i32
    %c0_i32_0 = arith.constant 0 : i32
    return %c0_i32, %arg1 : i32, i32
  }
  func.func @transform_3(%arg0: i32, %arg1: i32, %arg2: i32) -> (i32, i32) {
    %c0_i32 = arith.constant 0 : i32
    return %arg0, %arg1 : i32, i32
  }
}

module attributes {stable_mosaic.version = 11 : i64} {
  func.func @_fc_kernel(%arg0: i32, %arg1: i32, %arg2: memref<2x2048xbf16, #tpu.memory_space<vmem>>, %arg3: memref<2048x128xbf16, #tpu.memory_space<vmem>>, %arg4: memref<1x128xf32, #tpu.memory_space<vmem>>, %arg5: memref<2x128xf32, #tpu.memory_space<vmem>>, %arg6: memref<2x128xf32, #tpu.memory_space<vmem>>) attributes {dimension_semantics = [#tpu.dimension_semantics<parallel>, #tpu.dimension_semantics<arbitrary>], iteration_bounds = array<i64: 2, 1>, scalar_prefetch = 0 : i64, scratch_operands = 1 : i64, tpu.core_type = #tpu.core_type<tc>, window_params = [{transform_indices = @transform_0, window_bounds = array<i64: 2, 2048>}, {transform_indices = @transform_1, window_bounds = array<i64: 2048, 128>}, {transform_indices = @transform_2, window_bounds = array<i64: 1, 128>}, {transform_indices = @transform_3, window_bounds = array<i64: 2, 128>}]} {
    %c0_i32 = arith.constant 0 : i32
    %0 = arith.cmpi eq, %arg1, %c0_i32 : i32
    %1 = arith.extui %0 : i1 to i32
    %c0_i32_0 = arith.constant 0 : i32
    %2 = arith.cmpi ne, %1, %c0_i32_0 : i32
    scf.if %2 {
      %cst_10 = arith.constant 0.000000e+00 : f32
      %12 = vector.broadcast %cst_10 : f32 to vector<2x128xf32>
      %c0_11 = arith.constant 0 : index
      %c0_12 = arith.constant 0 : index
      %13 = vector.load %arg6[%c0_11, %c0_12] : memref<2x128xf32, #tpu.memory_space<vmem>>, vector<2x128xf32>
      tpu.vector_store %arg6[%c0_11, %c0_12], %12 {strides = array<i32>} : memref<2x128xf32, #tpu.memory_space<vmem>>, vector<2x128xf32>,
    } else {
    }
    %c0 = arith.constant 0 : index
    %c0_1 = arith.constant 0 : index
    %3 = vector.load %arg6[%c0, %c0_1] : memref<2x128xf32, #tpu.memory_space<vmem>>, vector<2x128xf32>
    %c0_2 = arith.constant 0 : index
    %c0_3 = arith.constant 0 : index
    %4 = vector.load %arg2[%c0_2, %c0_3] : memref<2x2048xbf16, #tpu.memory_space<vmem>>, vector<2x2048xbf16>
    %c0_4 = arith.constant 0 : index
    %c0_5 = arith.constant 0 : index
    %5 = vector.load %arg3[%c0_4, %c0_5] : memref<2048x128xbf16, #tpu.memory_space<vmem>>, vector<2048x128xbf16>
    %cst = arith.constant dense<0.000000e+00> : vector<2x128xf32>
    %6 = tpu.matmul %4, %5, %cst {dimension_numbers = #tpu.dot_dimension_numbers<[1], [0], [0], [1], [0, 0, 1, 1], [], []>} : vector<2x2048xbf16>, vector<2048x128xbf16>, vector<2x128xf32> -> vector<2x128xf32>
    %7 = arith.addf %3, %6 : vector<2x128xf32>
    %c0_6 = arith.constant 0 : index
    %c0_7 = arith.constant 0 : index
    %8 = vector.load %arg6[%c0_6, %c0_7] : memref<2x128xf32, #tpu.memory_space<vmem>>, vector<2x128xf32>
    tpu.vector_store %arg6[%c0_6, %c0_7], %7 {strides = array<i32>} : memref<2x128xf32, #tpu.memory_space<vmem>>, vector<2x128xf32>,
    %c0_i32_8 = arith.constant 0 : i32
    %9 = arith.cmpi eq, %arg1, %c0_i32_8 : i32
    %10 = arith.extui %9 : i1 to i32
    %c0_i32_9 = arith.constant 0 : i32
    %11 = arith.cmpi ne, %10, %c0_i32_9 : i32
    scf.if %11 {
      %c0_10 = arith.constant 0 : index
      %c0_11 = arith.constant 0 : index
      %12 = vector.load %arg6[%c0_10, %c0_11] : memref<2x128xf32, #tpu.memory_space<vmem>>, vector<2x128xf32>
      %c0_12 = arith.constant 0 : index
      %c0_13 = arith.constant 0 : index
      %13 = vector.load %arg4[%c0_12, %c0_13] : memref<1x128xf32, #tpu.memory_space<vmem>>, vector<1x128xf32>
      %14 = vector.broadcast %13 : vector<1x128xf32> to vector<2x128xf32>
      %15 = arith.addf %12, %14 : vector<2x128xf32>
      %c0_14 = arith.constant 0 : index
      %c0_15 = arith.constant 0 : index
      %16 = vector.load %arg5[%c0_14, %c0_15] : memref<2x128xf32, #tpu.memory_space<vmem>>, vector<2x128xf32>
      tpu.vector_store %arg5[%c0_14, %c0_15], %15 {strides = array<i32>} : memref<2x128xf32, #tpu.memory_space<vmem>>, vector<2x128xf32>,
    } else {
    }
    return
  }
  func.func @transform_0(%arg0: i32, %arg1: i32) -> (i32, i32) {
    %c0_i32 = arith.constant 0 : i32
    %c0_i32_0 = arith.constant 0 : i32
    return %c0_i32, %arg1 : i32, i32
  }
  func.func @transform_1(%arg0: i32, %arg1: i32) -> (i32, i32) {
    %c0_i32 = arith.constant 0 : i32
    return %arg1, %arg0 : i32, i32
  }
  func.func @transform_2(%arg0: i32, %arg1: i32) -> (i32, i32) {
    %c0_i32 = arith.constant 0 : i32
    %c0_i32_0 = arith.constant 0 : i32
    return %c0_i32, %arg0 : i32, i32
  }
  func.func @transform_3(%arg0: i32, %arg1: i32) -> (i32, i32) {
    %c0_i32 = arith.constant 0 : i32
    %c0_i32_0 = arith.constant 0 : i32
    return %c0_i32, %arg0 : i32, i32
  }
}

module attributes {stable_mosaic.version = 11 : i64} {
  func.func @_mm_kernel(%arg0: i32, %arg1: i32, %arg2: i32, %arg3: memref<32x1152xbf16, #tpu.memory_space<vmem>>, %arg4: memref<1152x256xbf16, #tpu.memory_space<vmem>>, %arg5: memref<1x256xf32, #tpu.memory_space<vmem>>, %arg6: memref<32x256xbf16, #tpu.memory_space<vmem>>, %arg7: memref<32x256xf32, #tpu.memory_space<vmem>>) attributes {dimension_semantics = [#tpu.dimension_semantics<parallel>, #tpu.dimension_semantics<parallel>, #tpu.dimension_semantics<arbitrary>], iteration_bounds = array<i64: 1, 1, 1>, scalar_prefetch = 0 : i64, scratch_operands = 1 : i64, tpu.core_type = #tpu.core_type<tc>, window_params = [{transform_indices = @transform_0, window_bounds = array<i64: 32, 1152>}, {transform_indices = @transform_1, window_bounds = array<i64: 1152, 256>}, {transform_indices = @transform_2, window_bounds = array<i64: 1, 256>}, {transform_indices = @transform_3, window_bounds = array<i64: 32, 256>}]} {
    %c0_i32 = arith.constant 0 : i32
    %0 = arith.cmpi eq, %arg2, %c0_i32 : i32
    %1 = arith.extui %0 : i1 to i32
    %c0_i32_0 = arith.constant 0 : i32
    %2 = arith.cmpi ne, %1, %c0_i32_0 : i32
    scf.if %2 {
      %cst_10 = arith.constant 0.000000e+00 : f32
      %12 = vector.broadcast %cst_10 : f32 to vector<32x256xf32>
      %c0_11 = arith.constant 0 : index
      %c0_12 = arith.constant 0 : index
      %13 = vector.load %arg7[%c0_11, %c0_12] : memref<32x256xf32, #tpu.memory_space<vmem>>, vector<32x256xf32>
      tpu.vector_store %arg7[%c0_11, %c0_12], %12 {strides = array<i32>} : memref<32x256xf32, #tpu.memory_space<vmem>>, vector<32x256xf32>,
    } else {
    }
    %c0 = arith.constant 0 : index
    %c0_1 = arith.constant 0 : index
    %3 = vector.load %arg7[%c0, %c0_1] : memref<32x256xf32, #tpu.memory_space<vmem>>, vector<32x256xf32>
    %c0_2 = arith.constant 0 : index
    %c0_3 = arith.constant 0 : index
    %4 = vector.load %arg3[%c0_2, %c0_3] : memref<32x1152xbf16, #tpu.memory_space<vmem>>, vector<32x1152xbf16>
    %c0_4 = arith.constant 0 : index
    %c0_5 = arith.constant 0 : index
    %5 = vector.load %arg4[%c0_4, %c0_5] : memref<1152x256xbf16, #tpu.memory_space<vmem>>, vector<1152x256xbf16>
    %cst = arith.constant dense<0.000000e+00> : vector<32x256xf32>
    %6 = tpu.matmul %4, %5, %cst {dimension_numbers = #tpu.dot_dimension_numbers<[1], [0], [0], [1], [0, 0, 1, 1], [], []>} : vector<32x1152xbf16>, vector<1152x256xbf16>, vector<32x256xf32> -> vector<32x256xf32>
    %7 = arith.addf %3, %6 : vector<32x256xf32>
    %c0_6 = arith.constant 0 : index
    %c0_7 = arith.constant 0 : index
    %8 = vector.load %arg7[%c0_6, %c0_7] : memref<32x256xf32, #tpu.memory_space<vmem>>, vector<32x256xf32>
    tpu.vector_store %arg7[%c0_6, %c0_7], %7 {strides = array<i32>} : memref<32x256xf32, #tpu.memory_space<vmem>>, vector<32x256xf32>,
    %c0_i32_8 = arith.constant 0 : i32
    %9 = arith.cmpi eq, %arg2, %c0_i32_8 : i32
    %10 = arith.extui %9 : i1 to i32
    %c0_i32_9 = arith.constant 0 : i32
    %11 = arith.cmpi ne, %10, %c0_i32_9 : i32
    scf.if %11 {
      %c0_10 = arith.constant 0 : index
      %c0_11 = arith.constant 0 : index
      %12 = vector.load %arg7[%c0_10, %c0_11] : memref<32x256xf32, #tpu.memory_space<vmem>>, vector<32x256xf32>
      %c0_12 = arith.constant 0 : index
      %c0_13 = arith.constant 0 : index
      %13 = vector.load %arg5[%c0_12, %c0_13] : memref<1x256xf32, #tpu.memory_space<vmem>>, vector<1x256xf32>
      %14 = vector.broadcast %13 : vector<1x256xf32> to vector<32x256xf32>
      %15 = arith.addf %12, %14 : vector<32x256xf32>
      %cst_14 = arith.constant 0.000000e+00 : f32
      %16 = vector.broadcast %cst_14 : f32 to vector<32x256xf32>
      %17 = arith.maximumf %15, %16 : vector<32x256xf32>
      %18 = arith.truncf %17 : vector<32x256xf32> to vector<32x256xbf16>
      %c0_15 = arith.constant 0 : index
      %c0_16 = arith.constant 0 : index
      %19 = vector.load %arg6[%c0_15, %c0_16] : memref<32x256xbf16, #tpu.memory_space<vmem>>, vector<32x256xbf16>
      tpu.vector_store %arg6[%c0_15, %c0_16], %18 {strides = array<i32>} : memref<32x256xbf16, #tpu.memory_space<vmem>>, vector<32x256xbf16>,
    } else {
    }
    return
  }
  func.func @transform_0(%arg0: i32, %arg1: i32, %arg2: i32) -> (i32, i32) {
    %c0_i32 = arith.constant 0 : i32
    return %arg0, %arg2 : i32, i32
  }
  func.func @transform_1(%arg0: i32, %arg1: i32, %arg2: i32) -> (i32, i32) {
    %c0_i32 = arith.constant 0 : i32
    return %arg2, %arg1 : i32, i32
  }
  func.func @transform_2(%arg0: i32, %arg1: i32, %arg2: i32) -> (i32, i32) {
    %c0_i32 = arith.constant 0 : i32
    %c0_i32_0 = arith.constant 0 : i32
    return %c0_i32, %arg1 : i32, i32
  }
  func.func @transform_3(%arg0: i32, %arg1: i32, %arg2: i32) -> (i32, i32) {
    %c0_i32 = arith.constant 0 : i32
    return %arg0, %arg1 : i32, i32
  }
}

module attributes {stable_mosaic.version = 11 : i64} {
  func.func @_mm_kernel(%arg0: i32, %arg1: i32, %arg2: i32, %arg3: memref<128x576xbf16, #tpu.memory_space<vmem>>, %arg4: memref<576x128xbf16, #tpu.memory_space<vmem>>, %arg5: memref<1x128xf32, #tpu.memory_space<vmem>>, %arg6: memref<128x128xf32, #tpu.memory_space<vmem>>, %arg7: memref<128x128xf32, #tpu.memory_space<vmem>>) attributes {dimension_semantics = [#tpu.dimension_semantics<parallel>, #tpu.dimension_semantics<parallel>, #tpu.dimension_semantics<arbitrary>], iteration_bounds = array<i64: 1, 1, 1>, scalar_prefetch = 0 : i64, scratch_operands = 1 : i64, tpu.core_type = #tpu.core_type<tc>, window_params = [{transform_indices = @transform_0, window_bounds = array<i64: 128, 576>}, {transform_indices = @transform_1, window_bounds = array<i64: 576, 128>}, {transform_indices = @transform_2, window_bounds = array<i64: 1, 128>}, {transform_indices = @transform_3, window_bounds = array<i64: 128, 128>}]} {
    %c0_i32 = arith.constant 0 : i32
    %0 = arith.cmpi eq, %arg2, %c0_i32 : i32
    %1 = arith.extui %0 : i1 to i32
    %c0_i32_0 = arith.constant 0 : i32
    %2 = arith.cmpi ne, %1, %c0_i32_0 : i32
    scf.if %2 {
      %cst_10 = arith.constant 0.000000e+00 : f32
      %12 = vector.broadcast %cst_10 : f32 to vector<128x128xf32>
      %c0_11 = arith.constant 0 : index
      %c0_12 = arith.constant 0 : index
      %13 = vector.load %arg7[%c0_11, %c0_12] : memref<128x128xf32, #tpu.memory_space<vmem>>, vector<128x128xf32>
      tpu.vector_store %arg7[%c0_11, %c0_12], %12 {strides = array<i32>} : memref<128x128xf32, #tpu.memory_space<vmem>>, vector<128x128xf32>,
    } else {
    }
    %c0 = arith.constant 0 : index
    %c0_1 = arith.constant 0 : index
    %3 = vector.load %arg7[%c0, %c0_1] : memref<128x128xf32, #tpu.memory_space<vmem>>, vector<128x128xf32>
    %c0_2 = arith.constant 0 : index
    %c0_3 = arith.constant 0 : index
    %4 = vector.load %arg3[%c0_2, %c0_3] : memref<128x576xbf16, #tpu.memory_space<vmem>>, vector<128x576xbf16>
    %c0_4 = arith.constant 0 : index
    %c0_5 = arith.constant 0 : index
    %5 = vector.load %arg4[%c0_4, %c0_5] : memref<576x128xbf16, #tpu.memory_space<vmem>>, vector<576x128xbf16>
    %cst = arith.constant dense<0.000000e+00> : vector<128x128xf32>
    %6 = tpu.matmul %4, %5, %cst {dimension_numbers = #tpu.dot_dimension_numbers<[1], [0], [0], [1], [0, 0, 1, 1], [], []>} : vector<128x576xbf16>, vector<576x128xbf16>, vector<128x128xf32> -> vector<128x128xf32>
    %7 = arith.addf %3, %6 : vector<128x128xf32>
    %c0_6 = arith.constant 0 : index
    %c0_7 = arith.constant 0 : index
    %8 = vector.load %arg7[%c0_6, %c0_7] : memref<128x128xf32, #tpu.memory_space<vmem>>, vector<128x128xf32>
    tpu.vector_store %arg7[%c0_6, %c0_7], %7 {strides = array<i32>} : memref<128x128xf32, #tpu.memory_space<vmem>>, vector<128x128xf32>,
    %c0_i32_8 = arith.constant 0 : i32
    %9 = arith.cmpi eq, %arg2, %c0_i32_8 : i32
    %10 = arith.extui %9 : i1 to i32
    %c0_i32_9 = arith.constant 0 : i32
    %11 = arith.cmpi ne, %10, %c0_i32_9 : i32
    scf.if %11 {
      %c0_10 = arith.constant 0 : index
      %c0_11 = arith.constant 0 : index
      %12 = vector.load %arg7[%c0_10, %c0_11] : memref<128x128xf32, #tpu.memory_space<vmem>>, vector<128x128xf32>
      %c0_12 = arith.constant 0 : index
      %c0_13 = arith.constant 0 : index
      %13 = vector.load %arg5[%c0_12, %c0_13] : memref<1x128xf32, #tpu.memory_space<vmem>>, vector<1x128xf32>
      %14 = vector.broadcast %13 : vector<1x128xf32> to vector<128x128xf32>
      %15 = arith.addf %12, %14 : vector<128x128xf32>
      %cst_14 = arith.constant 0.000000e+00 : f32
      %16 = vector.broadcast %cst_14 : f32 to vector<128x128xf32>
      %17 = arith.subf %16, %15 : vector<128x128xf32>
      %18 = math.exp %17 : vector<128x128xf32>
      %cst_15 = arith.constant 1.000000e+00 : f32
      %19 = vector.broadcast %cst_15 : f32 to vector<128x128xf32>
      %20 = arith.addf %19, %18 : vector<128x128xf32>
      %cst_16 = arith.constant 1.000000e+00 : f32
      %21 = vector.broadcast %cst_16 : f32 to vector<128x128xf32>
      %22 = arith.divf %21, %20 : vector<128x128xf32>
      %c0_17 = arith.constant 0 : index
      %c0_18 = arith.constant 0 : index
      %23 = vector.load %arg6[%c0_17, %c0_18] : memref<128x128xf32, #tpu.memory_space<vmem>>, vector<128x128xf32>
      tpu.vector_store %arg6[%c0_17, %c0_18], %22 {strides = array<i32>} : memref<128x128xf32, #tpu.memory_space<vmem>>, vector<128x128xf32>,
    } else {
    }
    return
  }
  func.func @transform_0(%arg0: i32, %arg1: i32, %arg2: i32) -> (i32, i32) {
    %c0_i32 = arith.constant 0 : i32
    return %arg0, %arg2 : i32, i32
  }
  func.func @transform_1(%arg0: i32, %arg1: i32, %arg2: i32) -> (i32, i32) {
    %c0_i32 = arith.constant 0 : i32
    return %arg2, %arg1 : i32, i32
  }
  func.func @transform_2(%arg0: i32, %arg1: i32, %arg2: i32) -> (i32, i32) {
    %c0_i32 = arith.constant 0 : i32
    %c0_i32_0 = arith.constant 0 : i32
    return %c0_i32, %arg1 : i32, i32
  }
  func.func @transform_3(%arg0: i32, %arg1: i32, %arg2: i32) -> (i32, i32) {
    %c0_i32 = arith.constant 0 : i32
    return %arg0, %arg1 : i32, i32
  }
}

</mosaic_0001>

<llo_original>
// kernel: _forward.6
$region0: #{_forward.6}
  #allocation0 [shape = 'u32[]', space=smem, size = 0x4, offset = 0x4, fixed_abs, tag = 'smem constant byte address 0x4 - core index']
  #allocation1 [shape = 'u32[144,128]{1,0:T(1,128)}', space=vmem, size = 0x12000, scoped, tag = 'internal scratch']
  #allocation2 [shape = 'f32[128,128]{1,0:T(8,128)}', space=vmem, size = 0x10000, scoped, tag = 'scratch operand']
  %s0 = inlined_call_operand.vmem [shape: bf16[128,48], index: 0, kind: input, shape index: {}]
  %s1 = inlined_call_operand.vmem [shape: bf16[48,128], index: 1, kind: input, shape index: {}]
  %s2 = inlined_call_operand.vmem [shape: f32[1,128], index: 2, kind: input, shape index: {}]
  %s3 = inlined_call_operand.vmem [shape: bf16[128,128], index: 3, kind: output, shape index: {}]
  %s4 = sld [smem:[#allocation0]]
  $region30: #{_forward.6} parent=0
    _
  %s6 = ssub.s32 1, %s4
  %s7 = scalar_select 0, %s6, %s4
  // Predicated region
  $region2: #{_forward.6} parent=0 // pred_check
    _
  $region3: #{_forward.6} parent=0 // pred_check_branch
    %9 = sbr.rel (0) target = $region5
  $region4: #{_forward.6} parent=0 // pred_region
    _
  $region5: #{_forward.6} parent=0 // pred_fallthru
    _
  // Predicated region
  $region6: #{_forward.6} parent=0 // pred_check
    _
  $region7: #{_forward.6} parent=0 // pred_check_branch
    %11 = sbr.rel (0) target = $region9
  $region8: #{_forward.6} parent=0 // pred_region
    _
  $region9: #{_forward.6} parent=0 // pred_fallthru
    _
  // Predicated region
  $region10: #{_forward.6} parent=0 // pred_check
    _
  $region11: #{_forward.6} parent=0 // pred_check_branch
    %13 = sbr.rel (0) target = $region13
  $region12: #{_forward.6} parent=0 // pred_region
    _
  $region13: #{_forward.6} parent=0 // pred_fallthru
    _
  %p15 = scmp.eq.s32.totalorder 0, 0
  // Predicated region
  $region14: #{_forward.6} parent=0 // pred_check
    %p16 = pneg %p15
  $region15: #{_forward.6} parent=0 // pred_check_branch
    %18 = sbr.rel (%p16) target = $region17
  $region16: #{_forward.6} parent=0 // pred_region
    %19 = vst [vmem:[#allocation2] sm:$0xff] 0.0
    %20 = vst [vmem:[#allocation2 + $0x8] sm:$0xff] 0.0
    %21 = vst [vmem:[#allocation2 + $0x10] sm:$0xff] 0.0
    %22 = vst [vmem:[#allocation2 + $0x18] sm:$0xff] 0.0
    %23 = vst [vmem:[#allocation2 + $0x20] sm:$0xff] 0.0
    %24 = vst [vmem:[#allocation2 + $0x28] sm:$0xff] 0.0
    %25 = vst [vmem:[#allocation2 + $0x30] sm:$0xff] 0.0
    %26 = vst [vmem:[#allocation2 + $0x38] sm:$0xff] 0.0
    %27 = vst [vmem:[#allocation2 + $0x40] sm:$0xff] 0.0
    %28 = vst [vmem:[#allocation2 + $0x48] sm:$0xff] 0.0
    %29 = vst [vmem:[#allocation2 + $0x50] sm:$0xff] 0.0
    %30 = vst [vmem:[#allocation2 + $0x58] sm:$0xff] 0.0
    %31 = vst [vmem:[#allocation2 + $0x60] sm:$0xff] 0.0
    %32 = vst [vmem:[#allocation2 + $0x68] sm:$0xff] 0.0
    %33 = vst [vmem:[#allocation2 + $0x70] sm:$0xff] 0.0
    %34 = vst [vmem:[#allocation2 + $0x78] sm:$0xff] 0.0
  $region17: #{_forward.6} parent=0 // pred_fallthru
    _
  %v35 = vld [vmem:[#allocation2] sm:$0xff]
  %v36 = vld [vmem:[#allocation2 + $0x8] sm:$0xff]
  %v37 = vld [vmem:[#allocation2 + $0x10] sm:$0xff]
  %v38 = vld [vmem:[#allocation2 + $0x18] sm:$0xff]
  %v39 = vld [vmem:[#allocation2 + $0x20] sm:$0xff]
  %v40 = vld [vmem:[#allocation2 + $0x28] sm:$0xff]
  %v41 = vld [vmem:[#allocation2 + $0x30] sm:$0xff]
  %v42 = vld [vmem:[#allocation2 + $0x38] sm:$0xff]
  %v43 = vld [vmem:[#allocation2 + $0x40] sm:$0xff]
  %v44 = vld [vmem:[#allocation2 + $0x48] sm:$0xff]
  %v45 = vld [vmem:[#allocation2 + $0x50] sm:$0xff]
  %v46 = vld [vmem:[#allocation2 + $0x58] sm:$0xff]
  %v47 = vld [vmem:[#allocation2 + $0x60] sm:$0xff]
  %v48 = vld [vmem:[#allocation2 + $0x68] sm:$0xff]
  %v49 = vld [vmem:[#allocation2 + $0x70] sm:$0xff]
  %v50 = vld [vmem:[#allocation2 + $0x78] sm:$0xff]
  %v51 = vld [vmem:[%s0] sm:$0xf]
  %v52 = vld [vmem:[%s0 + $0x4] sm:$0xf]
  %v53 = vld [vmem:[%s0 + $0x8] sm:$0xf]
  %v54 = vld [vmem:[%s0 + $0xc] sm:$0xf]
  %v55 = vld [vmem:[%s0 + $0x10] sm:$0xf]
  %v56 = vld [vmem:[%s0 + $0x14] sm:$0xf]
  %v57 = vld [vmem:[%s0 + $0x18] sm:$0xf]
  %v58 = vld [vmem:[%s0 + $0x1c] sm:$0xf]
  %v59 = vld [vmem:[%s0 + $0x20] sm:$0xf]
  %v60 = vld [vmem:[%s0 + $0x24] sm:$0xf]
  %v61 = vld [vmem:[%s0 + $0x28] sm:$0xf]
  %v62 = vld [vmem:[%s0 + $0x2c] sm:$0xf]
  %v63 = vld [vmem:[%s0 + $0x30] sm:$0xf]
  %v64 = vld [vmem:[%s0 + $0x34] sm:$0xf]
  %v65 = vld [vmem:[%s0 + $0x38] sm:$0xf]
  %v66 = vld [vmem:[%s0 + $0x3c] sm:$0xf]
  %v67 = vld [vmem:[%s1] sm:$0xf]
  %v68 = vld [vmem:[%s1 + $0x4] sm:$0xf]
  %v69 = vld [vmem:[%s1 + $0x8] sm:$0xf]
  %v70 = vld [vmem:[%s1 + $0xc] sm:$0xf]
  %v71 = vld [vmem:[%s1 + $0x10] sm:$0xf]
  %v72 = vld [vmem:[%s1 + $0x14] sm:$0xf]
  %v89 = vunpack.c.l.b16 %v51
  %v90 = vunpack.c.l.b16 %v52
  %v91 = vunpack.c.l.b16 %v53
  %v92 = vunpack.c.l.b16 %v54
  %v93 = vunpack.c.l.b16 %v55
  %v94 = vunpack.c.l.b16 %v56
  %v95 = vunpack.c.l.b16 %v57
  %v96 = vunpack.c.l.b16 %v58
  %v97 = vunpack.c.l.b16 %v59
  %v98 = vunpack.c.l.b16 %v60
  %v99 = vunpack.c.l.b16 %v61
  %v100 = vunpack.c.l.b16 %v62
  %v101 = vunpack.c.l.b16 %v63
  %v102 = vunpack.c.l.b16 %v64
  %v103 = vunpack.c.l.b16 %v65
  %v104 = vunpack.c.l.b16 %v66
  %v105 = vpack.c.b16 %v90, %v89
  %v106 = vpack.c.b16 %v92, %v91
  %v107 = vpack.c.b16 %v94, %v93
  %v108 = vpack.c.b16 %v96, %v95
  %v109 = vpack.c.b16 %v98, %v97
  %v110 = vpack.c.b16 %v100, %v99
  %v111 = vpack.c.b16 %v102, %v101
  %v112 = vpack.c.b16 %v104, %v103
  %v119 = vunpack.c.l.b16 %v67
  %v120 = vunpack.c.l.b16 %v68
  %v121 = vunpack.c.l.b16 %v69
  %v122 = vunpack.c.l.b16 %v70
  %v123 = vunpack.c.l.b16 %v71
  %v124 = vunpack.c.l.b16 %v72
  %v125 = vpack.c.b16 %v120, %v119
  %v126 = vpack.c.b16 %v122, %v121
  %v127 = vpack.c.b16 %v124, %v123
  %vm131 = vcmask 392192
  %v133 = vsel %vm131, %v105, 0
  %v136 = vsel %vm131, %v106, 0
  %v139 = vsel %vm131, %v107, 0
  %v142 = vsel %vm131, %v108, 0
  %v145 = vsel %vm131, %v109, 0
  %v148 = vsel %vm131, %v110, 0
  %v151 = vsel %vm131, %v111, 0
  %v154 = vsel %vm131, %v112, 0
  %156 = vmatprep.subr.bf16.mxu0 0
  %157 = vmatpush1.bf16.msra.mxu0 0
  %158 = vmatprep.subr.bf16.mxu0 0
  %159 = vmatpush1.bf16.msra.mxu0 0
  %160 = vmatprep.subr.bf16.mxu0 0
  %161 = vmatpush1.bf16.msra.mxu0 0
  %162 = vmatprep.subr.bf16.mxu0 0
  %163 = vmatpush1.bf16.msra.mxu0 0
  %164 = vmatprep.subr.bf16.mxu0 0
  %165 = vmatpush1.bf16.msra.mxu0 0
  %166 = vmatprep.subr.bf16.mxu0 0
  %167 = vmatpush1.bf16.msra.mxu0 %v127
  %168 = vmatprep.subr.bf16.mxu0 0
  %169 = vmatpush1.bf16.msra.mxu0 %v126
  %170 = vmatprep.subr.bf16.mxu0 0
  %171 = vmatpush1.bf16.msra.mxu0 %v125
  %172 = vmatprep.subr.bf16.mxu0 0
  %173 = vmatpush2.bf16.msra.mxu0 0
  %174 = vmatprep.subr.bf16.mxu0 0
  %175 = vmatpush2.bf16.msra.mxu0 0
  %176 = vmatprep.subr.bf16.mxu0 0
  %177 = vmatpush2.bf16.msra.mxu0 0
  %178 = vmatprep.subr.bf16.mxu0 0
  %179 = vmatpush2.bf16.msra.mxu0 0
  %180 = vmatprep.subr.bf16.mxu0 0
  %181 = vmatpush2.bf16.msra.mxu0 0
  %182 = vmatprep.subr.bf16.mxu0 0
  %183 = vmatpush2.bf16.msra.mxu0 0
  %184 = vmatprep.subr.bf16.mxu0 0
  %185 = vmatpush2.bf16.msra.mxu0 0
  %186 = vmatprep.subr.bf16.mxu0 0
  %187 = vmatpush2.bf16.msra.mxu0 0
  %188 = vmatprep.mubr.bf16.mxu0 0
  %189 = vmatmul.mubr.bf16.gmra.mxu0 %v133
  %v190 = vpop.f32.mrf.mxu0
  %v191 = vadd.f32 0.0, %v190
  %v192 = vpop.f32.mrf.mxu0
  %v193 = vpop.f32.mrf.mxu0
  %v194 = vadd.f32 0.0, %v193
  %v195 = vpop.f32.mrf.mxu0
  %196 = vmatprep.mubr.bf16.mxu0 0
  %197 = vmatmul.mubr.bf16.gmra.mxu0 %v136
  %v198 = vpop.f32.mrf.mxu0
  %v199 = vadd.f32 0.0, %v198
  %v200 = vpop.f32.mrf.mxu0
  %v201 = vpop.f32.mrf.mxu0
  %v202 = vadd.f32 0.0, %v201
  %v203 = vpop.f32.mrf.mxu0
  %204 = vmatprep.mubr.bf16.mxu0 0
  %205 = vmatmul.mubr.bf16.gmra.mxu0 %v139
  %v206 = vpop.f32.mrf.mxu0
  %v207 = vadd.f32 0.0, %v206
  %v208 = vpop.f32.mrf.mxu0
  %v209 = vpop.f32.mrf.mxu0
  %v210 = vadd.f32 0.0, %v209
  %v211 = vpop.f32.mrf.mxu0
  %212 = vmatprep.mubr.bf16.mxu0 0
  %213 = vmatmul.mubr.bf16.gmra.mxu0 %v142
  %v214 = vpop.f32.mrf.mxu0
  %v215 = vadd.f32 0.0, %v214
  %v216 = vpop.f32.mrf.mxu0
  %v217 = vpop.f32.mrf.mxu0
  %v218 = vadd.f32 0.0, %v217
  %v219 = vpop.f32.mrf.mxu0
  %220 = vmatprep.mubr.bf16.mxu0 0
  %221 = vmatmul.mubr.bf16.gmra.mxu0 %v145
  %v222 = vpop.f32.mrf.mxu0
  %v223 = vadd.f32 0.0, %v222
  %v224 = vpop.f32.mrf.mxu0
  %v225 = vpop.f32.mrf.mxu0
  %v226 = vadd.f32 0.0, %v225
  %v227 = vpop.f32.mrf.mxu0
  %228 = vmatprep.mubr.bf16.mxu0 0
  %229 = vmatmul.mubr.bf16.gmra.mxu0 %v148
  %v230 = vpop.f32.mrf.mxu0
  %v231 = vadd.f32 0.0, %v230
  %v232 = vpop.f32.mrf.mxu0
  %v233 = vpop.f32.mrf.mxu0
  %v234 = vadd.f32 0.0, %v233
  %v235 = vpop.f32.mrf.mxu0
  %236 = vmatprep.mubr.bf16.mxu0 0
  %237 = vmatmul.mubr.bf16.gmra.mxu0 %v151
  %v238 = vpop.f32.mrf.mxu0
  %v239 = vadd.f32 0.0, %v238
  %v240 = vpop.f32.mrf.mxu0
  %v241 = vpop.f32.mrf.mxu0
  %v242 = vadd.f32 0.0, %v241
  %v243 = vpop.f32.mrf.mxu0
  %244 = vmatprep.mubr.bf16.mxu0 0
  %245 = vmatmul.mubr.bf16.gmra.mxu0 %v154
  %v246 = vpop.f32.mrf.mxu0
  %v247 = vadd.f32 0.0, %v246
  %v248 = vpop.f32.mrf.mxu0
  %v249 = vpop.f32.mrf.mxu0
  %v250 = vadd.f32 0.0, %v249
  %v251 = vpop.f32.mrf.mxu0
  %252 = vdwg.mxu0
  %v253 = vadd.f32 %v35, %v191
  %v254 = vadd.f32 %v36, %v194
  %v255 = vadd.f32 %v37, %v199
  %v256 = vadd.f32 %v38, %v202
  %v257 = vadd.f32 %v39, %v207
  %v258 = vadd.f32 %v40, %v210
  %v259 = vadd.f32 %v41, %v215
  %v260 = vadd.f32 %v42, %v218
  %v261 = vadd.f32 %v43, %v223
  %v262 = vadd.f32 %v44, %v226
  %v263 = vadd.f32 %v45, %v231
  %v264 = vadd.f32 %v46, %v234
  %v265 = vadd.f32 %v47, %v239
  %v266 = vadd.f32 %v48, %v242
  %v267 = vadd.f32 %v49, %v247
  %v268 = vadd.f32 %v50, %v250
  %269 = vst [vmem:[#allocation2] sm:$0xff] %v253
  %270 = vst [vmem:[#allocation2 + $0x8] sm:$0xff] %v254
  %271 = vst [vmem:[#allocation2 + $0x10] sm:$0xff] %v255
  %272 = vst [vmem:[#allocation2 + $0x18] sm:$0xff] %v256
  %273 = vst [vmem:[#allocation2 + $0x20] sm:$0xff] %v257
  %274 = vst [vmem:[#allocation2 + $0x28] sm:$0xff] %v258
  %275 = vst [vmem:[#allocation2 + $0x30] sm:$0xff] %v259
  %276 = vst [vmem:[#allocation2 + $0x38] sm:$0xff] %v260
  %277 = vst [vmem:[#allocation2 + $0x40] sm:$0xff] %v261
  %278 = vst [vmem:[#allocation2 + $0x48] sm:$0xff] %v262
  %279 = vst [vmem:[#allocation2 + $0x50] sm:$0xff] %v263
  %280 = vst [vmem:[#allocation2 + $0x58] sm:$0xff] %v264
  %281 = vst [vmem:[#allocation2 + $0x60] sm:$0xff] %v265
  %282 = vst [vmem:[#allocation2 + $0x68] sm:$0xff] %v266
  %283 = vst [vmem:[#allocation2 + $0x70] sm:$0xff] %v267
  %284 = vst [vmem:[#allocation2 + $0x78] sm:$0xff] %v268
  // Predicated region
  $region18: #{_forward.6} parent=0 // pred_check
    %p285 = pneg %p15
  $region19: #{_forward.6} parent=0 // pred_check_branch
    %287 = sbr.rel (%p285) target = $region21
  $region20: #{_forward.6} parent=0 // pred_region
    %v288 = vld [vmem:[#allocation2] sm:$0xff]
    %v289 = vld [vmem:[#allocation2 + $0x8] sm:$0xff]
    %v290 = vld [vmem:[#allocation2 + $0x10] sm:$0xff]
    %v291 = vld [vmem:[#allocation2 + $0x18] sm:$0xff]
    %v292 = vld [vmem:[#allocation2 + $0x20] sm:$0xff]
    %v293 = vld [vmem:[#allocation2 + $0x28] sm:$0xff]
    %v294 = vld [vmem:[#allocation2 + $0x30] sm:$0xff]
    %v295 = vld [vmem:[#allocation2 + $0x38] sm:$0xff]
    %v296 = vld [vmem:[#allocation2 + $0x40] sm:$0xff]
    %v297 = vld [vmem:[#allocation2 + $0x48] sm:$0xff]
    %v298 = vld [vmem:[#allocation2 + $0x50] sm:$0xff]
    %v299 = vld [vmem:[#allocation2 + $0x58] sm:$0xff]
    %v300 = vld [vmem:[#allocation2 + $0x60] sm:$0xff]
    %v301 = vld [vmem:[#allocation2 + $0x68] sm:$0xff]
    %v302 = vld [vmem:[#allocation2 + $0x70] sm:$0xff]
    %v303 = vld [vmem:[#allocation2 + $0x78] sm:$0xff]
    %v304 = vld [vmem:[%s2] sm:$0x1]
    %v306 = vlaneseq
    %v307 = vshrl.u32 %v306, 7
    %v308 = vsub.s32 0, %v307
    %v309 = vrot.slane %v304, %v308
    %v311 = vadd.f32 %v288, %v309
    %v312 = vadd.f32 %v289, %v309
    %v313 = vadd.f32 %v290, %v309
    %v314 = vadd.f32 %v291, %v309
    %v315 = vadd.f32 %v292, %v309
    %v316 = vadd.f32 %v293, %v309
    %v317 = vadd.f32 %v294, %v309
    %v318 = vadd.f32 %v295, %v309
    %v319 = vadd.f32 %v296, %v309
    %v320 = vadd.f32 %v297, %v309
    %v321 = vadd.f32 %v298, %v309
    %v322 = vadd.f32 %v299, %v309
    %v323 = vadd.f32 %v300, %v309
    %v324 = vadd.f32 %v301, %v309
    %v325 = vadd.f32 %v302, %v309
    %v326 = vadd.f32 %v303, %v309
    %v327 = vmax.f32 %v311, 0.0
    %v328 = vmax.f32 %v312, 0.0
    %v329 = vmax.f32 %v313, 0.0
    %v330 = vmax.f32 %v314, 0.0
    %v331 = vmax.f32 %v315, 0.0
    %v332 = vmax.f32 %v316, 0.0
    %v333 = vmax.f32 %v317, 0.0
    %v334 = vmax.f32 %v318, 0.0
    %v335 = vmax.f32 %v319, 0.0
    %v336 = vmax.f32 %v320, 0.0
    %v337 = vmax.f32 %v321, 0.0
    %v338 = vmax.f32 %v322, 0.0
    %v339 = vmax.f32 %v323, 0.0
    %v340 = vmax.f32 %v324, 0.0
    %v341 = vmax.f32 %v325, 0.0
    %v342 = vmax.f32 %v326, 0.0
    %v343 = vpack.c.bf16 %v328, %v327
    %v344 = vpack.c.bf16 %v330, %v329
    %v345 = vpack.c.bf16 %v332, %v331
    %v346 = vpack.c.bf16 %v334, %v333
    %v347 = vpack.c.bf16 %v336, %v335
    %v348 = vpack.c.bf16 %v338, %v337
    %v349 = vpack.c.bf16 %v340, %v339
    %v350 = vpack.c.bf16 %v342, %v341
    %v359 = vunpack.c.l.b16 %v343
    %v360 = vunpack.c.h.b16 %v343
    %v361 = vunpack.c.l.b16 %v344
    %v362 = vunpack.c.h.b16 %v344
    %v363 = vunpack.c.l.b16 %v345
    %v364 = vunpack.c.h.b16 %v345
    %v365 = vunpack.c.l.b16 %v346
    %v366 = vunpack.c.h.b16 %v346
    %v367 = vunpack.c.l.b16 %v347
    %v368 = vunpack.c.h.b16 %v347
    %v369 = vunpack.c.l.b16 %v348
    %v370 = vunpack.c.h.b16 %v348
    %v371 = vunpack.c.l.b16 %v349
    %v372 = vunpack.c.h.b16 %v349
    %v373 = vunpack.c.l.b16 %v350
    %v374 = vunpack.c.h.b16 %v350
    %v375 = vpack.c.b16 %v359, %v359
    %v376 = vpack.c.b16 %v360, %v360
    %v377 = vpack.c.b16 %v361, %v361
    %v378 = vpack.c.b16 %v362, %v362
    %v379 = vpack.c.b16 %v363, %v363
    %v380 = vpack.c.b16 %v364, %v364
    %v381 = vpack.c.b16 %v365, %v365
    %v382 = vpack.c.b16 %v366, %v366
    %v383 = vpack.c.b16 %v367, %v367
    %v384 = vpack.c.b16 %v368, %v368
    %v385 = vpack.c.b16 %v369, %v369
    %v386 = vpack.c.b16 %v370, %v370
    %v387 = vpack.c.b16 %v371, %v371
    %v388 = vpack.c.b16 %v372, %v372
    %v389 = vpack.c.b16 %v373, %v373
    %v390 = vpack.c.b16 %v374, %v374
    %407 = vst [vmem:[%s3] sm:$0xf] %v375
    %408 = vst [vmem:[%s3 + $0x4] sm:$0xf] %v376
    %409 = vst [vmem:[%s3 + $0x8] sm:$0xf] %v377
    %410 = vst [vmem:[%s3 + $0xc] sm:$0xf] %v378
    %411 = vst [vmem:[%s3 + $0x10] sm:$0xf] %v379
    %412 = vst [vmem:[%s3 + $0x14] sm:$0xf] %v380
    %413 = vst [vmem:[%s3 + $0x18] sm:$0xf] %v381
    %414 = vst [vmem:[%s3 + $0x1c] sm:$0xf] %v382
    %415 = vst [vmem:[%s3 + $0x20] sm:$0xf] %v383
    %416 = vst [vmem:[%s3 + $0x24] sm:$0xf] %v384
    %417 = vst [vmem:[%s3 + $0x28] sm:$0xf] %v385
    %418 = vst [vmem:[%s3 + $0x2c] sm:$0xf] %v386
    %419 = vst [vmem:[%s3 + $0x30] sm:$0xf] %v387
    %420 = vst [vmem:[%s3 + $0x34] sm:$0xf] %v388
    %421 = vst [vmem:[%s3 + $0x38] sm:$0xf] %v389
    %422 = vst [vmem:[%s3 + $0x3c] sm:$0xf] %v390
  $region21: #{_forward.6} parent=0 // pred_fallthru
    _
  // Predicated region
  $region22: #{_forward.6} parent=0 // pred_check
    _
  $region23: #{_forward.6} parent=0 // pred_check_branch
    %424 = sbr.rel (0) target = $region25
  $region24: #{_forward.6} parent=0 // pred_region
    _
  $region25: #{_forward.6} parent=0 // pred_fallthru
    _
  // Predicated region
  $region26: #{_forward.6} parent=0 // pred_check
    _
  $region27: #{_forward.6} parent=0 // pred_check_branch
    %426 = sbr.rel (0) target = $region29
  $region28: #{_forward.6} parent=0 // pred_region
    _
  $region29: #{_forward.6} parent=0 // pred_fallthru
    _

// kernel: _forward.9
$region0: #{_forward.9}
  #allocation0 [shape = 'u32[]', space=smem, size = 0x4, offset = 0x4, fixed_abs, tag = 'smem constant byte address 0x4 - core index']
  #allocation1 [shape = 'u32[144,128]{1,0:T(1,128)}', space=vmem, size = 0x12000, scoped, tag = 'internal scratch']
  #allocation2 [shape = 'f32[16,2048]{1,0:T(8,128)}', space=vmem, size = 0x20000, scoped, tag = 'scratch operand']
  %s0 = inlined_call_operand.vmem [shape: bf16[16,32], index: 0, kind: input, shape index: {}]
  %s1 = inlined_call_operand.vmem [shape: bf16[32,2048], index: 1, kind: input, shape index: {}]
  %s2 = inlined_call_operand.vmem [shape: f32[1,2048], index: 2, kind: input, shape index: {}]
  %s3 = inlined_call_operand.vmem [shape: bf16[16,2048], index: 3, kind: output, shape index: {}]
  %s4 = sld [smem:[#allocation0]]
  $region30: #{_forward.9} parent=0
    _
  %s6 = ssub.s32 1, %s4
  %s7 = scalar_select 0, %s6, %s4
  // Predicated region
  $region2: #{_forward.9} parent=0 // pred_check
    _
  $region3: #{_forward.9} parent=0 // pred_check_branch
    %9 = sbr.rel (0) target = $region5
  $region4: #{_forward.9} parent=0 // pred_region
    _
  $region5: #{_forward.9} parent=0 // pred_fallthru
    _
  // Predicated region
  $region6: #{_forward.9} parent=0 // pred_check
    _
  $region7: #{_forward.9} parent=0 // pred_check_branch
    %11 = sbr.rel (0) target = $region9
  $region8: #{_forward.9} parent=0 // pred_region
    _
  $region9: #{_forward.9} parent=0 // pred_fallthru
    _
  // Predicated region
  $region10: #{_forward.9} parent=0 // pred_check
    _
  $region11: #{_forward.9} parent=0 // pred_check_branch
    %13 = sbr.rel (0) target = $region13
  $region12: #{_forward.9} parent=0 // pred_region
    _
  $region13: #{_forward.9} parent=0 // pred_fallthru
    _
  %p15 = scmp.eq.s32.totalorder 0, 0
  // Predicated region
  $region14: #{_forward.9} parent=0 // pred_check
    %p16 = pneg %p15
  $region15: #{_forward.9} parent=0 // pred_check_branch
    %18 = sbr.rel (%p16) target = $region17
  $region16: #{_forward.9} parent=0 // pred_region
    %19 = vst [vmem:[#allocation2] sm:$0xff] 0.0
    %20 = vst [vmem:[#allocation2 + $0x8] sm:$0xff] 0.0
    %21 = vst [vmem:[#allocation2 + $0x10] sm:$0xff] 0.0
    %22 = vst [vmem:[#allocation2 + $0x18] sm:$0xff] 0.0
    %23 = vst [vmem:[#allocation2 + $0x20] sm:$0xff] 0.0
    %24 = vst [vmem:[#allocation2 + $0x28] sm:$0xff] 0.0
    %25 = vst [vmem:[#allocation2 + $0x30] sm:$0xff] 0.0
    %26 = vst [vmem:[#allocation2 + $0x38] sm:$0xff] 0.0
    %27 = vst [vmem:[#allocation2 + $0x40] sm:$0xff] 0.0
    %28 = vst [vmem:[#allocation2 + $0x48] sm:$0xff] 0.0
    %29 = vst [vmem:[#allocation2 + $0x50] sm:$0xff] 0.0
    %30 = vst [vmem:[#allocation2 + $0x58] sm:$0xff] 0.0
    %31 = vst [vmem:[#allocation2 + $0x60] sm:$0xff] 0.0
    %32 = vst [vmem:[#allocation2 + $0x68] sm:$0xff] 0.0
    %33 = vst [vmem:[#allocation2 + $0x70] sm:$0xff] 0.0
    %34 = vst [vmem:[#allocation2 + $0x78] sm:$0xff] 0.0
    %35 = vst [vmem:[#allocation2 + $0x80] sm:$0xff] 0.0
    %36 = vst [vmem:[#allocation2 + $0x88] sm:$0xff] 0.0
    %37 = vst [vmem:[#allocation2 + $0x90] sm:$0xff] 0.0
    %38 = vst [vmem:[#allocation2 + $0x98] sm:$0xff] 0.0
    %39 = vst [vmem:[#allocation2 + $0xa0] sm:$0xff] 0.0
    %40 = vst [vmem:[#allocation2 + $0xa8] sm:$0xff] 0.0
    %41 = vst [vmem:[#allocation2 + $0xb0] sm:$0xff] 0.0
    %42 = vst [vmem:[#allocation2 + $0xb8] sm:$0xff] 0.0
    %43 = vst [vmem:[#allocation2 + $0xc0] sm:$0xff] 0.0
    %44 = vst [vmem:[#allocation2 + $0xc8] sm:$0xff] 0.0
    %45 = vst [vmem:[#allocation2 + $0xd0] sm:$0xff] 0.0
    %46 = vst [vmem:[#allocation2 + $0xd8] sm:$0xff] 0.0
    %47 = vst [vmem:[#allocation2 + $0xe0] sm:$0xff] 0.0
    %48 = vst [vmem:[#allocation2 + $0xe8] sm:$0xff] 0.0
    %49 = vst [vmem:[#allocation2 + $0xf0] sm:$0xff] 0.0
    %50 = vst [vmem:[#allocation2 + $0xf8] sm:$0xff] 0.0
  $region17: #{_forward.9} parent=0 // pred_fallthru
    _
  %v51 = vld [vmem:[#allocation2] sm:$0xff]
  %v52 = vld [vmem:[#allocation2 + $0x8] sm:$0xff]
  %v53 = vld [vmem:[#allocation2 + $0x10] sm:$0xff]
  %v54 = vld [vmem:[#allocation2 + $0x18] sm:$0xff]
  %v55 = vld [vmem:[#allocation2 + $0x20] sm:$0xff]
  %v56 = vld [vmem:[#allocation2 + $0x28] sm:$0xff]
  %v57 = vld [vmem:[#allocation2 + $0x30] sm:$0xff]
  %v58 = vld [vmem:[#allocation2 + $0x38] sm:$0xff]
  %v59 = vld [vmem:[#allocation2 + $0x40] sm:$0xff]
  %v60 = vld [vmem:[#allocation2 + $0x48] sm:$0xff]
  %v61 = vld [vmem:[#allocation2 + $0x50] sm:$0xff]
  %v62 = vld [vmem:[#allocation2 + $0x58] sm:$0xff]
  %v63 = vld [vmem:[#allocation2 + $0x60] sm:$0xff]
  %v64 = vld [vmem:[#allocation2 + $0x68] sm:$0xff]
  %v65 = vld [vmem:[#allocation2 + $0x70] sm:$0xff]
  %v66 = vld [vmem:[#allocation2 + $0x78] sm:$0xff]
  %v67 = vld [vmem:[#allocation2 + $0x80] sm:$0xff]
  %v68 = vld [vmem:[#allocation2 + $0x88] sm:$0xff]
  %v69 = vld [vmem:[#allocation2 + $0x90] sm:$0xff]
  %v70 = vld [vmem:[#allocation2 + $0x98] sm:$0xff]
  %v71 = vld [vmem:[#allocation2 + $0xa0] sm:$0xff]
  %v72 = vld [vmem:[#allocation2 + $0xa8] sm:$0xff]
  %v73 = vld [vmem:[#allocation2 + $0xb0] sm:$0xff]
  %v74 = vld [vmem:[#allocation2 + $0xb8] sm:$0xff]
  %v75 = vld [vmem:[#allocation2 + $0xc0] sm:$0xff]
  %v76 = vld [vmem:[#allocation2 + $0xc8] sm:$0xff]
  %v77 = vld [vmem:[#allocation2 + $0xd0] sm:$0xff]
  %v78 = vld [vmem:[#allocation2 + $0xd8] sm:$0xff]
  %v79 = vld [vmem:[#allocation2 + $0xe0] sm:$0xff]
  %v80 = vld [vmem:[#allocation2 + $0xe8] sm:$0xff]
  %v81 = vld [vmem:[#allocation2 + $0xf0] sm:$0xff]
  %v82 = vld [vmem:[#allocation2 + $0xf8] sm:$0xff]
  %v83 = vld [vmem:[%s0] sm:$0xf]
  %v84 = vld [vmem:[%s0 + $0x4] sm:$0xf]
  %v85 = vld [vmem:[%s1] sm:$0xff]
  %v86 = vld [vmem:[%s1 + $0x8] sm:$0xff]
  %v87 = vld [vmem:[%s1 + $0x10] sm:$0xff]
  %v88 = vld [vmem:[%s1 + $0x18] sm:$0xff]
  %v89 = vld [vmem:[%s1 + $0x20] sm:$0xff]
  %v90 = vld [vmem:[%s1 + $0x28] sm:$0xff]
  %v91 = vld [vmem:[%s1 + $0x30] sm:$0xff]
  %v92 = vld [vmem:[%s1 + $0x38] sm:$0xff]
  %v93 = vld [vmem:[%s1 + $0x40] sm:$0xff]
  %v94 = vld [vmem:[%s1 + $0x48] sm:$0xff]
  %v95 = vld [vmem:[%s1 + $0x50] sm:$0xff]
  %v96 = vld [vmem:[%s1 + $0x58] sm:$0xff]
  %v97 = vld [vmem:[%s1 + $0x60] sm:$0xff]
  %v98 = vld [vmem:[%s1 + $0x68] sm:$0xff]
  %v99 = vld [vmem:[%s1 + $0x70] sm:$0xff]
  %v100 = vld [vmem:[%s1 + $0x78] sm:$0xff]
  %v101 = vld [vmem:[%s1 + $0x80] sm:$0xff]
  %v102 = vld [vmem:[%s1 + $0x88] sm:$0xff]
  %v103 = vld [vmem:[%s1 + $0x90] sm:$0xff]
  %v104 = vld [vmem:[%s1 + $0x98] sm:$0xff]
  %v105 = vld [vmem:[%s1 + $0xa0] sm:$0xff]
  %v106 = vld [vmem:[%s1 + $0xa8] sm:$0xff]
  %v107 = vld [vmem:[%s1 + $0xb0] sm:$0xff]
  %v108 = vld [vmem:[%s1 + $0xb8] sm:$0xff]
  %v109 = vld [vmem:[%s1 + $0xc0] sm:$0xff]
  %v110 = vld [vmem:[%s1 + $0xc8] sm:$0xff]
  %v111 = vld [vmem:[%s1 + $0xd0] sm:$0xff]
  %v112 = vld [vmem:[%s1 + $0xd8] sm:$0xff]
  %v113 = vld [vmem:[%s1 + $0xe0] sm:$0xff]
  %v114 = vld [vmem:[%s1 + $0xe8] sm:$0xff]
  %v115 = vld [vmem:[%s1 + $0xf0] sm:$0xff]
  %v116 = vld [vmem:[%s1 + $0xf8] sm:$0xff]
  %v119 = vunpack.c.l.b16 %v83
  %v120 = vunpack.c.l.b16 %v84
  %v121 = vpack.c.b16 %v120, %v119
  %v154 = vunpack.c.l.b16 %v85
  %v155 = vunpack.c.h.b16 %v85
  %v156 = vunpack.c.l.b16 %v86
  %v157 = vunpack.c.h.b16 %v86
  %v158 = vunpack.c.l.b16 %v87
  %v159 = vunpack.c.h.b16 %v87
  %v160 = vunpack.c.l.b16 %v88
  %v161 = vunpack.c.h.b16 %v88
  %v162 = vunpack.c.l.b16 %v89
  %v163 = vunpack.c.h.b16 %v89
  %v164 = vunpack.c.l.b16 %v90
  %v165 = vunpack.c.h.b16 %v90
  %v166 = vunpack.c.l.b16 %v91
  %v167 = vunpack.c.h.b16 %v91
  %v168 = vunpack.c.l.b16 %v92
  %v169 = vunpack.c.h.b16 %v92
  %v170 = vunpack.c.l.b16 %v93
  %v171 = vunpack.c.h.b16 %v93
  %v172 = vunpack.c.l.b16 %v94
  %v173 = vunpack.c.h.b16 %v94
  %v174 = vunpack.c.l.b16 %v95
  %v175 = vunpack.c.h.b16 %v95
  %v176 = vunpack.c.l.b16 %v96
  %v177 = vunpack.c.h.b16 %v96
  %v178 = vunpack.c.l.b16 %v97
  %v179 = vunpack.c.h.b16 %v97
  %v180 = vunpack.c.l.b16 %v98
  %v181 = vunpack.c.h.b16 %v98
  %v182 = vunpack.c.l.b16 %v99
  %v183 = vunpack.c.h.b16 %v99
  %v184 = vunpack.c.l.b16 %v100
  %v185 = vunpack.c.h.b16 %v100
  %v186 = vunpack.c.l.b16 %v101
  %v187 = vunpack.c.h.b16 %v101
  %v188 = vunpack.c.l.b16 %v102
  %v189 = vunpack.c.h.b16 %v102
  %v190 = vunpack.c.l.b16 %v103
  %v191 = vunpack.c.h.b16 %v103
  %v192 = vunpack.c.l.b16 %v104
  %v193 = vunpack.c.h.b16 %v104
  %v194 = vunpack.c.l.b16 %v105
  %v195 = vunpack.c.h.b16 %v105
  %v196 = vunpack.c.l.b16 %v106
  %v197 = vunpack.c.h.b16 %v106
  %v198 = vunpack.c.l.b16 %v107
  %v199 = vunpack.c.h.b16 %v107
  %v200 = vunpack.c.l.b16 %v108
  %v201 = vunpack.c.h.b16 %v108
  %v202 = vunpack.c.l.b16 %v109
  %v203 = vunpack.c.h.b16 %v109
  %v204 = vunpack.c.l.b16 %v110
  %v205 = vunpack.c.h.b16 %v110
  %v206 = vunpack.c.l.b16 %v111
  %v207 = vunpack.c.h.b16 %v111
  %v208 = vunpack.c.l.b16 %v112
  %v209 = vunpack.c.h.b16 %v112
  %v210 = vunpack.c.l.b16 %v113
  %v211 = vunpack.c.h.b16 %v113
  %v212 = vunpack.c.l.b16 %v114
  %v213 = vunpack.c.h.b16 %v114
  %v214 = vunpack.c.l.b16 %v115
  %v215 = vunpack.c.h.b16 %v115
  %v216 = vunpack.c.l.b16 %v116
  %v217 = vunpack.c.h.b16 %v116
  %v218 = vpack.c.b16 %v170, %v154
  %v219 = vpack.c.b16 %v171, %v155
  %v220 = vpack.c.b16 %v172, %v156
  %v221 = vpack.c.b16 %v173, %v157
  %v222 = vpack.c.b16 %v174, %v158
  %v223 = vpack.c.b16 %v175, %v159
  %v224 = vpack.c.b16 %v176, %v160
  %v225 = vpack.c.b16 %v177, %v161
  %v226 = vpack.c.b16 %v178, %v162
  %v227 = vpack.c.b16 %v179, %v163
  %v228 = vpack.c.b16 %v180, %v164
  %v229 = vpack.c.b16 %v181, %v165
  %v230 = vpack.c.b16 %v182, %v166
  %v231 = vpack.c.b16 %v183, %v167
  %v232 = vpack.c.b16 %v184, %v168
  %v233 = vpack.c.b16 %v185, %v169
  %v234 = vpack.c.b16 %v202, %v186
  %v235 = vpack.c.b16 %v203, %v187
  %v236 = vpack.c.b16 %v204, %v188
  %v237 = vpack.c.b16 %v205, %v189
  %v238 = vpack.c.b16 %v206, %v190
  %v239 = vpack.c.b16 %v207, %v191
  %v240 = vpack.c.b16 %v208, %v192
  %v241 = vpack.c.b16 %v209, %v193
  %v242 = vpack.c.b16 %v210, %v194
  %v243 = vpack.c.b16 %v211, %v195
  %v244 = vpack.c.b16 %v212, %v196
  %v245 = vpack.c.b16 %v213, %v197
  %v246 = vpack.c.b16 %v214, %v198
  %v247 = vpack.c.b16 %v215, %v199
  %v248 = vpack.c.b16 %v216, %v200
  %v249 = vpack.c.b16 %v217, %v201
  %vm282 = vcmask 261120
  %v284 = vsel %vm282, %v121, 0
  %286 = vmatprep.subr.bf16.mxu0 0
  %287 = vmatpush1.bf16.msra.mxu0 0
  %288 = vmatprep.subr.bf16.mxu0 0
  %289 = vmatpush1.bf16.msra.mxu0 0
  %290 = vmatprep.subr.bf16.mxu0 0
  %291 = vmatpush1.bf16.msra.mxu0 0
  %292 = vmatprep.subr.bf16.mxu0 0
  %293 = vmatpush1.bf16.msra.mxu0 0
  %294 = vmatprep.subr.bf16.mxu0 0
  %295 = vmatpush1.bf16.msra.mxu0 0
  %296 = vmatprep.subr.bf16.mxu0 0
  %297 = vmatpush1.bf16.msra.mxu0 0
  %298 = vmatprep.subr.bf16.mxu0 %v235
  %299 = vmatpush1.bf16.msra.mxu0 %v234
  %300 = vmatprep.subr.bf16.mxu0 %v219
  %301 = vmatpush1.bf16.msra.mxu0 %v218
  %302 = vmatprep.subr.bf16.mxu0 0
  %303 = vmatpush2.bf16.msra.mxu0 0
  %304 = vmatprep.subr.bf16.mxu0 0
  %305 = vmatpush2.bf16.msra.mxu0 0
  %306 = vmatprep.subr.bf16.mxu0 0
  %307 = vmatpush2.bf16.msra.mxu0 0
  %308 = vmatprep.subr.bf16.mxu0 0
  %309 = vmatpush2.bf16.msra.mxu0 0
  %310 = vmatprep.subr.bf16.mxu0 0
  %311 = vmatpush2.bf16.msra.mxu0 0
  %312 = vmatprep.subr.bf16.mxu0 0
  %313 = vmatpush2.bf16.msra.mxu0 0
  %314 = vmatprep.subr.bf16.mxu0 0
  %315 = vmatpush2.bf16.msra.mxu0 0
  %316 = vmatprep.subr.bf16.mxu0 0
  %317 = vmatpush2.bf16.msra.mxu0 0
  %318 = vmatprep.mubr.bf16.mxu0 0
  %319 = vmatmul.mubr.bf16.gmra.mxu0 %v284
  %v320 = vpop.f32.mrf.mxu0
  %v321 = vadd.f32 0.0, %v320
  %v322 = vpop.f32.mrf.mxu0
  %v323 = vadd.f32 0.0, %v322
  %v324 = vpop.f32.mrf.mxu0
  %v325 = vadd.f32 0.0, %v324
  %v326 = vpop.f32.mrf.mxu0
  %v327 = vadd.f32 0.0, %v326
  %328 = vdwg.mxu0
  %329 = vmatprep.subr.bf16.mxu0 0
  %330 = vmatpush1.bf16.msra.mxu0 0
  %331 = vmatprep.subr.bf16.mxu0 0
  %332 = vmatpush1.bf16.msra.mxu0 0
  %333 = vmatprep.subr.bf16.mxu0 0
  %334 = vmatpush1.bf16.msra.mxu0 0
  %335 = vmatprep.subr.bf16.mxu0 0
  %336 = vmatpush1.bf16.msra.mxu0 0
  %337 = vmatprep.subr.bf16.mxu0 0
  %338 = vmatpush1.bf16.msra.mxu0 0
  %339 = vmatprep.subr.bf16.mxu0 0
  %340 = vmatpush1.bf16.msra.mxu0 0
  %341 = vmatprep.subr.bf16.mxu0 %v237
  %342 = vmatpush1.bf16.msra.mxu0 %v236
  %343 = vmatprep.subr.bf16.mxu0 %v221
  %344 = vmatpush1.bf16.msra.mxu0 %v220
  %345 = vmatprep.subr.bf16.mxu0 0
  %346 = vmatpush2.bf16.msra.mxu0 0
  %347 = vmatprep.subr.bf16.mxu0 0
  %348 = vmatpush2.bf16.msra.mxu0 0
  %349 = vmatprep.subr.bf16.mxu0 0
  %350 = vmatpush2.bf16.msra.mxu0 0
  %351 = vmatprep.subr.bf16.mxu0 0
  %352 = vmatpush2.bf16.msra.mxu0 0
  %353 = vmatprep.subr.bf16.mxu0 0
  %354 = vmatpush2.bf16.msra.mxu0 0
  %355 = vmatprep.subr.bf16.mxu0 0
  %356 = vmatpush2.bf16.msra.mxu0 0
  %357 = vmatprep.subr.bf16.mxu0 0
  %358 = vmatpush2.bf16.msra.mxu0 0
  %359 = vmatprep.subr.bf16.mxu0 0
  %360 = vmatpush2.bf16.msra.mxu0 0
  %361 = vmatprep.mubr.bf16.mxu0 0
  %362 = vmatmul.mubr.bf16.gmra.mxu0 %v284
  %v363 = vpop.f32.mrf.mxu0
  %v364 = vadd.f32 0.0, %v363
  %v365 = vpop.f32.mrf.mxu0
  %v366 = vadd.f32 0.0, %v365
  %v367 = vpop.f32.mrf.mxu0
  %v368 = vadd.f32 0.0, %v367
  %v369 = vpop.f32.mrf.mxu0
  %v370 = vadd.f32 0.0, %v369
  %371 = vdwg.mxu0
  %372 = vmatprep.subr.bf16.mxu0 0
  %373 = vmatpush1.bf16.msra.mxu0 0
  %374 = vmatprep.subr.bf16.mxu0 0
  %375 = vmatpush1.bf16.msra.mxu0 0
  %376 = vmatprep.subr.bf16.mxu0 0
  %377 = vmatpush1.bf16.msra.mxu0 0
  %378 = vmatprep.subr.bf16.mxu0 0
  %379 = vmatpush1.bf16.msra.mxu0 0
  %380 = vmatprep.subr.bf16.mxu0 0
  %381 = vmatpush1.bf16.msra.mxu0 0
  %382 = vmatprep.subr.bf16.mxu0 0
  %383 = vmatpush1.bf16.msra.mxu0 0
  %384 = vmatprep.subr.bf16.mxu0 %v239
  %385 = vmatpush1.bf16.msra.mxu0 %v238
  %386 = vmatprep.subr.bf16.mxu0 %v223
  %387 = vmatpush1.bf16.msra.mxu0 %v222
  %388 = vmatprep.subr.bf16.mxu0 0
  %389 = vmatpush2.bf16.msra.mxu0 0
  %390 = vmatprep.subr.bf16.mxu0 0
  %391 = vmatpush2.bf16.msra.mxu0 0
  %392 = vmatprep.subr.bf16.mxu0 0
  %393 = vmatpush2.bf16.msra.mxu0 0
  %394 = vmatprep.subr.bf16.mxu0 0
  %395 = vmatpush2.bf16.msra.mxu0 0
  %396 = vmatprep.subr.bf16.mxu0 0
  %397 = vmatpush2.bf16.msra.mxu0 0
  %398 = vmatprep.subr.bf16.mxu0 0
  %399 = vmatpush2.bf16.msra.mxu0 0
  %400 = vmatprep.subr.bf16.mxu0 0
  %401 = vmatpush2.bf16.msra.mxu0 0
  %402 = vmatprep.subr.bf16.mxu0 0
  %403 = vmatpush2.bf16.msra.mxu0 0
  %404 = vmatprep.mubr.bf16.mxu0 0
  %405 = vmatmul.mubr.bf16.gmra.mxu0 %v284
  %v406 = vpop.f32.mrf.mxu0
  %v407 = vadd.f32 0.0, %v406
  %v408 = vpop.f32.mrf.mxu0
  %v409 = vadd.f32 0.0, %v408
  %v410 = vpop.f32.mrf.mxu0
  %v411 = vadd.f32 0.0, %v410
  %v412 = vpop.f32.mrf.mxu0
  %v413 = vadd.f32 0.0, %v412
  %414 = vdwg.mxu0
  %415 = vmatprep.subr.bf16.mxu0 0
  %416 = vmatpush1.bf16.msra.mxu0 0
  %417 = vmatprep.subr.bf16.mxu0 0
  %418 = vmatpush1.bf16.msra.mxu0 0
  %419 = vmatprep.subr.bf16.mxu0 0
  %420 = vmatpush1.bf16.msra.mxu0 0
  %421 = vmatprep.subr.bf16.mxu0 0
  %422 = vmatpush1.bf16.msra.mxu0 0
  %423 = vmatprep.subr.bf16.mxu0 0
  %424 = vmatpush1.bf16.msra.mxu0 0
  %425 = vmatprep.subr.bf16.mxu0 0
  %426 = vmatpush1.bf16.msra.mxu0 0
  %427 = vmatprep.subr.bf16.mxu0 %v241
  %428 = vmatpush1.bf16.msra.mxu0 %v240
  %429 = vmatprep.subr.bf16.mxu0 %v225
  %430 = vmatpush1.bf16.msra.mxu0 %v224
  %431 = vmatprep.subr.bf16.mxu0 0
  %432 = vmatpush2.bf16.msra.mxu0 0
  %433 = vmatprep.subr.bf16.mxu0 0
  %434 = vmatpush2.bf16.msra.mxu0 0
  %435 = vmatprep.subr.bf16.mxu0 0
  %436 = vmatpush2.bf16.msra.mxu0 0
  %437 = vmatprep.subr.bf16.mxu0 0
  %438 = vmatpush2.bf16.msra.mxu0 0
  %439 = vmatprep.subr.bf16.mxu0 0
  %440 = vmatpush2.bf16.msra.mxu0 0
  %441 = vmatprep.subr.bf16.mxu0 0
  %442 = vmatpush2.bf16.msra.mxu0 0
  %443 = vmatprep.subr.bf16.mxu0 0
  %444 = vmatpush2.bf16.msra.mxu0 0
  %445 = vmatprep.subr.bf16.mxu0 0
  %446 = vmatpush2.bf16.msra.mxu0 0
  %447 = vmatprep.mubr.bf16.mxu0 0
  %448 = vmatmul.mubr.bf16.gmra.mxu0 %v284
  %v449 = vpop.f32.mrf.mxu0
  %v450 = vadd.f32 0.0, %v449
  %v451 = vpop.f32.mrf.mxu0
  %v452 = vadd.f32 0.0, %v451
  %v453 = vpop.f32.mrf.mxu0
  %v454 = vadd.f32 0.0, %v453
  %v455 = vpop.f32.mrf.mxu0
  %v456 = vadd.f32 0.0, %v455
  %457 = vdwg.mxu0
  %458 = vmatprep.subr.bf16.mxu0 0
  %459 = vmatpush1.bf16.msra.mxu0 0
  %460 = vmatprep.subr.bf16.mxu0 0
  %461 = vmatpush1.bf16.msra.mxu0 0
  %462 = vmatprep.subr.bf16.mxu0 0
  %463 = vmatpush1.bf16.msra.mxu0 0
  %464 = vmatprep.subr.bf16.mxu0 0
  %465 = vmatpush1.bf16.msra.mxu0 0
  %466 = vmatprep.subr.bf16.mxu0 0
  %467 = vmatpush1.bf16.msra.mxu0 0
  %468 = vmatprep.subr.bf16.mxu0 0
  %469 = vmatpush1.bf16.msra.mxu0 0
  %470 = vmatprep.subr.bf16.mxu0 %v243
  %471 = vmatpush1.bf16.msra.mxu0 %v242
  %472 = vmatprep.subr.bf16.mxu0 %v227
  %473 = vmatpush1.bf16.msra.mxu0 %v226
  %474 = vmatprep.subr.bf16.mxu0 0
  %475 = vmatpush2.bf16.msra.mxu0 0
  %476 = vmatprep.subr.bf16.mxu0 0
  %477 = vmatpush2.bf16.msra.mxu0 0
  %478 = vmatprep.subr.bf16.mxu0 0
  %479 = vmatpush2.bf16.msra.mxu0 0
  %480 = vmatprep.subr.bf16.mxu0 0
  %481 = vmatpush2.bf16.msra.mxu0 0
  %482 = vmatprep.subr.bf16.mxu0 0
  %483 = vmatpush2.bf16.msra.mxu0 0
  %484 = vmatprep.subr.bf16.mxu0 0
  %485 = vmatpush2.bf16.msra.mxu0 0
  %486 = vmatprep.subr.bf16.mxu0 0
  %487 = vmatpush2.bf16.msra.mxu0 0
  %488 = vmatprep.subr.bf16.mxu0 0
  %489 = vmatpush2.bf16.msra.mxu0 0
  %490 = vmatprep.mubr.bf16.mxu0 0
  %491 = vmatmul.mubr.bf16.gmra.mxu0 %v284
  %v492 = vpop.f32.mrf.mxu0
  %v493 = vadd.f32 0.0, %v492
  %v494 = vpop.f32.mrf.mxu0
  %v495 = vadd.f32 0.0, %v494
  %v496 = vpop.f32.mrf.mxu0
  %v497 = vadd.f32 0.0, %v496
  %v498 = vpop.f32.mrf.mxu0
  %v499 = vadd.f32 0.0, %v498
  %500 = vdwg.mxu0
  %501 = vmatprep.subr.bf16.mxu0 0
  %502 = vmatpush1.bf16.msra.mxu0 0
  %503 = vmatprep.subr.bf16.mxu0 0
  %504 = vmatpush1.bf16.msra.mxu0 0
  %505 = vmatprep.subr.bf16.mxu0 0
  %506 = vmatpush1.bf16.msra.mxu0 0
  %507 = vmatprep.subr.bf16.mxu0 0
  %508 = vmatpush1.bf16.msra.mxu0 0
  %509 = vmatprep.subr.bf16.mxu0 0
  %510 = vmatpush1.bf16.msra.mxu0 0
  %511 = vmatprep.subr.bf16.mxu0 0
  %512 = vmatpush1.bf16.msra.mxu0 0
  %513 = vmatprep.subr.bf16.mxu0 %v245
  %514 = vmatpush1.bf16.msra.mxu0 %v244
  %515 = vmatprep.subr.bf16.mxu0 %v229
  %516 = vmatpush1.bf16.msra.mxu0 %v228
  %517 = vmatprep.subr.bf16.mxu0 0
  %518 = vmatpush2.bf16.msra.mxu0 0
  %519 = vmatprep.subr.bf16.mxu0 0
  %520 = vmatpush2.bf16.msra.mxu0 0
  %521 = vmatprep.subr.bf16.mxu0 0
  %522 = vmatpush2.bf16.msra.mxu0 0
  %523 = vmatprep.subr.bf16.mxu0 0
  %524 = vmatpush2.bf16.msra.mxu0 0
  %525 = vmatprep.subr.bf16.mxu0 0
  %526 = vmatpush2.bf16.msra.mxu0 0
  %527 = vmatprep.subr.bf16.mxu0 0
  %528 = vmatpush2.bf16.msra.mxu0 0
  %529 = vmatprep.subr.bf16.mxu0 0
  %530 = vmatpush2.bf16.msra.mxu0 0
  %531 = vmatprep.subr.bf16.mxu0 0
  %532 = vmatpush2.bf16.msra.mxu0 0
  %533 = vmatprep.mubr.bf16.mxu0 0
  %534 = vmatmul.mubr.bf16.gmra.mxu0 %v284
  %v535 = vpop.f32.mrf.mxu0
  %v536 = vadd.f32 0.0, %v535
  %v537 = vpop.f32.mrf.mxu0
  %v538 = vadd.f32 0.0, %v537
  %v539 = vpop.f32.mrf.mxu0
  %v540 = vadd.f32 0.0, %v539
  %v541 = vpop.f32.mrf.mxu0
  %v542 = vadd.f32 0.0, %v541
  %543 = vdwg.mxu0
  %544 = vmatprep.subr.bf16.mxu0 0
  %545 = vmatpush1.bf16.msra.mxu0 0
  %546 = vmatprep.subr.bf16.mxu0 0
  %547 = vmatpush1.bf16.msra.mxu0 0
  %548 = vmatprep.subr.bf16.mxu0 0
  %549 = vmatpush1.bf16.msra.mxu0 0
  %550 = vmatprep.subr.bf16.mxu0 0
  %551 = vmatpush1.bf16.msra.mxu0 0
  %552 = vmatprep.subr.bf16.mxu0 0
  %553 = vmatpush1.bf16.msra.mxu0 0
  %554 = vmatprep.subr.bf16.mxu0 0
  %555 = vmatpush1.bf16.msra.mxu0 0
  %556 = vmatprep.subr.bf16.mxu0 %v247
  %557 = vmatpush1.bf16.msra.mxu0 %v246
  %558 = vmatprep.subr.bf16.mxu0 %v231
  %559 = vmatpush1.bf16.msra.mxu0 %v230
  %560 = vmatprep.subr.bf16.mxu0 0
  %561 = vmatpush2.bf16.msra.mxu0 0
  %562 = vmatprep.subr.bf16.mxu0 0
  %563 = vmatpush2.bf16.msra.mxu0 0
  %564 = vmatprep.subr.bf16.mxu0 0
  %565 = vmatpush2.bf16.msra.mxu0 0
  %566 = vmatprep.subr.bf16.mxu0 0
  %567 = vmatpush2.bf16.msra.mxu0 0
  %568 = vmatprep.subr.bf16.mxu0 0
  %569 = vmatpush2.bf16.msra.mxu0 0
  %570 = vmatprep.subr.bf16.mxu0 0
  %571 = vmatpush2.bf16.msra.mxu0 0
  %572 = vmatprep.subr.bf16.mxu0 0
  %573 = vmatpush2.bf16.msra.mxu0 0
  %574 = vmatprep.subr.bf16.mxu0 0
  %575 = vmatpush2.bf16.msra.mxu0 0
  %576 = vmatprep.mubr.bf16.mxu0 0
  %577 = vmatmul.mubr.bf16.gmra.mxu0 %v284
  %v578 = vpop.f32.mrf.mxu0
  %v579 = vadd.f32 0.0, %v578
  %v580 = vpop.f32.mrf.mxu0
  %v581 = vadd.f32 0.0, %v580
  %v582 = vpop.f32.mrf.mxu0
  %v583 = vadd.f32 0.0, %v582
  %v584 = vpop.f32.mrf.mxu0
  %v585 = vadd.f32 0.0, %v584
  %586 = vdwg.mxu0
  %587 = vmatprep.subr.bf16.mxu0 0
  %588 = vmatpush1.bf16.msra.mxu0 0
  %589 = vmatprep.subr.bf16.mxu0 0
  %590 = vmatpush1.bf16.msra.mxu0 0
  %591 = vmatprep.subr.bf16.mxu0 0
  %592 = vmatpush1.bf16.msra.mxu0 0
  %593 = vmatprep.subr.bf16.mxu0 0
  %594 = vmatpush1.bf16.msra.mxu0 0
  %595 = vmatprep.subr.bf16.mxu0 0
  %596 = vmatpush1.bf16.msra.mxu0 0
  %597 = vmatprep.subr.bf16.mxu0 0
  %598 = vmatpush1.bf16.msra.mxu0 0
  %599 = vmatprep.subr.bf16.mxu0 %v249
  %600 = vmatpush1.bf16.msra.mxu0 %v248
  %601 = vmatprep.subr.bf16.mxu0 %v233
  %602 = vmatpush1.bf16.msra.mxu0 %v232
  %603 = vmatprep.subr.bf16.mxu0 0
  %604 = vmatpush2.bf16.msra.mxu0 0
  %605 = vmatprep.subr.bf16.mxu0 0
  %606 = vmatpush2.bf16.msra.mxu0 0
  %607 = vmatprep.subr.bf16.mxu0 0
  %608 = vmatpush2.bf16.msra.mxu0 0
  %609 = vmatprep.subr.bf16.mxu0 0
  %610 = vmatpush2.bf16.msra.mxu0 0
  %611 = vmatprep.subr.bf16.mxu0 0
  %612 = vmatpush2.bf16.msra.mxu0 0
  %613 = vmatprep.subr.bf16.mxu0 0
  %614 = vmatpush2.bf16.msra.mxu0 0
  %615 = vmatprep.subr.bf16.mxu0 0
  %616 = vmatpush2.bf16.msra.mxu0 0
  %617 = vmatprep.subr.bf16.mxu0 0
  %618 = vmatpush2.bf16.msra.mxu0 0
  %619 = vmatprep.mubr.bf16.mxu0 0
  %620 = vmatmul.mubr.bf16.gmra.mxu0 %v284
  %v621 = vpop.f32.mrf.mxu0
  %v622 = vadd.f32 0.0, %v621
  %v623 = vpop.f32.mrf.mxu0
  %v624 = vadd.f32 0.0, %v623
  %v625 = vpop.f32.mrf.mxu0
  %v626 = vadd.f32 0.0, %v625
  %v627 = vpop.f32.mrf.mxu0
  %v628 = vadd.f32 0.0, %v627
  %629 = vdwg.mxu0
  %v630 = vadd.f32 %v51, %v321
  %v631 = vadd.f32 %v52, %v323
  %v632 = vadd.f32 %v53, %v364
  %v633 = vadd.f32 %v54, %v366
  %v634 = vadd.f32 %v55, %v407
  %v635 = vadd.f32 %v56, %v409
  %v636 = vadd.f32 %v57, %v450
  %v637 = vadd.f32 %v58, %v452
  %v638 = vadd.f32 %v59, %v493
  %v639 = vadd.f32 %v60, %v495
  %v640 = vadd.f32 %v61, %v536
  %v641 = vadd.f32 %v62, %v538
  %v642 = vadd.f32 %v63, %v579
  %v643 = vadd.f32 %v64, %v581
  %v644 = vadd.f32 %v65, %v622
  %v645 = vadd.f32 %v66, %v624
  %v646 = vadd.f32 %v67, %v325
  %v647 = vadd.f32 %v68, %v327
  %v648 = vadd.f32 %v69, %v368
  %v649 = vadd.f32 %v70, %v370
  %v650 = vadd.f32 %v71, %v411
  %v651 = vadd.f32 %v72, %v413
  %v652 = vadd.f32 %v73, %v454
  %v653 = vadd.f32 %v74, %v456
  %v654 = vadd.f32 %v75, %v497
  %v655 = vadd.f32 %v76, %v499
  %v656 = vadd.f32 %v77, %v540
  %v657 = vadd.f32 %v78, %v542
  %v658 = vadd.f32 %v79, %v583
  %v659 = vadd.f32 %v80, %v585
  %v660 = vadd.f32 %v81, %v626
  %v661 = vadd.f32 %v82, %v628
  %662 = vst [vmem:[#allocation2] sm:$0xff] %v630
  %663 = vst [vmem:[#allocation2 + $0x8] sm:$0xff] %v631
  %664 = vst [vmem:[#allocation2 + $0x10] sm:$0xff] %v632
  %665 = vst [vmem:[#allocation2 + $0x18] sm:$0xff] %v633
  %666 = vst [vmem:[#allocation2 + $0x20] sm:$0xff] %v634
  %667 = vst [vmem:[#allocation2 + $0x28] sm:$0xff] %v635
  %668 = vst [vmem:[#allocation2 + $0x30] sm:$0xff] %v636
  %669 = vst [vmem:[#allocation2 + $0x38] sm:$0xff] %v637
  %670 = vst [vmem:[#allocation2 + $0x40] sm:$0xff] %v638
  %671 = vst [vmem:[#allocation2 + $0x48] sm:$0xff] %v639
  %672 = vst [vmem:[#allocation2 + $0x50] sm:$0xff] %v640
  %673 = vst [vmem:[#allocation2 + $0x58] sm:$0xff] %v641
  %674 = vst [vmem:[#allocation2 + $0x60] sm:$0xff] %v642
  %675 = vst [vmem:[#allocation2 + $0x68] sm:$0xff] %v643
  %676 = vst [vmem:[#allocation2 + $0x70] sm:$0xff] %v644
  %677 = vst [vmem:[#allocation2 + $0x78] sm:$0xff] %v645
  %678 = vst [vmem:[#allocation2 + $0x80] sm:$0xff] %v646
  %679 = vst [vmem:[#allocation2 + $0x88] sm:$0xff] %v647
  %680 = vst [vmem:[#allocation2 + $0x90] sm:$0xff] %v648
  %681 = vst [vmem:[#allocation2 + $0x98] sm:$0xff] %v649
  %682 = vst [vmem:[#allocation2 + $0xa0] sm:$0xff] %v650
  %683 = vst [vmem:[#allocation2 + $0xa8] sm:$0xff] %v651
  %684 = vst [vmem:[#allocation2 + $0xb0] sm:$0xff] %v652
  %685 = vst [vmem:[#allocation2 + $0xb8] sm:$0xff] %v653
  %686 = vst [vmem:[#allocation2 + $0xc0] sm:$0xff] %v654
  %687 = vst [vmem:[#allocation2 + $0xc8] sm:$0xff] %v655
  %688 = vst [vmem:[#allocation2 + $0xd0] sm:$0xff] %v656
  %689 = vst [vmem:[#allocation2 + $0xd8] sm:$0xff] %v657
  %690 = vst [vmem:[#allocation2 + $0xe0] sm:$0xff] %v658
  %691 = vst [vmem:[#allocation2 + $0xe8] sm:$0xff] %v659
  %692 = vst [vmem:[#allocation2 + $0xf0] sm:$0xff] %v660
  %693 = vst [vmem:[#allocation2 + $0xf8] sm:$0xff] %v661
  // Predicated region
  $region18: #{_forward.9} parent=0 // pred_check
    %p694 = pneg %p15
  $region19: #{_forward.9} parent=0 // pred_check_branch
    %696 = sbr.rel (%p694) target = $region21
  $region20: #{_forward.9} parent=0 // pred_region
    %v697 = vld [vmem:[#allocation2] sm:$0xff]
    %v698 = vld [vmem:[#allocation2 + $0x8] sm:$0xff]
    %v699 = vld [vmem:[#allocation2 + $0x10] sm:$0xff]
    %v700 = vld [vmem:[#allocation2 + $0x18] sm:$0xff]
    %v701 = vld [vmem:[#allocation2 + $0x20] sm:$0xff]
    %v702 = vld [vmem:[#allocation2 + $0x28] sm:$0xff]
    %v703 = vld [vmem:[#allocation2 + $0x30] sm:$0xff]
    %v704 = vld [vmem:[#allocation2 + $0x38] sm:$0xff]
    %v705 = vld [vmem:[#allocation2 + $0x40] sm:$0xff]
    %v706 = vld [vmem:[#allocation2 + $0x48] sm:$0xff]
    %v707 = vld [vmem:[#allocation2 + $0x50] sm:$0xff]
    %v708 = vld [vmem:[#allocation2 + $0x58] sm:$0xff]
    %v709 = vld [vmem:[#allocation2 + $0x60] sm:$0xff]
    %v710 = vld [vmem:[#allocation2 + $0x68] sm:$0xff]
    %v711 = vld [vmem:[#allocation2 + $0x70] sm:$0xff]
    %v712 = vld [vmem:[#allocation2 + $0x78] sm:$0xff]
    %v713 = vld [vmem:[#allocation2 + $0x80] sm:$0xff]
    %v714 = vld [vmem:[#allocation2 + $0x88] sm:$0xff]
    %v715 = vld [vmem:[#allocation2 + $0x90] sm:$0xff]
    %v716 = vld [vmem:[#allocation2 + $0x98] sm:$0xff]
    %v717 = vld [vmem:[#allocation2 + $0xa0] sm:$0xff]
    %v718 = vld [vmem:[#allocation2 + $0xa8] sm:$0xff]
    %v719 = vld [vmem:[#allocation2 + $0xb0] sm:$0xff]
    %v720 = vld [vmem:[#allocation2 + $0xb8] sm:$0xff]
    %v721 = vld [vmem:[#allocation2 + $0xc0] sm:$0xff]
    %v722 = vld [vmem:[#allocation2 + $0xc8] sm:$0xff]
    %v723 = vld [vmem:[#allocation2 + $0xd0] sm:$0xff]
    %v724 = vld [vmem:[#allocation2 + $0xd8] sm:$0xff]
    %v725 = vld [vmem:[#allocation2 + $0xe0] sm:$0xff]
    %v726 = vld [vmem:[#allocation2 + $0xe8] sm:$0xff]
    %v727 = vld [vmem:[#allocation2 + $0xf0] sm:$0xff]
    %v728 = vld [vmem:[#allocation2 + $0xf8] sm:$0xff]
    %v729 = vld [vmem:[%s2] sm:$0xff]
    %v730 = vld [vmem:[%s2 + $0x8] sm:$0xff]
    %v733 = vlaneseq
    %v734 = vshrl.u32 %v733, 7
    %v735 = vsub.s32 0, %v734
    %v736 = vrot.slane %v729, %v735
    %v737 = vlaneseq
    %v738 = vshrl.u32 %v737, 7
    %v739 = vsub.s32 1, %v738
    %v740 = vrot.slane %v729, %v739
    %v741 = vlaneseq
    %v742 = vshrl.u32 %v741, 7
    %v743 = vsub.s32 2, %v742
    %v744 = vrot.slane %v729, %v743
    %v745 = vlaneseq
    %v746 = vshrl.u32 %v745, 7
    %v747 = vsub.s32 3, %v746
    %v748 = vrot.slane %v729, %v747
    %v749 = vlaneseq
    %v750 = vshrl.u32 %v749, 7
    %v751 = vsub.s32 4, %v750
    %v752 = vrot.slane %v729, %v751
    %v753 = vlaneseq
    %v754 = vshrl.u32 %v753, 7
    %v755 = vsub.s32 5, %v754
    %v756 = vrot.slane %v729, %v755
    %v757 = vlaneseq
    %v758 = vshrl.u32 %v757, 7
    %v759 = vsub.s32 6, %v758
    %v760 = vrot.slane %v729, %v759
    %v761 = vlaneseq
    %v762 = vshrl.u32 %v761, 7
    %v763 = vsub.s32 7, %v762
    %v764 = vrot.slane %v729, %v763
    %v765 = vlaneseq
    %v766 = vshrl.u32 %v765, 7
    %v767 = vsub.s32 0, %v766
    %v768 = vrot.slane %v730, %v767
    %v769 = vlaneseq
    %v770 = vshrl.u32 %v769, 7
    %v771 = vsub.s32 1, %v770
    %v772 = vrot.slane %v730, %v771
    %v773 = vlaneseq
    %v774 = vshrl.u32 %v773, 7
    %v775 = vsub.s32 2, %v774
    %v776 = vrot.slane %v730, %v775
    %v777 = vlaneseq
    %v778 = vshrl.u32 %v777, 7
    %v779 = vsub.s32 3, %v778
    %v780 = vrot.slane %v730, %v779
    %v781 = vlaneseq
    %v782 = vshrl.u32 %v781, 7
    %v783 = vsub.s32 4, %v782
    %v784 = vrot.slane %v730, %v783
    %v785 = vlaneseq
    %v786 = vshrl.u32 %v785, 7
    %v787 = vsub.s32 5, %v786
    %v788 = vrot.slane %v730, %v787
    %v789 = vlaneseq
    %v790 = vshrl.u32 %v789, 7
    %v791 = vsub.s32 6, %v790
    %v792 = vrot.slane %v730, %v791
    %v793 = vlaneseq
    %v794 = vshrl.u32 %v793, 7
    %v795 = vsub.s32 7, %v794
    %v796 = vrot.slane %v730, %v795
    %v813 = vadd.f32 %v697, %v736
    %v814 = vadd.f32 %v698, %v740
    %v815 = vadd.f32 %v699, %v744
    %v816 = vadd.f32 %v700, %v748
    %v817 = vadd.f32 %v701, %v752
    %v818 = vadd.f32 %v702, %v756
    %v819 = vadd.f32 %v703, %v760
    %v820 = vadd.f32 %v704, %v764
    %v821 = vadd.f32 %v705, %v768
    %v822 = vadd.f32 %v706, %v772
    %v823 = vadd.f32 %v707, %v776
    %v824 = vadd.f32 %v708, %v780
    %v825 = vadd.f32 %v709, %v784
    %v826 = vadd.f32 %v710, %v788
    %v827 = vadd.f32 %v711, %v792
    %v828 = vadd.f32 %v712, %v796
    %v829 = vadd.f32 %v713, %v736
    %v830 = vadd.f32 %v714, %v740
    %v831 = vadd.f32 %v715, %v744
    %v832 = vadd.f32 %v716, %v748
    %v833 = vadd.f32 %v717, %v752
    %v834 = vadd.f32 %v718, %v756
    %v835 = vadd.f32 %v719, %v760
    %v836 = vadd.f32 %v720, %v764
    %v837 = vadd.f32 %v721, %v768
    %v838 = vadd.f32 %v722, %v772
    %v839 = vadd.f32 %v723, %v776
    %v840 = vadd.f32 %v724, %v780
    %v841 = vadd.f32 %v725, %v784
    %v842 = vadd.f32 %v726, %v788
    %v843 = vadd.f32 %v727, %v792
    %v844 = vadd.f32 %v728, %v796
    %v845 = vmax.f32 %v813, 0.0
    %v846 = vmax.f32 %v814, 0.0
    %v847 = vmax.f32 %v815, 0.0
    %v848 = vmax.f32 %v816, 0.0
    %v849 = vmax.f32 %v817, 0.0
    %v850 = vmax.f32 %v818, 0.0
    %v851 = vmax.f32 %v819, 0.0
    %v852 = vmax.f32 %v820, 0.0
    %v853 = vmax.f32 %v821, 0.0
    %v854 = vmax.f32 %v822, 0.0
    %v855 = vmax.f32 %v823, 0.0
    %v856 = vmax.f32 %v824, 0.0
    %v857 = vmax.f32 %v825, 0.0
    %v858 = vmax.f32 %v826, 0.0
    %v859 = vmax.f32 %v827, 0.0
    %v860 = vmax.f32 %v828, 0.0
    %v861 = vmax.f32 %v829, 0.0
    %v862 = vmax.f32 %v830, 0.0
    %v863 = vmax.f32 %v831, 0.0
    %v864 = vmax.f32 %v832, 0.0
    %v865 = vmax.f32 %v833, 0.0
    %v866 = vmax.f32 %v834, 0.0
    %v867 = vmax.f32 %v835, 0.0
    %v868 = vmax.f32 %v836, 0.0
    %v869 = vmax.f32 %v837, 0.0
    %v870 = vmax.f32 %v838, 0.0
    %v871 = vmax.f32 %v839, 0.0
    %v872 = vmax.f32 %v840, 0.0
    %v873 = vmax.f32 %v841, 0.0
    %v874 = vmax.f32 %v842, 0.0
    %v875 = vmax.f32 %v843, 0.0
    %v876 = vmax.f32 %v844, 0.0
    %v877 = vpack.c.bf16 %v861, %v845
    %v878 = vpack.c.bf16 %v862, %v846
    %v879 = vpack.c.bf16 %v863, %v847
    %v880 = vpack.c.bf16 %v864, %v848
    %v881 = vpack.c.bf16 %v865, %v849
    %v882 = vpack.c.bf16 %v866, %v850
    %v883 = vpack.c.bf16 %v867, %v851
    %v884 = vpack.c.bf16 %v868, %v852
    %v885 = vpack.c.bf16 %v869, %v853
    %v886 = vpack.c.bf16 %v870, %v854
    %v887 = vpack.c.bf16 %v871, %v855
    %v888 = vpack.c.bf16 %v872, %v856
    %v889 = vpack.c.bf16 %v873, %v857
    %v890 = vpack.c.bf16 %v874, %v858
    %v891 = vpack.c.bf16 %v875, %v859
    %v892 = vpack.c.bf16 %v876, %v860
    %v909 = vunpack.c.l.b16 %v877
    %v910 = vunpack.c.l.b16 %v878
    %v911 = vunpack.c.l.b16 %v879
    %v912 = vunpack.c.l.b16 %v880
    %v913 = vunpack.c.l.b16 %v881
    %v914 = vunpack.c.l.b16 %v882
    %v915 = vunpack.c.l.b16 %v883
    %v916 = vunpack.c.l.b16 %v884
    %v917 = vunpack.c.l.b16 %v885
    %v918 = vunpack.c.l.b16 %v886
    %v919 = vunpack.c.l.b16 %v887
    %v920 = vunpack.c.l.b16 %v888
    %v921 = vunpack.c.l.b16 %v889
    %v922 = vunpack.c.l.b16 %v890
    %v923 = vunpack.c.l.b16 %v891
    %v924 = vunpack.c.l.b16 %v892
    %v925 = vunpack.c.h.b16 %v877
    %v926 = vunpack.c.h.b16 %v878
    %v927 = vunpack.c.h.b16 %v879
    %v928 = vunpack.c.h.b16 %v880
    %v929 = vunpack.c.h.b16 %v881
    %v930 = vunpack.c.h.b16 %v882
    %v931 = vunpack.c.h.b16 %v883
    %v932 = vunpack.c.h.b16 %v884
    %v933 = vunpack.c.h.b16 %v885
    %v934 = vunpack.c.h.b16 %v886
    %v935 = vunpack.c.h.b16 %v887
    %v936 = vunpack.c.h.b16 %v888
    %v937 = vunpack.c.h.b16 %v889
    %v938 = vunpack.c.h.b16 %v890
    %v939 = vunpack.c.h.b16 %v891
    %v940 = vunpack.c.h.b16 %v892
    %v941 = vpack.c.b16 %v910, %v909
    %v942 = vpack.c.b16 %v912, %v911
    %v943 = vpack.c.b16 %v914, %v913
    %v944 = vpack.c.b16 %v916, %v915
    %v945 = vpack.c.b16 %v918, %v917
    %v946 = vpack.c.b16 %v920, %v919
    %v947 = vpack.c.b16 %v922, %v921
    %v948 = vpack.c.b16 %v924, %v923
    %v949 = vpack.c.b16 %v926, %v925
    %v950 = vpack.c.b16 %v928, %v927
    %v951 = vpack.c.b16 %v930, %v929
    %v952 = vpack.c.b16 %v932, %v931
    %v953 = vpack.c.b16 %v934, %v933
    %v954 = vpack.c.b16 %v936, %v935
    %v955 = vpack.c.b16 %v938, %v937
    %v956 = vpack.c.b16 %v940, %v939
    %973 = vst [vmem:[%s3] sm:$0xff] %v941
    %974 = vst [vmem:[%s3 + $0x8] sm:$0xff] %v942
    %975 = vst [vmem:[%s3 + $0x10] sm:$0xff] %v943
    %976 = vst [vmem:[%s3 + $0x18] sm:$0xff] %v944
    %977 = vst [vmem:[%s3 + $0x20] sm:$0xff] %v945
    %978 = vst [vmem:[%s3 + $0x28] sm:$0xff] %v946
    %979 = vst [vmem:[%s3 + $0x30] sm:$0xff] %v947
    %980 = vst [vmem:[%s3 + $0x38] sm:$0xff] %v948
    %981 = vst [vmem:[%s3 + $0x40] sm:$0xff] %v949
    %982 = vst [vmem:[%s3 + $0x48] sm:$0xff] %v950
    %983 = vst [vmem:[%s3 + $0x50] sm:$0xff] %v951
    %984 = vst [vmem:[%s3 + $0x58] sm:$0xff] %v952
    %985 = vst [vmem:[%s3 + $0x60] sm:$0xff] %v953
    %986 = vst [vmem:[%s3 + $0x68] sm:$0xff] %v954
    %987 = vst [vmem:[%s3 + $0x70] sm:$0xff] %v955
    %988 = vst [vmem:[%s3 + $0x78] sm:$0xff] %v956
  $region21: #{_forward.9} parent=0 // pred_fallthru
    _
  // Predicated region
  $region22: #{_forward.9} parent=0 // pred_check
    _
  $region23: #{_forward.9} parent=0 // pred_check_branch
    %990 = sbr.rel (0) target = $region25
  $region24: #{_forward.9} parent=0 // pred_region
    _
  $region25: #{_forward.9} parent=0 // pred_fallthru
    _
  // Predicated region
  $region26: #{_forward.9} parent=0 // pred_check
    _
  $region27: #{_forward.9} parent=0 // pred_check_branch
    %992 = sbr.rel (0) target = $region29
  $region28: #{_forward.9} parent=0 // pred_region
    _
  $region29: #{_forward.9} parent=0 // pred_fallthru
    _

// kernel: _forward.7
$region0: #{_forward.7}
  #allocation0 [shape = 'u32[]', space=smem, size = 0x4, offset = 0x4, fixed_abs, tag = 'smem constant byte address 0x4 - core index']
  #allocation1 [shape = 'u32[144,128]{1,0:T(1,128)}', space=vmem, size = 0x12000, scoped, tag = 'internal scratch']
  #allocation2 [shape = 'f32[32,128]{1,0:T(8,128)}', space=vmem, size = 0x4000, scoped, tag = 'scratch operand']
  %s0 = inlined_call_operand.vmem [shape: bf16[32,1024], index: 0, kind: input, shape index: {}]
  %s1 = inlined_call_operand.vmem [shape: bf16[1024,128], index: 1, kind: input, shape index: {}]
  %s2 = inlined_call_operand.vmem [shape: f32[1,128], index: 2, kind: input, shape index: {}]
  %s3 = inlined_call_operand.vmem [shape: bf16[32,128], index: 3, kind: output, shape index: {}]
  %s4 = sld [smem:[#allocation0]]
  $region30: #{_forward.7} parent=0
    _
  %s6 = ssub.s32 1, %s4
  %s7 = scalar_select 0, %s6, %s4
  // Predicated region
  $region2: #{_forward.7} parent=0 // pred_check
    _
  $region3: #{_forward.7} parent=0 // pred_check_branch
    %9 = sbr.rel (0) target = $region5
  $region4: #{_forward.7} parent=0 // pred_region
    _
  $region5: #{_forward.7} parent=0 // pred_fallthru
    _
  // Predicated region
  $region6: #{_forward.7} parent=0 // pred_check
    _
  $region7: #{_forward.7} parent=0 // pred_check_branch
    %11 = sbr.rel (0) target = $region9
  $region8: #{_forward.7} parent=0 // pred_region
    _
  $region9: #{_forward.7} parent=0 // pred_fallthru
    _
  // Predicated region
  $region10: #{_forward.7} parent=0 // pred_check
    _
  $region11: #{_forward.7} parent=0 // pred_check_branch
    %13 = sbr.rel (0) target = $region13
  $region12: #{_forward.7} parent=0 // pred_region
    _
  $region13: #{_forward.7} parent=0 // pred_fallthru
    _
  %p15 = scmp.eq.s32.totalorder 0, 0
  // Predicated region
  $region14: #{_forward.7} parent=0 // pred_check
    %p16 = pneg %p15
  $region15: #{_forward.7} parent=0 // pred_check_branch
    %18 = sbr.rel (%p16) target = $region17
  $region16: #{_forward.7} parent=0 // pred_region
    %19 = vst [vmem:[#allocation2] sm:$0xff] 0.0
    %20 = vst [vmem:[#allocation2 + $0x8] sm:$0xff] 0.0
    %21 = vst [vmem:[#allocation2 + $0x10] sm:$0xff] 0.0
    %22 = vst [vmem:[#allocation2 + $0x18] sm:$0xff] 0.0
  $region17: #{_forward.7} parent=0 // pred_fallthru
    _
  %v23 = vld [vmem:[#allocation2] sm:$0xff]
  %v24 = vld [vmem:[#allocation2 + $0x8] sm:$0xff]
  %v25 = vld [vmem:[#allocation2 + $0x10] sm:$0xff]
  %v26 = vld [vmem:[#allocation2 + $0x18] sm:$0xff]
  %v27 = vld [vmem:[%s0] sm:$0xff]
  %v28 = vld [vmem:[%s0 + $0x8] sm:$0xff]
  %v29 = vld [vmem:[%s0 + $0x10] sm:$0xff]
  %v30 = vld [vmem:[%s0 + $0x18] sm:$0xff]
  %v31 = vld [vmem:[%s0 + $0x20] sm:$0xff]
  %v32 = vld [vmem:[%s0 + $0x28] sm:$0xff]
  %v33 = vld [vmem:[%s0 + $0x30] sm:$0xff]
  %v34 = vld [vmem:[%s0 + $0x38] sm:$0xff]
  %v35 = vld [vmem:[%s0 + $0x40] sm:$0xff]
  %v36 = vld [vmem:[%s0 + $0x48] sm:$0xff]
  %v37 = vld [vmem:[%s0 + $0x50] sm:$0xff]
  %v38 = vld [vmem:[%s0 + $0x58] sm:$0xff]
  %v39 = vld [vmem:[%s0 + $0x60] sm:$0xff]
  %v40 = vld [vmem:[%s0 + $0x68] sm:$0xff]
  %v41 = vld [vmem:[%s0 + $0x70] sm:$0xff]
  %v42 = vld [vmem:[%s0 + $0x78] sm:$0xff]
  %v43 = vld [vmem:[%s1] sm:$0xf]
  %v44 = vld [vmem:[%s1 + $0x4] sm:$0xf]
  %v45 = vld [vmem:[%s1 + $0x8] sm:$0xf]
  %v46 = vld [vmem:[%s1 + $0xc] sm:$0xf]
  %v47 = vld [vmem:[%s1 + $0x10] sm:$0xf]
  %v48 = vld [vmem:[%s1 + $0x14] sm:$0xf]
  %v49 = vld [vmem:[%s1 + $0x18] sm:$0xf]
  %v50 = vld [vmem:[%s1 + $0x1c] sm:$0xf]
  %v51 = vld [vmem:[%s1 + $0x20] sm:$0xf]
  %v52 = vld [vmem:[%s1 + $0x24] sm:$0xf]
  %v53 = vld [vmem:[%s1 + $0x28] sm:$0xf]
  %v54 = vld [vmem:[%s1 + $0x2c] sm:$0xf]
  %v55 = vld [vmem:[%s1 + $0x30] sm:$0xf]
  %v56 = vld [vmem:[%s1 + $0x34] sm:$0xf]
  %v57 = vld [vmem:[%s1 + $0x38] sm:$0xf]
  %v58 = vld [vmem:[%s1 + $0x3c] sm:$0xf]
  %v59 = vld [vmem:[%s1 + $0x40] sm:$0xf]
  %v60 = vld [vmem:[%s1 + $0x44] sm:$0xf]
  %v61 = vld [vmem:[%s1 + $0x48] sm:$0xf]
  %v62 = vld [vmem:[%s1 + $0x4c] sm:$0xf]
  %v63 = vld [vmem:[%s1 + $0x50] sm:$0xf]
  %v64 = vld [vmem:[%s1 + $0x54] sm:$0xf]
  %v65 = vld [vmem:[%s1 + $0x58] sm:$0xf]
  %v66 = vld [vmem:[%s1 + $0x5c] sm:$0xf]
  %v67 = vld [vmem:[%s1 + $0x60] sm:$0xf]
  %v68 = vld [vmem:[%s1 + $0x64] sm:$0xf]
  %v69 = vld [vmem:[%s1 + $0x68] sm:$0xf]
  %v70 = vld [vmem:[%s1 + $0x6c] sm:$0xf]
  %v71 = vld [vmem:[%s1 + $0x70] sm:$0xf]
  %v72 = vld [vmem:[%s1 + $0x74] sm:$0xf]
  %v73 = vld [vmem:[%s1 + $0x78] sm:$0xf]
  %v74 = vld [vmem:[%s1 + $0x7c] sm:$0xf]
  %v75 = vld [vmem:[%s1 + $0x80] sm:$0xf]
  %v76 = vld [vmem:[%s1 + $0x84] sm:$0xf]
  %v77 = vld [vmem:[%s1 + $0x88] sm:$0xf]
  %v78 = vld [vmem:[%s1 + $0x8c] sm:$0xf]
  %v79 = vld [vmem:[%s1 + $0x90] sm:$0xf]
  %v80 = vld [vmem:[%s1 + $0x94] sm:$0xf]
  %v81 = vld [vmem:[%s1 + $0x98] sm:$0xf]
  %v82 = vld [vmem:[%s1 + $0x9c] sm:$0xf]
  %v83 = vld [vmem:[%s1 + $0xa0] sm:$0xf]
  %v84 = vld [vmem:[%s1 + $0xa4] sm:$0xf]
  %v85 = vld [vmem:[%s1 + $0xa8] sm:$0xf]
  %v86 = vld [vmem:[%s1 + $0xac] sm:$0xf]
  %v87 = vld [vmem:[%s1 + $0xb0] sm:$0xf]
  %v88 = vld [vmem:[%s1 + $0xb4] sm:$0xf]
  %v89 = vld [vmem:[%s1 + $0xb8] sm:$0xf]
  %v90 = vld [vmem:[%s1 + $0xbc] sm:$0xf]
  %v91 = vld [vmem:[%s1 + $0xc0] sm:$0xf]
  %v92 = vld [vmem:[%s1 + $0xc4] sm:$0xf]
  %v93 = vld [vmem:[%s1 + $0xc8] sm:$0xf]
  %v94 = vld [vmem:[%s1 + $0xcc] sm:$0xf]
  %v95 = vld [vmem:[%s1 + $0xd0] sm:$0xf]
  %v96 = vld [vmem:[%s1 + $0xd4] sm:$0xf]
  %v97 = vld [vmem:[%s1 + $0xd8] sm:$0xf]
  %v98 = vld [vmem:[%s1 + $0xdc] sm:$0xf]
  %v99 = vld [vmem:[%s1 + $0xe0] sm:$0xf]
  %v100 = vld [vmem:[%s1 + $0xe4] sm:$0xf]
  %v101 = vld [vmem:[%s1 + $0xe8] sm:$0xf]
  %v102 = vld [vmem:[%s1 + $0xec] sm:$0xf]
  %v103 = vld [vmem:[%s1 + $0xf0] sm:$0xf]
  %v104 = vld [vmem:[%s1 + $0xf4] sm:$0xf]
  %v105 = vld [vmem:[%s1 + $0xf8] sm:$0xf]
  %v106 = vld [vmem:[%s1 + $0xfc] sm:$0xf]
  %v107 = vld [vmem:[%s1 + $0x100] sm:$0xf]
  %v108 = vld [vmem:[%s1 + $0x104] sm:$0xf]
  %v109 = vld [vmem:[%s1 + $0x108] sm:$0xf]
  %v110 = vld [vmem:[%s1 + $0x10c] sm:$0xf]
  %v111 = vld [vmem:[%s1 + $0x110] sm:$0xf]
  %v112 = vld [vmem:[%s1 + $0x114] sm:$0xf]
  %v113 = vld [vmem:[%s1 + $0x118] sm:$0xf]
  %v114 = vld [vmem:[%s1 + $0x11c] sm:$0xf]
  %v115 = vld [vmem:[%s1 + $0x120] sm:$0xf]
  %v116 = vld [vmem:[%s1 + $0x124] sm:$0xf]
  %v117 = vld [vmem:[%s1 + $0x128] sm:$0xf]
  %v118 = vld [vmem:[%s1 + $0x12c] sm:$0xf]
  %v119 = vld [vmem:[%s1 + $0x130] sm:$0xf]
  %v120 = vld [vmem:[%s1 + $0x134] sm:$0xf]
  %v121 = vld [vmem:[%s1 + $0x138] sm:$0xf]
  %v122 = vld [vmem:[%s1 + $0x13c] sm:$0xf]
  %v123 = vld [vmem:[%s1 + $0x140] sm:$0xf]
  %v124 = vld [vmem:[%s1 + $0x144] sm:$0xf]
  %v125 = vld [vmem:[%s1 + $0x148] sm:$0xf]
  %v126 = vld [vmem:[%s1 + $0x14c] sm:$0xf]
  %v127 = vld [vmem:[%s1 + $0x150] sm:$0xf]
  %v128 = vld [vmem:[%s1 + $0x154] sm:$0xf]
  %v129 = vld [vmem:[%s1 + $0x158] sm:$0xf]
  %v130 = vld [vmem:[%s1 + $0x15c] sm:$0xf]
  %v131 = vld [vmem:[%s1 + $0x160] sm:$0xf]
  %v132 = vld [vmem:[%s1 + $0x164] sm:$0xf]
  %v133 = vld [vmem:[%s1 + $0x168] sm:$0xf]
  %v134 = vld [vmem:[%s1 + $0x16c] sm:$0xf]
  %v135 = vld [vmem:[%s1 + $0x170] sm:$0xf]
  %v136 = vld [vmem:[%s1 + $0x174] sm:$0xf]
  %v137 = vld [vmem:[%s1 + $0x178] sm:$0xf]
  %v138 = vld [vmem:[%s1 + $0x17c] sm:$0xf]
  %v139 = vld [vmem:[%s1 + $0x180] sm:$0xf]
  %v140 = vld [vmem:[%s1 + $0x184] sm:$0xf]
  %v141 = vld [vmem:[%s1 + $0x188] sm:$0xf]
  %v142 = vld [vmem:[%s1 + $0x18c] sm:$0xf]
  %v143 = vld [vmem:[%s1 + $0x190] sm:$0xf]
  %v144 = vld [vmem:[%s1 + $0x194] sm:$0xf]
  %v145 = vld [vmem:[%s1 + $0x198] sm:$0xf]
  %v146 = vld [vmem:[%s1 + $0x19c] sm:$0xf]
  %v147 = vld [vmem:[%s1 + $0x1a0] sm:$0xf]
  %v148 = vld [vmem:[%s1 + $0x1a4] sm:$0xf]
  %v149 = vld [vmem:[%s1 + $0x1a8] sm:$0xf]
  %v150 = vld [vmem:[%s1 + $0x1ac] sm:$0xf]
  %v151 = vld [vmem:[%s1 + $0x1b0] sm:$0xf]
  %v152 = vld [vmem:[%s1 + $0x1b4] sm:$0xf]
  %v153 = vld [vmem:[%s1 + $0x1b8] sm:$0xf]
  %v154 = vld [vmem:[%s1 + $0x1bc] sm:$0xf]
  %v155 = vld [vmem:[%s1 + $0x1c0] sm:$0xf]
  %v156 = vld [vmem:[%s1 + $0x1c4] sm:$0xf]
  %v157 = vld [vmem:[%s1 + $0x1c8] sm:$0xf]
  %v158 = vld [vmem:[%s1 + $0x1cc] sm:$0xf]
  %v159 = vld [vmem:[%s1 + $0x1d0] sm:$0xf]
  %v160 = vld [vmem:[%s1 + $0x1d4] sm:$0xf]
  %v161 = vld [vmem:[%s1 + $0x1d8] sm:$0xf]
  %v162 = vld [vmem:[%s1 + $0x1dc] sm:$0xf]
  %v163 = vld [vmem:[%s1 + $0x1e0] sm:$0xf]
  %v164 = vld [vmem:[%s1 + $0x1e4] sm:$0xf]
  %v165 = vld [vmem:[%s1 + $0x1e8] sm:$0xf]
  %v166 = vld [vmem:[%s1 + $0x1ec] sm:$0xf]
  %v167 = vld [vmem:[%s1 + $0x1f0] sm:$0xf]
  %v168 = vld [vmem:[%s1 + $0x1f4] sm:$0xf]
  %v169 = vld [vmem:[%s1 + $0x1f8] sm:$0xf]
  %v170 = vld [vmem:[%s1 + $0x1fc] sm:$0xf]
  %v187 = vunpack.c.l.b16 %v27
  %v188 = vunpack.c.h.b16 %v27
  %v189 = vunpack.c.l.b16 %v28
  %v190 = vunpack.c.h.b16 %v28
  %v191 = vunpack.c.l.b16 %v29
  %v192 = vunpack.c.h.b16 %v29
  %v193 = vunpack.c.l.b16 %v30
  %v194 = vunpack.c.h.b16 %v30
  %v195 = vunpack.c.l.b16 %v31
  %v196 = vunpack.c.h.b16 %v31
  %v197 = vunpack.c.l.b16 %v32
  %v198 = vunpack.c.h.b16 %v32
  %v199 = vunpack.c.l.b16 %v33
  %v200 = vunpack.c.h.b16 %v33
  %v201 = vunpack.c.l.b16 %v34
  %v202 = vunpack.c.h.b16 %v34
  %v203 = vunpack.c.l.b16 %v35
  %v204 = vunpack.c.h.b16 %v35
  %v205 = vunpack.c.l.b16 %v36
  %v206 = vunpack.c.h.b16 %v36
  %v207 = vunpack.c.l.b16 %v37
  %v208 = vunpack.c.h.b16 %v37
  %v209 = vunpack.c.l.b16 %v38
  %v210 = vunpack.c.h.b16 %v38
  %v211 = vunpack.c.l.b16 %v39
  %v212 = vunpack.c.h.b16 %v39
  %v213 = vunpack.c.l.b16 %v40
  %v214 = vunpack.c.h.b16 %v40
  %v215 = vunpack.c.l.b16 %v41
  %v216 = vunpack.c.h.b16 %v41
  %v217 = vunpack.c.l.b16 %v42
  %v218 = vunpack.c.h.b16 %v42
  %v219 = vpack.c.b16 %v195, %v187
  %v220 = vpack.c.b16 %v196, %v188
  %v221 = vpack.c.b16 %v197, %v189
  %v222 = vpack.c.b16 %v198, %v190
  %v223 = vpack.c.b16 %v199, %v191
  %v224 = vpack.c.b16 %v200, %v192
  %v225 = vpack.c.b16 %v201, %v193
  %v226 = vpack.c.b16 %v202, %v194
  %v227 = vpack.c.b16 %v211, %v203
  %v228 = vpack.c.b16 %v212, %v204
  %v229 = vpack.c.b16 %v213, %v205
  %v230 = vpack.c.b16 %v214, %v206
  %v231 = vpack.c.b16 %v215, %v207
  %v232 = vpack.c.b16 %v216, %v208
  %v233 = vpack.c.b16 %v217, %v209
  %v234 = vpack.c.b16 %v218, %v210
  %v379 = vunpack.c.l.b16 %v43
  %v380 = vunpack.c.l.b16 %v44
  %v381 = vunpack.c.l.b16 %v45
  %v382 = vunpack.c.l.b16 %v46
  %v383 = vunpack.c.l.b16 %v47
  %v384 = vunpack.c.l.b16 %v48
  %v385 = vunpack.c.l.b16 %v49
  %v386 = vunpack.c.l.b16 %v50
  %v387 = vunpack.c.l.b16 %v51
  %v388 = vunpack.c.l.b16 %v52
  %v389 = vunpack.c.l.b16 %v53
  %v390 = vunpack.c.l.b16 %v54
  %v391 = vunpack.c.l.b16 %v55
  %v392 = vunpack.c.l.b16 %v56
  %v393 = vunpack.c.l.b16 %v57
  %v394 = vunpack.c.l.b16 %v58
  %v395 = vunpack.c.l.b16 %v59
  %v396 = vunpack.c.l.b16 %v60
  %v397 = vunpack.c.l.b16 %v61
  %v398 = vunpack.c.l.b16 %v62
  %v399 = vunpack.c.l.b16 %v63
  %v400 = vunpack.c.l.b16 %v64
  %v401 = vunpack.c.l.b16 %v65
  %v402 = vunpack.c.l.b16 %v66
  %v403 = vunpack.c.l.b16 %v67
  %v404 = vunpack.c.l.b16 %v68
  %v405 = vunpack.c.l.b16 %v69
  %v406 = vunpack.c.l.b16 %v70
  %v407 = vunpack.c.l.b16 %v71
  %v408 = vunpack.c.l.b16 %v72
  %v409 = vunpack.c.l.b16 %v73
  %v410 = vunpack.c.l.b16 %v74
  %v411 = vunpack.c.l.b16 %v75
  %v412 = vunpack.c.l.b16 %v76
  %v413 = vunpack.c.l.b16 %v77
  %v414 = vunpack.c.l.b16 %v78
  %v415 = vunpack.c.l.b16 %v79
  %v416 = vunpack.c.l.b16 %v80
  %v417 = vunpack.c.l.b16 %v81
  %v418 = vunpack.c.l.b16 %v82
  %v419 = vunpack.c.l.b16 %v83
  %v420 = vunpack.c.l.b16 %v84
  %v421 = vunpack.c.l.b16 %v85
  %v422 = vunpack.c.l.b16 %v86
  %v423 = vunpack.c.l.b16 %v87
  %v424 = vunpack.c.l.b16 %v88
  %v425 = vunpack.c.l.b16 %v89
  %v426 = vunpack.c.l.b16 %v90
  %v427 = vunpack.c.l.b16 %v91
  %v428 = vunpack.c.l.b16 %v92
  %v429 = vunpack.c.l.b16 %v93
  %v430 = vunpack.c.l.b16 %v94
  %v431 = vunpack.c.l.b16 %v95
  %v432 = vunpack.c.l.b16 %v96
  %v433 = vunpack.c.l.b16 %v97
  %v434 = vunpack.c.l.b16 %v98
  %v435 = vunpack.c.l.b16 %v99
  %v436 = vunpack.c.l.b16 %v100
  %v437 = vunpack.c.l.b16 %v101
  %v438 = vunpack.c.l.b16 %v102
  %v439 = vunpack.c.l.b16 %v103
  %v440 = vunpack.c.l.b16 %v104
  %v441 = vunpack.c.l.b16 %v105
  %v442 = vunpack.c.l.b16 %v106
  %v443 = vunpack.c.l.b16 %v107
  %v444 = vunpack.c.l.b16 %v108
  %v445 = vunpack.c.l.b16 %v109
  %v446 = vunpack.c.l.b16 %v110
  %v447 = vunpack.c.l.b16 %v111
  %v448 = vunpack.c.l.b16 %v112
  %v449 = vunpack.c.l.b16 %v113
  %v450 = vunpack.c.l.b16 %v114
  %v451 = vunpack.c.l.b16 %v115
  %v452 = vunpack.c.l.b16 %v116
  %v453 = vunpack.c.l.b16 %v117
  %v454 = vunpack.c.l.b16 %v118
  %v455 = vunpack.c.l.b16 %v119
  %v456 = vunpack.c.l.b16 %v120
  %v457 = vunpack.c.l.b16 %v121
  %v458 = vunpack.c.l.b16 %v122
  %v459 = vunpack.c.l.b16 %v123
  %v460 = vunpack.c.l.b16 %v124
  %v461 = vunpack.c.l.b16 %v125
  %v462 = vunpack.c.l.b16 %v126
  %v463 = vunpack.c.l.b16 %v127
  %v464 = vunpack.c.l.b16 %v128
  %v465 = vunpack.c.l.b16 %v129
  %v466 = vunpack.c.l.b16 %v130
  %v467 = vunpack.c.l.b16 %v131
  %v468 = vunpack.c.l.b16 %v132
  %v469 = vunpack.c.l.b16 %v133
  %v470 = vunpack.c.l.b16 %v134
  %v471 = vunpack.c.l.b16 %v135
  %v472 = vunpack.c.l.b16 %v136
  %v473 = vunpack.c.l.b16 %v137
  %v474 = vunpack.c.l.b16 %v138
  %v475 = vunpack.c.l.b16 %v139
  %v476 = vunpack.c.l.b16 %v140
  %v477 = vunpack.c.l.b16 %v141
  %v478 = vunpack.c.l.b16 %v142
  %v479 = vunpack.c.l.b16 %v143
  %v480 = vunpack.c.l.b16 %v144
  %v481 = vunpack.c.l.b16 %v145
  %v482 = vunpack.c.l.b16 %v146
  %v483 = vunpack.c.l.b16 %v147
  %v484 = vunpack.c.l.b16 %v148
  %v485 = vunpack.c.l.b16 %v149
  %v486 = vunpack.c.l.b16 %v150
  %v487 = vunpack.c.l.b16 %v151
  %v488 = vunpack.c.l.b16 %v152
  %v489 = vunpack.c.l.b16 %v153
  %v490 = vunpack.c.l.b16 %v154
  %v491 = vunpack.c.l.b16 %v155
  %v492 = vunpack.c.l.b16 %v156
  %v493 = vunpack.c.l.b16 %v157
  %v494 = vunpack.c.l.b16 %v158
  %v495 = vunpack.c.l.b16 %v159
  %v496 = vunpack.c.l.b16 %v160
  %v497 = vunpack.c.l.b16 %v161
  %v498 = vunpack.c.l.b16 %v162
  %v499 = vunpack.c.l.b16 %v163
  %v500 = vunpack.c.l.b16 %v164
  %v501 = vunpack.c.l.b16 %v165
  %v502 = vunpack.c.l.b16 %v166
  %v503 = vunpack.c.l.b16 %v167
  %v504 = vunpack.c.l.b16 %v168
  %v505 = vunpack.c.l.b16 %v169
  %v506 = vunpack.c.l.b16 %v170
  %v507 = vpack.c.b16 %v380, %v379
  %v508 = vpack.c.b16 %v382, %v381
  %v509 = vpack.c.b16 %v384, %v383
  %v510 = vpack.c.b16 %v386, %v385
  %v511 = vpack.c.b16 %v388, %v387
  %v512 = vpack.c.b16 %v390, %v389
  %v513 = vpack.c.b16 %v392, %v391
  %v514 = vpack.c.b16 %v394, %v393
  %v515 = vpack.c.b16 %v396, %v395
  %v516 = vpack.c.b16 %v398, %v397
  %v517 = vpack.c.b16 %v400, %v399
  %v518 = vpack.c.b16 %v402, %v401
  %v519 = vpack.c.b16 %v404, %v403
  %v520 = vpack.c.b16 %v406, %v405
  %v521 = vpack.c.b16 %v408, %v407
  %v522 = vpack.c.b16 %v410, %v409
  %v523 = vpack.c.b16 %v412, %v411
  %v524 = vpack.c.b16 %v414, %v413
  %v525 = vpack.c.b16 %v416, %v415
  %v526 = vpack.c.b16 %v418, %v417
  %v527 = vpack.c.b16 %v420, %v419
  %v528 = vpack.c.b16 %v422, %v421
  %v529 = vpack.c.b16 %v424, %v423
  %v530 = vpack.c.b16 %v426, %v425
  %v531 = vpack.c.b16 %v428, %v427
  %v532 = vpack.c.b16 %v430, %v429
  %v533 = vpack.c.b16 %v432, %v431
  %v534 = vpack.c.b16 %v434, %v433
  %v535 = vpack.c.b16 %v436, %v435
  %v536 = vpack.c.b16 %v438, %v437
  %v537 = vpack.c.b16 %v440, %v439
  %v538 = vpack.c.b16 %v442, %v441
  %v539 = vpack.c.b16 %v444, %v443
  %v540 = vpack.c.b16 %v446, %v445
  %v541 = vpack.c.b16 %v448, %v447
  %v542 = vpack.c.b16 %v450, %v449
  %v543 = vpack.c.b16 %v452, %v451
  %v544 = vpack.c.b16 %v454, %v453
  %v545 = vpack.c.b16 %v456, %v455
  %v546 = vpack.c.b16 %v458, %v457
  %v547 = vpack.c.b16 %v460, %v459
  %v548 = vpack.c.b16 %v462, %v461
  %v549 = vpack.c.b16 %v464, %v463
  %v550 = vpack.c.b16 %v466, %v465
  %v551 = vpack.c.b16 %v468, %v467
  %v552 = vpack.c.b16 %v470, %v469
  %v553 = vpack.c.b16 %v472, %v471
  %v554 = vpack.c.b16 %v474, %v473
  %v555 = vpack.c.b16 %v476, %v475
  %v556 = vpack.c.b16 %v478, %v477
  %v557 = vpack.c.b16 %v480, %v479
  %v558 = vpack.c.b16 %v482, %v481
  %v559 = vpack.c.b16 %v484, %v483
  %v560 = vpack.c.b16 %v486, %v485
  %v561 = vpack.c.b16 %v488, %v487
  %v562 = vpack.c.b16 %v490, %v489
  %v563 = vpack.c.b16 %v492, %v491
  %v564 = vpack.c.b16 %v494, %v493
  %v565 = vpack.c.b16 %v496, %v495
  %v566 = vpack.c.b16 %v498, %v497
  %v567 = vpack.c.b16 %v500, %v499
  %v568 = vpack.c.b16 %v502, %v501
  %v569 = vpack.c.b16 %v504, %v503
  %v570 = vpack.c.b16 %v506, %v505
  %635 = vmatprep.subr.bf16.mxu0 0
  %636 = vmatpush1.bf16.msra.mxu0 %v514
  %637 = vmatprep.subr.bf16.mxu0 0
  %638 = vmatpush1.bf16.msra.mxu0 %v513
  %639 = vmatprep.subr.bf16.mxu0 0
  %640 = vmatpush1.bf16.msra.mxu0 %v512
  %641 = vmatprep.subr.bf16.mxu0 0
  %642 = vmatpush1.bf16.msra.mxu0 %v511
  %643 = vmatprep.subr.bf16.mxu0 0
  %644 = vmatpush1.bf16.msra.mxu0 %v510
  %645 = vmatprep.subr.bf16.mxu0 0
  %646 = vmatpush1.bf16.msra.mxu0 %v509
  %647 = vmatprep.subr.bf16.mxu0 0
  %648 = vmatpush1.bf16.msra.mxu0 %v508
  %649 = vmatprep.subr.bf16.mxu0 0
  %650 = vmatpush1.bf16.msra.mxu0 %v507
  %651 = vmatprep.subr.bf16.mxu0 0
  %652 = vmatpush2.bf16.msra.mxu0 %v522
  %653 = vmatprep.subr.bf16.mxu0 0
  %654 = vmatpush2.bf16.msra.mxu0 %v521
  %655 = vmatprep.subr.bf16.mxu0 0
  %656 = vmatpush2.bf16.msra.mxu0 %v520
  %657 = vmatprep.subr.bf16.mxu0 0
  %658 = vmatpush2.bf16.msra.mxu0 %v519
  %659 = vmatprep.subr.bf16.mxu0 0
  %660 = vmatpush2.bf16.msra.mxu0 %v518
  %661 = vmatprep.subr.bf16.mxu0 0
  %662 = vmatpush2.bf16.msra.mxu0 %v517
  %663 = vmatprep.subr.bf16.mxu0 0
  %664 = vmatpush2.bf16.msra.mxu0 %v516
  %665 = vmatprep.subr.bf16.mxu0 0
  %666 = vmatpush2.bf16.msra.mxu0 %v515
  %667 = vmatprep.mubr.bf16.mxu0 %v220
  %668 = vmatmul.mubr.bf16.gmra.mxu0 %v219
  %v669 = vpop.f32.mrf.mxu0
  %v670 = vadd.f32 0.0, %v669
  %v671 = vpop.f32.mrf.mxu0
  %v672 = vpop.f32.mrf.mxu0
  %v673 = vadd.f32 0.0, %v672
  %v674 = vpop.f32.mrf.mxu0
  %675 = vmatprep.mubr.bf16.mxu0 %v228
  %676 = vmatmul.mubr.bf16.gmra.mxu0 %v227
  %v677 = vpop.f32.mrf.mxu0
  %v678 = vadd.f32 0.0, %v677
  %v679 = vpop.f32.mrf.mxu0
  %v680 = vpop.f32.mrf.mxu0
  %v681 = vadd.f32 0.0, %v680
  %v682 = vpop.f32.mrf.mxu0
  %683 = vdwg.mxu0
  %684 = vmatprep.subr.bf16.mxu0 0
  %685 = vmatpush1.bf16.msra.mxu0 %v530
  %686 = vmatprep.subr.bf16.mxu0 0
  %687 = vmatpush1.bf16.msra.mxu0 %v529
  %688 = vmatprep.subr.bf16.mxu0 0
  %689 = vmatpush1.bf16.msra.mxu0 %v528
  %690 = vmatprep.subr.bf16.mxu0 0
  %691 = vmatpush1.bf16.msra.mxu0 %v527
  %692 = vmatprep.subr.bf16.mxu0 0
  %693 = vmatpush1.bf16.msra.mxu0 %v526
  %694 = vmatprep.subr.bf16.mxu0 0
  %695 = vmatpush1.bf16.msra.mxu0 %v525
  %696 = vmatprep.subr.bf16.mxu0 0
  %697 = vmatpush1.bf16.msra.mxu0 %v524
  %698 = vmatprep.subr.bf16.mxu0 0
  %699 = vmatpush1.bf16.msra.mxu0 %v523
  %700 = vmatprep.subr.bf16.mxu0 0
  %701 = vmatpush2.bf16.msra.mxu0 %v538
  %702 = vmatprep.subr.bf16.mxu0 0
  %703 = vmatpush2.bf16.msra.mxu0 %v537
  %704 = vmatprep.subr.bf16.mxu0 0
  %705 = vmatpush2.bf16.msra.mxu0 %v536
  %706 = vmatprep.subr.bf16.mxu0 0
  %707 = vmatpush2.bf16.msra.mxu0 %v535
  %708 = vmatprep.subr.bf16.mxu0 0
  %709 = vmatpush2.bf16.msra.mxu0 %v534
  %710 = vmatprep.subr.bf16.mxu0 0
  %711 = vmatpush2.bf16.msra.mxu0 %v533
  %712 = vmatprep.subr.bf16.mxu0 0
  %713 = vmatpush2.bf16.msra.mxu0 %v532
  %714 = vmatprep.subr.bf16.mxu0 0
  %715 = vmatpush2.bf16.msra.mxu0 %v531
  %716 = vmatprep.mubr.bf16.mxu0 %v222
  %717 = vmatmul.mubr.bf16.gmra.mxu0 %v221
  %v718 = vpop.f32.mrf.mxu0
  %v719 = vadd.f32 %v670, %v718
  %v720 = vpop.f32.mrf.mxu0
  %v721 = vpop.f32.mrf.mxu0
  %v722 = vadd.f32 %v673, %v721
  %v723 = vpop.f32.mrf.mxu0
  %724 = vmatprep.mubr.bf16.mxu0 %v230
  %725 = vmatmul.mubr.bf16.gmra.mxu0 %v229
  %v726 = vpop.f32.mrf.mxu0
  %v727 = vadd.f32 %v678, %v726
  %v728 = vpop.f32.mrf.mxu0
  %v729 = vpop.f32.mrf.mxu0
  %v730 = vadd.f32 %v681, %v729
  %v731 = vpop.f32.mrf.mxu0
  %732 = vdwg.mxu0
  %733 = vmatprep.subr.bf16.mxu0 0
  %734 = vmatpush1.bf16.msra.mxu0 %v546
  %735 = vmatprep.subr.bf16.mxu0 0
  %736 = vmatpush1.bf16.msra.mxu0 %v545
  %737 = vmatprep.subr.bf16.mxu0 0
  %738 = vmatpush1.bf16.msra.mxu0 %v544
  %739 = vmatprep.subr.bf16.mxu0 0
  %740 = vmatpush1.bf16.msra.mxu0 %v543
  %741 = vmatprep.subr.bf16.mxu0 0
  %742 = vmatpush1.bf16.msra.mxu0 %v542
  %743 = vmatprep.subr.bf16.mxu0 0
  %744 = vmatpush1.bf16.msra.mxu0 %v541
  %745 = vmatprep.subr.bf16.mxu0 0
  %746 = vmatpush1.bf16.msra.mxu0 %v540
  %747 = vmatprep.subr.bf16.mxu0 0
  %748 = vmatpush1.bf16.msra.mxu0 %v539
  %749 = vmatprep.subr.bf16.mxu0 0
  %750 = vmatpush2.bf16.msra.mxu0 %v554
  %751 = vmatprep.subr.bf16.mxu0 0
  %752 = vmatpush2.bf16.msra.mxu0 %v553
  %753 = vmatprep.subr.bf16.mxu0 0
  %754 = vmatpush2.bf16.msra.mxu0 %v552
  %755 = vmatprep.subr.bf16.mxu0 0
  %756 = vmatpush2.bf16.msra.mxu0 %v551
  %757 = vmatprep.subr.bf16.mxu0 0
  %758 = vmatpush2.bf16.msra.mxu0 %v550
  %759 = vmatprep.subr.bf16.mxu0 0
  %760 = vmatpush2.bf16.msra.mxu0 %v549
  %761 = vmatprep.subr.bf16.mxu0 0
  %762 = vmatpush2.bf16.msra.mxu0 %v548
  %763 = vmatprep.subr.bf16.mxu0 0
  %764 = vmatpush2.bf16.msra.mxu0 %v547
  %765 = vmatprep.mubr.bf16.mxu0 %v224
  %766 = vmatmul.mubr.bf16.gmra.mxu0 %v223
  %v767 = vpop.f32.mrf.mxu0
  %v768 = vadd.f32 %v719, %v767
  %v769 = vpop.f32.mrf.mxu0
  %v770 = vpop.f32.mrf.mxu0
  %v771 = vadd.f32 %v722, %v770
  %v772 = vpop.f32.mrf.mxu0
  %773 = vmatprep.mubr.bf16.mxu0 %v232
  %774 = vmatmul.mubr.bf16.gmra.mxu0 %v231
  %v775 = vpop.f32.mrf.mxu0
  %v776 = vadd.f32 %v727, %v775
  %v777 = vpop.f32.mrf.mxu0
  %v778 = vpop.f32.mrf.mxu0
  %v779 = vadd.f32 %v730, %v778
  %v780 = vpop.f32.mrf.mxu0
  %781 = vdwg.mxu0
  %782 = vmatprep.subr.bf16.mxu0 0
  %783 = vmatpush1.bf16.msra.mxu0 %v562
  %784 = vmatprep.subr.bf16.mxu0 0
  %785 = vmatpush1.bf16.msra.mxu0 %v561
  %786 = vmatprep.subr.bf16.mxu0 0
  %787 = vmatpush1.bf16.msra.mxu0 %v560
  %788 = vmatprep.subr.bf16.mxu0 0
  %789 = vmatpush1.bf16.msra.mxu0 %v559
  %790 = vmatprep.subr.bf16.mxu0 0
  %791 = vmatpush1.bf16.msra.mxu0 %v558
  %792 = vmatprep.subr.bf16.mxu0 0
  %793 = vmatpush1.bf16.msra.mxu0 %v557
  %794 = vmatprep.subr.bf16.mxu0 0
  %795 = vmatpush1.bf16.msra.mxu0 %v556
  %796 = vmatprep.subr.bf16.mxu0 0
  %797 = vmatpush1.bf16.msra.mxu0 %v555
  %798 = vmatprep.subr.bf16.mxu0 0
  %799 = vmatpush2.bf16.msra.mxu0 %v570
  %800 = vmatprep.subr.bf16.mxu0 0
  %801 = vmatpush2.bf16.msra.mxu0 %v569
  %802 = vmatprep.subr.bf16.mxu0 0
  %803 = vmatpush2.bf16.msra.mxu0 %v568
  %804 = vmatprep.subr.bf16.mxu0 0
  %805 = vmatpush2.bf16.msra.mxu0 %v567
  %806 = vmatprep.subr.bf16.mxu0 0
  %807 = vmatpush2.bf16.msra.mxu0 %v566
  %808 = vmatprep.subr.bf16.mxu0 0
  %809 = vmatpush2.bf16.msra.mxu0 %v565
  %810 = vmatprep.subr.bf16.mxu0 0
  %811 = vmatpush2.bf16.msra.mxu0 %v564
  %812 = vmatprep.subr.bf16.mxu0 0
  %813 = vmatpush2.bf16.msra.mxu0 %v563
  %814 = vmatprep.mubr.bf16.mxu0 %v226
  %815 = vmatmul.mubr.bf16.gmra.mxu0 %v225
  %v816 = vpop.f32.mrf.mxu0
  %v817 = vadd.f32 %v768, %v816
  %v818 = vpop.f32.mrf.mxu0
  %v819 = vpop.f32.mrf.mxu0
  %v820 = vadd.f32 %v771, %v819
  %v821 = vpop.f32.mrf.mxu0
  %822 = vmatprep.mubr.bf16.mxu0 %v234
  %823 = vmatmul.mubr.bf16.gmra.mxu0 %v233
  %v824 = vpop.f32.mrf.mxu0
  %v825 = vadd.f32 %v776, %v824
  %v826 = vpop.f32.mrf.mxu0
  %v827 = vpop.f32.mrf.mxu0
  %v828 = vadd.f32 %v779, %v827
  %v829 = vpop.f32.mrf.mxu0
  %830 = vdwg.mxu0
  %v831 = vadd.f32 %v23, %v817
  %v832 = vadd.f32 %v24, %v820
  %v833 = vadd.f32 %v25, %v825
  %v834 = vadd.f32 %v26, %v828
  %835 = vst [vmem:[#allocation2] sm:$0xff] %v831
  %836 = vst [vmem:[#allocation2 + $0x8] sm:$0xff] %v832
  %837 = vst [vmem:[#allocation2 + $0x10] sm:$0xff] %v833
  %838 = vst [vmem:[#allocation2 + $0x18] sm:$0xff] %v834
  // Predicated region
  $region18: #{_forward.7} parent=0 // pred_check
    %p839 = pneg %p15
  $region19: #{_forward.7} parent=0 // pred_check_branch
    %841 = sbr.rel (%p839) target = $region21
  $region20: #{_forward.7} parent=0 // pred_region
    %v842 = vld [vmem:[#allocation2] sm:$0xff]
    %v843 = vld [vmem:[#allocation2 + $0x8] sm:$0xff]
    %v844 = vld [vmem:[#allocation2 + $0x10] sm:$0xff]
    %v845 = vld [vmem:[#allocation2 + $0x18] sm:$0xff]
    %v846 = vld [vmem:[%s2] sm:$0x1]
    %v848 = vlaneseq
    %v849 = vshrl.u32 %v848, 7
    %v850 = vsub.s32 0, %v849
    %v851 = vrot.slane %v846, %v850
    %v853 = vadd.f32 %v842, %v851
    %v854 = vadd.f32 %v843, %v851
    %v855 = vadd.f32 %v844, %v851
    %v856 = vadd.f32 %v845, %v851
    %v857 = vmax.f32 %v853, 0.0
    %v858 = vmax.f32 %v854, 0.0
    %v859 = vmax.f32 %v855, 0.0
    %v860 = vmax.f32 %v856, 0.0
    %v861 = vpack.c.bf16 %v858, %v857
    %v862 = vpack.c.bf16 %v860, %v859
    %v865 = vunpack.c.l.b16 %v861
    %v866 = vunpack.c.h.b16 %v861
    %v867 = vunpack.c.l.b16 %v862
    %v868 = vunpack.c.h.b16 %v862
    %v869 = vpack.c.b16 %v865, %v865
    %v870 = vpack.c.b16 %v866, %v866
    %v871 = vpack.c.b16 %v867, %v867
    %v872 = vpack.c.b16 %v868, %v868
    %877 = vst [vmem:[%s3] sm:$0xf] %v869
    %878 = vst [vmem:[%s3 + $0x4] sm:$0xf] %v870
    %879 = vst [vmem:[%s3 + $0x8] sm:$0xf] %v871
    %880 = vst [vmem:[%s3 + $0xc] sm:$0xf] %v872
  $region21: #{_forward.7} parent=0 // pred_fallthru
    _
  // Predicated region
  $region22: #{_forward.7} parent=0 // pred_check
    _
  $region23: #{_forward.7} parent=0 // pred_check_branch
    %882 = sbr.rel (0) target = $region25
  $region24: #{_forward.7} parent=0 // pred_region
    _
  $region25: #{_forward.7} parent=0 // pred_fallthru
    _
  // Predicated region
  $region26: #{_forward.7} parent=0 // pred_check
    _
  $region27: #{_forward.7} parent=0 // pred_check_branch
    %884 = sbr.rel (0) target = $region29
  $region28: #{_forward.7} parent=0 // pred_region
    _
  $region29: #{_forward.7} parent=0 // pred_fallthru
    _

// kernel: _forward.8
$region0: #{_forward.8}
  #allocation0 [shape = 'u32[]', space=smem, size = 0x4, offset = 0x4, fixed_abs, tag = 'smem constant byte address 0x4 - core index']
  #allocation1 [shape = 'u32[144,128]{1,0:T(1,128)}', space=vmem, size = 0x12000, scoped, tag = 'internal scratch']
  #allocation2 [shape = 'f32[2,128]{1,0:T(2,128)}', space=vmem, size = 0x400, scoped, tag = 'scratch operand']
  %s0 = inlined_call_operand.vmem [shape: bf16[2,2048], index: 0, kind: input, shape index: {}]
  %s1 = inlined_call_operand.vmem [shape: bf16[2048,256], index: 1, kind: input, shape index: {}]
  %s2 = inlined_call_operand.vmem [shape: f32[1,256], index: 2, kind: input, shape index: {}]
  %s3 = inlined_call_operand.vmem [shape: f32[2,256], index: 3, kind: output, shape index: {}]
  %s4 = sld [smem:[#allocation0]]
  $region94: #{_forward.8} parent=0
    _
  %s6 = ssub.s32 1, %s4
  %s7 = scalar_select 0, %s6, %s4
  $region1: #{_forward.8} parent=0
    #allocation3 [shape = 'u8[1048576]{0}', space=vmem, size = 0x100000, scoped, tag = 'input window, operand 1']
    loop: start=0, step=1, limit=4
    $region2: #{_forward.8} parent=1 // loop_pre_header
      _
    $region3: #{_forward.8} parent=1 // loop_header
      %s9 = sphi 0, %s13
      %p10 = scmp.ge.s32.totalorder %s9, 4
      %s16 = sphi 0, %s28
      %s17 = sphi 0, %s24
      %s18 = sphi 0, %s16
      %s19 = sphi 0, %s17
      %s20 = sphi 0, %s18
      %s21 = sphi 0, %s19
      %s31 = sphi 0, %s33
      %s34 = sphi 0, %s31
      %s35 = sphi 0, %s34
      %s51 = sphi 0, %s35
      %s59 = sphi 0, %s61
      %s62 = sphi 0, %s59
      %s63 = sphi 0, %s62
      %s79 = sphi 0, %s63
      %s85 = sphi 0, %s87
      %s88 = sphi 0, %s85
      %s89 = sphi 0, %s88
      %s105 = sphi 0, %s89
      %s111 = sphi 0, %s113
      %s114 = sphi 0, %s111
      %s115 = sphi 0, %s114
      %s131 = sphi 0, %s115
    $region4: #{_forward.8} parent=1 // loop_header_branch
      %12 = sbr.rel (%p10) target = $region8
    $region5: #{_forward.8} parent=1 // loop_body
      %s14 = ssub.s32 %s9, 1
      %s15 = ssub.s32 %s9, 2
      %s22 = sadd.s32 1, %s17
      %p23 = scmp.ge.s32.totalorder %s22, 1
      %s24 = scalar_select %p23, 0, %s22
      %s25 = sadd.s32 1, %s16
      %s26 = scalar_select %p23, %s25, %s16
      %p27 = scmp.ge.s32.totalorder %s26, 2
      %s28 = scalar_select %p27, 0, %s26
      %s29 = ssub.s32 %s17, %s24
      %p30 = scmp.eq.s32.totalorder %s29, 0
      %s32 = sadd.s32 %s31, 1
      %s33 = scalar_select %p30, %s31, %s32
      %p36 = pneg %p30
      %p37 = scmp.eq.s32.totalorder %s9, 1
      %p38 = por %p36, %p37
      %p39 = scmp.ne.s32.totalorder %s31, %s34
      %p40 = scmp.eq.s32.totalorder %s9, 0
      %p41 = por %p39, %p40
      %p42 = scmp.ne.s32.totalorder %s31, %s34
      %p43 = scmp.eq.s32.totalorder %s14, 1
      %p44 = por %p42, %p43
      %p45 = scmp.ne.s32.totalorder %s34, %s35
      %p46 = scmp.eq.s32.totalorder %s14, 0
      %p47 = por %p45, %p46
      %p48 = scmp.ne.s32.totalorder %s34, %s35
      %p49 = scmp.eq.s32.totalorder %s15, 1
      %p50 = por %p48, %p49
      %p52 = scmp.ne.s32.totalorder %s35, %s51
      %p53 = scmp.eq.s32.totalorder %s15, 0
      %p54 = por %p52, %p53
      %s55 = ssub.s32 %s17, %s24
      %s56 = ssub.s32 %s16, %s28
      %s57 = sor.u32 %s55, %s56
      %p58 = scmp.eq.s32.totalorder %s57, 0
      %s60 = sadd.s32 %s59, 1
      %s61 = scalar_select %p58, %s59, %s60
      %p64 = pneg %p58
      %p65 = scmp.eq.s32.totalorder %s9, 1
      %p66 = por %p64, %p65
      %p67 = scmp.ne.s32.totalorder %s59, %s62
      %p68 = scmp.eq.s32.totalorder %s9, 0
      %p69 = por %p67, %p68
      %p70 = scmp.ne.s32.totalorder %s59, %s62
      %p71 = scmp.eq.s32.totalorder %s14, 1
      %p72 = por %p70, %p71
      %p73 = scmp.ne.s32.totalorder %s62, %s63
      %p74 = scmp.eq.s32.totalorder %s14, 0
      %p75 = por %p73, %p74
      %p76 = scmp.ne.s32.totalorder %s62, %s63
      %p77 = scmp.eq.s32.totalorder %s15, 1
      %p78 = por %p76, %p77
      %p80 = scmp.ne.s32.totalorder %s63, %s79
      %p81 = scmp.eq.s32.totalorder %s15, 0
      %p82 = por %p80, %p81
      %s83 = ssub.s32 %s16, %s28
      %p84 = scmp.eq.s32.totalorder %s83, 0
      %s86 = sadd.s32 %s85, 1
      %s87 = scalar_select %p84, %s85, %s86
      %p90 = pneg %p84
      %p91 = scmp.eq.s32.totalorder %s9, 1
      %p92 = por %p90, %p91
      %p93 = scmp.ne.s32.totalorder %s85, %s88
      %p94 = scmp.eq.s32.totalorder %s9, 0
      %p95 = por %p93, %p94
      %p96 = scmp.ne.s32.totalorder %s85, %s88
      %p97 = scmp.eq.s32.totalorder %s14, 1
      %p98 = por %p96, %p97
      %p99 = scmp.ne.s32.totalorder %s88, %s89
      %p100 = scmp.eq.s32.totalorder %s14, 0
      %p101 = por %p99, %p100
      %p102 = scmp.ne.s32.totalorder %s88, %s89
      %p103 = scmp.eq.s32.totalorder %s15, 1
      %p104 = por %p102, %p103
      %p106 = scmp.ne.s32.totalorder %s89, %s105
      %p107 = scmp.eq.s32.totalorder %s15, 0
      %p108 = por %p106, %p107
      %s109 = ssub.s32 %s16, %s28
      %p110 = scmp.eq.s32.totalorder %s109, 0
      %s112 = sadd.s32 %s111, 1
      %s113 = scalar_select %p110, %s111, %s112
      %p116 = pneg %p110
      %p117 = scmp.eq.s32.totalorder %s9, 1
      %p118 = por %p116, %p117
      %p119 = scmp.ne.s32.totalorder %s111, %s114
      %p120 = scmp.eq.s32.totalorder %s9, 0
      %p121 = por %p119, %p120
      %p122 = scmp.ne.s32.totalorder %s111, %s114
      %p123 = scmp.eq.s32.totalorder %s14, 1
      %p124 = por %p122, %p123
      %p125 = scmp.ne.s32.totalorder %s114, %s115
      %p126 = scmp.eq.s32.totalorder %s14, 0
      %p127 = por %p125, %p126
      %p128 = scmp.ne.s32.totalorder %s114, %s115
      %p129 = scmp.eq.s32.totalorder %s15, 1
      %p130 = por %p128, %p129
      %p132 = scmp.ne.s32.totalorder %s115, %s131
      %p133 = scmp.eq.s32.totalorder %s15, 0
      %p134 = por %p132, %p133
      %p135 = scmp.le.s32.totalorder 1, %s9
      %p136 = scmp.lt.s32.totalorder %s9, 3
      %p137 = pnand %p135, %p136
      %p138 = pneg %p137
      // Predicated region
      $region9: #{_forward.8} parent=5 // pred_check
        _
      $region10: #{_forward.8} parent=5 // pred_check_branch
        %140 = sbr.rel (%p137) target = $region12
      $region11: #{_forward.8} parent=5 // pred_region
        %s141 = ssub.s32 %s9, 1
        // Predicated region
        $region13: #{_forward.8} parent=11 // pred_check
          %p142 = pneg %p47
        $region14: #{_forward.8} parent=11 // pred_check_branch
          %144 = sbr.rel (%p142) target = $region16
        $region15: #{_forward.8} parent=11 // pred_region
          %s145 = smul.u32 16, %s19
          %p146 = scmp.lt.s32.totalorder %s145, 15
          %s147 = scalar_select %p146, %s145, 15
          %s148 = scalar_lea.vmem %s0, %s147
          %s149 = smul.u32 16, %s19
        $region16: #{_forward.8} parent=11 // pred_fallthru
          _
      $region12: #{_forward.8} parent=5 // pred_fallthru
        _
      %p150 = scmp.lt.s32.totalorder %s9, 2
      // Predicated region
      $region17: #{_forward.8} parent=5 // pred_check
        %p151 = pneg %p150
      $region18: #{_forward.8} parent=5 // pred_check_branch
        %153 = sbr.rel (%p151) target = $region20
      $region19: #{_forward.8} parent=5 // pred_region
        // Predicated region
        $region21: #{_forward.8} parent=19 // pred_check
          %p154 = pneg %p69
        $region22: #{_forward.8} parent=19 // pred_check_branch
          %156 = sbr.rel (%p154) target = $region24
        $region23: #{_forward.8} parent=19 // pred_region
          %s157 = sand.u32 %s59, 1
          %s158 = sand.u32 %s59, 1
          %s159 = smul.addr %s158, 1024
          %s160 = scalar_lea.vmem [#allocation3], %s159
          %s161 = smul.u32 256, %s17
          %s162 = smul.addr %s161, 2
          %s163 = sadd.s32 %s16, %s162
          %s164 = smul.addr %s163, 4
          %s165 = scalar_lea.vmem %s1, %s164
          // Predicated region
          $region25: #{_forward.8} parent=23 // pred_check
            _
          $region26: #{_forward.8} parent=23 // pred_check_branch
            %167 = sbr.rel (0) target = $region28
          $region27: #{_forward.8} parent=23 // pred_region
            // Predicated region
            $region29: #{_forward.8} parent=27 // pred_check
              _
            $region30: #{_forward.8} parent=27 // pred_check_branch
              %169 = sbr.rel target = $region32
            $region31: #{_forward.8} parent=27 // pred_region
              // Predicated region
              $region44: #{_forward.8} parent=31 // pred_check
                _
              $region45: #{_forward.8} parent=31 // pred_check_branch
                %695 = sbr.rel (0) target = $region47
              $region46: #{_forward.8} parent=31 // pred_region
                loop: start=0, step=1, limit=1
                $region48: #{_forward.8} parent=46 // loop_pre_header
                  _
                $region49: #{_forward.8} parent=46 // loop_header
                  %s697 = sphi 0, %s701
                  %p698 = scmp.ge.s32.totalorder %s697, 1
                  %s702 = sphi %s165, %s165
                  %s703 = sphi %s160, %s160
                $region50: #{_forward.8} parent=46 // loop_header_branch
                  %700 = sbr.rel (%p698) target = $region54
                $region51: #{_forward.8} parent=46 // loop_body
                  _
                $region52: #{_forward.8} parent=46 // loop_footer
                  %s701 = sadd.s32 1, %s697
                $region53: #{_forward.8} parent=46 // loop_footer_branch
                  %696 = sbr.rel target = $region49
                $region54: #{_forward.8} parent=46 // loop_exit
                  _
                %s705 = ssub.s32 16, 1
                loop: start=0, step=1, limit=1
                $region55: #{_forward.8} parent=46 // loop_pre_header
                  _
                $region56: #{_forward.8} parent=46 // loop_header
                  %s707 = sphi 0, %s711
                  %p708 = scmp.ge.s32.totalorder %s707, 1
                  %s712 = sphi %s165, %s165
                  %s713 = sphi %s160, %s160
                $region57: #{_forward.8} parent=46 // loop_header_branch
                  %710 = sbr.rel (%p708) target = $region61
                $region58: #{_forward.8} parent=46 // loop_body
                  %v714 = vld [vmem:[%s712] sm:%s705]
                  %715 = vst [vmem:[%s713] sm:%s705] %v714
                  %v716 = vld [vmem:[%s712 + $0x8] sm:%s705]
                  %717 = vst [vmem:[%s713 + $0x4] sm:%s705] %v716
                  %v718 = vld [vmem:[%s712 + $0x10] sm:%s705]
                  %719 = vst [vmem:[%s713 + $0x8] sm:%s705] %v718
                  %v720 = vld [vmem:[%s712 + $0x18] sm:%s705]
                  %721 = vst [vmem:[%s713 + $0xc] sm:%s705] %v720
                  %v722 = vld [vmem:[%s712 + $0x20] sm:%s705]
                  %723 = vst [vmem:[%s713 + $0x10] sm:%s705] %v722
                  %v724 = vld [vmem:[%s712 + $0x28] sm:%s705]
                  %725 = vst [vmem:[%s713 + $0x14] sm:%s705] %v724
                  %v726 = vld [vmem:[%s712 + $0x30] sm:%s705]
                  %727 = vst [vmem:[%s713 + $0x18] sm:%s705] %v726
                  %v728 = vld [vmem:[%s712 + $0x38] sm:%s705]
                  %729 = vst [vmem:[%s713 + $0x1c] sm:%s705] %v728
                  %v730 = vld [vmem:[%s712 + $0x40] sm:%s705]
                  %731 = vst [vmem:[%s713 + $0x20] sm:%s705] %v730
                  %v732 = vld [vmem:[%s712 + $0x48] sm:%s705]
                  %733 = vst [vmem:[%s713 + $0x24] sm:%s705] %v732
                  %v734 = vld [vmem:[%s712 + $0x50] sm:%s705]
                  %735 = vst [vmem:[%s713 + $0x28] sm:%s705] %v734
                  %v736 = vld [vmem:[%s712 + $0x58] sm:%s705]
                  %737 = vst [vmem:[%s713 + $0x2c] sm:%s705] %v736
                  %v738 = vld [vmem:[%s712 + $0x60] sm:%s705]
                  %739 = vst [vmem:[%s713 + $0x30] sm:%s705] %v738
                  %v740 = vld [vmem:[%s712 + $0x68] sm:%s705]
                  %741 = vst [vmem:[%s713 + $0x34] sm:%s705] %v740
                  %v742 = vld [vmem:[%s712 + $0x70] sm:%s705]
                  %743 = vst [vmem:[%s713 + $0x38] sm:%s705] %v742
                  %v744 = vld [vmem:[%s712 + $0x78] sm:%s705]
                  %745 = vst [vmem:[%s713 + $0x3c] sm:%s705] %v744
                  %v746 = vld [vmem:[%s712 + $0x80] sm:%s705]
                  %747 = vst [vmem:[%s713 + $0x40] sm:%s705] %v746
                  %v748 = vld [vmem:[%s712 + $0x88] sm:%s705]
                  %749 = vst [vmem:[%s713 + $0x44] sm:%s705] %v748
                  %v750 = vld [vmem:[%s712 + $0x90] sm:%s705]
                  %751 = vst [vmem:[%s713 + $0x48] sm:%s705] %v750
                  %v752 = vld [vmem:[%s712 + $0x98] sm:%s705]
                  %753 = vst [vmem:[%s713 + $0x4c] sm:%s705] %v752
                  %v754 = vld [vmem:[%s712 + $0xa0] sm:%s705]
                  %755 = vst [vmem:[%s713 + $0x50] sm:%s705] %v754
                  %v756 = vld [vmem:[%s712 + $0xa8] sm:%s705]
                  %757 = vst [vmem:[%s713 + $0x54] sm:%s705] %v756
                  %v758 = vld [vmem:[%s712 + $0xb0] sm:%s705]
                  %759 = vst [vmem:[%s713 + $0x58] sm:%s705] %v758
                  %v760 = vld [vmem:[%s712 + $0xb8] sm:%s705]
                  %761 = vst [vmem:[%s713 + $0x5c] sm:%s705] %v760
                  %v762 = vld [vmem:[%s712 + $0xc0] sm:%s705]
                  %763 = vst [vmem:[%s713 + $0x60] sm:%s705] %v762
                  %v764 = vld [vmem:[%s712 + $0xc8] sm:%s705]
                  %765 = vst [vmem:[%s713 + $0x64] sm:%s705] %v764
                  %v766 = vld [vmem:[%s712 + $0xd0] sm:%s705]
                  %767 = vst [vmem:[%s713 + $0x68] sm:%s705] %v766
                  %v768 = vld [vmem:[%s712 + $0xd8] sm:%s705]
                  %769 = vst [vmem:[%s713 + $0x6c] sm:%s705] %v768
                  %v770 = vld [vmem:[%s712 + $0xe0] sm:%s705]
                  %771 = vst [vmem:[%s713 + $0x70] sm:%s705] %v770
                  %v772 = vld [vmem:[%s712 + $0xe8] sm:%s705]
                  %773 = vst [vmem:[%s713 + $0x74] sm:%s705] %v772
                  %v774 = vld [vmem:[%s712 + $0xf0] sm:%s705]
                  %775 = vst [vmem:[%s713 + $0x78] sm:%s705] %v774
                  %v776 = vld [vmem:[%s712 + $0xf8] sm:%s705]
                  %777 = vst [vmem:[%s713 + $0x7c] sm:%s705] %v776
                  %v778 = vld [vmem:[%s712 + $0x100] sm:%s705]
                  %779 = vst [vmem:[%s713 + $0x80] sm:%s705] %v778
                  %v780 = vld [vmem:[%s712 + $0x108] sm:%s705]
                  %781 = vst [vmem:[%s713 + $0x84] sm:%s705] %v780
                  %v782 = vld [vmem:[%s712 + $0x110] sm:%s705]
                  %783 = vst [vmem:[%s713 + $0x88] sm:%s705] %v782
                  %v784 = vld [vmem:[%s712 + $0x118] sm:%s705]
                  %785 = vst [vmem:[%s713 + $0x8c] sm:%s705] %v784
                  %v786 = vld [vmem:[%s712 + $0x120] sm:%s705]
                  %787 = vst [vmem:[%s713 + $0x90] sm:%s705] %v786
                  %v788 = vld [vmem:[%s712 + $0x128] sm:%s705]
                  %789 = vst [vmem:[%s713 + $0x94] sm:%s705] %v788
                  %v790 = vld [vmem:[%s712 + $0x130] sm:%s705]
                  %791 = vst [vmem:[%s713 + $0x98] sm:%s705] %v790
                  %v792 = vld [vmem:[%s712 + $0x138] sm:%s705]
                  %793 = vst [vmem:[%s713 + $0x9c] sm:%s705] %v792
                  %v794 = vld [vmem:[%s712 + $0x140] sm:%s705]
                  %795 = vst [vmem:[%s713 + $0xa0] sm:%s705] %v794
                  %v796 = vld [vmem:[%s712 + $0x148] sm:%s705]
                  %797 = vst [vmem:[%s713 + $0xa4] sm:%s705] %v796
                  %v798 = vld [vmem:[%s712 + $0x150] sm:%s705]
                  %799 = vst [vmem:[%s713 + $0xa8] sm:%s705] %v798
                  %v800 = vld [vmem:[%s712 + $0x158] sm:%s705]
                  %801 = vst [vmem:[%s713 + $0xac] sm:%s705] %v800
                  %v802 = vld [vmem:[%s712 + $0x160] sm:%s705]
                  %803 = vst [vmem:[%s713 + $0xb0] sm:%s705] %v802
                  %v804 = vld [vmem:[%s712 + $0x168] sm:%s705]
                  %805 = vst [vmem:[%s713 + $0xb4] sm:%s705] %v804
                  %v806 = vld [vmem:[%s712 + $0x170] sm:%s705]
                  %807 = vst [vmem:[%s713 + $0xb8] sm:%s705] %v806
                  %v808 = vld [vmem:[%s712 + $0x178] sm:%s705]
                  %809 = vst [vmem:[%s713 + $0xbc] sm:%s705] %v808
                  %v810 = vld [vmem:[%s712 + $0x180] sm:%s705]
                  %811 = vst [vmem:[%s713 + $0xc0] sm:%s705] %v810
                  %v812 = vld [vmem:[%s712 + $0x188] sm:%s705]
                  %813 = vst [vmem:[%s713 + $0xc4] sm:%s705] %v812
                  %v814 = vld [vmem:[%s712 + $0x190] sm:%s705]
                  %815 = vst [vmem:[%s713 + $0xc8] sm:%s705] %v814
                  %v816 = vld [vmem:[%s712 + $0x198] sm:%s705]
                  %817 = vst [vmem:[%s713 + $0xcc] sm:%s705] %v816
                  %v818 = vld [vmem:[%s712 + $0x1a0] sm:%s705]
                  %819 = vst [vmem:[%s713 + $0xd0] sm:%s705] %v818
                  %v820 = vld [vmem:[%s712 + $0x1a8] sm:%s705]
                  %821 = vst [vmem:[%s713 + $0xd4] sm:%s705] %v820
                  %v822 = vld [vmem:[%s712 + $0x1b0] sm:%s705]
                  %823 = vst [vmem:[%s713 + $0xd8] sm:%s705] %v822
                  %v824 = vld [vmem:[%s712 + $0x1b8] sm:%s705]
                  %825 = vst [vmem:[%s713 + $0xdc] sm:%s705] %v824
                  %v826 = vld [vmem:[%s712 + $0x1c0] sm:%s705]
                  %827 = vst [vmem:[%s713 + $0xe0] sm:%s705] %v826
                  %v828 = vld [vmem:[%s712 + $0x1c8] sm:%s705]
                  %829 = vst [vmem:[%s713 + $0xe4] sm:%s705] %v828
                  %v830 = vld [vmem:[%s712 + $0x1d0] sm:%s705]
                  %831 = vst [vmem:[%s713 + $0xe8] sm:%s705] %v830
                  %v832 = vld [vmem:[%s712 + $0x1d8] sm:%s705]
                  %833 = vst [vmem:[%s713 + $0xec] sm:%s705] %v832
                  %v834 = vld [vmem:[%s712 + $0x1e0] sm:%s705]
                  %835 = vst [vmem:[%s713 + $0xf0] sm:%s705] %v834
                  %v836 = vld [vmem:[%s712 + $0x1e8] sm:%s705]
                  %837 = vst [vmem:[%s713 + $0xf4] sm:%s705] %v836
                  %v838 = vld [vmem:[%s712 + $0x1f0] sm:%s705]
                  %839 = vst [vmem:[%s713 + $0xf8] sm:%s705] %v838
                  %v840 = vld [vmem:[%s712 + $0x1f8] sm:%s705]
                  %841 = vst [vmem:[%s713 + $0xfc] sm:%s705] %v840
                  %v842 = vld [vmem:[%s712 + $0x200] sm:%s705]
                  %843 = vst [vmem:[%s713 + $0x100] sm:%s705] %v842
                  %v844 = vld [vmem:[%s712 + $0x208] sm:%s705]
                  %845 = vst [vmem:[%s713 + $0x104] sm:%s705] %v844
                  %v846 = vld [vmem:[%s712 + $0x210] sm:%s705]
                  %847 = vst [vmem:[%s713 + $0x108] sm:%s705] %v846
                  %v848 = vld [vmem:[%s712 + $0x218] sm:%s705]
                  %849 = vst [vmem:[%s713 + $0x10c] sm:%s705] %v848
                  %v850 = vld [vmem:[%s712 + $0x220] sm:%s705]
                  %851 = vst [vmem:[%s713 + $0x110] sm:%s705] %v850
                  %v852 = vld [vmem:[%s712 + $0x228] sm:%s705]
                  %853 = vst [vmem:[%s713 + $0x114] sm:%s705] %v852
                  %v854 = vld [vmem:[%s712 + $0x230] sm:%s705]
                  %855 = vst [vmem:[%s713 + $0x118] sm:%s705] %v854
                  %v856 = vld [vmem:[%s712 + $0x238] sm:%s705]
                  %857 = vst [vmem:[%s713 + $0x11c] sm:%s705] %v856
                  %v858 = vld [vmem:[%s712 + $0x240] sm:%s705]
                  %859 = vst [vmem:[%s713 + $0x120] sm:%s705] %v858
                  %v860 = vld [vmem:[%s712 + $0x248] sm:%s705]
                  %861 = vst [vmem:[%s713 + $0x124] sm:%s705] %v860
                  %v862 = vld [vmem:[%s712 + $0x250] sm:%s705]
                  %863 = vst [vmem:[%s713 + $0x128] sm:%s705] %v862
                  %v864 = vld [vmem:[%s712 + $0x258] sm:%s705]
                  %865 = vst [vmem:[%s713 + $0x12c] sm:%s705] %v864
                  %v866 = vld [vmem:[%s712 + $0x260] sm:%s705]
                  %867 = vst [vmem:[%s713 + $0x130] sm:%s705] %v866
                  %v868 = vld [vmem:[%s712 + $0x268] sm:%s705]
                  %869 = vst [vmem:[%s713 + $0x134] sm:%s705] %v868
                  %v870 = vld [vmem:[%s712 + $0x270] sm:%s705]
                  %871 = vst [vmem:[%s713 + $0x138] sm:%s705] %v870
                  %v872 = vld [vmem:[%s712 + $0x278] sm:%s705]
                  %873 = vst [vmem:[%s713 + $0x13c] sm:%s705] %v872
                  %v874 = vld [vmem:[%s712 + $0x280] sm:%s705]
                  %875 = vst [vmem:[%s713 + $0x140] sm:%s705] %v874
                  %v876 = vld [vmem:[%s712 + $0x288] sm:%s705]
                  %877 = vst [vmem:[%s713 + $0x144] sm:%s705] %v876
                  %v878 = vld [vmem:[%s712 + $0x290] sm:%s705]
                  %879 = vst [vmem:[%s713 + $0x148] sm:%s705] %v878
                  %v880 = vld [vmem:[%s712 + $0x298] sm:%s705]
                  %881 = vst [vmem:[%s713 + $0x14c] sm:%s705] %v880
                  %v882 = vld [vmem:[%s712 + $0x2a0] sm:%s705]
                  %883 = vst [vmem:[%s713 + $0x150] sm:%s705] %v882
                  %v884 = vld [vmem:[%s712 + $0x2a8] sm:%s705]
                  %885 = vst [vmem:[%s713 + $0x154] sm:%s705] %v884
                  %v886 = vld [vmem:[%s712 + $0x2b0] sm:%s705]
                  %887 = vst [vmem:[%s713 + $0x158] sm:%s705] %v886
                  %v888 = vld [vmem:[%s712 + $0x2b8] sm:%s705]
                  %889 = vst [vmem:[%s713 + $0x15c] sm:%s705] %v888
                  %v890 = vld [vmem:[%s712 + $0x2c0] sm:%s705]
                  %891 = vst [vmem:[%s713 + $0x160] sm:%s705] %v890
                  %v892 = vld [vmem:[%s712 + $0x2c8] sm:%s705]
                  %893 = vst [vmem:[%s713 + $0x164] sm:%s705] %v892
                  %v894 = vld [vmem:[%s712 + $0x2d0] sm:%s705]
                  %895 = vst [vmem:[%s713 + $0x168] sm:%s705] %v894
                  %v896 = vld [vmem:[%s712 + $0x2d8] sm:%s705]
                  %897 = vst [vmem:[%s713 + $0x16c] sm:%s705] %v896
                  %v898 = vld [vmem:[%s712 + $0x2e0] sm:%s705]
                  %899 = vst [vmem:[%s713 + $0x170] sm:%s705] %v898
                  %v900 = vld [vmem:[%s712 + $0x2e8] sm:%s705]
                  %901 = vst [vmem:[%s713 + $0x174] sm:%s705] %v900
                  %v902 = vld [vmem:[%s712 + $0x2f0] sm:%s705]
                  %903 = vst [vmem:[%s713 + $0x178] sm:%s705] %v902
                  %v904 = vld [vmem:[%s712 + $0x2f8] sm:%s705]
                  %905 = vst [vmem:[%s713 + $0x17c] sm:%s705] %v904
                  %v906 = vld [vmem:[%s712 + $0x300] sm:%s705]
                  %907 = vst [vmem:[%s713 + $0x180] sm:%s705] %v906
                  %v908 = vld [vmem:[%s712 + $0x308] sm:%s705]
                  %909 = vst [vmem:[%s713 + $0x184] sm:%s705] %v908
                  %v910 = vld [vmem:[%s712 + $0x310] sm:%s705]
                  %911 = vst [vmem:[%s713 + $0x188] sm:%s705] %v910
                  %v912 = vld [vmem:[%s712 + $0x318] sm:%s705]
                  %913 = vst [vmem:[%s713 + $0x18c] sm:%s705] %v912
                  %v914 = vld [vmem:[%s712 + $0x320] sm:%s705]
                  %915 = vst [vmem:[%s713 + $0x190] sm:%s705] %v914
                  %v916 = vld [vmem:[%s712 + $0x328] sm:%s705]
                  %917 = vst [vmem:[%s713 + $0x194] sm:%s705] %v916
                  %v918 = vld [vmem:[%s712 + $0x330] sm:%s705]
                  %919 = vst [vmem:[%s713 + $0x198] sm:%s705] %v918
                  %v920 = vld [vmem:[%s712 + $0x338] sm:%s705]
                  %921 = vst [vmem:[%s713 + $0x19c] sm:%s705] %v920
                  %v922 = vld [vmem:[%s712 + $0x340] sm:%s705]
                  %923 = vst [vmem:[%s713 + $0x1a0] sm:%s705] %v922
                  %v924 = vld [vmem:[%s712 + $0x348] sm:%s705]
                  %925 = vst [vmem:[%s713 + $0x1a4] sm:%s705] %v924
                  %v926 = vld [vmem:[%s712 + $0x350] sm:%s705]
                  %927 = vst [vmem:[%s713 + $0x1a8] sm:%s705] %v926
                  %v928 = vld [vmem:[%s712 + $0x358] sm:%s705]
                  %929 = vst [vmem:[%s713 + $0x1ac] sm:%s705] %v928
                  %v930 = vld [vmem:[%s712 + $0x360] sm:%s705]
                  %931 = vst [vmem:[%s713 + $0x1b0] sm:%s705] %v930
                  %v932 = vld [vmem:[%s712 + $0x368] sm:%s705]
                  %933 = vst [vmem:[%s713 + $0x1b4] sm:%s705] %v932
                  %v934 = vld [vmem:[%s712 + $0x370] sm:%s705]
                  %935 = vst [vmem:[%s713 + $0x1b8] sm:%s705] %v934
                  %v936 = vld [vmem:[%s712 + $0x378] sm:%s705]
                  %937 = vst [vmem:[%s713 + $0x1bc] sm:%s705] %v936
                  %v938 = vld [vmem:[%s712 + $0x380] sm:%s705]
                  %939 = vst [vmem:[%s713 + $0x1c0] sm:%s705] %v938
                  %v940 = vld [vmem:[%s712 + $0x388] sm:%s705]
                  %941 = vst [vmem:[%s713 + $0x1c4] sm:%s705] %v940
                  %v942 = vld [vmem:[%s712 + $0x390] sm:%s705]
                  %943 = vst [vmem:[%s713 + $0x1c8] sm:%s705] %v942
                  %v944 = vld [vmem:[%s712 + $0x398] sm:%s705]
                  %945 = vst [vmem:[%s713 + $0x1cc] sm:%s705] %v944
                  %v946 = vld [vmem:[%s712 + $0x3a0] sm:%s705]
                  %947 = vst [vmem:[%s713 + $0x1d0] sm:%s705] %v946
                  %v948 = vld [vmem:[%s712 + $0x3a8] sm:%s705]
                  %949 = vst [vmem:[%s713 + $0x1d4] sm:%s705] %v948
                  %v950 = vld [vmem:[%s712 + $0x3b0] sm:%s705]
                  %951 = vst [vmem:[%s713 + $0x1d8] sm:%s705] %v950
                  %v952 = vld [vmem:[%s712 + $0x3b8] sm:%s705]
                  %953 = vst [vmem:[%s713 + $0x1dc] sm:%s705] %v952
                  %v954 = vld [vmem:[%s712 + $0x3c0] sm:%s705]
                  %955 = vst [vmem:[%s713 + $0x1e0] sm:%s705] %v954
                  %v956 = vld [vmem:[%s712 + $0x3c8] sm:%s705]
                  %957 = vst [vmem:[%s713 + $0x1e4] sm:%s705] %v956
                  %v958 = vld [vmem:[%s712 + $0x3d0] sm:%s705]
                  %959 = vst [vmem:[%s713 + $0x1e8] sm:%s705] %v958
                  %v960 = vld [vmem:[%s712 + $0x3d8] sm:%s705]
                  %961 = vst [vmem:[%s713 + $0x1ec] sm:%s705] %v960
                  %v962 = vld [vmem:[%s712 + $0x3e0] sm:%s705]
                  %963 = vst [vmem:[%s713 + $0x1f0] sm:%s705] %v962
                  %v964 = vld [vmem:[%s712 + $0x3e8] sm:%s705]
                  %965 = vst [vmem:[%s713 + $0x1f4] sm:%s705] %v964
                  %v966 = vld [vmem:[%s712 + $0x3f0] sm:%s705]
                  %967 = vst [vmem:[%s713 + $0x1f8] sm:%s705] %v966
                  %v968 = vld [vmem:[%s712 + $0x3f8] sm:%s705]
                  %969 = vst [vmem:[%s713 + $0x1fc] sm:%s705] %v968
                  %v970 = vld [vmem:[%s712 + $0x400] sm:%s705]
                  %971 = vst [vmem:[%s713 + $0x200] sm:%s705] %v970
                  %v972 = vld [vmem:[%s712 + $0x408] sm:%s705]
                  %973 = vst [vmem:[%s713 + $0x204] sm:%s705] %v972
                  %v974 = vld [vmem:[%s712 + $0x410] sm:%s705]
                  %975 = vst [vmem:[%s713 + $0x208] sm:%s705] %v974
                  %v976 = vld [vmem:[%s712 + $0x418] sm:%s705]
                  %977 = vst [vmem:[%s713 + $0x20c] sm:%s705] %v976
                  %v978 = vld [vmem:[%s712 + $0x420] sm:%s705]
                  %979 = vst [vmem:[%s713 + $0x210] sm:%s705] %v978
                  %v980 = vld [vmem:[%s712 + $0x428] sm:%s705]
                  %981 = vst [vmem:[%s713 + $0x214] sm:%s705] %v980
                  %v982 = vld [vmem:[%s712 + $0x430] sm:%s705]
                  %983 = vst [vmem:[%s713 + $0x218] sm:%s705] %v982
                  %v984 = vld [vmem:[%s712 + $0x438] sm:%s705]
                  %985 = vst [vmem:[%s713 + $0x21c] sm:%s705] %v984
                  %v986 = vld [vmem:[%s712 + $0x440] sm:%s705]
                  %987 = vst [vmem:[%s713 + $0x220] sm:%s705] %v986
                  %v988 = vld [vmem:[%s712 + $0x448] sm:%s705]
                  %989 = vst [vmem:[%s713 + $0x224] sm:%s705] %v988
                  %v990 = vld [vmem:[%s712 + $0x450] sm:%s705]
                  %991 = vst [vmem:[%s713 + $0x228] sm:%s705] %v990
                  %v992 = vld [vmem:[%s712 + $0x458] sm:%s705]
                  %993 = vst [vmem:[%s713 + $0x22c] sm:%s705] %v992
                  %v994 = vld [vmem:[%s712 + $0x460] sm:%s705]
                  %995 = vst [vmem:[%s713 + $0x230] sm:%s705] %v994
                  %v996 = vld [vmem:[%s712 + $0x468] sm:%s705]
                  %997 = vst [vmem:[%s713 + $0x234] sm:%s705] %v996
                  %v998 = vld [vmem:[%s712 + $0x470] sm:%s705]
                  %999 = vst [vmem:[%s713 + $0x238] sm:%s705] %v998
                  %v1000 = vld [vmem:[%s712 + $0x478] sm:%s705]
                  %1001 = vst [vmem:[%s713 + $0x23c] sm:%s705] %v1000
                  %v1002 = vld [vmem:[%s712 + $0x480] sm:%s705]
                  %1003 = vst [vmem:[%s713 + $0x240] sm:%s705] %v1002
                  %v1004 = vld [vmem:[%s712 + $0x488] sm:%s705]
                  %1005 = vst [vmem:[%s713 + $0x244] sm:%s705] %v1004
                  %v1006 = vld [vmem:[%s712 + $0x490] sm:%s705]
                  %1007 = vst [vmem:[%s713 + $0x248] sm:%s705] %v1006
                  %v1008 = vld [vmem:[%s712 + $0x498] sm:%s705]
                  %1009 = vst [vmem:[%s713 + $0x24c] sm:%s705] %v1008
                  %v1010 = vld [vmem:[%s712 + $0x4a0] sm:%s705]
                  %1011 = vst [vmem:[%s713 + $0x250] sm:%s705] %v1010
                  %v1012 = vld [vmem:[%s712 + $0x4a8] sm:%s705]
                  %1013 = vst [vmem:[%s713 + $0x254] sm:%s705] %v1012
                  %v1014 = vld [vmem:[%s712 + $0x4b0] sm:%s705]
                  %1015 = vst [vmem:[%s713 + $0x258] sm:%s705] %v1014
                  %v1016 = vld [vmem:[%s712 + $0x4b8] sm:%s705]
                  %1017 = vst [vmem:[%s713 + $0x25c] sm:%s705] %v1016
                  %v1018 = vld [vmem:[%s712 + $0x4c0] sm:%s705]
                  %1019 = vst [vmem:[%s713 + $0x260] sm:%s705] %v1018
                  %v1020 = vld [vmem:[%s712 + $0x4c8] sm:%s705]
                  %1021 = vst [vmem:[%s713 + $0x264] sm:%s705] %v1020
                  %v1022 = vld [vmem:[%s712 + $0x4d0] sm:%s705]
                  %1023 = vst [vmem:[%s713 + $0x268] sm:%s705] %v1022
                  %v1024 = vld [vmem:[%s712 + $0x4d8] sm:%s705]
                  %1025 = vst [vmem:[%s713 + $0x26c] sm:%s705] %v1024
                  %v1026 = vld [vmem:[%s712 + $0x4e0] sm:%s705]
                  %1027 = vst [vmem:[%s713 + $0x270] sm:%s705] %v1026
                  %v1028 = vld [vmem:[%s712 + $0x4e8] sm:%s705]
                  %1029 = vst [vmem:[%s713 + $0x274] sm:%s705] %v1028
                  %v1030 = vld [vmem:[%s712 + $0x4f0] sm:%s705]
                  %1031 = vst [vmem:[%s713 + $0x278] sm:%s705] %v1030
                  %v1032 = vld [vmem:[%s712 + $0x4f8] sm:%s705]
                  %1033 = vst [vmem:[%s713 + $0x27c] sm:%s705] %v1032
                  %v1034 = vld [vmem:[%s712 + $0x500] sm:%s705]
                  %1035 = vst [vmem:[%s713 + $0x280] sm:%s705] %v1034
                  %v1036 = vld [vmem:[%s712 + $0x508] sm:%s705]
                  %1037 = vst [vmem:[%s713 + $0x284] sm:%s705] %v1036
                  %v1038 = vld [vmem:[%s712 + $0x510] sm:%s705]
                  %1039 = vst [vmem:[%s713 + $0x288] sm:%s705] %v1038
                  %v1040 = vld [vmem:[%s712 + $0x518] sm:%s705]
                  %1041 = vst [vmem:[%s713 + $0x28c] sm:%s705] %v1040
                  %v1042 = vld [vmem:[%s712 + $0x520] sm:%s705]
                  %1043 = vst [vmem:[%s713 + $0x290] sm:%s705] %v1042
                  %v1044 = vld [vmem:[%s712 + $0x528] sm:%s705]
                  %1045 = vst [vmem:[%s713 + $0x294] sm:%s705] %v1044
                  %v1046 = vld [vmem:[%s712 + $0x530] sm:%s705]
                  %1047 = vst [vmem:[%s713 + $0x298] sm:%s705] %v1046
                  %v1048 = vld [vmem:[%s712 + $0x538] sm:%s705]
                  %1049 = vst [vmem:[%s713 + $0x29c] sm:%s705] %v1048
                  %v1050 = vld [vmem:[%s712 + $0x540] sm:%s705]
                  %1051 = vst [vmem:[%s713 + $0x2a0] sm:%s705] %v1050
                  %v1052 = vld [vmem:[%s712 + $0x548] sm:%s705]
                  %1053 = vst [vmem:[%s713 + $0x2a4] sm:%s705] %v1052
                  %v1054 = vld [vmem:[%s712 + $0x550] sm:%s705]
                  %1055 = vst [vmem:[%s713 + $0x2a8] sm:%s705] %v1054
                  %v1056 = vld [vmem:[%s712 + $0x558] sm:%s705]
                  %1057 = vst [vmem:[%s713 + $0x2ac] sm:%s705] %v1056
                  %v1058 = vld [vmem:[%s712 + $0x560] sm:%s705]
                  %1059 = vst [vmem:[%s713 + $0x2b0] sm:%s705] %v1058
                  %v1060 = vld [vmem:[%s712 + $0x568] sm:%s705]
                  %1061 = vst [vmem:[%s713 + $0x2b4] sm:%s705] %v1060
                  %v1062 = vld [vmem:[%s712 + $0x570] sm:%s705]
                  %1063 = vst [vmem:[%s713 + $0x2b8] sm:%s705] %v1062
                  %v1064 = vld [vmem:[%s712 + $0x578] sm:%s705]
                  %1065 = vst [vmem:[%s713 + $0x2bc] sm:%s705] %v1064
                  %v1066 = vld [vmem:[%s712 + $0x580] sm:%s705]
                  %1067 = vst [vmem:[%s713 + $0x2c0] sm:%s705] %v1066
                  %v1068 = vld [vmem:[%s712 + $0x588] sm:%s705]
                  %1069 = vst [vmem:[%s713 + $0x2c4] sm:%s705] %v1068
                  %v1070 = vld [vmem:[%s712 + $0x590] sm:%s705]
                  %1071 = vst [vmem:[%s713 + $0x2c8] sm:%s705] %v1070
                  %v1072 = vld [vmem:[%s712 + $0x598] sm:%s705]
                  %1073 = vst [vmem:[%s713 + $0x2cc] sm:%s705] %v1072
                  %v1074 = vld [vmem:[%s712 + $0x5a0] sm:%s705]
                  %1075 = vst [vmem:[%s713 + $0x2d0] sm:%s705] %v1074
                  %v1076 = vld [vmem:[%s712 + $0x5a8] sm:%s705]
                  %1077 = vst [vmem:[%s713 + $0x2d4] sm:%s705] %v1076
                  %v1078 = vld [vmem:[%s712 + $0x5b0] sm:%s705]
                  %1079 = vst [vmem:[%s713 + $0x2d8] sm:%s705] %v1078
                  %v1080 = vld [vmem:[%s712 + $0x5b8] sm:%s705]
                  %1081 = vst [vmem:[%s713 + $0x2dc] sm:%s705] %v1080
                  %v1082 = vld [vmem:[%s712 + $0x5c0] sm:%s705]
                  %1083 = vst [vmem:[%s713 + $0x2e0] sm:%s705] %v1082
                  %v1084 = vld [vmem:[%s712 + $0x5c8] sm:%s705]
                  %1085 = vst [vmem:[%s713 + $0x2e4] sm:%s705] %v1084
                  %v1086 = vld [vmem:[%s712 + $0x5d0] sm:%s705]
                  %1087 = vst [vmem:[%s713 + $0x2e8] sm:%s705] %v1086
                  %v1088 = vld [vmem:[%s712 + $0x5d8] sm:%s705]
                  %1089 = vst [vmem:[%s713 + $0x2ec] sm:%s705] %v1088
                  %v1090 = vld [vmem:[%s712 + $0x5e0] sm:%s705]
                  %1091 = vst [vmem:[%s713 + $0x2f0] sm:%s705] %v1090
                  %v1092 = vld [vmem:[%s712 + $0x5e8] sm:%s705]
                  %1093 = vst [vmem:[%s713 + $0x2f4] sm:%s705] %v1092
                  %v1094 = vld [vmem:[%s712 + $0x5f0] sm:%s705]
                  %1095 = vst [vmem:[%s713 + $0x2f8] sm:%s705] %v1094
                  %v1096 = vld [vmem:[%s712 + $0x5f8] sm:%s705]
                  %1097 = vst [vmem:[%s713 + $0x2fc] sm:%s705] %v1096
                  %v1098 = vld [vmem:[%s712 + $0x600] sm:%s705]
                  %1099 = vst [vmem:[%s713 + $0x300] sm:%s705] %v1098
                  %v1100 = vld [vmem:[%s712 + $0x608] sm:%s705]
                  %1101 = vst [vmem:[%s713 + $0x304] sm:%s705] %v1100
                  %v1102 = vld [vmem:[%s712 + $0x610] sm:%s705]
                  %1103 = vst [vmem:[%s713 + $0x308] sm:%s705] %v1102
                  %v1104 = vld [vmem:[%s712 + $0x618] sm:%s705]
                  %1105 = vst [vmem:[%s713 + $0x30c] sm:%s705] %v1104
                  %v1106 = vld [vmem:[%s712 + $0x620] sm:%s705]
                  %1107 = vst [vmem:[%s713 + $0x310] sm:%s705] %v1106
                  %v1108 = vld [vmem:[%s712 + $0x628] sm:%s705]
                  %1109 = vst [vmem:[%s713 + $0x314] sm:%s705] %v1108
                  %v1110 = vld [vmem:[%s712 + $0x630] sm:%s705]
                  %1111 = vst [vmem:[%s713 + $0x318] sm:%s705] %v1110
                  %v1112 = vld [vmem:[%s712 + $0x638] sm:%s705]
                  %1113 = vst [vmem:[%s713 + $0x31c] sm:%s705] %v1112
                  %v1114 = vld [vmem:[%s712 + $0x640] sm:%s705]
                  %1115 = vst [vmem:[%s713 + $0x320] sm:%s705] %v1114
                  %v1116 = vld [vmem:[%s712 + $0x648] sm:%s705]
                  %1117 = vst [vmem:[%s713 + $0x324] sm:%s705] %v1116
                  %v1118 = vld [vmem:[%s712 + $0x650] sm:%s705]
                  %1119 = vst [vmem:[%s713 + $0x328] sm:%s705] %v1118
                  %v1120 = vld [vmem:[%s712 + $0x658] sm:%s705]
                  %1121 = vst [vmem:[%s713 + $0x32c] sm:%s705] %v1120
                  %v1122 = vld [vmem:[%s712 + $0x660] sm:%s705]
                  %1123 = vst [vmem:[%s713 + $0x330] sm:%s705] %v1122
                  %v1124 = vld [vmem:[%s712 + $0x668] sm:%s705]
                  %1125 = vst [vmem:[%s713 + $0x334] sm:%s705] %v1124
                  %v1126 = vld [vmem:[%s712 + $0x670] sm:%s705]
                  %1127 = vst [vmem:[%s713 + $0x338] sm:%s705] %v1126
                  %v1128 = vld [vmem:[%s712 + $0x678] sm:%s705]
                  %1129 = vst [vmem:[%s713 + $0x33c] sm:%s705] %v1128
                  %v1130 = vld [vmem:[%s712 + $0x680] sm:%s705]
                  %1131 = vst [vmem:[%s713 + $0x340] sm:%s705] %v1130
                  %v1132 = vld [vmem:[%s712 + $0x688] sm:%s705]
                  %1133 = vst [vmem:[%s713 + $0x344] sm:%s705] %v1132
                  %v1134 = vld [vmem:[%s712 + $0x690] sm:%s705]
                  %1135 = vst [vmem:[%s713 + $0x348] sm:%s705] %v1134
                  %v1136 = vld [vmem:[%s712 + $0x698] sm:%s705]
                  %1137 = vst [vmem:[%s713 + $0x34c] sm:%s705] %v1136
                  %v1138 = vld [vmem:[%s712 + $0x6a0] sm:%s705]
                  %1139 = vst [vmem:[%s713 + $0x350] sm:%s705] %v1138
                  %v1140 = vld [vmem:[%s712 + $0x6a8] sm:%s705]
                  %1141 = vst [vmem:[%s713 + $0x354] sm:%s705] %v1140
                  %v1142 = vld [vmem:[%s712 + $0x6b0] sm:%s705]
                  %1143 = vst [vmem:[%s713 + $0x358] sm:%s705] %v1142
                  %v1144 = vld [vmem:[%s712 + $0x6b8] sm:%s705]
                  %1145 = vst [vmem:[%s713 + $0x35c] sm:%s705] %v1144
                  %v1146 = vld [vmem:[%s712 + $0x6c0] sm:%s705]
                  %1147 = vst [vmem:[%s713 + $0x360] sm:%s705] %v1146
                  %v1148 = vld [vmem:[%s712 + $0x6c8] sm:%s705]
                  %1149 = vst [vmem:[%s713 + $0x364] sm:%s705] %v1148
                  %v1150 = vld [vmem:[%s712 + $0x6d0] sm:%s705]
                  %1151 = vst [vmem:[%s713 + $0x368] sm:%s705] %v1150
                  %v1152 = vld [vmem:[%s712 + $0x6d8] sm:%s705]
                  %1153 = vst [vmem:[%s713 + $0x36c] sm:%s705] %v1152
                  %v1154 = vld [vmem:[%s712 + $0x6e0] sm:%s705]
                  %1155 = vst [vmem:[%s713 + $0x370] sm:%s705] %v1154
                  %v1156 = vld [vmem:[%s712 + $0x6e8] sm:%s705]
                  %1157 = vst [vmem:[%s713 + $0x374] sm:%s705] %v1156
                  %v1158 = vld [vmem:[%s712 + $0x6f0] sm:%s705]
                  %1159 = vst [vmem:[%s713 + $0x378] sm:%s705] %v1158
                  %v1160 = vld [vmem:[%s712 + $0x6f8] sm:%s705]
                  %1161 = vst [vmem:[%s713 + $0x37c] sm:%s705] %v1160
                  %v1162 = vld [vmem:[%s712 + $0x700] sm:%s705]
                  %1163 = vst [vmem:[%s713 + $0x380] sm:%s705] %v1162
                  %v1164 = vld [vmem:[%s712 + $0x708] sm:%s705]
                  %1165 = vst [vmem:[%s713 + $0x384] sm:%s705] %v1164
                  %v1166 = vld [vmem:[%s712 + $0x710] sm:%s705]
                  %1167 = vst [vmem:[%s713 + $0x388] sm:%s705] %v1166
                  %v1168 = vld [vmem:[%s712 + $0x718] sm:%s705]
                  %1169 = vst [vmem:[%s713 + $0x38c] sm:%s705] %v1168
                  %v1170 = vld [vmem:[%s712 + $0x720] sm:%s705]
                  %1171 = vst [vmem:[%s713 + $0x390] sm:%s705] %v1170
                  %v1172 = vld [vmem:[%s712 + $0x728] sm:%s705]
                  %1173 = vst [vmem:[%s713 + $0x394] sm:%s705] %v1172
                  %v1174 = vld [vmem:[%s712 + $0x730] sm:%s705]
                  %1175 = vst [vmem:[%s713 + $0x398] sm:%s705] %v1174
                  %v1176 = vld [vmem:[%s712 + $0x738] sm:%s705]
                  %1177 = vst [vmem:[%s713 + $0x39c] sm:%s705] %v1176
                  %v1178 = vld [vmem:[%s712 + $0x740] sm:%s705]
                  %1179 = vst [vmem:[%s713 + $0x3a0] sm:%s705] %v1178
                  %v1180 = vld [vmem:[%s712 + $0x748] sm:%s705]
                  %1181 = vst [vmem:[%s713 + $0x3a4] sm:%s705] %v1180
                  %v1182 = vld [vmem:[%s712 + $0x750] sm:%s705]
                  %1183 = vst [vmem:[%s713 + $0x3a8] sm:%s705] %v1182
                  %v1184 = vld [vmem:[%s712 + $0x758] sm:%s705]
                  %1185 = vst [vmem:[%s713 + $0x3ac] sm:%s705] %v1184
                  %v1186 = vld [vmem:[%s712 + $0x760] sm:%s705]
                  %1187 = vst [vmem:[%s713 + $0x3b0] sm:%s705] %v1186
                  %v1188 = vld [vmem:[%s712 + $0x768] sm:%s705]
                  %1189 = vst [vmem:[%s713 + $0x3b4] sm:%s705] %v1188
                  %v1190 = vld [vmem:[%s712 + $0x770] sm:%s705]
                  %1191 = vst [vmem:[%s713 + $0x3b8] sm:%s705] %v1190
                  %v1192 = vld [vmem:[%s712 + $0x778] sm:%s705]
                  %1193 = vst [vmem:[%s713 + $0x3bc] sm:%s705] %v1192
                  %v1194 = vld [vmem:[%s712 + $0x780] sm:%s705]
                  %1195 = vst [vmem:[%s713 + $0x3c0] sm:%s705] %v1194
                  %v1196 = vld [vmem:[%s712 + $0x788] sm:%s705]
                  %1197 = vst [vmem:[%s713 + $0x3c4] sm:%s705] %v1196
                  %v1198 = vld [vmem:[%s712 + $0x790] sm:%s705]
                  %1199 = vst [vmem:[%s713 + $0x3c8] sm:%s705] %v1198
                  %v1200 = vld [vmem:[%s712 + $0x798] sm:%s705]
                  %1201 = vst [vmem:[%s713 + $0x3cc] sm:%s705] %v1200
                  %v1202 = vld [vmem:[%s712 + $0x7a0] sm:%s705]
                  %1203 = vst [vmem:[%s713 + $0x3d0] sm:%s705] %v1202
                  %v1204 = vld [vmem:[%s712 + $0x7a8] sm:%s705]
                  %1205 = vst [vmem:[%s713 + $0x3d4] sm:%s705] %v1204
                  %v1206 = vld [vmem:[%s712 + $0x7b0] sm:%s705]
                  %1207 = vst [vmem:[%s713 + $0x3d8] sm:%s705] %v1206
                  %v1208 = vld [vmem:[%s712 + $0x7b8] sm:%s705]
                  %1209 = vst [vmem:[%s713 + $0x3dc] sm:%s705] %v1208
                  %v1210 = vld [vmem:[%s712 + $0x7c0] sm:%s705]
                  %1211 = vst [vmem:[%s713 + $0x3e0] sm:%s705] %v1210
                  %v1212 = vld [vmem:[%s712 + $0x7c8] sm:%s705]
                  %1213 = vst [vmem:[%s713 + $0x3e4] sm:%s705] %v1212
                  %v1214 = vld [vmem:[%s712 + $0x7d0] sm:%s705]
                  %1215 = vst [vmem:[%s713 + $0x3e8] sm:%s705] %v1214
                  %v1216 = vld [vmem:[%s712 + $0x7d8] sm:%s705]
                  %1217 = vst [vmem:[%s713 + $0x3ec] sm:%s705] %v1216
                  %v1218 = vld [vmem:[%s712 + $0x7e0] sm:%s705]
                  %1219 = vst [vmem:[%s713 + $0x3f0] sm:%s705] %v1218
                  %v1220 = vld [vmem:[%s712 + $0x7e8] sm:%s705]
                  %1221 = vst [vmem:[%s713 + $0x3f4] sm:%s705] %v1220
                  %v1222 = vld [vmem:[%s712 + $0x7f0] sm:%s705]
                  %1223 = vst [vmem:[%s713 + $0x3f8] sm:%s705] %v1222
                  %v1224 = vld [vmem:[%s712 + $0x7f8] sm:%s705]
                  %1225 = vst [vmem:[%s713 + $0x3fc] sm:%s705] %v1224
                $region59: #{_forward.8} parent=46 // loop_footer
                  %s711 = sadd.s32 1, %s707
                $region60: #{_forward.8} parent=46 // loop_footer_branch
                  %706 = sbr.rel target = $region56
                $region61: #{_forward.8} parent=46 // loop_exit
                  _
              $region47: #{_forward.8} parent=31 // pred_fallthru
                _
            $region32: #{_forward.8} parent=27 // pred_fallthru
              _
            // Predicated region
            $region33: #{_forward.8} parent=27 // pred_check
              _
            $region34: #{_forward.8} parent=27 // pred_check_branch
              %171 = sbr.rel (0) target = $region36
            $region35: #{_forward.8} parent=27 // pred_region
              %s173 = ssub.s32 16, 1
              loop: start=0, step=1, limit=1
              $region37: #{_forward.8} parent=35 // loop_pre_header
                _
              $region38: #{_forward.8} parent=35 // loop_header
                %s175 = sphi 0, %s179
                %p176 = scmp.ge.s32.totalorder %s175, 1
                %s180 = sphi %s165, %s165
                %s181 = sphi %s160, %s160
              $region39: #{_forward.8} parent=35 // loop_header_branch
                %178 = sbr.rel (%p176) target = $region43
              $region40: #{_forward.8} parent=35 // loop_body
                %v182 = vld [vmem:[%s180] sm:%s173]
                %183 = vst [vmem:[%s181] sm:%s173] %v182
                %v184 = vld [vmem:[%s180 + $0x8] sm:%s173]
                %185 = vst [vmem:[%s181 + $0x4] sm:%s173] %v184
                %v186 = vld [vmem:[%s180 + $0x10] sm:%s173]
                %187 = vst [vmem:[%s181 + $0x8] sm:%s173] %v186
                %v188 = vld [vmem:[%s180 + $0x18] sm:%s173]
                %189 = vst [vmem:[%s181 + $0xc] sm:%s173] %v188
                %v190 = vld [vmem:[%s180 + $0x20] sm:%s173]
                %191 = vst [vmem:[%s181 + $0x10] sm:%s173] %v190
                %v192 = vld [vmem:[%s180 + $0x28] sm:%s173]
                %193 = vst [vmem:[%s181 + $0x14] sm:%s173] %v192
                %v194 = vld [vmem:[%s180 + $0x30] sm:%s173]
                %195 = vst [vmem:[%s181 + $0x18] sm:%s173] %v194
                %v196 = vld [vmem:[%s180 + $0x38] sm:%s173]
                %197 = vst [vmem:[%s181 + $0x1c] sm:%s173] %v196
                %v198 = vld [vmem:[%s180 + $0x40] sm:%s173]
                %199 = vst [vmem:[%s181 + $0x20] sm:%s173] %v198
                %v200 = vld [vmem:[%s180 + $0x48] sm:%s173]
                %201 = vst [vmem:[%s181 + $0x24] sm:%s173] %v200
                %v202 = vld [vmem:[%s180 + $0x50] sm:%s173]
                %203 = vst [vmem:[%s181 + $0x28] sm:%s173] %v202
                %v204 = vld [vmem:[%s180 + $0x58] sm:%s173]
                %205 = vst [vmem:[%s181 + $0x2c] sm:%s173] %v204
                %v206 = vld [vmem:[%s180 + $0x60] sm:%s173]
                %207 = vst [vmem:[%s181 + $0x30] sm:%s173] %v206
                %v208 = vld [vmem:[%s180 + $0x68] sm:%s173]
                %209 = vst [vmem:[%s181 + $0x34] sm:%s173] %v208
                %v210 = vld [vmem:[%s180 + $0x70] sm:%s173]
                %211 = vst [vmem:[%s181 + $0x38] sm:%s173] %v210
                %v212 = vld [vmem:[%s180 + $0x78] sm:%s173]
                %213 = vst [vmem:[%s181 + $0x3c] sm:%s173] %v212
                %v214 = vld [vmem:[%s180 + $0x80] sm:%s173]
                %215 = vst [vmem:[%s181 + $0x40] sm:%s173] %v214
                %v216 = vld [vmem:[%s180 + $0x88] sm:%s173]
                %217 = vst [vmem:[%s181 + $0x44] sm:%s173] %v216
                %v218 = vld [vmem:[%s180 + $0x90] sm:%s173]
                %219 = vst [vmem:[%s181 + $0x48] sm:%s173] %v218
                %v220 = vld [vmem:[%s180 + $0x98] sm:%s173]
                %221 = vst [vmem:[%s181 + $0x4c] sm:%s173] %v220
                %v222 = vld [vmem:[%s180 + $0xa0] sm:%s173]
                %223 = vst [vmem:[%s181 + $0x50] sm:%s173] %v222
                %v224 = vld [vmem:[%s180 + $0xa8] sm:%s173]
                %225 = vst [vmem:[%s181 + $0x54] sm:%s173] %v224
                %v226 = vld [vmem:[%s180 + $0xb0] sm:%s173]
                %227 = vst [vmem:[%s181 + $0x58] sm:%s173] %v226
                %v228 = vld [vmem:[%s180 + $0xb8] sm:%s173]
                %229 = vst [vmem:[%s181 + $0x5c] sm:%s173] %v228
                %v230 = vld [vmem:[%s180 + $0xc0] sm:%s173]
                %231 = vst [vmem:[%s181 + $0x60] sm:%s173] %v230
                %v232 = vld [vmem:[%s180 + $0xc8] sm:%s173]
                %233 = vst [vmem:[%s181 + $0x64] sm:%s173] %v232
                %v234 = vld [vmem:[%s180 + $0xd0] sm:%s173]
                %235 = vst [vmem:[%s181 + $0x68] sm:%s173] %v234
                %v236 = vld [vmem:[%s180 + $0xd8] sm:%s173]
                %237 = vst [vmem:[%s181 + $0x6c] sm:%s173] %v236
                %v238 = vld [vmem:[%s180 + $0xe0] sm:%s173]
                %239 = vst [vmem:[%s181 + $0x70] sm:%s173] %v238
                %v240 = vld [vmem:[%s180 + $0xe8] sm:%s173]
                %241 = vst [vmem:[%s181 + $0x74] sm:%s173] %v240
                %v242 = vld [vmem:[%s180 + $0xf0] sm:%s173]
                %243 = vst [vmem:[%s181 + $0x78] sm:%s173] %v242
                %v244 = vld [vmem:[%s180 + $0xf8] sm:%s173]
                %245 = vst [vmem:[%s181 + $0x7c] sm:%s173] %v244
                %v246 = vld [vmem:[%s180 + $0x100] sm:%s173]
                %247 = vst [vmem:[%s181 + $0x80] sm:%s173] %v246
                %v248 = vld [vmem:[%s180 + $0x108] sm:%s173]
                %249 = vst [vmem:[%s181 + $0x84] sm:%s173] %v248
                %v250 = vld [vmem:[%s180 + $0x110] sm:%s173]
                %251 = vst [vmem:[%s181 + $0x88] sm:%s173] %v250
                %v252 = vld [vmem:[%s180 + $0x118] sm:%s173]
                %253 = vst [vmem:[%s181 + $0x8c] sm:%s173] %v252
                %v254 = vld [vmem:[%s180 + $0x120] sm:%s173]
                %255 = vst [vmem:[%s181 + $0x90] sm:%s173] %v254
                %v256 = vld [vmem:[%s180 + $0x128] sm:%s173]
                %257 = vst [vmem:[%s181 + $0x94] sm:%s173] %v256
                %v258 = vld [vmem:[%s180 + $0x130] sm:%s173]
                %259 = vst [vmem:[%s181 + $0x98] sm:%s173] %v258
                %v260 = vld [vmem:[%s180 + $0x138] sm:%s173]
                %261 = vst [vmem:[%s181 + $0x9c] sm:%s173] %v260
                %v262 = vld [vmem:[%s180 + $0x140] sm:%s173]
                %263 = vst [vmem:[%s181 + $0xa0] sm:%s173] %v262
                %v264 = vld [vmem:[%s180 + $0x148] sm:%s173]
                %265 = vst [vmem:[%s181 + $0xa4] sm:%s173] %v264
                %v266 = vld [vmem:[%s180 + $0x150] sm:%s173]
                %267 = vst [vmem:[%s181 + $0xa8] sm:%s173] %v266
                %v268 = vld [vmem:[%s180 + $0x158] sm:%s173]
                %269 = vst [vmem:[%s181 + $0xac] sm:%s173] %v268
                %v270 = vld [vmem:[%s180 + $0x160] sm:%s173]
                %271 = vst [vmem:[%s181 + $0xb0] sm:%s173] %v270
                %v272 = vld [vmem:[%s180 + $0x168] sm:%s173]
                %273 = vst [vmem:[%s181 + $0xb4] sm:%s173] %v272
                %v274 = vld [vmem:[%s180 + $0x170] sm:%s173]
                %275 = vst [vmem:[%s181 + $0xb8] sm:%s173] %v274
                %v276 = vld [vmem:[%s180 + $0x178] sm:%s173]
                %277 = vst [vmem:[%s181 + $0xbc] sm:%s173] %v276
                %v278 = vld [vmem:[%s180 + $0x180] sm:%s173]
                %279 = vst [vmem:[%s181 + $0xc0] sm:%s173] %v278
                %v280 = vld [vmem:[%s180 + $0x188] sm:%s173]
                %281 = vst [vmem:[%s181 + $0xc4] sm:%s173] %v280
                %v282 = vld [vmem:[%s180 + $0x190] sm:%s173]
                %283 = vst [vmem:[%s181 + $0xc8] sm:%s173] %v282
                %v284 = vld [vmem:[%s180 + $0x198] sm:%s173]
                %285 = vst [vmem:[%s181 + $0xcc] sm:%s173] %v284
                %v286 = vld [vmem:[%s180 + $0x1a0] sm:%s173]
                %287 = vst [vmem:[%s181 + $0xd0] sm:%s173] %v286
                %v288 = vld [vmem:[%s180 + $0x1a8] sm:%s173]
                %289 = vst [vmem:[%s181 + $0xd4] sm:%s173] %v288
                %v290 = vld [vmem:[%s180 + $0x1b0] sm:%s173]
                %291 = vst [vmem:[%s181 + $0xd8] sm:%s173] %v290
                %v292 = vld [vmem:[%s180 + $0x1b8] sm:%s173]
                %293 = vst [vmem:[%s181 + $0xdc] sm:%s173] %v292
                %v294 = vld [vmem:[%s180 + $0x1c0] sm:%s173]
                %295 = vst [vmem:[%s181 + $0xe0] sm:%s173] %v294
                %v296 = vld [vmem:[%s180 + $0x1c8] sm:%s173]
                %297 = vst [vmem:[%s181 + $0xe4] sm:%s173] %v296
                %v298 = vld [vmem:[%s180 + $0x1d0] sm:%s173]
                %299 = vst [vmem:[%s181 + $0xe8] sm:%s173] %v298
                %v300 = vld [vmem:[%s180 + $0x1d8] sm:%s173]
                %301 = vst [vmem:[%s181 + $0xec] sm:%s173] %v300
                %v302 = vld [vmem:[%s180 + $0x1e0] sm:%s173]
                %303 = vst [vmem:[%s181 + $0xf0] sm:%s173] %v302
                %v304 = vld [vmem:[%s180 + $0x1e8] sm:%s173]
                %305 = vst [vmem:[%s181 + $0xf4] sm:%s173] %v304
                %v306 = vld [vmem:[%s180 + $0x1f0] sm:%s173]
                %307 = vst [vmem:[%s181 + $0xf8] sm:%s173] %v306
                %v308 = vld [vmem:[%s180 + $0x1f8] sm:%s173]
                %309 = vst [vmem:[%s181 + $0xfc] sm:%s173] %v308
                %v310 = vld [vmem:[%s180 + $0x200] sm:%s173]
                %311 = vst [vmem:[%s181 + $0x100] sm:%s173] %v310
                %v312 = vld [vmem:[%s180 + $0x208] sm:%s173]
                %313 = vst [vmem:[%s181 + $0x104] sm:%s173] %v312
                %v314 = vld [vmem:[%s180 + $0x210] sm:%s173]
                %315 = vst [vmem:[%s181 + $0x108] sm:%s173] %v314
                %v316 = vld [vmem:[%s180 + $0x218] sm:%s173]
                %317 = vst [vmem:[%s181 + $0x10c] sm:%s173] %v316
                %v318 = vld [vmem:[%s180 + $0x220] sm:%s173]
                %319 = vst [vmem:[%s181 + $0x110] sm:%s173] %v318
                %v320 = vld [vmem:[%s180 + $0x228] sm:%s173]
                %321 = vst [vmem:[%s181 + $0x114] sm:%s173] %v320
                %v322 = vld [vmem:[%s180 + $0x230] sm:%s173]
                %323 = vst [vmem:[%s181 + $0x118] sm:%s173] %v322
                %v324 = vld [vmem:[%s180 + $0x238] sm:%s173]
                %325 = vst [vmem:[%s181 + $0x11c] sm:%s173] %v324
                %v326 = vld [vmem:[%s180 + $0x240] sm:%s173]
                %327 = vst [vmem:[%s181 + $0x120] sm:%s173] %v326
                %v328 = vld [vmem:[%s180 + $0x248] sm:%s173]
                %329 = vst [vmem:[%s181 + $0x124] sm:%s173] %v328
                %v330 = vld [vmem:[%s180 + $0x250] sm:%s173]
                %331 = vst [vmem:[%s181 + $0x128] sm:%s173] %v330
                %v332 = vld [vmem:[%s180 + $0x258] sm:%s173]
                %333 = vst [vmem:[%s181 + $0x12c] sm:%s173] %v332
                %v334 = vld [vmem:[%s180 + $0x260] sm:%s173]
                %335 = vst [vmem:[%s181 + $0x130] sm:%s173] %v334
                %v336 = vld [vmem:[%s180 + $0x268] sm:%s173]
                %337 = vst [vmem:[%s181 + $0x134] sm:%s173] %v336
                %v338 = vld [vmem:[%s180 + $0x270] sm:%s173]
                %339 = vst [vmem:[%s181 + $0x138] sm:%s173] %v338
                %v340 = vld [vmem:[%s180 + $0x278] sm:%s173]
                %341 = vst [vmem:[%s181 + $0x13c] sm:%s173] %v340
                %v342 = vld [vmem:[%s180 + $0x280] sm:%s173]
                %343 = vst [vmem:[%s181 + $0x140] sm:%s173] %v342
                %v344 = vld [vmem:[%s180 + $0x288] sm:%s173]
                %345 = vst [vmem:[%s181 + $0x144] sm:%s173] %v344
                %v346 = vld [vmem:[%s180 + $0x290] sm:%s173]
                %347 = vst [vmem:[%s181 + $0x148] sm:%s173] %v346
                %v348 = vld [vmem:[%s180 + $0x298] sm:%s173]
                %349 = vst [vmem:[%s181 + $0x14c] sm:%s173] %v348
                %v350 = vld [vmem:[%s180 + $0x2a0] sm:%s173]
                %351 = vst [vmem:[%s181 + $0x150] sm:%s173] %v350
                %v352 = vld [vmem:[%s180 + $0x2a8] sm:%s173]
                %353 = vst [vmem:[%s181 + $0x154] sm:%s173] %v352
                %v354 = vld [vmem:[%s180 + $0x2b0] sm:%s173]
                %355 = vst [vmem:[%s181 + $0x158] sm:%s173] %v354
                %v356 = vld [vmem:[%s180 + $0x2b8] sm:%s173]
                %357 = vst [vmem:[%s181 + $0x15c] sm:%s173] %v356
                %v358 = vld [vmem:[%s180 + $0x2c0] sm:%s173]
                %359 = vst [vmem:[%s181 + $0x160] sm:%s173] %v358
                %v360 = vld [vmem:[%s180 + $0x2c8] sm:%s173]
                %361 = vst [vmem:[%s181 + $0x164] sm:%s173] %v360
                %v362 = vld [vmem:[%s180 + $0x2d0] sm:%s173]
                %363 = vst [vmem:[%s181 + $0x168] sm:%s173] %v362
                %v364 = vld [vmem:[%s180 + $0x2d8] sm:%s173]
                %365 = vst [vmem:[%s181 + $0x16c] sm:%s173] %v364
                %v366 = vld [vmem:[%s180 + $0x2e0] sm:%s173]
                %367 = vst [vmem:[%s181 + $0x170] sm:%s173] %v366
                %v368 = vld [vmem:[%s180 + $0x2e8] sm:%s173]
                %369 = vst [vmem:[%s181 + $0x174] sm:%s173] %v368
                %v370 = vld [vmem:[%s180 + $0x2f0] sm:%s173]
                %371 = vst [vmem:[%s181 + $0x178] sm:%s173] %v370
                %v372 = vld [vmem:[%s180 + $0x2f8] sm:%s173]
                %373 = vst [vmem:[%s181 + $0x17c] sm:%s173] %v372
                %v374 = vld [vmem:[%s180 + $0x300] sm:%s173]
                %375 = vst [vmem:[%s181 + $0x180] sm:%s173] %v374
                %v376 = vld [vmem:[%s180 + $0x308] sm:%s173]
                %377 = vst [vmem:[%s181 + $0x184] sm:%s173] %v376
                %v378 = vld [vmem:[%s180 + $0x310] sm:%s173]
                %379 = vst [vmem:[%s181 + $0x188] sm:%s173] %v378
                %v380 = vld [vmem:[%s180 + $0x318] sm:%s173]
                %381 = vst [vmem:[%s181 + $0x18c] sm:%s173] %v380
                %v382 = vld [vmem:[%s180 + $0x320] sm:%s173]
                %383 = vst [vmem:[%s181 + $0x190] sm:%s173] %v382
                %v384 = vld [vmem:[%s180 + $0x328] sm:%s173]
                %385 = vst [vmem:[%s181 + $0x194] sm:%s173] %v384
                %v386 = vld [vmem:[%s180 + $0x330] sm:%s173]
                %387 = vst [vmem:[%s181 + $0x198] sm:%s173] %v386
                %v388 = vld [vmem:[%s180 + $0x338] sm:%s173]
                %389 = vst [vmem:[%s181 + $0x19c] sm:%s173] %v388
                %v390 = vld [vmem:[%s180 + $0x340] sm:%s173]
                %391 = vst [vmem:[%s181 + $0x1a0] sm:%s173] %v390
                %v392 = vld [vmem:[%s180 + $0x348] sm:%s173]
                %393 = vst [vmem:[%s181 + $0x1a4] sm:%s173] %v392
                %v394 = vld [vmem:[%s180 + $0x350] sm:%s173]
                %395 = vst [vmem:[%s181 + $0x1a8] sm:%s173] %v394
                %v396 = vld [vmem:[%s180 + $0x358] sm:%s173]
                %397 = vst [vmem:[%s181 + $0x1ac] sm:%s173] %v396
                %v398 = vld [vmem:[%s180 + $0x360] sm:%s173]
                %399 = vst [vmem:[%s181 + $0x1b0] sm:%s173] %v398
                %v400 = vld [vmem:[%s180 + $0x368] sm:%s173]
                %401 = vst [vmem:[%s181 + $0x1b4] sm:%s173] %v400
                %v402 = vld [vmem:[%s180 + $0x370] sm:%s173]
                %403 = vst [vmem:[%s181 + $0x1b8] sm:%s173] %v402
                %v404 = vld [vmem:[%s180 + $0x378] sm:%s173]
                %405 = vst [vmem:[%s181 + $0x1bc] sm:%s173] %v404
                %v406 = vld [vmem:[%s180 + $0x380] sm:%s173]
                %407 = vst [vmem:[%s181 + $0x1c0] sm:%s173] %v406
                %v408 = vld [vmem:[%s180 + $0x388] sm:%s173]
                %409 = vst [vmem:[%s181 + $0x1c4] sm:%s173] %v408
                %v410 = vld [vmem:[%s180 + $0x390] sm:%s173]
                %411 = vst [vmem:[%s181 + $0x1c8] sm:%s173] %v410
                %v412 = vld [vmem:[%s180 + $0x398] sm:%s173]
                %413 = vst [vmem:[%s181 + $0x1cc] sm:%s173] %v412
                %v414 = vld [vmem:[%s180 + $0x3a0] sm:%s173]
                %415 = vst [vmem:[%s181 + $0x1d0] sm:%s173] %v414
                %v416 = vld [vmem:[%s180 + $0x3a8] sm:%s173]
                %417 = vst [vmem:[%s181 + $0x1d4] sm:%s173] %v416
                %v418 = vld [vmem:[%s180 + $0x3b0] sm:%s173]
                %419 = vst [vmem:[%s181 + $0x1d8] sm:%s173] %v418
                %v420 = vld [vmem:[%s180 + $0x3b8] sm:%s173]
                %421 = vst [vmem:[%s181 + $0x1dc] sm:%s173] %v420
                %v422 = vld [vmem:[%s180 + $0x3c0] sm:%s173]
                %423 = vst [vmem:[%s181 + $0x1e0] sm:%s173] %v422
                %v424 = vld [vmem:[%s180 + $0x3c8] sm:%s173]
                %425 = vst [vmem:[%s181 + $0x1e4] sm:%s173] %v424
                %v426 = vld [vmem:[%s180 + $0x3d0] sm:%s173]
                %427 = vst [vmem:[%s181 + $0x1e8] sm:%s173] %v426
                %v428 = vld [vmem:[%s180 + $0x3d8] sm:%s173]
                %429 = vst [vmem:[%s181 + $0x1ec] sm:%s173] %v428
                %v430 = vld [vmem:[%s180 + $0x3e0] sm:%s173]
                %431 = vst [vmem:[%s181 + $0x1f0] sm:%s173] %v430
                %v432 = vld [vmem:[%s180 + $0x3e8] sm:%s173]
                %433 = vst [vmem:[%s181 + $0x1f4] sm:%s173] %v432
                %v434 = vld [vmem:[%s180 + $0x3f0] sm:%s173]
                %435 = vst [vmem:[%s181 + $0x1f8] sm:%s173] %v434
                %v436 = vld [vmem:[%s180 + $0x3f8] sm:%s173]
                %437 = vst [vmem:[%s181 + $0x1fc] sm:%s173] %v436
                %v438 = vld [vmem:[%s180 + $0x400] sm:%s173]
                %439 = vst [vmem:[%s181 + $0x200] sm:%s173] %v438
                %v440 = vld [vmem:[%s180 + $0x408] sm:%s173]
                %441 = vst [vmem:[%s181 + $0x204] sm:%s173] %v440
                %v442 = vld [vmem:[%s180 + $0x410] sm:%s173]
                %443 = vst [vmem:[%s181 + $0x208] sm:%s173] %v442
                %v444 = vld [vmem:[%s180 + $0x418] sm:%s173]
                %445 = vst [vmem:[%s181 + $0x20c] sm:%s173] %v444
                %v446 = vld [vmem:[%s180 + $0x420] sm:%s173]
                %447 = vst [vmem:[%s181 + $0x210] sm:%s173] %v446
                %v448 = vld [vmem:[%s180 + $0x428] sm:%s173]
                %449 = vst [vmem:[%s181 + $0x214] sm:%s173] %v448
                %v450 = vld [vmem:[%s180 + $0x430] sm:%s173]
                %451 = vst [vmem:[%s181 + $0x218] sm:%s173] %v450
                %v452 = vld [vmem:[%s180 + $0x438] sm:%s173]
                %453 = vst [vmem:[%s181 + $0x21c] sm:%s173] %v452
                %v454 = vld [vmem:[%s180 + $0x440] sm:%s173]
                %455 = vst [vmem:[%s181 + $0x220] sm:%s173] %v454
                %v456 = vld [vmem:[%s180 + $0x448] sm:%s173]
                %457 = vst [vmem:[%s181 + $0x224] sm:%s173] %v456
                %v458 = vld [vmem:[%s180 + $0x450] sm:%s173]
                %459 = vst [vmem:[%s181 + $0x228] sm:%s173] %v458
                %v460 = vld [vmem:[%s180 + $0x458] sm:%s173]
                %461 = vst [vmem:[%s181 + $0x22c] sm:%s173] %v460
                %v462 = vld [vmem:[%s180 + $0x460] sm:%s173]
                %463 = vst [vmem:[%s181 + $0x230] sm:%s173] %v462
                %v464 = vld [vmem:[%s180 + $0x468] sm:%s173]
                %465 = vst [vmem:[%s181 + $0x234] sm:%s173] %v464
                %v466 = vld [vmem:[%s180 + $0x470] sm:%s173]
                %467 = vst [vmem:[%s181 + $0x238] sm:%s173] %v466
                %v468 = vld [vmem:[%s180 + $0x478] sm:%s173]
                %469 = vst [vmem:[%s181 + $0x23c] sm:%s173] %v468
                %v470 = vld [vmem:[%s180 + $0x480] sm:%s173]
                %471 = vst [vmem:[%s181 + $0x240] sm:%s173] %v470
                %v472 = vld [vmem:[%s180 + $0x488] sm:%s173]
                %473 = vst [vmem:[%s181 + $0x244] sm:%s173] %v472
                %v474 = vld [vmem:[%s180 + $0x490] sm:%s173]
                %475 = vst [vmem:[%s181 + $0x248] sm:%s173] %v474
                %v476 = vld [vmem:[%s180 + $0x498] sm:%s173]
                %477 = vst [vmem:[%s181 + $0x24c] sm:%s173] %v476
                %v478 = vld [vmem:[%s180 + $0x4a0] sm:%s173]
                %479 = vst [vmem:[%s181 + $0x250] sm:%s173] %v478
                %v480 = vld [vmem:[%s180 + $0x4a8] sm:%s173]
                %481 = vst [vmem:[%s181 + $0x254] sm:%s173] %v480
                %v482 = vld [vmem:[%s180 + $0x4b0] sm:%s173]
                %483 = vst [vmem:[%s181 + $0x258] sm:%s173] %v482
                %v484 = vld [vmem:[%s180 + $0x4b8] sm:%s173]
                %485 = vst [vmem:[%s181 + $0x25c] sm:%s173] %v484
                %v486 = vld [vmem:[%s180 + $0x4c0] sm:%s173]
                %487 = vst [vmem:[%s181 + $0x260] sm:%s173] %v486
                %v488 = vld [vmem:[%s180 + $0x4c8] sm:%s173]
                %489 = vst [vmem:[%s181 + $0x264] sm:%s173] %v488
                %v490 = vld [vmem:[%s180 + $0x4d0] sm:%s173]
                %491 = vst [vmem:[%s181 + $0x268] sm:%s173] %v490
                %v492 = vld [vmem:[%s180 + $0x4d8] sm:%s173]
                %493 = vst [vmem:[%s181 + $0x26c] sm:%s173] %v492
                %v494 = vld [vmem:[%s180 + $0x4e0] sm:%s173]
                %495 = vst [vmem:[%s181 + $0x270] sm:%s173] %v494
                %v496 = vld [vmem:[%s180 + $0x4e8] sm:%s173]
                %497 = vst [vmem:[%s181 + $0x274] sm:%s173] %v496
                %v498 = vld [vmem:[%s180 + $0x4f0] sm:%s173]
                %499 = vst [vmem:[%s181 + $0x278] sm:%s173] %v498
                %v500 = vld [vmem:[%s180 + $0x4f8] sm:%s173]
                %501 = vst [vmem:[%s181 + $0x27c] sm:%s173] %v500
                %v502 = vld [vmem:[%s180 + $0x500] sm:%s173]
                %503 = vst [vmem:[%s181 + $0x280] sm:%s173] %v502
                %v504 = vld [vmem:[%s180 + $0x508] sm:%s173]
                %505 = vst [vmem:[%s181 + $0x284] sm:%s173] %v504
                %v506 = vld [vmem:[%s180 + $0x510] sm:%s173]
                %507 = vst [vmem:[%s181 + $0x288] sm:%s173] %v506
                %v508 = vld [vmem:[%s180 + $0x518] sm:%s173]
                %509 = vst [vmem:[%s181 + $0x28c] sm:%s173] %v508
                %v510 = vld [vmem:[%s180 + $0x520] sm:%s173]
                %511 = vst [vmem:[%s181 + $0x290] sm:%s173] %v510
                %v512 = vld [vmem:[%s180 + $0x528] sm:%s173]
                %513 = vst [vmem:[%s181 + $0x294] sm:%s173] %v512
                %v514 = vld [vmem:[%s180 + $0x530] sm:%s173]
                %515 = vst [vmem:[%s181 + $0x298] sm:%s173] %v514
                %v516 = vld [vmem:[%s180 + $0x538] sm:%s173]
                %517 = vst [vmem:[%s181 + $0x29c] sm:%s173] %v516
                %v518 = vld [vmem:[%s180 + $0x540] sm:%s173]
                %519 = vst [vmem:[%s181 + $0x2a0] sm:%s173] %v518
                %v520 = vld [vmem:[%s180 + $0x548] sm:%s173]
                %521 = vst [vmem:[%s181 + $0x2a4] sm:%s173] %v520
                %v522 = vld [vmem:[%s180 + $0x550] sm:%s173]
                %523 = vst [vmem:[%s181 + $0x2a8] sm:%s173] %v522
                %v524 = vld [vmem:[%s180 + $0x558] sm:%s173]
                %525 = vst [vmem:[%s181 + $0x2ac] sm:%s173] %v524
                %v526 = vld [vmem:[%s180 + $0x560] sm:%s173]
                %527 = vst [vmem:[%s181 + $0x2b0] sm:%s173] %v526
                %v528 = vld [vmem:[%s180 + $0x568] sm:%s173]
                %529 = vst [vmem:[%s181 + $0x2b4] sm:%s173] %v528
                %v530 = vld [vmem:[%s180 + $0x570] sm:%s173]
                %531 = vst [vmem:[%s181 + $0x2b8] sm:%s173] %v530
                %v532 = vld [vmem:[%s180 + $0x578] sm:%s173]
                %533 = vst [vmem:[%s181 + $0x2bc] sm:%s173] %v532
                %v534 = vld [vmem:[%s180 + $0x580] sm:%s173]
                %535 = vst [vmem:[%s181 + $0x2c0] sm:%s173] %v534
                %v536 = vld [vmem:[%s180 + $0x588] sm:%s173]
                %537 = vst [vmem:[%s181 + $0x2c4] sm:%s173] %v536
                %v538 = vld [vmem:[%s180 + $0x590] sm:%s173]
                %539 = vst [vmem:[%s181 + $0x2c8] sm:%s173] %v538
                %v540 = vld [vmem:[%s180 + $0x598] sm:%s173]
                %541 = vst [vmem:[%s181 + $0x2cc] sm:%s173] %v540
                %v542 = vld [vmem:[%s180 + $0x5a0] sm:%s173]
                %543 = vst [vmem:[%s181 + $0x2d0] sm:%s173] %v542
                %v544 = vld [vmem:[%s180 + $0x5a8] sm:%s173]
                %545 = vst [vmem:[%s181 + $0x2d4] sm:%s173] %v544
                %v546 = vld [vmem:[%s180 + $0x5b0] sm:%s173]
                %547 = vst [vmem:[%s181 + $0x2d8] sm:%s173] %v546
                %v548 = vld [vmem:[%s180 + $0x5b8] sm:%s173]
                %549 = vst [vmem:[%s181 + $0x2dc] sm:%s173] %v548
                %v550 = vld [vmem:[%s180 + $0x5c0] sm:%s173]
                %551 = vst [vmem:[%s181 + $0x2e0] sm:%s173] %v550
                %v552 = vld [vmem:[%s180 + $0x5c8] sm:%s173]
                %553 = vst [vmem:[%s181 + $0x2e4] sm:%s173] %v552
                %v554 = vld [vmem:[%s180 + $0x5d0] sm:%s173]
                %555 = vst [vmem:[%s181 + $0x2e8] sm:%s173] %v554
                %v556 = vld [vmem:[%s180 + $0x5d8] sm:%s173]
                %557 = vst [vmem:[%s181 + $0x2ec] sm:%s173] %v556
                %v558 = vld [vmem:[%s180 + $0x5e0] sm:%s173]
                %559 = vst [vmem:[%s181 + $0x2f0] sm:%s173] %v558
                %v560 = vld [vmem:[%s180 + $0x5e8] sm:%s173]
                %561 = vst [vmem:[%s181 + $0x2f4] sm:%s173] %v560
                %v562 = vld [vmem:[%s180 + $0x5f0] sm:%s173]
                %563 = vst [vmem:[%s181 + $0x2f8] sm:%s173] %v562
                %v564 = vld [vmem:[%s180 + $0x5f8] sm:%s173]
                %565 = vst [vmem:[%s181 + $0x2fc] sm:%s173] %v564
                %v566 = vld [vmem:[%s180 + $0x600] sm:%s173]
                %567 = vst [vmem:[%s181 + $0x300] sm:%s173] %v566
                %v568 = vld [vmem:[%s180 + $0x608] sm:%s173]
                %569 = vst [vmem:[%s181 + $0x304] sm:%s173] %v568
                %v570 = vld [vmem:[%s180 + $0x610] sm:%s173]
                %571 = vst [vmem:[%s181 + $0x308] sm:%s173] %v570
                %v572 = vld [vmem:[%s180 + $0x618] sm:%s173]
                %573 = vst [vmem:[%s181 + $0x30c] sm:%s173] %v572
                %v574 = vld [vmem:[%s180 + $0x620] sm:%s173]
                %575 = vst [vmem:[%s181 + $0x310] sm:%s173] %v574
                %v576 = vld [vmem:[%s180 + $0x628] sm:%s173]
                %577 = vst [vmem:[%s181 + $0x314] sm:%s173] %v576
                %v578 = vld [vmem:[%s180 + $0x630] sm:%s173]
                %579 = vst [vmem:[%s181 + $0x318] sm:%s173] %v578
                %v580 = vld [vmem:[%s180 + $0x638] sm:%s173]
                %581 = vst [vmem:[%s181 + $0x31c] sm:%s173] %v580
                %v582 = vld [vmem:[%s180 + $0x640] sm:%s173]
                %583 = vst [vmem:[%s181 + $0x320] sm:%s173] %v582
                %v584 = vld [vmem:[%s180 + $0x648] sm:%s173]
                %585 = vst [vmem:[%s181 + $0x324] sm:%s173] %v584
                %v586 = vld [vmem:[%s180 + $0x650] sm:%s173]
                %587 = vst [vmem:[%s181 + $0x328] sm:%s173] %v586
                %v588 = vld [vmem:[%s180 + $0x658] sm:%s173]
                %589 = vst [vmem:[%s181 + $0x32c] sm:%s173] %v588
                %v590 = vld [vmem:[%s180 + $0x660] sm:%s173]
                %591 = vst [vmem:[%s181 + $0x330] sm:%s173] %v590
                %v592 = vld [vmem:[%s180 + $0x668] sm:%s173]
                %593 = vst [vmem:[%s181 + $0x334] sm:%s173] %v592
                %v594 = vld [vmem:[%s180 + $0x670] sm:%s173]
                %595 = vst [vmem:[%s181 + $0x338] sm:%s173] %v594
                %v596 = vld [vmem:[%s180 + $0x678] sm:%s173]
                %597 = vst [vmem:[%s181 + $0x33c] sm:%s173] %v596
                %v598 = vld [vmem:[%s180 + $0x680] sm:%s173]
                %599 = vst [vmem:[%s181 + $0x340] sm:%s173] %v598
                %v600 = vld [vmem:[%s180 + $0x688] sm:%s173]
                %601 = vst [vmem:[%s181 + $0x344] sm:%s173] %v600
                %v602 = vld [vmem:[%s180 + $0x690] sm:%s173]
                %603 = vst [vmem:[%s181 + $0x348] sm:%s173] %v602
                %v604 = vld [vmem:[%s180 + $0x698] sm:%s173]
                %605 = vst [vmem:[%s181 + $0x34c] sm:%s173] %v604
                %v606 = vld [vmem:[%s180 + $0x6a0] sm:%s173]
                %607 = vst [vmem:[%s181 + $0x350] sm:%s173] %v606
                %v608 = vld [vmem:[%s180 + $0x6a8] sm:%s173]
                %609 = vst [vmem:[%s181 + $0x354] sm:%s173] %v608
                %v610 = vld [vmem:[%s180 + $0x6b0] sm:%s173]
                %611 = vst [vmem:[%s181 + $0x358] sm:%s173] %v610
                %v612 = vld [vmem:[%s180 + $0x6b8] sm:%s173]
                %613 = vst [vmem:[%s181 + $0x35c] sm:%s173] %v612
                %v614 = vld [vmem:[%s180 + $0x6c0] sm:%s173]
                %615 = vst [vmem:[%s181 + $0x360] sm:%s173] %v614
                %v616 = vld [vmem:[%s180 + $0x6c8] sm:%s173]
                %617 = vst [vmem:[%s181 + $0x364] sm:%s173] %v616
                %v618 = vld [vmem:[%s180 + $0x6d0] sm:%s173]
                %619 = vst [vmem:[%s181 + $0x368] sm:%s173] %v618
                %v620 = vld [vmem:[%s180 + $0x6d8] sm:%s173]
                %621 = vst [vmem:[%s181 + $0x36c] sm:%s173] %v620
                %v622 = vld [vmem:[%s180 + $0x6e0] sm:%s173]
                %623 = vst [vmem:[%s181 + $0x370] sm:%s173] %v622
                %v624 = vld [vmem:[%s180 + $0x6e8] sm:%s173]
                %625 = vst [vmem:[%s181 + $0x374] sm:%s173] %v624
                %v626 = vld [vmem:[%s180 + $0x6f0] sm:%s173]
                %627 = vst [vmem:[%s181 + $0x378] sm:%s173] %v626
                %v628 = vld [vmem:[%s180 + $0x6f8] sm:%s173]
                %629 = vst [vmem:[%s181 + $0x37c] sm:%s173] %v628
                %v630 = vld [vmem:[%s180 + $0x700] sm:%s173]
                %631 = vst [vmem:[%s181 + $0x380] sm:%s173] %v630
                %v632 = vld [vmem:[%s180 + $0x708] sm:%s173]
                %633 = vst [vmem:[%s181 + $0x384] sm:%s173] %v632
                %v634 = vld [vmem:[%s180 + $0x710] sm:%s173]
                %635 = vst [vmem:[%s181 + $0x388] sm:%s173] %v634
                %v636 = vld [vmem:[%s180 + $0x718] sm:%s173]
                %637 = vst [vmem:[%s181 + $0x38c] sm:%s173] %v636
                %v638 = vld [vmem:[%s180 + $0x720] sm:%s173]
                %639 = vst [vmem:[%s181 + $0x390] sm:%s173] %v638
                %v640 = vld [vmem:[%s180 + $0x728] sm:%s173]
                %641 = vst [vmem:[%s181 + $0x394] sm:%s173] %v640
                %v642 = vld [vmem:[%s180 + $0x730] sm:%s173]
                %643 = vst [vmem:[%s181 + $0x398] sm:%s173] %v642
                %v644 = vld [vmem:[%s180 + $0x738] sm:%s173]
                %645 = vst [vmem:[%s181 + $0x39c] sm:%s173] %v644
                %v646 = vld [vmem:[%s180 + $0x740] sm:%s173]
                %647 = vst [vmem:[%s181 + $0x3a0] sm:%s173] %v646
                %v648 = vld [vmem:[%s180 + $0x748] sm:%s173]
                %649 = vst [vmem:[%s181 + $0x3a4] sm:%s173] %v648
                %v650 = vld [vmem:[%s180 + $0x750] sm:%s173]
                %651 = vst [vmem:[%s181 + $0x3a8] sm:%s173] %v650
                %v652 = vld [vmem:[%s180 + $0x758] sm:%s173]
                %653 = vst [vmem:[%s181 + $0x3ac] sm:%s173] %v652
                %v654 = vld [vmem:[%s180 + $0x760] sm:%s173]
                %655 = vst [vmem:[%s181 + $0x3b0] sm:%s173] %v654
                %v656 = vld [vmem:[%s180 + $0x768] sm:%s173]
                %657 = vst [vmem:[%s181 + $0x3b4] sm:%s173] %v656
                %v658 = vld [vmem:[%s180 + $0x770] sm:%s173]
                %659 = vst [vmem:[%s181 + $0x3b8] sm:%s173] %v658
                %v660 = vld [vmem:[%s180 + $0x778] sm:%s173]
                %661 = vst [vmem:[%s181 + $0x3bc] sm:%s173] %v660
                %v662 = vld [vmem:[%s180 + $0x780] sm:%s173]
                %663 = vst [vmem:[%s181 + $0x3c0] sm:%s173] %v662
                %v664 = vld [vmem:[%s180 + $0x788] sm:%s173]
                %665 = vst [vmem:[%s181 + $0x3c4] sm:%s173] %v664
                %v666 = vld [vmem:[%s180 + $0x790] sm:%s173]
                %667 = vst [vmem:[%s181 + $0x3c8] sm:%s173] %v666
                %v668 = vld [vmem:[%s180 + $0x798] sm:%s173]
                %669 = vst [vmem:[%s181 + $0x3cc] sm:%s173] %v668
                %v670 = vld [vmem:[%s180 + $0x7a0] sm:%s173]
                %671 = vst [vmem:[%s181 + $0x3d0] sm:%s173] %v670
                %v672 = vld [vmem:[%s180 + $0x7a8] sm:%s173]
                %673 = vst [vmem:[%s181 + $0x3d4] sm:%s173] %v672
                %v674 = vld [vmem:[%s180 + $0x7b0] sm:%s173]
                %675 = vst [vmem:[%s181 + $0x3d8] sm:%s173] %v674
                %v676 = vld [vmem:[%s180 + $0x7b8] sm:%s173]
                %677 = vst [vmem:[%s181 + $0x3dc] sm:%s173] %v676
                %v678 = vld [vmem:[%s180 + $0x7c0] sm:%s173]
                %679 = vst [vmem:[%s181 + $0x3e0] sm:%s173] %v678
                %v680 = vld [vmem:[%s180 + $0x7c8] sm:%s173]
                %681 = vst [vmem:[%s181 + $0x3e4] sm:%s173] %v680
                %v682 = vld [vmem:[%s180 + $0x7d0] sm:%s173]
                %683 = vst [vmem:[%s181 + $0x3e8] sm:%s173] %v682
                %v684 = vld [vmem:[%s180 + $0x7d8] sm:%s173]
                %685 = vst [vmem:[%s181 + $0x3ec] sm:%s173] %v684
                %v686 = vld [vmem:[%s180 + $0x7e0] sm:%s173]
                %687 = vst [vmem:[%s181 + $0x3f0] sm:%s173] %v686
                %v688 = vld [vmem:[%s180 + $0x7e8] sm:%s173]
                %689 = vst [vmem:[%s181 + $0x3f4] sm:%s173] %v688
                %v690 = vld [vmem:[%s180 + $0x7f0] sm:%s173]
                %691 = vst [vmem:[%s181 + $0x3f8] sm:%s173] %v690
                %v692 = vld [vmem:[%s180 + $0x7f8] sm:%s173]
                %693 = vst [vmem:[%s181 + $0x3fc] sm:%s173] %v692
              $region41: #{_forward.8} parent=35 // loop_footer
                %s179 = sadd.s32 1, %s175
              $region42: #{_forward.8} parent=35 // loop_footer_branch
                %174 = sbr.rel target = $region38
              $region43: #{_forward.8} parent=35 // loop_exit
                _
            $region36: #{_forward.8} parent=27 // pred_fallthru
              _
          $region28: #{_forward.8} parent=23 // pred_fallthru
            _
          %1226 = vnop
        $region24: #{_forward.8} parent=19 // pred_fallthru
          _
        // Predicated region
        $region62: #{_forward.8} parent=19 // pred_check
          %p1227 = pneg %p95
        $region63: #{_forward.8} parent=19 // pred_check_branch
          %1229 = sbr.rel (%p1227) target = $region65
        $region64: #{_forward.8} parent=19 // pred_region
          %p1230 = scmp.lt.s32.totalorder %s16, 1
          %s1231 = scalar_select %p1230, %s16, 1
          %s1232 = scalar_lea.vmem %s2, %s1231
        $region65: #{_forward.8} parent=19 // pred_fallthru
          _
      $region20: #{_forward.8} parent=5 // pred_fallthru
        _
      %p1233 = scmp.le.s32.totalorder 1, %s9
      %p1234 = scmp.lt.s32.totalorder %s9, 3
      %p1235 = pnand %p1233, %p1234
      %p1236 = pneg %p1235
      // Predicated region
      $region66: #{_forward.8} parent=5 // pred_check
        _
      $region67: #{_forward.8} parent=5 // pred_check_branch
        %1238 = sbr.rel (%p1235) target = $region69
      $region68: #{_forward.8} parent=5 // pred_region
        %s1239 = ssub.s32 %s9, 1
        %s1240 = sand.u32 %s62, 1
        %s1241 = sand.u32 %s62, 1
        %s1242 = smul.addr %s1241, 1024
        %s1243 = scalar_lea.vmem [#allocation3], %s1242
        // Predicated region
        $region70: #{_forward.8} parent=68 // pred_check
          %p1244 = pneg %p75
        $region71: #{_forward.8} parent=68 // pred_check_branch
          %1246 = sbr.rel (%p1244) target = $region73
        $region72: #{_forward.8} parent=68 // pred_region
          _
        $region73: #{_forward.8} parent=68 // pred_fallthru
          _
        %s1247 = smul.u32 16, %s19
        %p1248 = scmp.lt.s32.totalorder %s1247, 15
        %s1249 = scalar_select %p1248, %s1247, 15
        %s1250 = scalar_lea.vmem %s0, %s1249
        %p1251 = pneg %p47
        %p1252 = pneg %p44
        %s1253 = sand.u32 %s62, 1
        %s1254 = sand.u32 %s62, 1
        %s1255 = smul.addr %s1254, 1024
        %s1256 = scalar_lea.vmem [#allocation3], %s1255
        %p1257 = pneg %p75
        %p1258 = pneg %p72
        %p1259 = scmp.lt.s32.totalorder %s18, 1
        %s1260 = scalar_select %p1259, %s18, 1
        %s1261 = scalar_lea.vmem %s2, %s1260
        %p1262 = pneg %p101
        %p1263 = pneg %p98
        %p1264 = pneg %p127
        %p1265 = pneg %p124
        %p1266 = scmp.lt.s32.totalorder %s18, 1
        %s1267 = scalar_select %p1266, %s18, 1
        %s1268 = smul.addr %s1267, 2
        %s1269 = scalar_lea.vmem %s3, %s1268
        %s1270 = smul.u32 16, %s19
        %p1271 = scmp.lt.s32.totalorder %s1270, 15
        %s1272 = scalar_select %p1271, %s1270, 15
        %s1273 = scalar_lea.vmem %s0, %s1272
        %s1274 = smul.u32 16, %s19
        %s1275 = smul.u32 256, %s19
        %p1276 = scmp.lt.s32.totalorder %s18, 1
        %s1277 = scalar_select %p1276, %s18, 1
        %s1278 = scalar_lea.vmem %s2, %s1277
        %p1279 = scmp.lt.s32.totalorder %s18, 1
        %s1280 = scalar_select %p1279, %s18, 1
        %s1281 = smul.addr %s1280, 2
        %s1282 = scalar_lea.vmem %s3, %s1281
        %p1284 = scmp.eq.s32.totalorder %s19, 0
        // Predicated region
        $region74: #{_forward.8} parent=68 // pred_check
          %p1285 = pneg %p1284
        $region75: #{_forward.8} parent=68 // pred_check_branch
          %1287 = sbr.rel (%p1285) target = $region77
        $region76: #{_forward.8} parent=68 // pred_region
          %1288 = vst [vmem:[#allocation2] sm:$0x3] 0.0
        $region77: #{_forward.8} parent=68 // pred_fallthru
          _
        %v1289 = vld [vmem:[#allocation2] sm:$0x3]
        %v1290 = vld [vmem:[%s1273] sm:$0xff]
        %v1291 = vld [vmem:[%s1273 + $0x8] sm:$0xff]
        %v1292 = vld [vmem:[%s1243] sm:$0xf]
        %v1293 = vld [vmem:[%s1243 + $0x4] sm:$0xf]
        %v1294 = vld [vmem:[%s1243 + $0x8] sm:$0xf]
        %v1295 = vld [vmem:[%s1243 + $0xc] sm:$0xf]
        %v1296 = vld [vmem:[%s1243 + $0x10] sm:$0xf]
        %v1297 = vld [vmem:[%s1243 + $0x14] sm:$0xf]
        %v1298 = vld [vmem:[%s1243 + $0x18] sm:$0xf]
        %v1299 = vld [vmem:[%s1243 + $0x1c] sm:$0xf]
        %v1300 = vld [vmem:[%s1243 + $0x20] sm:$0xf]
        %v1301 = vld [vmem:[%s1243 + $0x24] sm:$0xf]
        %v1302 = vld [vmem:[%s1243 + $0x28] sm:$0xf]
        %v1303 = vld [vmem:[%s1243 + $0x2c] sm:$0xf]
        %v1304 = vld [vmem:[%s1243 + $0x30] sm:$0xf]
        %v1305 = vld [vmem:[%s1243 + $0x34] sm:$0xf]
        %v1306 = vld [vmem:[%s1243 + $0x38] sm:$0xf]
        %v1307 = vld [vmem:[%s1243 + $0x3c] sm:$0xf]
        %v1308 = vld [vmem:[%s1243 + $0x40] sm:$0xf]
        %v1309 = vld [vmem:[%s1243 + $0x44] sm:$0xf]
        %v1310 = vld [vmem:[%s1243 + $0x48] sm:$0xf]
        %v1311 = vld [vmem:[%s1243 + $0x4c] sm:$0xf]
        %v1312 = vld [vmem:[%s1243 + $0x50] sm:$0xf]
        %v1313 = vld [vmem:[%s1243 + $0x54] sm:$0xf]
        %v1314 = vld [vmem:[%s1243 + $0x58] sm:$0xf]
        %v1315 = vld [vmem:[%s1243 + $0x5c] sm:$0xf]
        %v1316 = vld [vmem:[%s1243 + $0x60] sm:$0xf]
        %v1317 = vld [vmem:[%s1243 + $0x64] sm:$0xf]
        %v1318 = vld [vmem:[%s1243 + $0x68] sm:$0xf]
        %v1319 = vld [vmem:[%s1243 + $0x6c] sm:$0xf]
        %v1320 = vld [vmem:[%s1243 + $0x70] sm:$0xf]
        %v1321 = vld [vmem:[%s1243 + $0x74] sm:$0xf]
        %v1322 = vld [vmem:[%s1243 + $0x78] sm:$0xf]
        %v1323 = vld [vmem:[%s1243 + $0x7c] sm:$0xf]
        %v1324 = vld [vmem:[%s1243 + $0x80] sm:$0xf]
        %v1325 = vld [vmem:[%s1243 + $0x84] sm:$0xf]
        %v1326 = vld [vmem:[%s1243 + $0x88] sm:$0xf]
        %v1327 = vld [vmem:[%s1243 + $0x8c] sm:$0xf]
        %v1328 = vld [vmem:[%s1243 + $0x90] sm:$0xf]
        %v1329 = vld [vmem:[%s1243 + $0x94] sm:$0xf]
        %v1330 = vld [vmem:[%s1243 + $0x98] sm:$0xf]
        %v1331 = vld [vmem:[%s1243 + $0x9c] sm:$0xf]
        %v1332 = vld [vmem:[%s1243 + $0xa0] sm:$0xf]
        %v1333 = vld [vmem:[%s1243 + $0xa4] sm:$0xf]
        %v1334 = vld [vmem:[%s1243 + $0xa8] sm:$0xf]
        %v1335 = vld [vmem:[%s1243 + $0xac] sm:$0xf]
        %v1336 = vld [vmem:[%s1243 + $0xb0] sm:$0xf]
        %v1337 = vld [vmem:[%s1243 + $0xb4] sm:$0xf]
        %v1338 = vld [vmem:[%s1243 + $0xb8] sm:$0xf]
        %v1339 = vld [vmem:[%s1243 + $0xbc] sm:$0xf]
        %v1340 = vld [vmem:[%s1243 + $0xc0] sm:$0xf]
        %v1341 = vld [vmem:[%s1243 + $0xc4] sm:$0xf]
        %v1342 = vld [vmem:[%s1243 + $0xc8] sm:$0xf]
        %v1343 = vld [vmem:[%s1243 + $0xcc] sm:$0xf]
        %v1344 = vld [vmem:[%s1243 + $0xd0] sm:$0xf]
        %v1345 = vld [vmem:[%s1243 + $0xd4] sm:$0xf]
        %v1346 = vld [vmem:[%s1243 + $0xd8] sm:$0xf]
        %v1347 = vld [vmem:[%s1243 + $0xdc] sm:$0xf]
        %v1348 = vld [vmem:[%s1243 + $0xe0] sm:$0xf]
        %v1349 = vld [vmem:[%s1243 + $0xe4] sm:$0xf]
        %v1350 = vld [vmem:[%s1243 + $0xe8] sm:$0xf]
        %v1351 = vld [vmem:[%s1243 + $0xec] sm:$0xf]
        %v1352 = vld [vmem:[%s1243 + $0xf0] sm:$0xf]
        %v1353 = vld [vmem:[%s1243 + $0xf4] sm:$0xf]
        %v1354 = vld [vmem:[%s1243 + $0xf8] sm:$0xf]
        %v1355 = vld [vmem:[%s1243 + $0xfc] sm:$0xf]
        %v1356 = vld [vmem:[%s1243 + $0x100] sm:$0xf]
        %v1357 = vld [vmem:[%s1243 + $0x104] sm:$0xf]
        %v1358 = vld [vmem:[%s1243 + $0x108] sm:$0xf]
        %v1359 = vld [vmem:[%s1243 + $0x10c] sm:$0xf]
        %v1360 = vld [vmem:[%s1243 + $0x110] sm:$0xf]
        %v1361 = vld [vmem:[%s1243 + $0x114] sm:$0xf]
        %v1362 = vld [vmem:[%s1243 + $0x118] sm:$0xf]
        %v1363 = vld [vmem:[%s1243 + $0x11c] sm:$0xf]
        %v1364 = vld [vmem:[%s1243 + $0x120] sm:$0xf]
        %v1365 = vld [vmem:[%s1243 + $0x124] sm:$0xf]
        %v1366 = vld [vmem:[%s1243 + $0x128] sm:$0xf]
        %v1367 = vld [vmem:[%s1243 + $0x12c] sm:$0xf]
        %v1368 = vld [vmem:[%s1243 + $0x130] sm:$0xf]
        %v1369 = vld [vmem:[%s1243 + $0x134] sm:$0xf]
        %v1370 = vld [vmem:[%s1243 + $0x138] sm:$0xf]
        %v1371 = vld [vmem:[%s1243 + $0x13c] sm:$0xf]
        %v1372 = vld [vmem:[%s1243 + $0x140] sm:$0xf]
        %v1373 = vld [vmem:[%s1243 + $0x144] sm:$0xf]
        %v1374 = vld [vmem:[%s1243 + $0x148] sm:$0xf]
        %v1375 = vld [vmem:[%s1243 + $0x14c] sm:$0xf]
        %v1376 = vld [vmem:[%s1243 + $0x150] sm:$0xf]
        %v1377 = vld [vmem:[%s1243 + $0x154] sm:$0xf]
        %v1378 = vld [vmem:[%s1243 + $0x158] sm:$0xf]
        %v1379 = vld [vmem:[%s1243 + $0x15c] sm:$0xf]
        %v1380 = vld [vmem:[%s1243 + $0x160] sm:$0xf]
        %v1381 = vld [vmem:[%s1243 + $0x164] sm:$0xf]
        %v1382 = vld [vmem:[%s1243 + $0x168] sm:$0xf]
        %v1383 = vld [vmem:[%s1243 + $0x16c] sm:$0xf]
        %v1384 = vld [vmem:[%s1243 + $0x170] sm:$0xf]
        %v1385 = vld [vmem:[%s1243 + $0x174] sm:$0xf]
        %v1386 = vld [vmem:[%s1243 + $0x178] sm:$0xf]
        %v1387 = vld [vmem:[%s1243 + $0x17c] sm:$0xf]
        %v1388 = vld [vmem:[%s1243 + $0x180] sm:$0xf]
        %v1389 = vld [vmem:[%s1243 + $0x184] sm:$0xf]
        %v1390 = vld [vmem:[%s1243 + $0x188] sm:$0xf]
        %v1391 = vld [vmem:[%s1243 + $0x18c] sm:$0xf]
        %v1392 = vld [vmem:[%s1243 + $0x190] sm:$0xf]
        %v1393 = vld [vmem:[%s1243 + $0x194] sm:$0xf]
        %v1394 = vld [vmem:[%s1243 + $0x198] sm:$0xf]
        %v1395 = vld [vmem:[%s1243 + $0x19c] sm:$0xf]
        %v1396 = vld [vmem:[%s1243 + $0x1a0] sm:$0xf]
        %v1397 = vld [vmem:[%s1243 + $0x1a4] sm:$0xf]
        %v1398 = vld [vmem:[%s1243 + $0x1a8] sm:$0xf]
        %v1399 = vld [vmem:[%s1243 + $0x1ac] sm:$0xf]
        %v1400 = vld [vmem:[%s1243 + $0x1b0] sm:$0xf]
        %v1401 = vld [vmem:[%s1243 + $0x1b4] sm:$0xf]
        %v1402 = vld [vmem:[%s1243 + $0x1b8] sm:$0xf]
        %v1403 = vld [vmem:[%s1243 + $0x1bc] sm:$0xf]
        %v1404 = vld [vmem:[%s1243 + $0x1c0] sm:$0xf]
        %v1405 = vld [vmem:[%s1243 + $0x1c4] sm:$0xf]
        %v1406 = vld [vmem:[%s1243 + $0x1c8] sm:$0xf]
        %v1407 = vld [vmem:[%s1243 + $0x1cc] sm:$0xf]
        %v1408 = vld [vmem:[%s1243 + $0x1d0] sm:$0xf]
        %v1409 = vld [vmem:[%s1243 + $0x1d4] sm:$0xf]
        %v1410 = vld [vmem:[%s1243 + $0x1d8] sm:$0xf]
        %v1411 = vld [vmem:[%s1243 + $0x1dc] sm:$0xf]
        %v1412 = vld [vmem:[%s1243 + $0x1e0] sm:$0xf]
        %v1413 = vld [vmem:[%s1243 + $0x1e4] sm:$0xf]
        %v1414 = vld [vmem:[%s1243 + $0x1e8] sm:$0xf]
        %v1415 = vld [vmem:[%s1243 + $0x1ec] sm:$0xf]
        %v1416 = vld [vmem:[%s1243 + $0x1f0] sm:$0xf]
        %v1417 = vld [vmem:[%s1243 + $0x1f4] sm:$0xf]
        %v1418 = vld [vmem:[%s1243 + $0x1f8] sm:$0xf]
        %v1419 = vld [vmem:[%s1243 + $0x1fc] sm:$0xf]
        %v1420 = vld [vmem:[%s1243 + $0x200] sm:$0xf]
        %v1421 = vld [vmem:[%s1243 + $0x204] sm:$0xf]
        %v1422 = vld [vmem:[%s1243 + $0x208] sm:$0xf]
        %v1423 = vld [vmem:[%s1243 + $0x20c] sm:$0xf]
        %v1424 = vld [vmem:[%s1243 + $0x210] sm:$0xf]
        %v1425 = vld [vmem:[%s1243 + $0x214] sm:$0xf]
        %v1426 = vld [vmem:[%s1243 + $0x218] sm:$0xf]
        %v1427 = vld [vmem:[%s1243 + $0x21c] sm:$0xf]
        %v1428 = vld [vmem:[%s1243 + $0x220] sm:$0xf]
        %v1429 = vld [vmem:[%s1243 + $0x224] sm:$0xf]
        %v1430 = vld [vmem:[%s1243 + $0x228] sm:$0xf]
        %v1431 = vld [vmem:[%s1243 + $0x22c] sm:$0xf]
        %v1432 = vld [vmem:[%s1243 + $0x230] sm:$0xf]
        %v1433 = vld [vmem:[%s1243 + $0x234] sm:$0xf]
        %v1434 = vld [vmem:[%s1243 + $0x238] sm:$0xf]
        %v1435 = vld [vmem:[%s1243 + $0x23c] sm:$0xf]
        %v1436 = vld [vmem:[%s1243 + $0x240] sm:$0xf]
        %v1437 = vld [vmem:[%s1243 + $0x244] sm:$0xf]
        %v1438 = vld [vmem:[%s1243 + $0x248] sm:$0xf]
        %v1439 = vld [vmem:[%s1243 + $0x24c] sm:$0xf]
        %v1440 = vld [vmem:[%s1243 + $0x250] sm:$0xf]
        %v1441 = vld [vmem:[%s1243 + $0x254] sm:$0xf]
        %v1442 = vld [vmem:[%s1243 + $0x258] sm:$0xf]
        %v1443 = vld [vmem:[%s1243 + $0x25c] sm:$0xf]
        %v1444 = vld [vmem:[%s1243 + $0x260] sm:$0xf]
        %v1445 = vld [vmem:[%s1243 + $0x264] sm:$0xf]
        %v1446 = vld [vmem:[%s1243 + $0x268] sm:$0xf]
        %v1447 = vld [vmem:[%s1243 + $0x26c] sm:$0xf]
        %v1448 = vld [vmem:[%s1243 + $0x270] sm:$0xf]
        %v1449 = vld [vmem:[%s1243 + $0x274] sm:$0xf]
        %v1450 = vld [vmem:[%s1243 + $0x278] sm:$0xf]
        %v1451 = vld [vmem:[%s1243 + $0x27c] sm:$0xf]
        %v1452 = vld [vmem:[%s1243 + $0x280] sm:$0xf]
        %v1453 = vld [vmem:[%s1243 + $0x284] sm:$0xf]
        %v1454 = vld [vmem:[%s1243 + $0x288] sm:$0xf]
        %v1455 = vld [vmem:[%s1243 + $0x28c] sm:$0xf]
        %v1456 = vld [vmem:[%s1243 + $0x290] sm:$0xf]
        %v1457 = vld [vmem:[%s1243 + $0x294] sm:$0xf]
        %v1458 = vld [vmem:[%s1243 + $0x298] sm:$0xf]
        %v1459 = vld [vmem:[%s1243 + $0x29c] sm:$0xf]
        %v1460 = vld [vmem:[%s1243 + $0x2a0] sm:$0xf]
        %v1461 = vld [vmem:[%s1243 + $0x2a4] sm:$0xf]
        %v1462 = vld [vmem:[%s1243 + $0x2a8] sm:$0xf]
        %v1463 = vld [vmem:[%s1243 + $0x2ac] sm:$0xf]
        %v1464 = vld [vmem:[%s1243 + $0x2b0] sm:$0xf]
        %v1465 = vld [vmem:[%s1243 + $0x2b4] sm:$0xf]
        %v1466 = vld [vmem:[%s1243 + $0x2b8] sm:$0xf]
        %v1467 = vld [vmem:[%s1243 + $0x2bc] sm:$0xf]
        %v1468 = vld [vmem:[%s1243 + $0x2c0] sm:$0xf]
        %v1469 = vld [vmem:[%s1243 + $0x2c4] sm:$0xf]
        %v1470 = vld [vmem:[%s1243 + $0x2c8] sm:$0xf]
        %v1471 = vld [vmem:[%s1243 + $0x2cc] sm:$0xf]
        %v1472 = vld [vmem:[%s1243 + $0x2d0] sm:$0xf]
        %v1473 = vld [vmem:[%s1243 + $0x2d4] sm:$0xf]
        %v1474 = vld [vmem:[%s1243 + $0x2d8] sm:$0xf]
        %v1475 = vld [vmem:[%s1243 + $0x2dc] sm:$0xf]
        %v1476 = vld [vmem:[%s1243 + $0x2e0] sm:$0xf]
        %v1477 = vld [vmem:[%s1243 + $0x2e4] sm:$0xf]
        %v1478 = vld [vmem:[%s1243 + $0x2e8] sm:$0xf]
        %v1479 = vld [vmem:[%s1243 + $0x2ec] sm:$0xf]
        %v1480 = vld [vmem:[%s1243 + $0x2f0] sm:$0xf]
        %v1481 = vld [vmem:[%s1243 + $0x2f4] sm:$0xf]
        %v1482 = vld [vmem:[%s1243 + $0x2f8] sm:$0xf]
        %v1483 = vld [vmem:[%s1243 + $0x2fc] sm:$0xf]
        %v1484 = vld [vmem:[%s1243 + $0x300] sm:$0xf]
        %v1485 = vld [vmem:[%s1243 + $0x304] sm:$0xf]
        %v1486 = vld [vmem:[%s1243 + $0x308] sm:$0xf]
        %v1487 = vld [vmem:[%s1243 + $0x30c] sm:$0xf]
        %v1488 = vld [vmem:[%s1243 + $0x310] sm:$0xf]
        %v1489 = vld [vmem:[%s1243 + $0x314] sm:$0xf]
        %v1490 = vld [vmem:[%s1243 + $0x318] sm:$0xf]
        %v1491 = vld [vmem:[%s1243 + $0x31c] sm:$0xf]
        %v1492 = vld [vmem:[%s1243 + $0x320] sm:$0xf]
        %v1493 = vld [vmem:[%s1243 + $0x324] sm:$0xf]
        %v1494 = vld [vmem:[%s1243 + $0x328] sm:$0xf]
        %v1495 = vld [vmem:[%s1243 + $0x32c] sm:$0xf]
        %v1496 = vld [vmem:[%s1243 + $0x330] sm:$0xf]
        %v1497 = vld [vmem:[%s1243 + $0x334] sm:$0xf]
        %v1498 = vld [vmem:[%s1243 + $0x338] sm:$0xf]
        %v1499 = vld [vmem:[%s1243 + $0x33c] sm:$0xf]
        %v1500 = vld [vmem:[%s1243 + $0x340] sm:$0xf]
        %v1501 = vld [vmem:[%s1243 + $0x344] sm:$0xf]
        %v1502 = vld [vmem:[%s1243 + $0x348] sm:$0xf]
        %v1503 = vld [vmem:[%s1243 + $0x34c] sm:$0xf]
        %v1504 = vld [vmem:[%s1243 + $0x350] sm:$0xf]
        %v1505 = vld [vmem:[%s1243 + $0x354] sm:$0xf]
        %v1506 = vld [vmem:[%s1243 + $0x358] sm:$0xf]
        %v1507 = vld [vmem:[%s1243 + $0x35c] sm:$0xf]
        %v1508 = vld [vmem:[%s1243 + $0x360] sm:$0xf]
        %v1509 = vld [vmem:[%s1243 + $0x364] sm:$0xf]
        %v1510 = vld [vmem:[%s1243 + $0x368] sm:$0xf]
        %v1511 = vld [vmem:[%s1243 + $0x36c] sm:$0xf]
        %v1512 = vld [vmem:[%s1243 + $0x370] sm:$0xf]
        %v1513 = vld [vmem:[%s1243 + $0x374] sm:$0xf]
        %v1514 = vld [vmem:[%s1243 + $0x378] sm:$0xf]
        %v1515 = vld [vmem:[%s1243 + $0x37c] sm:$0xf]
        %v1516 = vld [vmem:[%s1243 + $0x380] sm:$0xf]
        %v1517 = vld [vmem:[%s1243 + $0x384] sm:$0xf]
        %v1518 = vld [vmem:[%s1243 + $0x388] sm:$0xf]
        %v1519 = vld [vmem:[%s1243 + $0x38c] sm:$0xf]
        %v1520 = vld [vmem:[%s1243 + $0x390] sm:$0xf]
        %v1521 = vld [vmem:[%s1243 + $0x394] sm:$0xf]
        %v1522 = vld [vmem:[%s1243 + $0x398] sm:$0xf]
        %v1523 = vld [vmem:[%s1243 + $0x39c] sm:$0xf]
        %v1524 = vld [vmem:[%s1243 + $0x3a0] sm:$0xf]
        %v1525 = vld [vmem:[%s1243 + $0x3a4] sm:$0xf]
        %v1526 = vld [vmem:[%s1243 + $0x3a8] sm:$0xf]
        %v1527 = vld [vmem:[%s1243 + $0x3ac] sm:$0xf]
        %v1528 = vld [vmem:[%s1243 + $0x3b0] sm:$0xf]
        %v1529 = vld [vmem:[%s1243 + $0x3b4] sm:$0xf]
        %v1530 = vld [vmem:[%s1243 + $0x3b8] sm:$0xf]
        %v1531 = vld [vmem:[%s1243 + $0x3bc] sm:$0xf]
        %v1532 = vld [vmem:[%s1243 + $0x3c0] sm:$0xf]
        %v1533 = vld [vmem:[%s1243 + $0x3c4] sm:$0xf]
        %v1534 = vld [vmem:[%s1243 + $0x3c8] sm:$0xf]
        %v1535 = vld [vmem:[%s1243 + $0x3cc] sm:$0xf]
        %v1536 = vld [vmem:[%s1243 + $0x3d0] sm:$0xf]
        %v1537 = vld [vmem:[%s1243 + $0x3d4] sm:$0xf]
        %v1538 = vld [vmem:[%s1243 + $0x3d8] sm:$0xf]
        %v1539 = vld [vmem:[%s1243 + $0x3dc] sm:$0xf]
        %v1540 = vld [vmem:[%s1243 + $0x3e0] sm:$0xf]
        %v1541 = vld [vmem:[%s1243 + $0x3e4] sm:$0xf]
        %v1542 = vld [vmem:[%s1243 + $0x3e8] sm:$0xf]
        %v1543 = vld [vmem:[%s1243 + $0x3ec] sm:$0xf]
        %v1544 = vld [vmem:[%s1243 + $0x3f0] sm:$0xf]
        %v1545 = vld [vmem:[%s1243 + $0x3f4] sm:$0xf]
        %v1546 = vld [vmem:[%s1243 + $0x3f8] sm:$0xf]
        %v1547 = vld [vmem:[%s1243 + $0x3fc] sm:$0xf]
        %v1550 = vcombine.high %v1290, %v1290
        %v1552 = vunpack.c.l.s4 1966171168
        %v1553 = vunpack.c.0.s8 %v1552
        %v1554 = vlaneseq
        %v1555 = vshrl.u32 %v1554, 7
        %v1556 = vsub.s32 %v1553, %v1555
        %v1557 = vrot.slane %v1290, %v1556
        %v1559 = vunpack.c.l.s4 1966171168
        %v1560 = vunpack.c.0.s8 %v1559
        %v1561 = vlaneseq
        %v1562 = vshrl.u32 %v1561, 7
        %v1563 = vsub.s32 %v1560, %v1562
        %v1564 = vrot.slane %v1550, %v1563
        %v1565 = vcombine.high %v1557, %v1557
        %v1566 = vcombine.high %v1564, %v1564
        %v1568 = vunpack.c.l.s4 1966171168
        %v1569 = vunpack.c.0.s8 %v1568
        %v1570 = vlaneseq
        %v1571 = vshrl.u32 %v1570, 7
        %v1572 = vsub.s32 %v1569, %v1571
        %v1573 = vrot.slane %v1557, %v1572
        %v1575 = vunpack.c.l.s4 1966171168
        %v1576 = vunpack.c.0.s8 %v1575
        %v1577 = vlaneseq
        %v1578 = vshrl.u32 %v1577, 7
        %v1579 = vsub.s32 %v1576, %v1578
        %v1580 = vrot.slane %v1564, %v1579
        %v1582 = vunpack.c.l.s4 1966171168
        %v1583 = vunpack.c.0.s8 %v1582
        %v1584 = vlaneseq
        %v1585 = vshrl.u32 %v1584, 7
        %v1586 = vsub.s32 %v1583, %v1585
        %v1587 = vrot.slane %v1565, %v1586
        %v1589 = vunpack.c.l.s4 1966171168
        %v1590 = vunpack.c.0.s8 %v1589
        %v1591 = vlaneseq
        %v1592 = vshrl.u32 %v1591, 7
        %v1593 = vsub.s32 %v1590, %v1592
        %v1594 = vrot.slane %v1566, %v1593
        %v1595 = vcombine.high %v1573, %v1573
        %v1596 = vcombine.high %v1580, %v1580
        %v1597 = vcombine.high %v1587, %v1587
        %v1598 = vcombine.high %v1594, %v1594
        %v1599 = vcombine.high %v1291, %v1291
        %v1601 = vunpack.c.l.s4 1966171168
        %v1602 = vunpack.c.0.s8 %v1601
        %v1603 = vlaneseq
        %v1604 = vshrl.u32 %v1603, 7
        %v1605 = vsub.s32 %v1602, %v1604
        %v1606 = vrot.slane %v1291, %v1605
        %v1608 = vunpack.c.l.s4 1966171168
        %v1609 = vunpack.c.0.s8 %v1608
        %v1610 = vlaneseq
        %v1611 = vshrl.u32 %v1610, 7
        %v1612 = vsub.s32 %v1609, %v1611
        %v1613 = vrot.slane %v1599, %v1612
        %v1614 = vcombine.high %v1606, %v1606
        %v1615 = vcombine.high %v1613, %v1613
        %v1617 = vunpack.c.l.s4 1966171168
        %v1618 = vunpack.c.0.s8 %v1617
        %v1619 = vlaneseq
        %v1620 = vshrl.u32 %v1619, 7
        %v1621 = vsub.s32 %v1618, %v1620
        %v1622 = vrot.slane %v1606, %v1621
        %v1624 = vunpack.c.l.s4 1966171168
        %v1625 = vunpack.c.0.s8 %v1624
        %v1626 = vlaneseq
        %v1627 = vshrl.u32 %v1626, 7
        %v1628 = vsub.s32 %v1625, %v1627
        %v1629 = vrot.slane %v1613, %v1628
        %v1631 = vunpack.c.l.s4 1966171168
        %v1632 = vunpack.c.0.s8 %v1631
        %v1633 = vlaneseq
        %v1634 = vshrl.u32 %v1633, 7
        %v1635 = vsub.s32 %v1632, %v1634
        %v1636 = vrot.slane %v1614, %v1635
        %v1638 = vunpack.c.l.s4 1966171168
        %v1639 = vunpack.c.0.s8 %v1638
        %v1640 = vlaneseq
        %v1641 = vshrl.u32 %v1640, 7
        %v1642 = vsub.s32 %v1639, %v1641
        %v1643 = vrot.slane %v1615, %v1642
        %v1644 = vcombine.high %v1622, %v1622
        %v1645 = vcombine.high %v1629, %v1629
        %v1646 = vcombine.high %v1636, %v1636
        %v1647 = vcombine.high %v1643, %v1643
        %v1920 = vunpack.c.l.b16 %v1292
        %v1921 = vunpack.c.l.b16 %v1293
        %v1922 = vunpack.c.l.b16 %v1294
        %v1923 = vunpack.c.l.b16 %v1295
        %v1924 = vunpack.c.l.b16 %v1296
        %v1925 = vunpack.c.l.b16 %v1297
        %v1926 = vunpack.c.l.b16 %v1298
        %v1927 = vunpack.c.l.b16 %v1299
        %v1928 = vunpack.c.l.b16 %v1300
        %v1929 = vunpack.c.l.b16 %v1301
        %v1930 = vunpack.c.l.b16 %v1302
        %v1931 = vunpack.c.l.b16 %v1303
        %v1932 = vunpack.c.l.b16 %v1304
        %v1933 = vunpack.c.l.b16 %v1305
        %v1934 = vunpack.c.l.b16 %v1306
        %v1935 = vunpack.c.l.b16 %v1307
        %v1936 = vunpack.c.l.b16 %v1308
        %v1937 = vunpack.c.l.b16 %v1309
        %v1938 = vunpack.c.l.b16 %v1310
        %v1939 = vunpack.c.l.b16 %v1311
        %v1940 = vunpack.c.l.b16 %v1312
        %v1941 = vunpack.c.l.b16 %v1313
        %v1942 = vunpack.c.l.b16 %v1314
        %v1943 = vunpack.c.l.b16 %v1315
        %v1944 = vunpack.c.l.b16 %v1316
        %v1945 = vunpack.c.l.b16 %v1317
        %v1946 = vunpack.c.l.b16 %v1318
        %v1947 = vunpack.c.l.b16 %v1319
        %v1948 = vunpack.c.l.b16 %v1320
        %v1949 = vunpack.c.l.b16 %v1321
        %v1950 = vunpack.c.l.b16 %v1322
        %v1951 = vunpack.c.l.b16 %v1323
        %v1952 = vunpack.c.l.b16 %v1324
        %v1953 = vunpack.c.l.b16 %v1325
        %v1954 = vunpack.c.l.b16 %v1326
        %v1955 = vunpack.c.l.b16 %v1327
        %v1956 = vunpack.c.l.b16 %v1328
        %v1957 = vunpack.c.l.b16 %v1329
        %v1958 = vunpack.c.l.b16 %v1330
        %v1959 = vunpack.c.l.b16 %v1331
        %v1960 = vunpack.c.l.b16 %v1332
        %v1961 = vunpack.c.l.b16 %v1333
        %v1962 = vunpack.c.l.b16 %v1334
        %v1963 = vunpack.c.l.b16 %v1335
        %v1964 = vunpack.c.l.b16 %v1336
        %v1965 = vunpack.c.l.b16 %v1337
        %v1966 = vunpack.c.l.b16 %v1338
        %v1967 = vunpack.c.l.b16 %v1339
        %v1968 = vunpack.c.l.b16 %v1340
        %v1969 = vunpack.c.l.b16 %v1341
        %v1970 = vunpack.c.l.b16 %v1342
        %v1971 = vunpack.c.l.b16 %v1343
        %v1972 = vunpack.c.l.b16 %v1344
        %v1973 = vunpack.c.l.b16 %v1345
        %v1974 = vunpack.c.l.b16 %v1346
        %v1975 = vunpack.c.l.b16 %v1347
        %v1976 = vunpack.c.l.b16 %v1348
        %v1977 = vunpack.c.l.b16 %v1349
        %v1978 = vunpack.c.l.b16 %v1350
        %v1979 = vunpack.c.l.b16 %v1351
        %v1980 = vunpack.c.l.b16 %v1352
        %v1981 = vunpack.c.l.b16 %v1353
        %v1982 = vunpack.c.l.b16 %v1354
        %v1983 = vunpack.c.l.b16 %v1355
        %v1984 = vunpack.c.l.b16 %v1356
        %v1985 = vunpack.c.l.b16 %v1357
        %v1986 = vunpack.c.l.b16 %v1358
        %v1987 = vunpack.c.l.b16 %v1359
        %v1988 = vunpack.c.l.b16 %v1360
        %v1989 = vunpack.c.l.b16 %v1361
        %v1990 = vunpack.c.l.b16 %v1362
        %v1991 = vunpack.c.l.b16 %v1363
        %v1992 = vunpack.c.l.b16 %v1364
        %v1993 = vunpack.c.l.b16 %v1365
        %v1994 = vunpack.c.l.b16 %v1366
        %v1995 = vunpack.c.l.b16 %v1367
        %v1996 = vunpack.c.l.b16 %v1368
        %v1997 = vunpack.c.l.b16 %v1369
        %v1998 = vunpack.c.l.b16 %v1370
        %v1999 = vunpack.c.l.b16 %v1371
        %v2000 = vunpack.c.l.b16 %v1372
        %v2001 = vunpack.c.l.b16 %v1373
        %v2002 = vunpack.c.l.b16 %v1374
        %v2003 = vunpack.c.l.b16 %v1375
        %v2004 = vunpack.c.l.b16 %v1376
        %v2005 = vunpack.c.l.b16 %v1377
        %v2006 = vunpack.c.l.b16 %v1378
        %v2007 = vunpack.c.l.b16 %v1379
        %v2008 = vunpack.c.l.b16 %v1380
        %v2009 = vunpack.c.l.b16 %v1381
        %v2010 = vunpack.c.l.b16 %v1382
        %v2011 = vunpack.c.l.b16 %v1383
        %v2012 = vunpack.c.l.b16 %v1384
        %v2013 = vunpack.c.l.b16 %v1385
        %v2014 = vunpack.c.l.b16 %v1386
        %v2015 = vunpack.c.l.b16 %v1387
        %v2016 = vunpack.c.l.b16 %v1388
        %v2017 = vunpack.c.l.b16 %v1389
        %v2018 = vunpack.c.l.b16 %v1390
        %v2019 = vunpack.c.l.b16 %v1391
        %v2020 = vunpack.c.l.b16 %v1392
        %v2021 = vunpack.c.l.b16 %v1393
        %v2022 = vunpack.c.l.b16 %v1394
        %v2023 = vunpack.c.l.b16 %v1395
        %v2024 = vunpack.c.l.b16 %v1396
        %v2025 = vunpack.c.l.b16 %v1397
        %v2026 = vunpack.c.l.b16 %v1398
        %v2027 = vunpack.c.l.b16 %v1399
        %v2028 = vunpack.c.l.b16 %v1400
        %v2029 = vunpack.c.l.b16 %v1401
        %v2030 = vunpack.c.l.b16 %v1402
        %v2031 = vunpack.c.l.b16 %v1403
        %v2032 = vunpack.c.l.b16 %v1404
        %v2033 = vunpack.c.l.b16 %v1405
        %v2034 = vunpack.c.l.b16 %v1406
        %v2035 = vunpack.c.l.b16 %v1407
        %v2036 = vunpack.c.l.b16 %v1408
        %v2037 = vunpack.c.l.b16 %v1409
        %v2038 = vunpack.c.l.b16 %v1410
        %v2039 = vunpack.c.l.b16 %v1411
        %v2040 = vunpack.c.l.b16 %v1412
        %v2041 = vunpack.c.l.b16 %v1413
        %v2042 = vunpack.c.l.b16 %v1414
        %v2043 = vunpack.c.l.b16 %v1415
        %v2044 = vunpack.c.l.b16 %v1416
        %v2045 = vunpack.c.l.b16 %v1417
        %v2046 = vunpack.c.l.b16 %v1418
        %v2047 = vunpack.c.l.b16 %v1419
        %v2048 = vunpack.c.l.b16 %v1420
        %v2049 = vunpack.c.l.b16 %v1421
        %v2050 = vunpack.c.l.b16 %v1422
        %v2051 = vunpack.c.l.b16 %v1423
        %v2052 = vunpack.c.l.b16 %v1424
        %v2053 = vunpack.c.l.b16 %v1425
        %v2054 = vunpack.c.l.b16 %v1426
        %v2055 = vunpack.c.l.b16 %v1427
        %v2056 = vunpack.c.l.b16 %v1428
        %v2057 = vunpack.c.l.b16 %v1429
        %v2058 = vunpack.c.l.b16 %v1430
        %v2059 = vunpack.c.l.b16 %v1431
        %v2060 = vunpack.c.l.b16 %v1432
        %v2061 = vunpack.c.l.b16 %v1433
        %v2062 = vunpack.c.l.b16 %v1434
        %v2063 = vunpack.c.l.b16 %v1435
        %v2064 = vunpack.c.l.b16 %v1436
        %v2065 = vunpack.c.l.b16 %v1437
        %v2066 = vunpack.c.l.b16 %v1438
        %v2067 = vunpack.c.l.b16 %v1439
        %v2068 = vunpack.c.l.b16 %v1440
        %v2069 = vunpack.c.l.b16 %v1441
        %v2070 = vunpack.c.l.b16 %v1442
        %v2071 = vunpack.c.l.b16 %v1443
        %v2072 = vunpack.c.l.b16 %v1444
        %v2073 = vunpack.c.l.b16 %v1445
        %v2074 = vunpack.c.l.b16 %v1446
        %v2075 = vunpack.c.l.b16 %v1447
        %v2076 = vunpack.c.l.b16 %v1448
        %v2077 = vunpack.c.l.b16 %v1449
        %v2078 = vunpack.c.l.b16 %v1450
        %v2079 = vunpack.c.l.b16 %v1451
        %v2080 = vunpack.c.l.b16 %v1452
        %v2081 = vunpack.c.l.b16 %v1453
        %v2082 = vunpack.c.l.b16 %v1454
        %v2083 = vunpack.c.l.b16 %v1455
        %v2084 = vunpack.c.l.b16 %v1456
        %v2085 = vunpack.c.l.b16 %v1457
        %v2086 = vunpack.c.l.b16 %v1458
        %v2087 = vunpack.c.l.b16 %v1459
        %v2088 = vunpack.c.l.b16 %v1460
        %v2089 = vunpack.c.l.b16 %v1461
        %v2090 = vunpack.c.l.b16 %v1462
        %v2091 = vunpack.c.l.b16 %v1463
        %v2092 = vunpack.c.l.b16 %v1464
        %v2093 = vunpack.c.l.b16 %v1465
        %v2094 = vunpack.c.l.b16 %v1466
        %v2095 = vunpack.c.l.b16 %v1467
        %v2096 = vunpack.c.l.b16 %v1468
        %v2097 = vunpack.c.l.b16 %v1469
        %v2098 = vunpack.c.l.b16 %v1470
        %v2099 = vunpack.c.l.b16 %v1471
        %v2100 = vunpack.c.l.b16 %v1472
        %v2101 = vunpack.c.l.b16 %v1473
        %v2102 = vunpack.c.l.b16 %v1474
        %v2103 = vunpack.c.l.b16 %v1475
        %v2104 = vunpack.c.l.b16 %v1476
        %v2105 = vunpack.c.l.b16 %v1477
        %v2106 = vunpack.c.l.b16 %v1478
        %v2107 = vunpack.c.l.b16 %v1479
        %v2108 = vunpack.c.l.b16 %v1480
        %v2109 = vunpack.c.l.b16 %v1481
        %v2110 = vunpack.c.l.b16 %v1482
        %v2111 = vunpack.c.l.b16 %v1483
        %v2112 = vunpack.c.l.b16 %v1484
        %v2113 = vunpack.c.l.b16 %v1485
        %v2114 = vunpack.c.l.b16 %v1486
        %v2115 = vunpack.c.l.b16 %v1487
        %v2116 = vunpack.c.l.b16 %v1488
        %v2117 = vunpack.c.l.b16 %v1489
        %v2118 = vunpack.c.l.b16 %v1490
        %v2119 = vunpack.c.l.b16 %v1491
        %v2120 = vunpack.c.l.b16 %v1492
        %v2121 = vunpack.c.l.b16 %v1493
        %v2122 = vunpack.c.l.b16 %v1494
        %v2123 = vunpack.c.l.b16 %v1495
        %v2124 = vunpack.c.l.b16 %v1496
        %v2125 = vunpack.c.l.b16 %v1497
        %v2126 = vunpack.c.l.b16 %v1498
        %v2127 = vunpack.c.l.b16 %v1499
        %v2128 = vunpack.c.l.b16 %v1500
        %v2129 = vunpack.c.l.b16 %v1501
        %v2130 = vunpack.c.l.b16 %v1502
        %v2131 = vunpack.c.l.b16 %v1503
        %v2132 = vunpack.c.l.b16 %v1504
        %v2133 = vunpack.c.l.b16 %v1505
        %v2134 = vunpack.c.l.b16 %v1506
        %v2135 = vunpack.c.l.b16 %v1507
        %v2136 = vunpack.c.l.b16 %v1508
        %v2137 = vunpack.c.l.b16 %v1509
        %v2138 = vunpack.c.l.b16 %v1510
        %v2139 = vunpack.c.l.b16 %v1511
        %v2140 = vunpack.c.l.b16 %v1512
        %v2141 = vunpack.c.l.b16 %v1513
        %v2142 = vunpack.c.l.b16 %v1514
        %v2143 = vunpack.c.l.b16 %v1515
        %v2144 = vunpack.c.l.b16 %v1516
        %v2145 = vunpack.c.l.b16 %v1517
        %v2146 = vunpack.c.l.b16 %v1518
        %v2147 = vunpack.c.l.b16 %v1519
        %v2148 = vunpack.c.l.b16 %v1520
        %v2149 = vunpack.c.l.b16 %v1521
        %v2150 = vunpack.c.l.b16 %v1522
        %v2151 = vunpack.c.l.b16 %v1523
        %v2152 = vunpack.c.l.b16 %v1524
        %v2153 = vunpack.c.l.b16 %v1525
        %v2154 = vunpack.c.l.b16 %v1526
        %v2155 = vunpack.c.l.b16 %v1527
        %v2156 = vunpack.c.l.b16 %v1528
        %v2157 = vunpack.c.l.b16 %v1529
        %v2158 = vunpack.c.l.b16 %v1530
        %v2159 = vunpack.c.l.b16 %v1531
        %v2160 = vunpack.c.l.b16 %v1532
        %v2161 = vunpack.c.l.b16 %v1533
        %v2162 = vunpack.c.l.b16 %v1534
        %v2163 = vunpack.c.l.b16 %v1535
        %v2164 = vunpack.c.l.b16 %v1536
        %v2165 = vunpack.c.l.b16 %v1537
        %v2166 = vunpack.c.l.b16 %v1538
        %v2167 = vunpack.c.l.b16 %v1539
        %v2168 = vunpack.c.l.b16 %v1540
        %v2169 = vunpack.c.l.b16 %v1541
        %v2170 = vunpack.c.l.b16 %v1542
        %v2171 = vunpack.c.l.b16 %v1543
        %v2172 = vunpack.c.l.b16 %v1544
        %v2173 = vunpack.c.l.b16 %v1545
        %v2174 = vunpack.c.l.b16 %v1546
        %v2175 = vunpack.c.l.b16 %v1547
        %v2176 = vpack.c.b16 %v1921, %v1920
        %v2177 = vpack.c.b16 %v1923, %v1922
        %v2178 = vpack.c.b16 %v1925, %v1924
        %v2179 = vpack.c.b16 %v1927, %v1926
        %v2180 = vpack.c.b16 %v1929, %v1928
        %v2181 = vpack.c.b16 %v1931, %v1930
        %v2182 = vpack.c.b16 %v1933, %v1932
        %v2183 = vpack.c.b16 %v1935, %v1934
        %v2184 = vpack.c.b16 %v1937, %v1936
        %v2185 = vpack.c.b16 %v1939, %v1938
        %v2186 = vpack.c.b16 %v1941, %v1940
        %v2187 = vpack.c.b16 %v1943, %v1942
        %v2188 = vpack.c.b16 %v1945, %v1944
        %v2189 = vpack.c.b16 %v1947, %v1946
        %v2190 = vpack.c.b16 %v1949, %v1948
        %v2191 = vpack.c.b16 %v1951, %v1950
        %v2192 = vpack.c.b16 %v1953, %v1952
        %v2193 = vpack.c.b16 %v1955, %v1954
        %v2194 = vpack.c.b16 %v1957, %v1956
        %v2195 = vpack.c.b16 %v1959, %v1958
        %v2196 = vpack.c.b16 %v1961, %v1960
        %v2197 = vpack.c.b16 %v1963, %v1962
        %v2198 = vpack.c.b16 %v1965, %v1964
        %v2199 = vpack.c.b16 %v1967, %v1966
        %v2200 = vpack.c.b16 %v1969, %v1968
        %v2201 = vpack.c.b16 %v1971, %v1970
        %v2202 = vpack.c.b16 %v1973, %v1972
        %v2203 = vpack.c.b16 %v1975, %v1974
        %v2204 = vpack.c.b16 %v1977, %v1976
        %v2205 = vpack.c.b16 %v1979, %v1978
        %v2206 = vpack.c.b16 %v1981, %v1980
        %v2207 = vpack.c.b16 %v1983, %v1982
        %v2208 = vpack.c.b16 %v1985, %v1984
        %v2209 = vpack.c.b16 %v1987, %v1986
        %v2210 = vpack.c.b16 %v1989, %v1988
        %v2211 = vpack.c.b16 %v1991, %v1990
        %v2212 = vpack.c.b16 %v1993, %v1992
        %v2213 = vpack.c.b16 %v1995, %v1994
        %v2214 = vpack.c.b16 %v1997, %v1996
        %v2215 = vpack.c.b16 %v1999, %v1998
        %v2216 = vpack.c.b16 %v2001, %v2000
        %v2217 = vpack.c.b16 %v2003, %v2002
        %v2218 = vpack.c.b16 %v2005, %v2004
        %v2219 = vpack.c.b16 %v2007, %v2006
        %v2220 = vpack.c.b16 %v2009, %v2008
        %v2221 = vpack.c.b16 %v2011, %v2010
        %v2222 = vpack.c.b16 %v2013, %v2012
        %v2223 = vpack.c.b16 %v2015, %v2014
        %v2224 = vpack.c.b16 %v2017, %v2016
        %v2225 = vpack.c.b16 %v2019, %v2018
        %v2226 = vpack.c.b16 %v2021, %v2020
        %v2227 = vpack.c.b16 %v2023, %v2022
        %v2228 = vpack.c.b16 %v2025, %v2024
        %v2229 = vpack.c.b16 %v2027, %v2026
        %v2230 = vpack.c.b16 %v2029, %v2028
        %v2231 = vpack.c.b16 %v2031, %v2030
        %v2232 = vpack.c.b16 %v2033, %v2032
        %v2233 = vpack.c.b16 %v2035, %v2034
        %v2234 = vpack.c.b16 %v2037, %v2036
        %v2235 = vpack.c.b16 %v2039, %v2038
        %v2236 = vpack.c.b16 %v2041, %v2040
        %v2237 = vpack.c.b16 %v2043, %v2042
        %v2238 = vpack.c.b16 %v2045, %v2044
        %v2239 = vpack.c.b16 %v2047, %v2046
        %v2240 = vpack.c.b16 %v2049, %v2048
        %v2241 = vpack.c.b16 %v2051, %v2050
        %v2242 = vpack.c.b16 %v2053, %v2052
        %v2243 = vpack.c.b16 %v2055, %v2054
        %v2244 = vpack.c.b16 %v2057, %v2056
        %v2245 = vpack.c.b16 %v2059, %v2058
        %v2246 = vpack.c.b16 %v2061, %v2060
        %v2247 = vpack.c.b16 %v2063, %v2062
        %v2248 = vpack.c.b16 %v2065, %v2064
        %v2249 = vpack.c.b16 %v2067, %v2066
        %v2250 = vpack.c.b16 %v2069, %v2068
        %v2251 = vpack.c.b16 %v2071, %v2070
        %v2252 = vpack.c.b16 %v2073, %v2072
        %v2253 = vpack.c.b16 %v2075, %v2074
        %v2254 = vpack.c.b16 %v2077, %v2076
        %v2255 = vpack.c.b16 %v2079, %v2078
        %v2256 = vpack.c.b16 %v2081, %v2080
        %v2257 = vpack.c.b16 %v2083, %v2082
        %v2258 = vpack.c.b16 %v2085, %v2084
        %v2259 = vpack.c.b16 %v2087, %v2086
        %v2260 = vpack.c.b16 %v2089, %v2088
        %v2261 = vpack.c.b16 %v2091, %v2090
        %v2262 = vpack.c.b16 %v2093, %v2092
        %v2263 = vpack.c.b16 %v2095, %v2094
        %v2264 = vpack.c.b16 %v2097, %v2096
        %v2265 = vpack.c.b16 %v2099, %v2098
        %v2266 = vpack.c.b16 %v2101, %v2100
        %v2267 = vpack.c.b16 %v2103, %v2102
        %v2268 = vpack.c.b16 %v2105, %v2104
        %v2269 = vpack.c.b16 %v2107, %v2106
        %v2270 = vpack.c.b16 %v2109, %v2108
        %v2271 = vpack.c.b16 %v2111, %v2110
        %v2272 = vpack.c.b16 %v2113, %v2112
        %v2273 = vpack.c.b16 %v2115, %v2114
        %v2274 = vpack.c.b16 %v2117, %v2116
        %v2275 = vpack.c.b16 %v2119, %v2118
        %v2276 = vpack.c.b16 %v2121, %v2120
        %v2277 = vpack.c.b16 %v2123, %v2122
        %v2278 = vpack.c.b16 %v2125, %v2124
        %v2279 = vpack.c.b16 %v2127, %v2126
        %v2280 = vpack.c.b16 %v2129, %v2128
        %v2281 = vpack.c.b16 %v2131, %v2130
        %v2282 = vpack.c.b16 %v2133, %v2132
        %v2283 = vpack.c.b16 %v2135, %v2134
        %v2284 = vpack.c.b16 %v2137, %v2136
        %v2285 = vpack.c.b16 %v2139, %v2138
        %v2286 = vpack.c.b16 %v2141, %v2140
        %v2287 = vpack.c.b16 %v2143, %v2142
        %v2288 = vpack.c.b16 %v2145, %v2144
        %v2289 = vpack.c.b16 %v2147, %v2146
        %v2290 = vpack.c.b16 %v2149, %v2148
        %v2291 = vpack.c.b16 %v2151, %v2150
        %v2292 = vpack.c.b16 %v2153, %v2152
        %v2293 = vpack.c.b16 %v2155, %v2154
        %v2294 = vpack.c.b16 %v2157, %v2156
        %v2295 = vpack.c.b16 %v2159, %v2158
        %v2296 = vpack.c.b16 %v2161, %v2160
        %v2297 = vpack.c.b16 %v2163, %v2162
        %v2298 = vpack.c.b16 %v2165, %v2164
        %v2299 = vpack.c.b16 %v2167, %v2166
        %v2300 = vpack.c.b16 %v2169, %v2168
        %v2301 = vpack.c.b16 %v2171, %v2170
        %v2302 = vpack.c.b16 %v2173, %v2172
        %v2303 = vpack.c.b16 %v2175, %v2174
        %2432 = vmatprep.subr.bf16.mxu0 0
        %2433 = vmatpush1.bf16.msra.mxu0 %v2183
        %2434 = vmatprep.subr.bf16.mxu0 0
        %2435 = vmatpush1.bf16.msra.mxu0 %v2182
        %2436 = vmatprep.subr.bf16.mxu0 0
        %2437 = vmatpush1.bf16.msra.mxu0 %v2181
        %2438 = vmatprep.subr.bf16.mxu0 0
        %2439 = vmatpush1.bf16.msra.mxu0 %v2180
        %2440 = vmatprep.subr.bf16.mxu0 0
        %2441 = vmatpush1.bf16.msra.mxu0 %v2179
        %2442 = vmatprep.subr.bf16.mxu0 0
        %2443 = vmatpush1.bf16.msra.mxu0 %v2178
        %2444 = vmatprep.subr.bf16.mxu0 0
        %2445 = vmatpush1.bf16.msra.mxu0 %v2177
        %2446 = vmatprep.subr.bf16.mxu0 0
        %2447 = vmatpush1.bf16.msra.mxu0 %v2176
        %2448 = vmatprep.subr.bf16.mxu0 0
        %2449 = vmatpush2.bf16.msra.mxu0 %v2191
        %2450 = vmatprep.subr.bf16.mxu0 0
        %2451 = vmatpush2.bf16.msra.mxu0 %v2190
        %2452 = vmatprep.subr.bf16.mxu0 0
        %2453 = vmatpush2.bf16.msra.mxu0 %v2189
        %2454 = vmatprep.subr.bf16.mxu0 0
        %2455 = vmatpush2.bf16.msra.mxu0 %v2188
        %2456 = vmatprep.subr.bf16.mxu0 0
        %2457 = vmatpush2.bf16.msra.mxu0 %v2187
        %2458 = vmatprep.subr.bf16.mxu0 0
        %2459 = vmatpush2.bf16.msra.mxu0 %v2186
        %2460 = vmatprep.subr.bf16.mxu0 0
        %2461 = vmatpush2.bf16.msra.mxu0 %v2185
        %2462 = vmatprep.subr.bf16.mxu0 0
        %2463 = vmatpush2.bf16.msra.mxu0 %v2184
        %2464 = vmatprep.mubr.bf16.mxu0 %v1587
        %2465 = vmatmul.mubr.bf16.gmra.mxu0 %v1573
        %v2466 = vpop.f32.mrf.mxu0
        %v2467 = vadd.f32 0.0, %v2466
        %v2468 = vpop.f32.mrf.mxu0
        %v2469 = vpop.f32.mrf.mxu0
        %v2470 = vpop.f32.mrf.mxu0
        %2471 = vdwg.mxu0
        %2472 = vmatprep.subr.bf16.mxu0 0
        %2473 = vmatpush1.bf16.msra.mxu0 %v2199
        %2474 = vmatprep.subr.bf16.mxu0 0
        %2475 = vmatpush1.bf16.msra.mxu0 %v2198
        %2476 = vmatprep.subr.bf16.mxu0 0
        %2477 = vmatpush1.bf16.msra.mxu0 %v2197
        %2478 = vmatprep.subr.bf16.mxu0 0
        %2479 = vmatpush1.bf16.msra.mxu0 %v2196
        %2480 = vmatprep.subr.bf16.mxu0 0
        %2481 = vmatpush1.bf16.msra.mxu0 %v2195
        %2482 = vmatprep.subr.bf16.mxu0 0
        %2483 = vmatpush1.bf16.msra.mxu0 %v2194
        %2484 = vmatprep.subr.bf16.mxu0 0
        %2485 = vmatpush1.bf16.msra.mxu0 %v2193
        %2486 = vmatprep.subr.bf16.mxu0 0
        %2487 = vmatpush1.bf16.msra.mxu0 %v2192
        %2488 = vmatprep.subr.bf16.mxu0 0
        %2489 = vmatpush2.bf16.msra.mxu0 %v2207
        %2490 = vmatprep.subr.bf16.mxu0 0
        %2491 = vmatpush2.bf16.msra.mxu0 %v2206
        %2492 = vmatprep.subr.bf16.mxu0 0
        %2493 = vmatpush2.bf16.msra.mxu0 %v2205
        %2494 = vmatprep.subr.bf16.mxu0 0
        %2495 = vmatpush2.bf16.msra.mxu0 %v2204
        %2496 = vmatprep.subr.bf16.mxu0 0
        %2497 = vmatpush2.bf16.msra.mxu0 %v2203
        %2498 = vmatprep.subr.bf16.mxu0 0
        %2499 = vmatpush2.bf16.msra.mxu0 %v2202
        %2500 = vmatprep.subr.bf16.mxu0 0
        %2501 = vmatpush2.bf16.msra.mxu0 %v2201
        %2502 = vmatprep.subr.bf16.mxu0 0
        %2503 = vmatpush2.bf16.msra.mxu0 %v2200
        %2504 = vmatprep.mubr.bf16.mxu0 %v1597
        %2505 = vmatmul.mubr.bf16.gmra.mxu0 %v1595
        %v2506 = vpop.f32.mrf.mxu0
        %v2507 = vadd.f32 %v2467, %v2506
        %v2508 = vpop.f32.mrf.mxu0
        %v2509 = vpop.f32.mrf.mxu0
        %v2510 = vpop.f32.mrf.mxu0
        %2511 = vdwg.mxu0
        %2512 = vmatprep.subr.bf16.mxu0 0
        %2513 = vmatpush1.bf16.msra.mxu0 %v2215
        %2514 = vmatprep.subr.bf16.mxu0 0
        %2515 = vmatpush1.bf16.msra.mxu0 %v2214
        %2516 = vmatprep.subr.bf16.mxu0 0
        %2517 = vmatpush1.bf16.msra.mxu0 %v2213
        %2518 = vmatprep.subr.bf16.mxu0 0
        %2519 = vmatpush1.bf16.msra.mxu0 %v2212
        %2520 = vmatprep.subr.bf16.mxu0 0
        %2521 = vmatpush1.bf16.msra.mxu0 %v2211
        %2522 = vmatprep.subr.bf16.mxu0 0
        %2523 = vmatpush1.bf16.msra.mxu0 %v2210
        %2524 = vmatprep.subr.bf16.mxu0 0
        %2525 = vmatpush1.bf16.msra.mxu0 %v2209
        %2526 = vmatprep.subr.bf16.mxu0 0
        %2527 = vmatpush1.bf16.msra.mxu0 %v2208
        %2528 = vmatprep.subr.bf16.mxu0 0
        %2529 = vmatpush2.bf16.msra.mxu0 %v2223
        %2530 = vmatprep.subr.bf16.mxu0 0
        %2531 = vmatpush2.bf16.msra.mxu0 %v2222
        %2532 = vmatprep.subr.bf16.mxu0 0
        %2533 = vmatpush2.bf16.msra.mxu0 %v2221
        %2534 = vmatprep.subr.bf16.mxu0 0
        %2535 = vmatpush2.bf16.msra.mxu0 %v2220
        %2536 = vmatprep.subr.bf16.mxu0 0
        %2537 = vmatpush2.bf16.msra.mxu0 %v2219
        %2538 = vmatprep.subr.bf16.mxu0 0
        %2539 = vmatpush2.bf16.msra.mxu0 %v2218
        %2540 = vmatprep.subr.bf16.mxu0 0
        %2541 = vmatpush2.bf16.msra.mxu0 %v2217
        %2542 = vmatprep.subr.bf16.mxu0 0
        %2543 = vmatpush2.bf16.msra.mxu0 %v2216
        %2544 = vmatprep.mubr.bf16.mxu0 %v1594
        %2545 = vmatmul.mubr.bf16.gmra.mxu0 %v1580
        %v2546 = vpop.f32.mrf.mxu0
        %v2547 = vadd.f32 %v2507, %v2546
        %v2548 = vpop.f32.mrf.mxu0
        %v2549 = vpop.f32.mrf.mxu0
        %v2550 = vpop.f32.mrf.mxu0
        %2551 = vdwg.mxu0
        %2552 = vmatprep.subr.bf16.mxu0 0
        %2553 = vmatpush1.bf16.msra.mxu0 %v2231
        %2554 = vmatprep.subr.bf16.mxu0 0
        %2555 = vmatpush1.bf16.msra.mxu0 %v2230
        %2556 = vmatprep.subr.bf16.mxu0 0
        %2557 = vmatpush1.bf16.msra.mxu0 %v2229
        %2558 = vmatprep.subr.bf16.mxu0 0
        %2559 = vmatpush1.bf16.msra.mxu0 %v2228
        %2560 = vmatprep.subr.bf16.mxu0 0
        %2561 = vmatpush1.bf16.msra.mxu0 %v2227
        %2562 = vmatprep.subr.bf16.mxu0 0
        %2563 = vmatpush1.bf16.msra.mxu0 %v2226
        %2564 = vmatprep.subr.bf16.mxu0 0
        %2565 = vmatpush1.bf16.msra.mxu0 %v2225
        %2566 = vmatprep.subr.bf16.mxu0 0
        %2567 = vmatpush1.bf16.msra.mxu0 %v2224
        %2568 = vmatprep.subr.bf16.mxu0 0
        %2569 = vmatpush2.bf16.msra.mxu0 %v2239
        %2570 = vmatprep.subr.bf16.mxu0 0
        %2571 = vmatpush2.bf16.msra.mxu0 %v2238
        %2572 = vmatprep.subr.bf16.mxu0 0
        %2573 = vmatpush2.bf16.msra.mxu0 %v2237
        %2574 = vmatprep.subr.bf16.mxu0 0
        %2575 = vmatpush2.bf16.msra.mxu0 %v2236
        %2576 = vmatprep.subr.bf16.mxu0 0
        %2577 = vmatpush2.bf16.msra.mxu0 %v2235
        %2578 = vmatprep.subr.bf16.mxu0 0
        %2579 = vmatpush2.bf16.msra.mxu0 %v2234
        %2580 = vmatprep.subr.bf16.mxu0 0
        %2581 = vmatpush2.bf16.msra.mxu0 %v2233
        %2582 = vmatprep.subr.bf16.mxu0 0
        %2583 = vmatpush2.bf16.msra.mxu0 %v2232
        %2584 = vmatprep.mubr.bf16.mxu0 %v1598
        %2585 = vmatmul.mubr.bf16.gmra.mxu0 %v1596
        %v2586 = vpop.f32.mrf.mxu0
        %v2587 = vadd.f32 %v2547, %v2586
        %v2588 = vpop.f32.mrf.mxu0
        %v2589 = vpop.f32.mrf.mxu0
        %v2590 = vpop.f32.mrf.mxu0
        %2591 = vdwg.mxu0
        %2592 = vmatprep.subr.bf16.mxu0 0
        %2593 = vmatpush1.bf16.msra.mxu0 %v2247
        %2594 = vmatprep.subr.bf16.mxu0 0
        %2595 = vmatpush1.bf16.msra.mxu0 %v2246
        %2596 = vmatprep.subr.bf16.mxu0 0
        %2597 = vmatpush1.bf16.msra.mxu0 %v2245
        %2598 = vmatprep.subr.bf16.mxu0 0
        %2599 = vmatpush1.bf16.msra.mxu0 %v2244
        %2600 = vmatprep.subr.bf16.mxu0 0
        %2601 = vmatpush1.bf16.msra.mxu0 %v2243
        %2602 = vmatprep.subr.bf16.mxu0 0
        %2603 = vmatpush1.bf16.msra.mxu0 %v2242
        %2604 = vmatprep.subr.bf16.mxu0 0
        %2605 = vmatpush1.bf16.msra.mxu0 %v2241
        %2606 = vmatprep.subr.bf16.mxu0 0
        %2607 = vmatpush1.bf16.msra.mxu0 %v2240
        %2608 = vmatprep.subr.bf16.mxu0 0
        %2609 = vmatpush2.bf16.msra.mxu0 %v2255
        %2610 = vmatprep.subr.bf16.mxu0 0
        %2611 = vmatpush2.bf16.msra.mxu0 %v2254
        %2612 = vmatprep.subr.bf16.mxu0 0
        %2613 = vmatpush2.bf16.msra.mxu0 %v2253
        %2614 = vmatprep.subr.bf16.mxu0 0
        %2615 = vmatpush2.bf16.msra.mxu0 %v2252
        %2616 = vmatprep.subr.bf16.mxu0 0
        %2617 = vmatpush2.bf16.msra.mxu0 %v2251
        %2618 = vmatprep.subr.bf16.mxu0 0
        %2619 = vmatpush2.bf16.msra.mxu0 %v2250
        %2620 = vmatprep.subr.bf16.mxu0 0
        %2621 = vmatpush2.bf16.msra.mxu0 %v2249
        %2622 = vmatprep.subr.bf16.mxu0 0
        %2623 = vmatpush2.bf16.msra.mxu0 %v2248
        %2624 = vmatprep.mubr.bf16.mxu0 %v1636
        %2625 = vmatmul.mubr.bf16.gmra.mxu0 %v1622
        %v2626 = vpop.f32.mrf.mxu0
        %v2627 = vadd.f32 %v2587, %v2626
        %v2628 = vpop.f32.mrf.mxu0
        %v2629 = vpop.f32.mrf.mxu0
        %v2630 = vpop.f32.mrf.mxu0
        %2631 = vdwg.mxu0
        %2632 = vmatprep.subr.bf16.mxu0 0
        %2633 = vmatpush1.bf16.msra.mxu0 %v2263
        %2634 = vmatprep.subr.bf16.mxu0 0
        %2635 = vmatpush1.bf16.msra.mxu0 %v2262
        %2636 = vmatprep.subr.bf16.mxu0 0
        %2637 = vmatpush1.bf16.msra.mxu0 %v2261
        %2638 = vmatprep.subr.bf16.mxu0 0
        %2639 = vmatpush1.bf16.msra.mxu0 %v2260
        %2640 = vmatprep.subr.bf16.mxu0 0
        %2641 = vmatpush1.bf16.msra.mxu0 %v2259
        %2642 = vmatprep.subr.bf16.mxu0 0
        %2643 = vmatpush1.bf16.msra.mxu0 %v2258
        %2644 = vmatprep.subr.bf16.mxu0 0
        %2645 = vmatpush1.bf16.msra.mxu0 %v2257
        %2646 = vmatprep.subr.bf16.mxu0 0
        %2647 = vmatpush1.bf16.msra.mxu0 %v2256
        %2648 = vmatprep.subr.bf16.mxu0 0
        %2649 = vmatpush2.bf16.msra.mxu0 %v2271
        %2650 = vmatprep.subr.bf16.mxu0 0
        %2651 = vmatpush2.bf16.msra.mxu0 %v2270
        %2652 = vmatprep.subr.bf16.mxu0 0
        %2653 = vmatpush2.bf16.msra.mxu0 %v2269
        %2654 = vmatprep.subr.bf16.mxu0 0
        %2655 = vmatpush2.bf16.msra.mxu0 %v2268
        %2656 = vmatprep.subr.bf16.mxu0 0
        %2657 = vmatpush2.bf16.msra.mxu0 %v2267
        %2658 = vmatprep.subr.bf16.mxu0 0
        %2659 = vmatpush2.bf16.msra.mxu0 %v2266
        %2660 = vmatprep.subr.bf16.mxu0 0
        %2661 = vmatpush2.bf16.msra.mxu0 %v2265
        %2662 = vmatprep.subr.bf16.mxu0 0
        %2663 = vmatpush2.bf16.msra.mxu0 %v2264
        %2664 = vmatprep.mubr.bf16.mxu0 %v1646
        %2665 = vmatmul.mubr.bf16.gmra.mxu0 %v1644
        %v2666 = vpop.f32.mrf.mxu0
        %v2667 = vadd.f32 %v2627, %v2666
        %v2668 = vpop.f32.mrf.mxu0
        %v2669 = vpop.f32.mrf.mxu0
        %v2670 = vpop.f32.mrf.mxu0
        %2671 = vdwg.mxu0
        %2672 = vmatprep.subr.bf16.mxu0 0
        %2673 = vmatpush1.bf16.msra.mxu0 %v2279
        %2674 = vmatprep.subr.bf16.mxu0 0
        %2675 = vmatpush1.bf16.msra.mxu0 %v2278
        %2676 = vmatprep.subr.bf16.mxu0 0
        %2677 = vmatpush1.bf16.msra.mxu0 %v2277
        %2678 = vmatprep.subr.bf16.mxu0 0
        %2679 = vmatpush1.bf16.msra.mxu0 %v2276
        %2680 = vmatprep.subr.bf16.mxu0 0
        %2681 = vmatpush1.bf16.msra.mxu0 %v2275
        %2682 = vmatprep.subr.bf16.mxu0 0
        %2683 = vmatpush1.bf16.msra.mxu0 %v2274
        %2684 = vmatprep.subr.bf16.mxu0 0
        %2685 = vmatpush1.bf16.msra.mxu0 %v2273
        %2686 = vmatprep.subr.bf16.mxu0 0
        %2687 = vmatpush1.bf16.msra.mxu0 %v2272
        %2688 = vmatprep.subr.bf16.mxu0 0
        %2689 = vmatpush2.bf16.msra.mxu0 %v2287
        %2690 = vmatprep.subr.bf16.mxu0 0
        %2691 = vmatpush2.bf16.msra.mxu0 %v2286
        %2692 = vmatprep.subr.bf16.mxu0 0
        %2693 = vmatpush2.bf16.msra.mxu0 %v2285
        %2694 = vmatprep.subr.bf16.mxu0 0
        %2695 = vmatpush2.bf16.msra.mxu0 %v2284
        %2696 = vmatprep.subr.bf16.mxu0 0
        %2697 = vmatpush2.bf16.msra.mxu0 %v2283
        %2698 = vmatprep.subr.bf16.mxu0 0
        %2699 = vmatpush2.bf16.msra.mxu0 %v2282
        %2700 = vmatprep.subr.bf16.mxu0 0
        %2701 = vmatpush2.bf16.msra.mxu0 %v2281
        %2702 = vmatprep.subr.bf16.mxu0 0
        %2703 = vmatpush2.bf16.msra.mxu0 %v2280
        %2704 = vmatprep.mubr.bf16.mxu0 %v1643
        %2705 = vmatmul.mubr.bf16.gmra.mxu0 %v1629
        %v2706 = vpop.f32.mrf.mxu0
        %v2707 = vadd.f32 %v2667, %v2706
        %v2708 = vpop.f32.mrf.mxu0
        %v2709 = vpop.f32.mrf.mxu0
        %v2710 = vpop.f32.mrf.mxu0
        %2711 = vdwg.mxu0
        %2712 = vmatprep.subr.bf16.mxu0 0
        %2713 = vmatpush1.bf16.msra.mxu0 %v2295
        %2714 = vmatprep.subr.bf16.mxu0 0
        %2715 = vmatpush1.bf16.msra.mxu0 %v2294
        %2716 = vmatprep.subr.bf16.mxu0 0
        %2717 = vmatpush1.bf16.msra.mxu0 %v2293
        %2718 = vmatprep.subr.bf16.mxu0 0
        %2719 = vmatpush1.bf16.msra.mxu0 %v2292
        %2720 = vmatprep.subr.bf16.mxu0 0
        %2721 = vmatpush1.bf16.msra.mxu0 %v2291
        %2722 = vmatprep.subr.bf16.mxu0 0
        %2723 = vmatpush1.bf16.msra.mxu0 %v2290
        %2724 = vmatprep.subr.bf16.mxu0 0
        %2725 = vmatpush1.bf16.msra.mxu0 %v2289
        %2726 = vmatprep.subr.bf16.mxu0 0
        %2727 = vmatpush1.bf16.msra.mxu0 %v2288
        %2728 = vmatprep.subr.bf16.mxu0 0
        %2729 = vmatpush2.bf16.msra.mxu0 %v2303
        %2730 = vmatprep.subr.bf16.mxu0 0
        %2731 = vmatpush2.bf16.msra.mxu0 %v2302
        %2732 = vmatprep.subr.bf16.mxu0 0
        %2733 = vmatpush2.bf16.msra.mxu0 %v2301
        %2734 = vmatprep.subr.bf16.mxu0 0
        %2735 = vmatpush2.bf16.msra.mxu0 %v2300
        %2736 = vmatprep.subr.bf16.mxu0 0
        %2737 = vmatpush2.bf16.msra.mxu0 %v2299
        %2738 = vmatprep.subr.bf16.mxu0 0
        %2739 = vmatpush2.bf16.msra.mxu0 %v2298
        %2740 = vmatprep.subr.bf16.mxu0 0
        %2741 = vmatpush2.bf16.msra.mxu0 %v2297
        %2742 = vmatprep.subr.bf16.mxu0 0
        %2743 = vmatpush2.bf16.msra.mxu0 %v2296
        %2744 = vmatprep.mubr.bf16.mxu0 %v1647
        %2745 = vmatmul.mubr.bf16.gmra.mxu0 %v1645
        %v2746 = vpop.f32.mrf.mxu0
        %v2747 = vadd.f32 %v2707, %v2746
        %v2748 = vpop.f32.mrf.mxu0
        %v2749 = vpop.f32.mrf.mxu0
        %v2750 = vpop.f32.mrf.mxu0
        %2751 = vdwg.mxu0
        %v2752 = vadd.f32 %v1289, %v2747
        %2753 = vst [vmem:[#allocation2] sm:$0x3] %v2752
        // Predicated region
        $region78: #{_forward.8} parent=68 // pred_check
          %p2754 = pneg %p1284
        $region79: #{_forward.8} parent=68 // pred_check_branch
          %2756 = sbr.rel (%p2754) target = $region81
        $region80: #{_forward.8} parent=68 // pred_region
          %v2757 = vld [vmem:[#allocation2] sm:$0x3]
          %v2758 = vld [vmem:[%s1278] sm:$0x1]
          %v2760 = vlaneseq
          %v2761 = vshrl.u32 %v2760, 7
          %v2762 = vsub.s32 0, %v2761
          %v2763 = vrot.slane %v2758, %v2762
          %v2765 = vadd.f32 %v2757, %v2763
          %2766 = vst [vmem:[%s1282] sm:$0x3] %v2765
        $region81: #{_forward.8} parent=68 // pred_fallthru
          _
        %p2767 = scmp.lt.s32.totalorder %s18, 1
        %s2768 = scalar_select %p2767, %s18, 1
        %s2769 = smul.addr %s2768, 2
        %s2770 = scalar_lea.vmem %s3, %s2769
        // Predicated region
        $region82: #{_forward.8} parent=68 // pred_check
          %p2771 = pneg %p124
        $region83: #{_forward.8} parent=68 // pred_check_branch
          %2773 = sbr.rel (%p2771) target = $region85
        $region84: #{_forward.8} parent=68 // pred_region
          _
        $region85: #{_forward.8} parent=68 // pred_fallthru
          _
      $region69: #{_forward.8} parent=5 // pred_fallthru
        _
      %p2774 = scmp.le.s32.totalorder 2, %s9
      // Predicated region
      $region86: #{_forward.8} parent=5 // pred_check
        %p2775 = pneg %p2774
      $region87: #{_forward.8} parent=5 // pred_check_branch
        %2777 = sbr.rel (%p2775) target = $region89
      $region88: #{_forward.8} parent=5 // pred_region
        %s2778 = ssub.s32 %s9, 2
        // Predicated region
        $region90: #{_forward.8} parent=88 // pred_check
          %p2779 = pneg %p130
        $region91: #{_forward.8} parent=88 // pred_check_branch
          %2781 = sbr.rel (%p2779) target = $region93
        $region92: #{_forward.8} parent=88 // pred_region
          %p2782 = scmp.lt.s32.totalorder %s20, 1
          %s2783 = scalar_select %p2782, %s20, 1
          %s2784 = smul.addr %s2783, 2
          %s2785 = scalar_lea.vmem %s3, %s2784
        $region93: #{_forward.8} parent=88 // pred_fallthru
          _
      $region89: #{_forward.8} parent=5 // pred_fallthru
        _
    $region6: #{_forward.8} parent=1 // loop_footer
      %s13 = sadd.s32 1, %s9
    $region7: #{_forward.8} parent=1 // loop_footer_branch
      %8 = sbr.rel target = $region3
    $region8: #{_forward.8} parent=1 // loop_exit
      _

// kernel: _forward.10
$region0: #{_forward.10}
  #allocation0 [shape = 'u32[]', space=smem, size = 0x4, offset = 0x4, fixed_abs, tag = 'smem constant byte address 0x4 - core index']
  #allocation1 [shape = 'u32[144,128]{1,0:T(1,128)}', space=vmem, size = 0x12000, scoped, tag = 'internal scratch']
  #allocation2 [shape = 'f32[32,256]{1,0:T(8,128)}', space=vmem, size = 0x8000, scoped, tag = 'scratch operand']
  %s0 = inlined_call_operand.vmem [shape: bf16[32,1152], index: 0, kind: input, shape index: {}]
  %s1 = inlined_call_operand.vmem [shape: bf16[1152,256], index: 1, kind: input, shape index: {}]
  %s2 = inlined_call_operand.vmem [shape: f32[1,256], index: 2, kind: input, shape index: {}]
  %s3 = inlined_call_operand.vmem [shape: bf16[32,256], index: 3, kind: output, shape index: {}]
  %s4 = sld [smem:[#allocation0]]
  $region30: #{_forward.10} parent=0
    _
  %s6 = ssub.s32 1, %s4
  %s7 = scalar_select 0, %s6, %s4
  // Predicated region
  $region2: #{_forward.10} parent=0 // pred_check
    _
  $region3: #{_forward.10} parent=0 // pred_check_branch
    %9 = sbr.rel (0) target = $region5
  $region4: #{_forward.10} parent=0 // pred_region
    _
  $region5: #{_forward.10} parent=0 // pred_fallthru
    _
  // Predicated region
  $region6: #{_forward.10} parent=0 // pred_check
    _
  $region7: #{_forward.10} parent=0 // pred_check_branch
    %11 = sbr.rel (0) target = $region9
  $region8: #{_forward.10} parent=0 // pred_region
    _
  $region9: #{_forward.10} parent=0 // pred_fallthru
    _
  // Predicated region
  $region10: #{_forward.10} parent=0 // pred_check
    _
  $region11: #{_forward.10} parent=0 // pred_check_branch
    %13 = sbr.rel (0) target = $region13
  $region12: #{_forward.10} parent=0 // pred_region
    _
  $region13: #{_forward.10} parent=0 // pred_fallthru
    _
  %p15 = scmp.eq.s32.totalorder 0, 0
  // Predicated region
  $region14: #{_forward.10} parent=0 // pred_check
    %p16 = pneg %p15
  $region15: #{_forward.10} parent=0 // pred_check_branch
    %18 = sbr.rel (%p16) target = $region17
  $region16: #{_forward.10} parent=0 // pred_region
    %19 = vst [vmem:[#allocation2] sm:$0xff] 0.0
    %20 = vst [vmem:[#allocation2 + $0x8] sm:$0xff] 0.0
    %21 = vst [vmem:[#allocation2 + $0x10] sm:$0xff] 0.0
    %22 = vst [vmem:[#allocation2 + $0x18] sm:$0xff] 0.0
    %23 = vst [vmem:[#allocation2 + $0x20] sm:$0xff] 0.0
    %24 = vst [vmem:[#allocation2 + $0x28] sm:$0xff] 0.0
    %25 = vst [vmem:[#allocation2 + $0x30] sm:$0xff] 0.0
    %26 = vst [vmem:[#allocation2 + $0x38] sm:$0xff] 0.0
  $region17: #{_forward.10} parent=0 // pred_fallthru
    _
  %v27 = vld [vmem:[#allocation2] sm:$0xff]
  %v28 = vld [vmem:[#allocation2 + $0x8] sm:$0xff]
  %v29 = vld [vmem:[#allocation2 + $0x10] sm:$0xff]
  %v30 = vld [vmem:[#allocation2 + $0x18] sm:$0xff]
  %v31 = vld [vmem:[#allocation2 + $0x20] sm:$0xff]
  %v32 = vld [vmem:[#allocation2 + $0x28] sm:$0xff]
  %v33 = vld [vmem:[#allocation2 + $0x30] sm:$0xff]
  %v34 = vld [vmem:[#allocation2 + $0x38] sm:$0xff]
  %v35 = vld [vmem:[%s0] sm:$0xff]
  %v36 = vld [vmem:[%s0 + $0x8] sm:$0xff]
  %v37 = vld [vmem:[%s0 + $0x10] sm:$0xff]
  %v38 = vld [vmem:[%s0 + $0x18] sm:$0xff]
  %v39 = vld [vmem:[%s0 + $0x20] sm:$0xf]
  %v40 = vld [vmem:[%s0 + $0x24] sm:$0xff]
  %v41 = vld [vmem:[%s0 + $0x2c] sm:$0xff]
  %v42 = vld [vmem:[%s0 + $0x34] sm:$0xff]
  %v43 = vld [vmem:[%s0 + $0x3c] sm:$0xff]
  %v44 = vld [vmem:[%s0 + $0x44] sm:$0xf]
  %v45 = vld [vmem:[%s0 + $0x48] sm:$0xff]
  %v46 = vld [vmem:[%s0 + $0x50] sm:$0xff]
  %v47 = vld [vmem:[%s0 + $0x58] sm:$0xff]
  %v48 = vld [vmem:[%s0 + $0x60] sm:$0xff]
  %v49 = vld [vmem:[%s0 + $0x68] sm:$0xf]
  %v50 = vld [vmem:[%s0 + $0x6c] sm:$0xff]
  %v51 = vld [vmem:[%s0 + $0x74] sm:$0xff]
  %v52 = vld [vmem:[%s0 + $0x7c] sm:$0xff]
  %v53 = vld [vmem:[%s0 + $0x84] sm:$0xff]
  %v54 = vld [vmem:[%s0 + $0x8c] sm:$0xf]
  %v55 = vld [vmem:[%s1] sm:$0xff]
  %v56 = vld [vmem:[%s1 + $0x8] sm:$0xff]
  %v57 = vld [vmem:[%s1 + $0x10] sm:$0xff]
  %v58 = vld [vmem:[%s1 + $0x18] sm:$0xff]
  %v59 = vld [vmem:[%s1 + $0x20] sm:$0xff]
  %v60 = vld [vmem:[%s1 + $0x28] sm:$0xff]
  %v61 = vld [vmem:[%s1 + $0x30] sm:$0xff]
  %v62 = vld [vmem:[%s1 + $0x38] sm:$0xff]
  %v63 = vld [vmem:[%s1 + $0x40] sm:$0xff]
  %v64 = vld [vmem:[%s1 + $0x48] sm:$0xff]
  %v65 = vld [vmem:[%s1 + $0x50] sm:$0xff]
  %v66 = vld [vmem:[%s1 + $0x58] sm:$0xff]
  %v67 = vld [vmem:[%s1 + $0x60] sm:$0xff]
  %v68 = vld [vmem:[%s1 + $0x68] sm:$0xff]
  %v69 = vld [vmem:[%s1 + $0x70] sm:$0xff]
  %v70 = vld [vmem:[%s1 + $0x78] sm:$0xff]
  %v71 = vld [vmem:[%s1 + $0x80] sm:$0xff]
  %v72 = vld [vmem:[%s1 + $0x88] sm:$0xff]
  %v73 = vld [vmem:[%s1 + $0x90] sm:$0xff]
  %v74 = vld [vmem:[%s1 + $0x98] sm:$0xff]
  %v75 = vld [vmem:[%s1 + $0xa0] sm:$0xff]
  %v76 = vld [vmem:[%s1 + $0xa8] sm:$0xff]
  %v77 = vld [vmem:[%s1 + $0xb0] sm:$0xff]
  %v78 = vld [vmem:[%s1 + $0xb8] sm:$0xff]
  %v79 = vld [vmem:[%s1 + $0xc0] sm:$0xff]
  %v80 = vld [vmem:[%s1 + $0xc8] sm:$0xff]
  %v81 = vld [vmem:[%s1 + $0xd0] sm:$0xff]
  %v82 = vld [vmem:[%s1 + $0xd8] sm:$0xff]
  %v83 = vld [vmem:[%s1 + $0xe0] sm:$0xff]
  %v84 = vld [vmem:[%s1 + $0xe8] sm:$0xff]
  %v85 = vld [vmem:[%s1 + $0xf0] sm:$0xff]
  %v86 = vld [vmem:[%s1 + $0xf8] sm:$0xff]
  %v87 = vld [vmem:[%s1 + $0x100] sm:$0xff]
  %v88 = vld [vmem:[%s1 + $0x108] sm:$0xff]
  %v89 = vld [vmem:[%s1 + $0x110] sm:$0xff]
  %v90 = vld [vmem:[%s1 + $0x118] sm:$0xff]
  %v91 = vld [vmem:[%s1 + $0x120] sm:$0xff]
  %v92 = vld [vmem:[%s1 + $0x128] sm:$0xff]
  %v93 = vld [vmem:[%s1 + $0x130] sm:$0xff]
  %v94 = vld [vmem:[%s1 + $0x138] sm:$0xff]
  %v95 = vld [vmem:[%s1 + $0x140] sm:$0xff]
  %v96 = vld [vmem:[%s1 + $0x148] sm:$0xff]
  %v97 = vld [vmem:[%s1 + $0x150] sm:$0xff]
  %v98 = vld [vmem:[%s1 + $0x158] sm:$0xff]
  %v99 = vld [vmem:[%s1 + $0x160] sm:$0xff]
  %v100 = vld [vmem:[%s1 + $0x168] sm:$0xff]
  %v101 = vld [vmem:[%s1 + $0x170] sm:$0xff]
  %v102 = vld [vmem:[%s1 + $0x178] sm:$0xff]
  %v103 = vld [vmem:[%s1 + $0x180] sm:$0xff]
  %v104 = vld [vmem:[%s1 + $0x188] sm:$0xff]
  %v105 = vld [vmem:[%s1 + $0x190] sm:$0xff]
  %v106 = vld [vmem:[%s1 + $0x198] sm:$0xff]
  %v107 = vld [vmem:[%s1 + $0x1a0] sm:$0xff]
  %v108 = vld [vmem:[%s1 + $0x1a8] sm:$0xff]
  %v109 = vld [vmem:[%s1 + $0x1b0] sm:$0xff]
  %v110 = vld [vmem:[%s1 + $0x1b8] sm:$0xff]
  %v111 = vld [vmem:[%s1 + $0x1c0] sm:$0xff]
  %v112 = vld [vmem:[%s1 + $0x1c8] sm:$0xff]
  %v113 = vld [vmem:[%s1 + $0x1d0] sm:$0xff]
  %v114 = vld [vmem:[%s1 + $0x1d8] sm:$0xff]
  %v115 = vld [vmem:[%s1 + $0x1e0] sm:$0xff]
  %v116 = vld [vmem:[%s1 + $0x1e8] sm:$0xff]
  %v117 = vld [vmem:[%s1 + $0x1f0] sm:$0xff]
  %v118 = vld [vmem:[%s1 + $0x1f8] sm:$0xff]
  %v119 = vld [vmem:[%s1 + $0x200] sm:$0xff]
  %v120 = vld [vmem:[%s1 + $0x208] sm:$0xff]
  %v121 = vld [vmem:[%s1 + $0x210] sm:$0xff]
  %v122 = vld [vmem:[%s1 + $0x218] sm:$0xff]
  %v123 = vld [vmem:[%s1 + $0x220] sm:$0xff]
  %v124 = vld [vmem:[%s1 + $0x228] sm:$0xff]
  %v125 = vld [vmem:[%s1 + $0x230] sm:$0xff]
  %v126 = vld [vmem:[%s1 + $0x238] sm:$0xff]
  %v127 = vld [vmem:[%s1 + $0x240] sm:$0xff]
  %v128 = vld [vmem:[%s1 + $0x248] sm:$0xff]
  %v129 = vld [vmem:[%s1 + $0x250] sm:$0xff]
  %v130 = vld [vmem:[%s1 + $0x258] sm:$0xff]
  %v131 = vld [vmem:[%s1 + $0x260] sm:$0xff]
  %v132 = vld [vmem:[%s1 + $0x268] sm:$0xff]
  %v133 = vld [vmem:[%s1 + $0x270] sm:$0xff]
  %v134 = vld [vmem:[%s1 + $0x278] sm:$0xff]
  %v135 = vld [vmem:[%s1 + $0x280] sm:$0xff]
  %v136 = vld [vmem:[%s1 + $0x288] sm:$0xff]
  %v137 = vld [vmem:[%s1 + $0x290] sm:$0xff]
  %v138 = vld [vmem:[%s1 + $0x298] sm:$0xff]
  %v139 = vld [vmem:[%s1 + $0x2a0] sm:$0xff]
  %v140 = vld [vmem:[%s1 + $0x2a8] sm:$0xff]
  %v141 = vld [vmem:[%s1 + $0x2b0] sm:$0xff]
  %v142 = vld [vmem:[%s1 + $0x2b8] sm:$0xff]
  %v143 = vld [vmem:[%s1 + $0x2c0] sm:$0xff]
  %v144 = vld [vmem:[%s1 + $0x2c8] sm:$0xff]
  %v145 = vld [vmem:[%s1 + $0x2d0] sm:$0xff]
  %v146 = vld [vmem:[%s1 + $0x2d8] sm:$0xff]
  %v147 = vld [vmem:[%s1 + $0x2e0] sm:$0xff]
  %v148 = vld [vmem:[%s1 + $0x2e8] sm:$0xff]
  %v149 = vld [vmem:[%s1 + $0x2f0] sm:$0xff]
  %v150 = vld [vmem:[%s1 + $0x2f8] sm:$0xff]
  %v151 = vld [vmem:[%s1 + $0x300] sm:$0xff]
  %v152 = vld [vmem:[%s1 + $0x308] sm:$0xff]
  %v153 = vld [vmem:[%s1 + $0x310] sm:$0xff]
  %v154 = vld [vmem:[%s1 + $0x318] sm:$0xff]
  %v155 = vld [vmem:[%s1 + $0x320] sm:$0xff]
  %v156 = vld [vmem:[%s1 + $0x328] sm:$0xff]
  %v157 = vld [vmem:[%s1 + $0x330] sm:$0xff]
  %v158 = vld [vmem:[%s1 + $0x338] sm:$0xff]
  %v159 = vld [vmem:[%s1 + $0x340] sm:$0xff]
  %v160 = vld [vmem:[%s1 + $0x348] sm:$0xff]
  %v161 = vld [vmem:[%s1 + $0x350] sm:$0xff]
  %v162 = vld [vmem:[%s1 + $0x358] sm:$0xff]
  %v163 = vld [vmem:[%s1 + $0x360] sm:$0xff]
  %v164 = vld [vmem:[%s1 + $0x368] sm:$0xff]
  %v165 = vld [vmem:[%s1 + $0x370] sm:$0xff]
  %v166 = vld [vmem:[%s1 + $0x378] sm:$0xff]
  %v167 = vld [vmem:[%s1 + $0x380] sm:$0xff]
  %v168 = vld [vmem:[%s1 + $0x388] sm:$0xff]
  %v169 = vld [vmem:[%s1 + $0x390] sm:$0xff]
  %v170 = vld [vmem:[%s1 + $0x398] sm:$0xff]
  %v171 = vld [vmem:[%s1 + $0x3a0] sm:$0xff]
  %v172 = vld [vmem:[%s1 + $0x3a8] sm:$0xff]
  %v173 = vld [vmem:[%s1 + $0x3b0] sm:$0xff]
  %v174 = vld [vmem:[%s1 + $0x3b8] sm:$0xff]
  %v175 = vld [vmem:[%s1 + $0x3c0] sm:$0xff]
  %v176 = vld [vmem:[%s1 + $0x3c8] sm:$0xff]
  %v177 = vld [vmem:[%s1 + $0x3d0] sm:$0xff]
  %v178 = vld [vmem:[%s1 + $0x3d8] sm:$0xff]
  %v179 = vld [vmem:[%s1 + $0x3e0] sm:$0xff]
  %v180 = vld [vmem:[%s1 + $0x3e8] sm:$0xff]
  %v181 = vld [vmem:[%s1 + $0x3f0] sm:$0xff]
  %v182 = vld [vmem:[%s1 + $0x3f8] sm:$0xff]
  %v183 = vld [vmem:[%s1 + $0x400] sm:$0xff]
  %v184 = vld [vmem:[%s1 + $0x408] sm:$0xff]
  %v185 = vld [vmem:[%s1 + $0x410] sm:$0xff]
  %v186 = vld [vmem:[%s1 + $0x418] sm:$0xff]
  %v187 = vld [vmem:[%s1 + $0x420] sm:$0xff]
  %v188 = vld [vmem:[%s1 + $0x428] sm:$0xff]
  %v189 = vld [vmem:[%s1 + $0x430] sm:$0xff]
  %v190 = vld [vmem:[%s1 + $0x438] sm:$0xff]
  %v191 = vld [vmem:[%s1 + $0x440] sm:$0xff]
  %v192 = vld [vmem:[%s1 + $0x448] sm:$0xff]
  %v193 = vld [vmem:[%s1 + $0x450] sm:$0xff]
  %v194 = vld [vmem:[%s1 + $0x458] sm:$0xff]
  %v195 = vld [vmem:[%s1 + $0x460] sm:$0xff]
  %v196 = vld [vmem:[%s1 + $0x468] sm:$0xff]
  %v197 = vld [vmem:[%s1 + $0x470] sm:$0xff]
  %v198 = vld [vmem:[%s1 + $0x478] sm:$0xff]
  %v219 = vunpack.c.l.b16 %v35
  %v220 = vunpack.c.h.b16 %v35
  %v221 = vunpack.c.l.b16 %v36
  %v222 = vunpack.c.h.b16 %v36
  %v223 = vunpack.c.l.b16 %v37
  %v224 = vunpack.c.h.b16 %v37
  %v225 = vunpack.c.l.b16 %v38
  %v226 = vunpack.c.h.b16 %v38
  %v227 = vunpack.c.l.b16 %v39
  %v228 = vunpack.c.l.b16 %v40
  %v229 = vunpack.c.h.b16 %v40
  %v230 = vunpack.c.l.b16 %v41
  %v231 = vunpack.c.h.b16 %v41
  %v232 = vunpack.c.l.b16 %v42
  %v233 = vunpack.c.h.b16 %v42
  %v234 = vunpack.c.l.b16 %v43
  %v235 = vunpack.c.h.b16 %v43
  %v236 = vunpack.c.l.b16 %v44
  %v237 = vunpack.c.l.b16 %v45
  %v238 = vunpack.c.h.b16 %v45
  %v239 = vunpack.c.l.b16 %v46
  %v240 = vunpack.c.h.b16 %v46
  %v241 = vunpack.c.l.b16 %v47
  %v242 = vunpack.c.h.b16 %v47
  %v243 = vunpack.c.l.b16 %v48
  %v244 = vunpack.c.h.b16 %v48
  %v245 = vunpack.c.l.b16 %v49
  %v246 = vunpack.c.l.b16 %v50
  %v247 = vunpack.c.h.b16 %v50
  %v248 = vunpack.c.l.b16 %v51
  %v249 = vunpack.c.h.b16 %v51
  %v250 = vunpack.c.l.b16 %v52
  %v251 = vunpack.c.h.b16 %v52
  %v252 = vunpack.c.l.b16 %v53
  %v253 = vunpack.c.h.b16 %v53
  %v254 = vunpack.c.l.b16 %v54
  %v255 = vpack.c.b16 %v228, %v219
  %v256 = vpack.c.b16 %v229, %v220
  %v257 = vpack.c.b16 %v230, %v221
  %v258 = vpack.c.b16 %v231, %v222
  %v259 = vpack.c.b16 %v232, %v223
  %v260 = vpack.c.b16 %v233, %v224
  %v261 = vpack.c.b16 %v234, %v225
  %v262 = vpack.c.b16 %v235, %v226
  %v263 = vpack.c.b16 %v236, %v227
  %v264 = vpack.c.b16 %v246, %v237
  %v265 = vpack.c.b16 %v247, %v238
  %v266 = vpack.c.b16 %v248, %v239
  %v267 = vpack.c.b16 %v249, %v240
  %v268 = vpack.c.b16 %v250, %v241
  %v269 = vpack.c.b16 %v251, %v242
  %v270 = vpack.c.b16 %v252, %v243
  %v271 = vpack.c.b16 %v253, %v244
  %v272 = vpack.c.b16 %v254, %v245
  %v435 = vunpack.c.l.b16 %v55
  %v436 = vunpack.c.h.b16 %v55
  %v437 = vunpack.c.l.b16 %v56
  %v438 = vunpack.c.h.b16 %v56
  %v439 = vunpack.c.l.b16 %v57
  %v440 = vunpack.c.h.b16 %v57
  %v441 = vunpack.c.l.b16 %v58
  %v442 = vunpack.c.h.b16 %v58
  %v443 = vunpack.c.l.b16 %v59
  %v444 = vunpack.c.h.b16 %v59
  %v445 = vunpack.c.l.b16 %v60
  %v446 = vunpack.c.h.b16 %v60
  %v447 = vunpack.c.l.b16 %v61
  %v448 = vunpack.c.h.b16 %v61
  %v449 = vunpack.c.l.b16 %v62
  %v450 = vunpack.c.h.b16 %v62
  %v451 = vunpack.c.l.b16 %v63
  %v452 = vunpack.c.h.b16 %v63
  %v453 = vunpack.c.l.b16 %v64
  %v454 = vunpack.c.h.b16 %v64
  %v455 = vunpack.c.l.b16 %v65
  %v456 = vunpack.c.h.b16 %v65
  %v457 = vunpack.c.l.b16 %v66
  %v458 = vunpack.c.h.b16 %v66
  %v459 = vunpack.c.l.b16 %v67
  %v460 = vunpack.c.h.b16 %v67
  %v461 = vunpack.c.l.b16 %v68
  %v462 = vunpack.c.h.b16 %v68
  %v463 = vunpack.c.l.b16 %v69
  %v464 = vunpack.c.h.b16 %v69
  %v465 = vunpack.c.l.b16 %v70
  %v466 = vunpack.c.h.b16 %v70
  %v467 = vunpack.c.l.b16 %v71
  %v468 = vunpack.c.h.b16 %v71
  %v469 = vunpack.c.l.b16 %v72
  %v470 = vunpack.c.h.b16 %v72
  %v471 = vunpack.c.l.b16 %v73
  %v472 = vunpack.c.h.b16 %v73
  %v473 = vunpack.c.l.b16 %v74
  %v474 = vunpack.c.h.b16 %v74
  %v475 = vunpack.c.l.b16 %v75
  %v476 = vunpack.c.h.b16 %v75
  %v477 = vunpack.c.l.b16 %v76
  %v478 = vunpack.c.h.b16 %v76
  %v479 = vunpack.c.l.b16 %v77
  %v480 = vunpack.c.h.b16 %v77
  %v481 = vunpack.c.l.b16 %v78
  %v482 = vunpack.c.h.b16 %v78
  %v483 = vunpack.c.l.b16 %v79
  %v484 = vunpack.c.h.b16 %v79
  %v485 = vunpack.c.l.b16 %v80
  %v486 = vunpack.c.h.b16 %v80
  %v487 = vunpack.c.l.b16 %v81
  %v488 = vunpack.c.h.b16 %v81
  %v489 = vunpack.c.l.b16 %v82
  %v490 = vunpack.c.h.b16 %v82
  %v491 = vunpack.c.l.b16 %v83
  %v492 = vunpack.c.h.b16 %v83
  %v493 = vunpack.c.l.b16 %v84
  %v494 = vunpack.c.h.b16 %v84
  %v495 = vunpack.c.l.b16 %v85
  %v496 = vunpack.c.h.b16 %v85
  %v497 = vunpack.c.l.b16 %v86
  %v498 = vunpack.c.h.b16 %v86
  %v499 = vunpack.c.l.b16 %v87
  %v500 = vunpack.c.h.b16 %v87
  %v501 = vunpack.c.l.b16 %v88
  %v502 = vunpack.c.h.b16 %v88
  %v503 = vunpack.c.l.b16 %v89
  %v504 = vunpack.c.h.b16 %v89
  %v505 = vunpack.c.l.b16 %v90
  %v506 = vunpack.c.h.b16 %v90
  %v507 = vunpack.c.l.b16 %v91
  %v508 = vunpack.c.h.b16 %v91
  %v509 = vunpack.c.l.b16 %v92
  %v510 = vunpack.c.h.b16 %v92
  %v511 = vunpack.c.l.b16 %v93
  %v512 = vunpack.c.h.b16 %v93
  %v513 = vunpack.c.l.b16 %v94
  %v514 = vunpack.c.h.b16 %v94
  %v515 = vunpack.c.l.b16 %v95
  %v516 = vunpack.c.h.b16 %v95
  %v517 = vunpack.c.l.b16 %v96
  %v518 = vunpack.c.h.b16 %v96
  %v519 = vunpack.c.l.b16 %v97
  %v520 = vunpack.c.h.b16 %v97
  %v521 = vunpack.c.l.b16 %v98
  %v522 = vunpack.c.h.b16 %v98
  %v523 = vunpack.c.l.b16 %v99
  %v524 = vunpack.c.h.b16 %v99
  %v525 = vunpack.c.l.b16 %v100
  %v526 = vunpack.c.h.b16 %v100
  %v527 = vunpack.c.l.b16 %v101
  %v528 = vunpack.c.h.b16 %v101
  %v529 = vunpack.c.l.b16 %v102
  %v530 = vunpack.c.h.b16 %v102
  %v531 = vunpack.c.l.b16 %v103
  %v532 = vunpack.c.h.b16 %v103
  %v533 = vunpack.c.l.b16 %v104
  %v534 = vunpack.c.h.b16 %v104
  %v535 = vunpack.c.l.b16 %v105
  %v536 = vunpack.c.h.b16 %v105
  %v537 = vunpack.c.l.b16 %v106
  %v538 = vunpack.c.h.b16 %v106
  %v539 = vunpack.c.l.b16 %v107
  %v540 = vunpack.c.h.b16 %v107
  %v541 = vunpack.c.l.b16 %v108
  %v542 = vunpack.c.h.b16 %v108
  %v543 = vunpack.c.l.b16 %v109
  %v544 = vunpack.c.h.b16 %v109
  %v545 = vunpack.c.l.b16 %v110
  %v546 = vunpack.c.h.b16 %v110
  %v547 = vunpack.c.l.b16 %v111
  %v548 = vunpack.c.h.b16 %v111
  %v549 = vunpack.c.l.b16 %v112
  %v550 = vunpack.c.h.b16 %v112
  %v551 = vunpack.c.l.b16 %v113
  %v552 = vunpack.c.h.b16 %v113
  %v553 = vunpack.c.l.b16 %v114
  %v554 = vunpack.c.h.b16 %v114
  %v555 = vunpack.c.l.b16 %v115
  %v556 = vunpack.c.h.b16 %v115
  %v557 = vunpack.c.l.b16 %v116
  %v558 = vunpack.c.h.b16 %v116
  %v559 = vunpack.c.l.b16 %v117
  %v560 = vunpack.c.h.b16 %v117
  %v561 = vunpack.c.l.b16 %v118
  %v562 = vunpack.c.h.b16 %v118
  %v563 = vunpack.c.l.b16 %v119
  %v564 = vunpack.c.h.b16 %v119
  %v565 = vunpack.c.l.b16 %v120
  %v566 = vunpack.c.h.b16 %v120
  %v567 = vunpack.c.l.b16 %v121
  %v568 = vunpack.c.h.b16 %v121
  %v569 = vunpack.c.l.b16 %v122
  %v570 = vunpack.c.h.b16 %v122
  %v571 = vunpack.c.l.b16 %v123
  %v572 = vunpack.c.h.b16 %v123
  %v573 = vunpack.c.l.b16 %v124
  %v574 = vunpack.c.h.b16 %v124
  %v575 = vunpack.c.l.b16 %v125
  %v576 = vunpack.c.h.b16 %v125
  %v577 = vunpack.c.l.b16 %v126
  %v578 = vunpack.c.h.b16 %v126
  %v579 = vunpack.c.l.b16 %v127
  %v580 = vunpack.c.h.b16 %v127
  %v581 = vunpack.c.l.b16 %v128
  %v582 = vunpack.c.h.b16 %v128
  %v583 = vunpack.c.l.b16 %v129
  %v584 = vunpack.c.h.b16 %v129
  %v585 = vunpack.c.l.b16 %v130
  %v586 = vunpack.c.h.b16 %v130
  %v587 = vunpack.c.l.b16 %v131
  %v588 = vunpack.c.h.b16 %v131
  %v589 = vunpack.c.l.b16 %v132
  %v590 = vunpack.c.h.b16 %v132
  %v591 = vunpack.c.l.b16 %v133
  %v592 = vunpack.c.h.b16 %v133
  %v593 = vunpack.c.l.b16 %v134
  %v594 = vunpack.c.h.b16 %v134
  %v595 = vunpack.c.l.b16 %v135
  %v596 = vunpack.c.h.b16 %v135
  %v597 = vunpack.c.l.b16 %v136
  %v598 = vunpack.c.h.b16 %v136
  %v599 = vunpack.c.l.b16 %v137
  %v600 = vunpack.c.h.b16 %v137
  %v601 = vunpack.c.l.b16 %v138
  %v602 = vunpack.c.h.b16 %v138
  %v603 = vunpack.c.l.b16 %v139
  %v604 = vunpack.c.h.b16 %v139
  %v605 = vunpack.c.l.b16 %v140
  %v606 = vunpack.c.h.b16 %v140
  %v607 = vunpack.c.l.b16 %v141
  %v608 = vunpack.c.h.b16 %v141
  %v609 = vunpack.c.l.b16 %v142
  %v610 = vunpack.c.h.b16 %v142
  %v611 = vunpack.c.l.b16 %v143
  %v612 = vunpack.c.h.b16 %v143
  %v613 = vunpack.c.l.b16 %v144
  %v614 = vunpack.c.h.b16 %v144
  %v615 = vunpack.c.l.b16 %v145
  %v616 = vunpack.c.h.b16 %v145
  %v617 = vunpack.c.l.b16 %v146
  %v618 = vunpack.c.h.b16 %v146
  %v619 = vunpack.c.l.b16 %v147
  %v620 = vunpack.c.h.b16 %v147
  %v621 = vunpack.c.l.b16 %v148
  %v622 = vunpack.c.h.b16 %v148
  %v623 = vunpack.c.l.b16 %v149
  %v624 = vunpack.c.h.b16 %v149
  %v625 = vunpack.c.l.b16 %v150
  %v626 = vunpack.c.h.b16 %v150
  %v627 = vunpack.c.l.b16 %v151
  %v628 = vunpack.c.h.b16 %v151
  %v629 = vunpack.c.l.b16 %v152
  %v630 = vunpack.c.h.b16 %v152
  %v631 = vunpack.c.l.b16 %v153
  %v632 = vunpack.c.h.b16 %v153
  %v633 = vunpack.c.l.b16 %v154
  %v634 = vunpack.c.h.b16 %v154
  %v635 = vunpack.c.l.b16 %v155
  %v636 = vunpack.c.h.b16 %v155
  %v637 = vunpack.c.l.b16 %v156
  %v638 = vunpack.c.h.b16 %v156
  %v639 = vunpack.c.l.b16 %v157
  %v640 = vunpack.c.h.b16 %v157
  %v641 = vunpack.c.l.b16 %v158
  %v642 = vunpack.c.h.b16 %v158
  %v643 = vunpack.c.l.b16 %v159
  %v644 = vunpack.c.h.b16 %v159
  %v645 = vunpack.c.l.b16 %v160
  %v646 = vunpack.c.h.b16 %v160
  %v647 = vunpack.c.l.b16 %v161
  %v648 = vunpack.c.h.b16 %v161
  %v649 = vunpack.c.l.b16 %v162
  %v650 = vunpack.c.h.b16 %v162
  %v651 = vunpack.c.l.b16 %v163
  %v652 = vunpack.c.h.b16 %v163
  %v653 = vunpack.c.l.b16 %v164
  %v654 = vunpack.c.h.b16 %v164
  %v655 = vunpack.c.l.b16 %v165
  %v656 = vunpack.c.h.b16 %v165
  %v657 = vunpack.c.l.b16 %v166
  %v658 = vunpack.c.h.b16 %v166
  %v659 = vunpack.c.l.b16 %v167
  %v660 = vunpack.c.h.b16 %v167
  %v661 = vunpack.c.l.b16 %v168
  %v662 = vunpack.c.h.b16 %v168
  %v663 = vunpack.c.l.b16 %v169
  %v664 = vunpack.c.h.b16 %v169
  %v665 = vunpack.c.l.b16 %v170
  %v666 = vunpack.c.h.b16 %v170
  %v667 = vunpack.c.l.b16 %v171
  %v668 = vunpack.c.h.b16 %v171
  %v669 = vunpack.c.l.b16 %v172
  %v670 = vunpack.c.h.b16 %v172
  %v671 = vunpack.c.l.b16 %v173
  %v672 = vunpack.c.h.b16 %v173
  %v673 = vunpack.c.l.b16 %v174
  %v674 = vunpack.c.h.b16 %v174
  %v675 = vunpack.c.l.b16 %v175
  %v676 = vunpack.c.h.b16 %v175
  %v677 = vunpack.c.l.b16 %v176
  %v678 = vunpack.c.h.b16 %v176
  %v679 = vunpack.c.l.b16 %v177
  %v680 = vunpack.c.h.b16 %v177
  %v681 = vunpack.c.l.b16 %v178
  %v682 = vunpack.c.h.b16 %v178
  %v683 = vunpack.c.l.b16 %v179
  %v684 = vunpack.c.h.b16 %v179
  %v685 = vunpack.c.l.b16 %v180
  %v686 = vunpack.c.h.b16 %v180
  %v687 = vunpack.c.l.b16 %v181
  %v688 = vunpack.c.h.b16 %v181
  %v689 = vunpack.c.l.b16 %v182
  %v690 = vunpack.c.h.b16 %v182
  %v691 = vunpack.c.l.b16 %v183
  %v692 = vunpack.c.h.b16 %v183
  %v693 = vunpack.c.l.b16 %v184
  %v694 = vunpack.c.h.b16 %v184
  %v695 = vunpack.c.l.b16 %v185
  %v696 = vunpack.c.h.b16 %v185
  %v697 = vunpack.c.l.b16 %v186
  %v698 = vunpack.c.h.b16 %v186
  %v699 = vunpack.c.l.b16 %v187
  %v700 = vunpack.c.h.b16 %v187
  %v701 = vunpack.c.l.b16 %v188
  %v702 = vunpack.c.h.b16 %v188
  %v703 = vunpack.c.l.b16 %v189
  %v704 = vunpack.c.h.b16 %v189
  %v705 = vunpack.c.l.b16 %v190
  %v706 = vunpack.c.h.b16 %v190
  %v707 = vunpack.c.l.b16 %v191
  %v708 = vunpack.c.h.b16 %v191
  %v709 = vunpack.c.l.b16 %v192
  %v710 = vunpack.c.h.b16 %v192
  %v711 = vunpack.c.l.b16 %v193
  %v712 = vunpack.c.h.b16 %v193
  %v713 = vunpack.c.l.b16 %v194
  %v714 = vunpack.c.h.b16 %v194
  %v715 = vunpack.c.l.b16 %v195
  %v716 = vunpack.c.h.b16 %v195
  %v717 = vunpack.c.l.b16 %v196
  %v718 = vunpack.c.h.b16 %v196
  %v719 = vunpack.c.l.b16 %v197
  %v720 = vunpack.c.h.b16 %v197
  %v721 = vunpack.c.l.b16 %v198
  %v722 = vunpack.c.h.b16 %v198
  %v723 = vpack.c.b16 %v437, %v435
  %v724 = vpack.c.b16 %v438, %v436
  %v725 = vpack.c.b16 %v441, %v439
  %v726 = vpack.c.b16 %v442, %v440
  %v727 = vpack.c.b16 %v445, %v443
  %v728 = vpack.c.b16 %v446, %v444
  %v729 = vpack.c.b16 %v449, %v447
  %v730 = vpack.c.b16 %v450, %v448
  %v731 = vpack.c.b16 %v453, %v451
  %v732 = vpack.c.b16 %v454, %v452
  %v733 = vpack.c.b16 %v457, %v455
  %v734 = vpack.c.b16 %v458, %v456
  %v735 = vpack.c.b16 %v461, %v459
  %v736 = vpack.c.b16 %v462, %v460
  %v737 = vpack.c.b16 %v465, %v463
  %v738 = vpack.c.b16 %v466, %v464
  %v739 = vpack.c.b16 %v469, %v467
  %v740 = vpack.c.b16 %v470, %v468
  %v741 = vpack.c.b16 %v473, %v471
  %v742 = vpack.c.b16 %v474, %v472
  %v743 = vpack.c.b16 %v477, %v475
  %v744 = vpack.c.b16 %v478, %v476
  %v745 = vpack.c.b16 %v481, %v479
  %v746 = vpack.c.b16 %v482, %v480
  %v747 = vpack.c.b16 %v485, %v483
  %v748 = vpack.c.b16 %v486, %v484
  %v749 = vpack.c.b16 %v489, %v487
  %v750 = vpack.c.b16 %v490, %v488
  %v751 = vpack.c.b16 %v493, %v491
  %v752 = vpack.c.b16 %v494, %v492
  %v753 = vpack.c.b16 %v497, %v495
  %v754 = vpack.c.b16 %v498, %v496
  %v755 = vpack.c.b16 %v501, %v499
  %v756 = vpack.c.b16 %v502, %v500
  %v757 = vpack.c.b16 %v505, %v503
  %v758 = vpack.c.b16 %v506, %v504
  %v759 = vpack.c.b16 %v509, %v507
  %v760 = vpack.c.b16 %v510, %v508
  %v761 = vpack.c.b16 %v513, %v511
  %v762 = vpack.c.b16 %v514, %v512
  %v763 = vpack.c.b16 %v517, %v515
  %v764 = vpack.c.b16 %v518, %v516
  %v765 = vpack.c.b16 %v521, %v519
  %v766 = vpack.c.b16 %v522, %v520
  %v767 = vpack.c.b16 %v525, %v523
  %v768 = vpack.c.b16 %v526, %v524
  %v769 = vpack.c.b16 %v529, %v527
  %v770 = vpack.c.b16 %v530, %v528
  %v771 = vpack.c.b16 %v533, %v531
  %v772 = vpack.c.b16 %v534, %v532
  %v773 = vpack.c.b16 %v537, %v535
  %v774 = vpack.c.b16 %v538, %v536
  %v775 = vpack.c.b16 %v541, %v539
  %v776 = vpack.c.b16 %v542, %v540
  %v777 = vpack.c.b16 %v545, %v543
  %v778 = vpack.c.b16 %v546, %v544
  %v779 = vpack.c.b16 %v549, %v547
  %v780 = vpack.c.b16 %v550, %v548
  %v781 = vpack.c.b16 %v553, %v551
  %v782 = vpack.c.b16 %v554, %v552
  %v783 = vpack.c.b16 %v557, %v555
  %v784 = vpack.c.b16 %v558, %v556
  %v785 = vpack.c.b16 %v561, %v559
  %v786 = vpack.c.b16 %v562, %v560
  %v787 = vpack.c.b16 %v565, %v563
  %v788 = vpack.c.b16 %v566, %v564
  %v789 = vpack.c.b16 %v569, %v567
  %v790 = vpack.c.b16 %v570, %v568
  %v791 = vpack.c.b16 %v573, %v571
  %v792 = vpack.c.b16 %v574, %v572
  %v793 = vpack.c.b16 %v577, %v575
  %v794 = vpack.c.b16 %v578, %v576
  %v795 = vpack.c.b16 %v581, %v579
  %v796 = vpack.c.b16 %v582, %v580
  %v797 = vpack.c.b16 %v585, %v583
  %v798 = vpack.c.b16 %v586, %v584
  %v799 = vpack.c.b16 %v589, %v587
  %v800 = vpack.c.b16 %v590, %v588
  %v801 = vpack.c.b16 %v593, %v591
  %v802 = vpack.c.b16 %v594, %v592
  %v803 = vpack.c.b16 %v597, %v595
  %v804 = vpack.c.b16 %v598, %v596
  %v805 = vpack.c.b16 %v601, %v599
  %v806 = vpack.c.b16 %v602, %v600
  %v807 = vpack.c.b16 %v605, %v603
  %v808 = vpack.c.b16 %v606, %v604
  %v809 = vpack.c.b16 %v609, %v607
  %v810 = vpack.c.b16 %v610, %v608
  %v811 = vpack.c.b16 %v613, %v611
  %v812 = vpack.c.b16 %v614, %v612
  %v813 = vpack.c.b16 %v617, %v615
  %v814 = vpack.c.b16 %v618, %v616
  %v815 = vpack.c.b16 %v621, %v619
  %v816 = vpack.c.b16 %v622, %v620
  %v817 = vpack.c.b16 %v625, %v623
  %v818 = vpack.c.b16 %v626, %v624
  %v819 = vpack.c.b16 %v629, %v627
  %v820 = vpack.c.b16 %v630, %v628
  %v821 = vpack.c.b16 %v633, %v631
  %v822 = vpack.c.b16 %v634, %v632
  %v823 = vpack.c.b16 %v637, %v635
  %v824 = vpack.c.b16 %v638, %v636
  %v825 = vpack.c.b16 %v641, %v639
  %v826 = vpack.c.b16 %v642, %v640
  %v827 = vpack.c.b16 %v645, %v643
  %v828 = vpack.c.b16 %v646, %v644
  %v829 = vpack.c.b16 %v649, %v647
  %v830 = vpack.c.b16 %v650, %v648
  %v831 = vpack.c.b16 %v653, %v651
  %v832 = vpack.c.b16 %v654, %v652
  %v833 = vpack.c.b16 %v657, %v655
  %v834 = vpack.c.b16 %v658, %v656
  %v835 = vpack.c.b16 %v661, %v659
  %v836 = vpack.c.b16 %v662, %v660
  %v837 = vpack.c.b16 %v665, %v663
  %v838 = vpack.c.b16 %v666, %v664
  %v839 = vpack.c.b16 %v669, %v667
  %v840 = vpack.c.b16 %v670, %v668
  %v841 = vpack.c.b16 %v673, %v671
  %v842 = vpack.c.b16 %v674, %v672
  %v843 = vpack.c.b16 %v677, %v675
  %v844 = vpack.c.b16 %v678, %v676
  %v845 = vpack.c.b16 %v681, %v679
  %v846 = vpack.c.b16 %v682, %v680
  %v847 = vpack.c.b16 %v685, %v683
  %v848 = vpack.c.b16 %v686, %v684
  %v849 = vpack.c.b16 %v689, %v687
  %v850 = vpack.c.b16 %v690, %v688
  %v851 = vpack.c.b16 %v693, %v691
  %v852 = vpack.c.b16 %v694, %v692
  %v853 = vpack.c.b16 %v697, %v695
  %v854 = vpack.c.b16 %v698, %v696
  %v855 = vpack.c.b16 %v701, %v699
  %v856 = vpack.c.b16 %v702, %v700
  %v857 = vpack.c.b16 %v705, %v703
  %v858 = vpack.c.b16 %v706, %v704
  %v859 = vpack.c.b16 %v709, %v707
  %v860 = vpack.c.b16 %v710, %v708
  %v861 = vpack.c.b16 %v713, %v711
  %v862 = vpack.c.b16 %v714, %v712
  %v863 = vpack.c.b16 %v717, %v715
  %v864 = vpack.c.b16 %v718, %v716
  %v865 = vpack.c.b16 %v721, %v719
  %v866 = vpack.c.b16 %v722, %v720
  %1011 = vmatprep.subr.bf16.mxu0 %v738
  %1012 = vmatpush1.bf16.msra.mxu0 %v737
  %1013 = vmatprep.subr.bf16.mxu0 %v736
  %1014 = vmatpush1.bf16.msra.mxu0 %v735
  %1015 = vmatprep.subr.bf16.mxu0 %v734
  %1016 = vmatpush1.bf16.msra.mxu0 %v733
  %1017 = vmatprep.subr.bf16.mxu0 %v732
  %1018 = vmatpush1.bf16.msra.mxu0 %v731
  %1019 = vmatprep.subr.bf16.mxu0 %v730
  %1020 = vmatpush1.bf16.msra.mxu0 %v729
  %1021 = vmatprep.subr.bf16.mxu0 %v728
  %1022 = vmatpush1.bf16.msra.mxu0 %v727
  %1023 = vmatprep.subr.bf16.mxu0 %v726
  %1024 = vmatpush1.bf16.msra.mxu0 %v725
  %1025 = vmatprep.subr.bf16.mxu0 %v724
  %1026 = vmatpush1.bf16.msra.mxu0 %v723
  %1027 = vmatprep.subr.bf16.mxu0 %v754
  %1028 = vmatpush2.bf16.msra.mxu0 %v753
  %1029 = vmatprep.subr.bf16.mxu0 %v752
  %1030 = vmatpush2.bf16.msra.mxu0 %v751
  %1031 = vmatprep.subr.bf16.mxu0 %v750
  %1032 = vmatpush2.bf16.msra.mxu0 %v749
  %1033 = vmatprep.subr.bf16.mxu0 %v748
  %1034 = vmatpush2.bf16.msra.mxu0 %v747
  %1035 = vmatprep.subr.bf16.mxu0 %v746
  %1036 = vmatpush2.bf16.msra.mxu0 %v745
  %1037 = vmatprep.subr.bf16.mxu0 %v744
  %1038 = vmatpush2.bf16.msra.mxu0 %v743
  %1039 = vmatprep.subr.bf16.mxu0 %v742
  %1040 = vmatpush2.bf16.msra.mxu0 %v741
  %1041 = vmatprep.subr.bf16.mxu0 %v740
  %1042 = vmatpush2.bf16.msra.mxu0 %v739
  %1043 = vmatprep.mubr.bf16.mxu0 %v256
  %1044 = vmatmul.mubr.bf16.gmra.mxu0 %v255
  %v1045 = vpop.f32.mrf.mxu0
  %v1046 = vadd.f32 0.0, %v1045
  %v1047 = vpop.f32.mrf.mxu0
  %v1048 = vadd.f32 0.0, %v1047
  %v1049 = vpop.f32.mrf.mxu0
  %v1050 = vadd.f32 0.0, %v1049
  %v1051 = vpop.f32.mrf.mxu0
  %v1052 = vadd.f32 0.0, %v1051
  %1053 = vmatprep.mubr.bf16.mxu0 %v265
  %1054 = vmatmul.mubr.bf16.gmra.mxu0 %v264
  %v1055 = vpop.f32.mrf.mxu0
  %v1056 = vadd.f32 0.0, %v1055
  %v1057 = vpop.f32.mrf.mxu0
  %v1058 = vadd.f32 0.0, %v1057
  %v1059 = vpop.f32.mrf.mxu0
  %v1060 = vadd.f32 0.0, %v1059
  %v1061 = vpop.f32.mrf.mxu0
  %v1062 = vadd.f32 0.0, %v1061
  %1063 = vdwg.mxu0
  %1064 = vmatprep.subr.bf16.mxu0 %v770
  %1065 = vmatpush1.bf16.msra.mxu0 %v769
  %1066 = vmatprep.subr.bf16.mxu0 %v768
  %1067 = vmatpush1.bf16.msra.mxu0 %v767
  %1068 = vmatprep.subr.bf16.mxu0 %v766
  %1069 = vmatpush1.bf16.msra.mxu0 %v765
  %1070 = vmatprep.subr.bf16.mxu0 %v764
  %1071 = vmatpush1.bf16.msra.mxu0 %v763
  %1072 = vmatprep.subr.bf16.mxu0 %v762
  %1073 = vmatpush1.bf16.msra.mxu0 %v761
  %1074 = vmatprep.subr.bf16.mxu0 %v760
  %1075 = vmatpush1.bf16.msra.mxu0 %v759
  %1076 = vmatprep.subr.bf16.mxu0 %v758
  %1077 = vmatpush1.bf16.msra.mxu0 %v757
  %1078 = vmatprep.subr.bf16.mxu0 %v756
  %1079 = vmatpush1.bf16.msra.mxu0 %v755
  %1080 = vmatprep.subr.bf16.mxu0 %v786
  %1081 = vmatpush2.bf16.msra.mxu0 %v785
  %1082 = vmatprep.subr.bf16.mxu0 %v784
  %1083 = vmatpush2.bf16.msra.mxu0 %v783
  %1084 = vmatprep.subr.bf16.mxu0 %v782
  %1085 = vmatpush2.bf16.msra.mxu0 %v781
  %1086 = vmatprep.subr.bf16.mxu0 %v780
  %1087 = vmatpush2.bf16.msra.mxu0 %v779
  %1088 = vmatprep.subr.bf16.mxu0 %v778
  %1089 = vmatpush2.bf16.msra.mxu0 %v777
  %1090 = vmatprep.subr.bf16.mxu0 %v776
  %1091 = vmatpush2.bf16.msra.mxu0 %v775
  %1092 = vmatprep.subr.bf16.mxu0 %v774
  %1093 = vmatpush2.bf16.msra.mxu0 %v773
  %1094 = vmatprep.subr.bf16.mxu0 %v772
  %1095 = vmatpush2.bf16.msra.mxu0 %v771
  %1096 = vmatprep.mubr.bf16.mxu0 %v258
  %1097 = vmatmul.mubr.bf16.gmra.mxu0 %v257
  %v1098 = vpop.f32.mrf.mxu0
  %v1099 = vadd.f32 %v1046, %v1098
  %v1100 = vpop.f32.mrf.mxu0
  %v1101 = vadd.f32 %v1048, %v1100
  %v1102 = vpop.f32.mrf.mxu0
  %v1103 = vadd.f32 %v1050, %v1102
  %v1104 = vpop.f32.mrf.mxu0
  %v1105 = vadd.f32 %v1052, %v1104
  %1106 = vmatprep.mubr.bf16.mxu0 %v267
  %1107 = vmatmul.mubr.bf16.gmra.mxu0 %v266
  %v1108 = vpop.f32.mrf.mxu0
  %v1109 = vadd.f32 %v1056, %v1108
  %v1110 = vpop.f32.mrf.mxu0
  %v1111 = vadd.f32 %v1058, %v1110
  %v1112 = vpop.f32.mrf.mxu0
  %v1113 = vadd.f32 %v1060, %v1112
  %v1114 = vpop.f32.mrf.mxu0
  %v1115 = vadd.f32 %v1062, %v1114
  %1116 = vdwg.mxu0
  %1117 = vmatprep.subr.bf16.mxu0 %v802
  %1118 = vmatpush1.bf16.msra.mxu0 %v801
  %1119 = vmatprep.subr.bf16.mxu0 %v800
  %1120 = vmatpush1.bf16.msra.mxu0 %v799
  %1121 = vmatprep.subr.bf16.mxu0 %v798
  %1122 = vmatpush1.bf16.msra.mxu0 %v797
  %1123 = vmatprep.subr.bf16.mxu0 %v796
  %1124 = vmatpush1.bf16.msra.mxu0 %v795
  %1125 = vmatprep.subr.bf16.mxu0 %v794
  %1126 = vmatpush1.bf16.msra.mxu0 %v793
  %1127 = vmatprep.subr.bf16.mxu0 %v792
  %1128 = vmatpush1.bf16.msra.mxu0 %v791
  %1129 = vmatprep.subr.bf16.mxu0 %v790
  %1130 = vmatpush1.bf16.msra.mxu0 %v789
  %1131 = vmatprep.subr.bf16.mxu0 %v788
  %1132 = vmatpush1.bf16.msra.mxu0 %v787
  %1133 = vmatprep.subr.bf16.mxu0 %v818
  %1134 = vmatpush2.bf16.msra.mxu0 %v817
  %1135 = vmatprep.subr.bf16.mxu0 %v816
  %1136 = vmatpush2.bf16.msra.mxu0 %v815
  %1137 = vmatprep.subr.bf16.mxu0 %v814
  %1138 = vmatpush2.bf16.msra.mxu0 %v813
  %1139 = vmatprep.subr.bf16.mxu0 %v812
  %1140 = vmatpush2.bf16.msra.mxu0 %v811
  %1141 = vmatprep.subr.bf16.mxu0 %v810
  %1142 = vmatpush2.bf16.msra.mxu0 %v809
  %1143 = vmatprep.subr.bf16.mxu0 %v808
  %1144 = vmatpush2.bf16.msra.mxu0 %v807
  %1145 = vmatprep.subr.bf16.mxu0 %v806
  %1146 = vmatpush2.bf16.msra.mxu0 %v805
  %1147 = vmatprep.subr.bf16.mxu0 %v804
  %1148 = vmatpush2.bf16.msra.mxu0 %v803
  %1149 = vmatprep.mubr.bf16.mxu0 %v260
  %1150 = vmatmul.mubr.bf16.gmra.mxu0 %v259
  %v1151 = vpop.f32.mrf.mxu0
  %v1152 = vadd.f32 %v1099, %v1151
  %v1153 = vpop.f32.mrf.mxu0
  %v1154 = vadd.f32 %v1101, %v1153
  %v1155 = vpop.f32.mrf.mxu0
  %v1156 = vadd.f32 %v1103, %v1155
  %v1157 = vpop.f32.mrf.mxu0
  %v1158 = vadd.f32 %v1105, %v1157
  %1159 = vmatprep.mubr.bf16.mxu0 %v269
  %1160 = vmatmul.mubr.bf16.gmra.mxu0 %v268
  %v1161 = vpop.f32.mrf.mxu0
  %v1162 = vadd.f32 %v1109, %v1161
  %v1163 = vpop.f32.mrf.mxu0
  %v1164 = vadd.f32 %v1111, %v1163
  %v1165 = vpop.f32.mrf.mxu0
  %v1166 = vadd.f32 %v1113, %v1165
  %v1167 = vpop.f32.mrf.mxu0
  %v1168 = vadd.f32 %v1115, %v1167
  %1169 = vdwg.mxu0
  %1170 = vmatprep.subr.bf16.mxu0 %v834
  %1171 = vmatpush1.bf16.msra.mxu0 %v833
  %1172 = vmatprep.subr.bf16.mxu0 %v832
  %1173 = vmatpush1.bf16.msra.mxu0 %v831
  %1174 = vmatprep.subr.bf16.mxu0 %v830
  %1175 = vmatpush1.bf16.msra.mxu0 %v829
  %1176 = vmatprep.subr.bf16.mxu0 %v828
  %1177 = vmatpush1.bf16.msra.mxu0 %v827
  %1178 = vmatprep.subr.bf16.mxu0 %v826
  %1179 = vmatpush1.bf16.msra.mxu0 %v825
  %1180 = vmatprep.subr.bf16.mxu0 %v824
  %1181 = vmatpush1.bf16.msra.mxu0 %v823
  %1182 = vmatprep.subr.bf16.mxu0 %v822
  %1183 = vmatpush1.bf16.msra.mxu0 %v821
  %1184 = vmatprep.subr.bf16.mxu0 %v820
  %1185 = vmatpush1.bf16.msra.mxu0 %v819
  %1186 = vmatprep.subr.bf16.mxu0 %v850
  %1187 = vmatpush2.bf16.msra.mxu0 %v849
  %1188 = vmatprep.subr.bf16.mxu0 %v848
  %1189 = vmatpush2.bf16.msra.mxu0 %v847
  %1190 = vmatprep.subr.bf16.mxu0 %v846
  %1191 = vmatpush2.bf16.msra.mxu0 %v845
  %1192 = vmatprep.subr.bf16.mxu0 %v844
  %1193 = vmatpush2.bf16.msra.mxu0 %v843
  %1194 = vmatprep.subr.bf16.mxu0 %v842
  %1195 = vmatpush2.bf16.msra.mxu0 %v841
  %1196 = vmatprep.subr.bf16.mxu0 %v840
  %1197 = vmatpush2.bf16.msra.mxu0 %v839
  %1198 = vmatprep.subr.bf16.mxu0 %v838
  %1199 = vmatpush2.bf16.msra.mxu0 %v837
  %1200 = vmatprep.subr.bf16.mxu0 %v836
  %1201 = vmatpush2.bf16.msra.mxu0 %v835
  %1202 = vmatprep.mubr.bf16.mxu0 %v262
  %1203 = vmatmul.mubr.bf16.gmra.mxu0 %v261
  %v1204 = vpop.f32.mrf.mxu0
  %v1205 = vadd.f32 %v1152, %v1204
  %v1206 = vpop.f32.mrf.mxu0
  %v1207 = vadd.f32 %v1154, %v1206
  %v1208 = vpop.f32.mrf.mxu0
  %v1209 = vadd.f32 %v1156, %v1208
  %v1210 = vpop.f32.mrf.mxu0
  %v1211 = vadd.f32 %v1158, %v1210
  %1212 = vmatprep.mubr.bf16.mxu0 %v271
  %1213 = vmatmul.mubr.bf16.gmra.mxu0 %v270
  %v1214 = vpop.f32.mrf.mxu0
  %v1215 = vadd.f32 %v1162, %v1214
  %v1216 = vpop.f32.mrf.mxu0
  %v1217 = vadd.f32 %v1164, %v1216
  %v1218 = vpop.f32.mrf.mxu0
  %v1219 = vadd.f32 %v1166, %v1218
  %v1220 = vpop.f32.mrf.mxu0
  %v1221 = vadd.f32 %v1168, %v1220
  %1222 = vdwg.mxu0
  %1223 = vmatprep.subr.bf16.mxu0 %v866
  %1224 = vmatpush1.bf16.msra.mxu0 %v865
  %1225 = vmatprep.subr.bf16.mxu0 %v864
  %1226 = vmatpush1.bf16.msra.mxu0 %v863
  %1227 = vmatprep.subr.bf16.mxu0 %v862
  %1228 = vmatpush1.bf16.msra.mxu0 %v861
  %1229 = vmatprep.subr.bf16.mxu0 %v860
  %1230 = vmatpush1.bf16.msra.mxu0 %v859
  %1231 = vmatprep.subr.bf16.mxu0 %v858
  %1232 = vmatpush1.bf16.msra.mxu0 %v857
  %1233 = vmatprep.subr.bf16.mxu0 %v856
  %1234 = vmatpush1.bf16.msra.mxu0 %v855
  %1235 = vmatprep.subr.bf16.mxu0 %v854
  %1236 = vmatpush1.bf16.msra.mxu0 %v853
  %1237 = vmatprep.subr.bf16.mxu0 %v852
  %1238 = vmatpush1.bf16.msra.mxu0 %v851
  %1239 = vmatprep.subr.bf16.mxu0 0
  %1240 = vmatpush2.bf16.msra.mxu0 0
  %1241 = vmatprep.subr.bf16.mxu0 0
  %1242 = vmatpush2.bf16.msra.mxu0 0
  %1243 = vmatprep.subr.bf16.mxu0 0
  %1244 = vmatpush2.bf16.msra.mxu0 0
  %1245 = vmatprep.subr.bf16.mxu0 0
  %1246 = vmatpush2.bf16.msra.mxu0 0
  %1247 = vmatprep.subr.bf16.mxu0 0
  %1248 = vmatpush2.bf16.msra.mxu0 0
  %1249 = vmatprep.subr.bf16.mxu0 0
  %1250 = vmatpush2.bf16.msra.mxu0 0
  %1251 = vmatprep.subr.bf16.mxu0 0
  %1252 = vmatpush2.bf16.msra.mxu0 0
  %1253 = vmatprep.subr.bf16.mxu0 0
  %1254 = vmatpush2.bf16.msra.mxu0 0
  %1255 = vmatprep.mubr.bf16.mxu0 0
  %1256 = vmatmul.mubr.bf16.gmra.mxu0 %v263
  %v1257 = vpop.f32.mrf.mxu0
  %v1258 = vadd.f32 %v1205, %v1257
  %v1259 = vpop.f32.mrf.mxu0
  %v1260 = vadd.f32 %v1207, %v1259
  %v1261 = vpop.f32.mrf.mxu0
  %v1262 = vadd.f32 %v1209, %v1261
  %v1263 = vpop.f32.mrf.mxu0
  %v1264 = vadd.f32 %v1211, %v1263
  %1265 = vmatprep.mubr.bf16.mxu0 0
  %1266 = vmatmul.mubr.bf16.gmra.mxu0 %v272
  %v1267 = vpop.f32.mrf.mxu0
  %v1268 = vadd.f32 %v1215, %v1267
  %v1269 = vpop.f32.mrf.mxu0
  %v1270 = vadd.f32 %v1217, %v1269
  %v1271 = vpop.f32.mrf.mxu0
  %v1272 = vadd.f32 %v1219, %v1271
  %v1273 = vpop.f32.mrf.mxu0
  %v1274 = vadd.f32 %v1221, %v1273
  %1275 = vdwg.mxu0
  %v1276 = vadd.f32 %v27, %v1258
  %v1277 = vadd.f32 %v28, %v1260
  %v1278 = vadd.f32 %v29, %v1262
  %v1279 = vadd.f32 %v30, %v1264
  %v1280 = vadd.f32 %v31, %v1268
  %v1281 = vadd.f32 %v32, %v1270
  %v1282 = vadd.f32 %v33, %v1272
  %v1283 = vadd.f32 %v34, %v1274
  %1284 = vst [vmem:[#allocation2] sm:$0xff] %v1276
  %1285 = vst [vmem:[#allocation2 + $0x8] sm:$0xff] %v1277
  %1286 = vst [vmem:[#allocation2 + $0x10] sm:$0xff] %v1278
  %1287 = vst [vmem:[#allocation2 + $0x18] sm:$0xff] %v1279
  %1288 = vst [vmem:[#allocation2 + $0x20] sm:$0xff] %v1280
  %1289 = vst [vmem:[#allocation2 + $0x28] sm:$0xff] %v1281
  %1290 = vst [vmem:[#allocation2 + $0x30] sm:$0xff] %v1282
  %1291 = vst [vmem:[#allocation2 + $0x38] sm:$0xff] %v1283
  // Predicated region
  $region18: #{_forward.10} parent=0 // pred_check
    %p1292 = pneg %p15
  $region19: #{_forward.10} parent=0 // pred_check_branch
    %1294 = sbr.rel (%p1292) target = $region21
  $region20: #{_forward.10} parent=0 // pred_region
    %v1295 = vld [vmem:[#allocation2] sm:$0xff]
    %v1296 = vld [vmem:[#allocation2 + $0x8] sm:$0xff]
    %v1297 = vld [vmem:[#allocation2 + $0x10] sm:$0xff]
    %v1298 = vld [vmem:[#allocation2 + $0x18] sm:$0xff]
    %v1299 = vld [vmem:[#allocation2 + $0x20] sm:$0xff]
    %v1300 = vld [vmem:[#allocation2 + $0x28] sm:$0xff]
    %v1301 = vld [vmem:[#allocation2 + $0x30] sm:$0xff]
    %v1302 = vld [vmem:[#allocation2 + $0x38] sm:$0xff]
    %v1303 = vld [vmem:[%s2] sm:$0x3]
    %v1305 = vlaneseq
    %v1306 = vshrl.u32 %v1305, 7
    %v1307 = vsub.s32 0, %v1306
    %v1308 = vrot.slane %v1303, %v1307
    %v1309 = vlaneseq
    %v1310 = vshrl.u32 %v1309, 7
    %v1311 = vsub.s32 1, %v1310
    %v1312 = vrot.slane %v1303, %v1311
    %v1315 = vadd.f32 %v1295, %v1308
    %v1316 = vadd.f32 %v1296, %v1312
    %v1317 = vadd.f32 %v1297, %v1308
    %v1318 = vadd.f32 %v1298, %v1312
    %v1319 = vadd.f32 %v1299, %v1308
    %v1320 = vadd.f32 %v1300, %v1312
    %v1321 = vadd.f32 %v1301, %v1308
    %v1322 = vadd.f32 %v1302, %v1312
    %v1323 = vmax.f32 %v1315, 0.0
    %v1324 = vmax.f32 %v1316, 0.0
    %v1325 = vmax.f32 %v1317, 0.0
    %v1326 = vmax.f32 %v1318, 0.0
    %v1327 = vmax.f32 %v1319, 0.0
    %v1328 = vmax.f32 %v1320, 0.0
    %v1329 = vmax.f32 %v1321, 0.0
    %v1330 = vmax.f32 %v1322, 0.0
    %v1331 = vpack.c.bf16 %v1325, %v1323
    %v1332 = vpack.c.bf16 %v1326, %v1324
    %v1333 = vpack.c.bf16 %v1329, %v1327
    %v1334 = vpack.c.bf16 %v1330, %v1328
    %v1339 = vunpack.c.l.b16 %v1331
    %v1340 = vunpack.c.l.b16 %v1332
    %v1341 = vunpack.c.h.b16 %v1331
    %v1342 = vunpack.c.h.b16 %v1332
    %v1343 = vunpack.c.l.b16 %v1333
    %v1344 = vunpack.c.l.b16 %v1334
    %v1345 = vunpack.c.h.b16 %v1333
    %v1346 = vunpack.c.h.b16 %v1334
    %v1347 = vpack.c.b16 %v1340, %v1339
    %v1348 = vpack.c.b16 %v1342, %v1341
    %v1349 = vpack.c.b16 %v1344, %v1343
    %v1350 = vpack.c.b16 %v1346, %v1345
    %1355 = vst [vmem:[%s3] sm:$0xff] %v1347
    %1356 = vst [vmem:[%s3 + $0x8] sm:$0xff] %v1348
    %1357 = vst [vmem:[%s3 + $0x10] sm:$0xff] %v1349
    %1358 = vst [vmem:[%s3 + $0x18] sm:$0xff] %v1350
  $region21: #{_forward.10} parent=0 // pred_fallthru
    _
  // Predicated region
  $region22: #{_forward.10} parent=0 // pred_check
    _
  $region23: #{_forward.10} parent=0 // pred_check_branch
    %1360 = sbr.rel (0) target = $region25
  $region24: #{_forward.10} parent=0 // pred_region
    _
  $region25: #{_forward.10} parent=0 // pred_fallthru
    _
  // Predicated region
  $region26: #{_forward.10} parent=0 // pred_check
    _
  $region27: #{_forward.10} parent=0 // pred_check_branch
    %1362 = sbr.rel (0) target = $region29
  $region28: #{_forward.10} parent=0 // pred_region
    _
  $region29: #{_forward.10} parent=0 // pred_fallthru
    _

// kernel: _forward.11
$region0: #{_forward.11}
  #allocation0 [shape = 'u32[]', space=smem, size = 0x4, offset = 0x4, fixed_abs, tag = 'smem constant byte address 0x4 - core index']
  #allocation1 [shape = 'u32[144,128]{1,0:T(1,128)}', space=vmem, size = 0x12000, scoped, tag = 'internal scratch']
  #allocation2 [shape = 'f32[128,128]{1,0:T(8,128)}', space=vmem, size = 0x10000, scoped, tag = 'scratch operand']
  %s0 = inlined_call_operand.vmem [shape: bf16[128,576], index: 0, kind: input, shape index: {}]
  %s1 = inlined_call_operand.vmem [shape: bf16[576,128], index: 1, kind: input, shape index: {}]
  %s2 = inlined_call_operand.vmem [shape: f32[1,128], index: 2, kind: input, shape index: {}]
  %s3 = inlined_call_operand.vmem [shape: f32[128,128], index: 3, kind: output, shape index: {}]
  %s4 = sld [smem:[#allocation0]]
  $region30: #{_forward.11} parent=0
    _
  %s6 = ssub.s32 1, %s4
  %s7 = scalar_select 0, %s6, %s4
  // Predicated region
  $region2: #{_forward.11} parent=0 // pred_check
    _
  $region3: #{_forward.11} parent=0 // pred_check_branch
    %9 = sbr.rel (0) target = $region5
  $region4: #{_forward.11} parent=0 // pred_region
    _
  $region5: #{_forward.11} parent=0 // pred_fallthru
    _
  // Predicated region
  $region6: #{_forward.11} parent=0 // pred_check
    _
  $region7: #{_forward.11} parent=0 // pred_check_branch
    %11 = sbr.rel (0) target = $region9
  $region8: #{_forward.11} parent=0 // pred_region
    _
  $region9: #{_forward.11} parent=0 // pred_fallthru
    _
  // Predicated region
  $region10: #{_forward.11} parent=0 // pred_check
    _
  $region11: #{_forward.11} parent=0 // pred_check_branch
    %13 = sbr.rel (0) target = $region13
  $region12: #{_forward.11} parent=0 // pred_region
    _
  $region13: #{_forward.11} parent=0 // pred_fallthru
    _
  %p15 = scmp.eq.s32.totalorder 0, 0
  // Predicated region
  $region14: #{_forward.11} parent=0 // pred_check
    %p16 = pneg %p15
  $region15: #{_forward.11} parent=0 // pred_check_branch
    %18 = sbr.rel (%p16) target = $region17
  $region16: #{_forward.11} parent=0 // pred_region
    %19 = vst [vmem:[#allocation2] sm:$0xff] 0.0
    %20 = vst [vmem:[#allocation2 + $0x8] sm:$0xff] 0.0
    %21 = vst [vmem:[#allocation2 + $0x10] sm:$0xff] 0.0
    %22 = vst [vmem:[#allocation2 + $0x18] sm:$0xff] 0.0
    %23 = vst [vmem:[#allocation2 + $0x20] sm:$0xff] 0.0
    %24 = vst [vmem:[#allocation2 + $0x28] sm:$0xff] 0.0
    %25 = vst [vmem:[#allocation2 + $0x30] sm:$0xff] 0.0
    %26 = vst [vmem:[#allocation2 + $0x38] sm:$0xff] 0.0
    %27 = vst [vmem:[#allocation2 + $0x40] sm:$0xff] 0.0
    %28 = vst [vmem:[#allocation2 + $0x48] sm:$0xff] 0.0
    %29 = vst [vmem:[#allocation2 + $0x50] sm:$0xff] 0.0
    %30 = vst [vmem:[#allocation2 + $0x58] sm:$0xff] 0.0
    %31 = vst [vmem:[#allocation2 + $0x60] sm:$0xff] 0.0
    %32 = vst [vmem:[#allocation2 + $0x68] sm:$0xff] 0.0
    %33 = vst [vmem:[#allocation2 + $0x70] sm:$0xff] 0.0
    %34 = vst [vmem:[#allocation2 + $0x78] sm:$0xff] 0.0
  $region17: #{_forward.11} parent=0 // pred_fallthru
    _
  %v35 = vld [vmem:[#allocation2] sm:$0xff]
  %v36 = vld [vmem:[#allocation2 + $0x8] sm:$0xff]
  %v37 = vld [vmem:[#allocation2 + $0x10] sm:$0xff]
  %v38 = vld [vmem:[#allocation2 + $0x18] sm:$0xff]
  %v39 = vld [vmem:[#allocation2 + $0x20] sm:$0xff]
  %v40 = vld [vmem:[#allocation2 + $0x28] sm:$0xff]
  %v41 = vld [vmem:[#allocation2 + $0x30] sm:$0xff]
  %v42 = vld [vmem:[#allocation2 + $0x38] sm:$0xff]
  %v43 = vld [vmem:[#allocation2 + $0x40] sm:$0xff]
  %v44 = vld [vmem:[#allocation2 + $0x48] sm:$0xff]
  %v45 = vld [vmem:[#allocation2 + $0x50] sm:$0xff]
  %v46 = vld [vmem:[#allocation2 + $0x58] sm:$0xff]
  %v47 = vld [vmem:[#allocation2 + $0x60] sm:$0xff]
  %v48 = vld [vmem:[#allocation2 + $0x68] sm:$0xff]
  %v49 = vld [vmem:[#allocation2 + $0x70] sm:$0xff]
  %v50 = vld [vmem:[#allocation2 + $0x78] sm:$0xff]
  %v51 = vld [vmem:[%s0] sm:$0xff]
  %v52 = vld [vmem:[%s0 + $0x8] sm:$0xff]
  %v53 = vld [vmem:[%s0 + $0x10] sm:$0xf]
  %v54 = vld [vmem:[%s0 + $0x14] sm:$0xff]
  %v55 = vld [vmem:[%s0 + $0x1c] sm:$0xff]
  %v56 = vld [vmem:[%s0 + $0x24] sm:$0xf]
  %v57 = vld [vmem:[%s0 + $0x28] sm:$0xff]
  %v58 = vld [vmem:[%s0 + $0x30] sm:$0xff]
  %v59 = vld [vmem:[%s0 + $0x38] sm:$0xf]
  %v60 = vld [vmem:[%s0 + $0x3c] sm:$0xff]
  %v61 = vld [vmem:[%s0 + $0x44] sm:$0xff]
  %v62 = vld [vmem:[%s0 + $0x4c] sm:$0xf]
  %v63 = vld [vmem:[%s0 + $0x50] sm:$0xff]
  %v64 = vld [vmem:[%s0 + $0x58] sm:$0xff]
  %v65 = vld [vmem:[%s0 + $0x60] sm:$0xf]
  %v66 = vld [vmem:[%s0 + $0x64] sm:$0xff]
  %v67 = vld [vmem:[%s0 + $0x6c] sm:$0xff]
  %v68 = vld [vmem:[%s0 + $0x74] sm:$0xf]
  %v69 = vld [vmem:[%s0 + $0x78] sm:$0xff]
  %v70 = vld [vmem:[%s0 + $0x80] sm:$0xff]
  %v71 = vld [vmem:[%s0 + $0x88] sm:$0xf]
  %v72 = vld [vmem:[%s0 + $0x8c] sm:$0xff]
  %v73 = vld [vmem:[%s0 + $0x94] sm:$0xff]
  %v74 = vld [vmem:[%s0 + $0x9c] sm:$0xf]
  %v75 = vld [vmem:[%s0 + $0xa0] sm:$0xff]
  %v76 = vld [vmem:[%s0 + $0xa8] sm:$0xff]
  %v77 = vld [vmem:[%s0 + $0xb0] sm:$0xf]
  %v78 = vld [vmem:[%s0 + $0xb4] sm:$0xff]
  %v79 = vld [vmem:[%s0 + $0xbc] sm:$0xff]
  %v80 = vld [vmem:[%s0 + $0xc4] sm:$0xf]
  %v81 = vld [vmem:[%s0 + $0xc8] sm:$0xff]
  %v82 = vld [vmem:[%s0 + $0xd0] sm:$0xff]
  %v83 = vld [vmem:[%s0 + $0xd8] sm:$0xf]
  %v84 = vld [vmem:[%s0 + $0xdc] sm:$0xff]
  %v85 = vld [vmem:[%s0 + $0xe4] sm:$0xff]
  %v86 = vld [vmem:[%s0 + $0xec] sm:$0xf]
  %v87 = vld [vmem:[%s0 + $0xf0] sm:$0xff]
  %v88 = vld [vmem:[%s0 + $0xf8] sm:$0xff]
  %v89 = vld [vmem:[%s0 + $0x100] sm:$0xf]
  %v90 = vld [vmem:[%s0 + $0x104] sm:$0xff]
  %v91 = vld [vmem:[%s0 + $0x10c] sm:$0xff]
  %v92 = vld [vmem:[%s0 + $0x114] sm:$0xf]
  %v93 = vld [vmem:[%s0 + $0x118] sm:$0xff]
  %v94 = vld [vmem:[%s0 + $0x120] sm:$0xff]
  %v95 = vld [vmem:[%s0 + $0x128] sm:$0xf]
  %v96 = vld [vmem:[%s0 + $0x12c] sm:$0xff]
  %v97 = vld [vmem:[%s0 + $0x134] sm:$0xff]
  %v98 = vld [vmem:[%s0 + $0x13c] sm:$0xf]
  %v99 = vld [vmem:[%s1] sm:$0xf]
  %v100 = vld [vmem:[%s1 + $0x4] sm:$0xf]
  %v101 = vld [vmem:[%s1 + $0x8] sm:$0xf]
  %v102 = vld [vmem:[%s1 + $0xc] sm:$0xf]
  %v103 = vld [vmem:[%s1 + $0x10] sm:$0xf]
  %v104 = vld [vmem:[%s1 + $0x14] sm:$0xf]
  %v105 = vld [vmem:[%s1 + $0x18] sm:$0xf]
  %v106 = vld [vmem:[%s1 + $0x1c] sm:$0xf]
  %v107 = vld [vmem:[%s1 + $0x20] sm:$0xf]
  %v108 = vld [vmem:[%s1 + $0x24] sm:$0xf]
  %v109 = vld [vmem:[%s1 + $0x28] sm:$0xf]
  %v110 = vld [vmem:[%s1 + $0x2c] sm:$0xf]
  %v111 = vld [vmem:[%s1 + $0x30] sm:$0xf]
  %v112 = vld [vmem:[%s1 + $0x34] sm:$0xf]
  %v113 = vld [vmem:[%s1 + $0x38] sm:$0xf]
  %v114 = vld [vmem:[%s1 + $0x3c] sm:$0xf]
  %v115 = vld [vmem:[%s1 + $0x40] sm:$0xf]
  %v116 = vld [vmem:[%s1 + $0x44] sm:$0xf]
  %v117 = vld [vmem:[%s1 + $0x48] sm:$0xf]
  %v118 = vld [vmem:[%s1 + $0x4c] sm:$0xf]
  %v119 = vld [vmem:[%s1 + $0x50] sm:$0xf]
  %v120 = vld [vmem:[%s1 + $0x54] sm:$0xf]
  %v121 = vld [vmem:[%s1 + $0x58] sm:$0xf]
  %v122 = vld [vmem:[%s1 + $0x5c] sm:$0xf]
  %v123 = vld [vmem:[%s1 + $0x60] sm:$0xf]
  %v124 = vld [vmem:[%s1 + $0x64] sm:$0xf]
  %v125 = vld [vmem:[%s1 + $0x68] sm:$0xf]
  %v126 = vld [vmem:[%s1 + $0x6c] sm:$0xf]
  %v127 = vld [vmem:[%s1 + $0x70] sm:$0xf]
  %v128 = vld [vmem:[%s1 + $0x74] sm:$0xf]
  %v129 = vld [vmem:[%s1 + $0x78] sm:$0xf]
  %v130 = vld [vmem:[%s1 + $0x7c] sm:$0xf]
  %v131 = vld [vmem:[%s1 + $0x80] sm:$0xf]
  %v132 = vld [vmem:[%s1 + $0x84] sm:$0xf]
  %v133 = vld [vmem:[%s1 + $0x88] sm:$0xf]
  %v134 = vld [vmem:[%s1 + $0x8c] sm:$0xf]
  %v135 = vld [vmem:[%s1 + $0x90] sm:$0xf]
  %v136 = vld [vmem:[%s1 + $0x94] sm:$0xf]
  %v137 = vld [vmem:[%s1 + $0x98] sm:$0xf]
  %v138 = vld [vmem:[%s1 + $0x9c] sm:$0xf]
  %v139 = vld [vmem:[%s1 + $0xa0] sm:$0xf]
  %v140 = vld [vmem:[%s1 + $0xa4] sm:$0xf]
  %v141 = vld [vmem:[%s1 + $0xa8] sm:$0xf]
  %v142 = vld [vmem:[%s1 + $0xac] sm:$0xf]
  %v143 = vld [vmem:[%s1 + $0xb0] sm:$0xf]
  %v144 = vld [vmem:[%s1 + $0xb4] sm:$0xf]
  %v145 = vld [vmem:[%s1 + $0xb8] sm:$0xf]
  %v146 = vld [vmem:[%s1 + $0xbc] sm:$0xf]
  %v147 = vld [vmem:[%s1 + $0xc0] sm:$0xf]
  %v148 = vld [vmem:[%s1 + $0xc4] sm:$0xf]
  %v149 = vld [vmem:[%s1 + $0xc8] sm:$0xf]
  %v150 = vld [vmem:[%s1 + $0xcc] sm:$0xf]
  %v151 = vld [vmem:[%s1 + $0xd0] sm:$0xf]
  %v152 = vld [vmem:[%s1 + $0xd4] sm:$0xf]
  %v153 = vld [vmem:[%s1 + $0xd8] sm:$0xf]
  %v154 = vld [vmem:[%s1 + $0xdc] sm:$0xf]
  %v155 = vld [vmem:[%s1 + $0xe0] sm:$0xf]
  %v156 = vld [vmem:[%s1 + $0xe4] sm:$0xf]
  %v157 = vld [vmem:[%s1 + $0xe8] sm:$0xf]
  %v158 = vld [vmem:[%s1 + $0xec] sm:$0xf]
  %v159 = vld [vmem:[%s1 + $0xf0] sm:$0xf]
  %v160 = vld [vmem:[%s1 + $0xf4] sm:$0xf]
  %v161 = vld [vmem:[%s1 + $0xf8] sm:$0xf]
  %v162 = vld [vmem:[%s1 + $0xfc] sm:$0xf]
  %v163 = vld [vmem:[%s1 + $0x100] sm:$0xf]
  %v164 = vld [vmem:[%s1 + $0x104] sm:$0xf]
  %v165 = vld [vmem:[%s1 + $0x108] sm:$0xf]
  %v166 = vld [vmem:[%s1 + $0x10c] sm:$0xf]
  %v167 = vld [vmem:[%s1 + $0x110] sm:$0xf]
  %v168 = vld [vmem:[%s1 + $0x114] sm:$0xf]
  %v169 = vld [vmem:[%s1 + $0x118] sm:$0xf]
  %v170 = vld [vmem:[%s1 + $0x11c] sm:$0xf]
  %v219 = vunpack.c.l.b16 %v51
  %v220 = vunpack.c.h.b16 %v51
  %v221 = vunpack.c.l.b16 %v52
  %v222 = vunpack.c.h.b16 %v52
  %v223 = vunpack.c.l.b16 %v53
  %v224 = vunpack.c.l.b16 %v54
  %v225 = vunpack.c.h.b16 %v54
  %v226 = vunpack.c.l.b16 %v55
  %v227 = vunpack.c.h.b16 %v55
  %v228 = vunpack.c.l.b16 %v56
  %v229 = vunpack.c.l.b16 %v57
  %v230 = vunpack.c.h.b16 %v57
  %v231 = vunpack.c.l.b16 %v58
  %v232 = vunpack.c.h.b16 %v58
  %v233 = vunpack.c.l.b16 %v59
  %v234 = vunpack.c.l.b16 %v60
  %v235 = vunpack.c.h.b16 %v60
  %v236 = vunpack.c.l.b16 %v61
  %v237 = vunpack.c.h.b16 %v61
  %v238 = vunpack.c.l.b16 %v62
  %v239 = vunpack.c.l.b16 %v63
  %v240 = vunpack.c.h.b16 %v63
  %v241 = vunpack.c.l.b16 %v64
  %v242 = vunpack.c.h.b16 %v64
  %v243 = vunpack.c.l.b16 %v65
  %v244 = vunpack.c.l.b16 %v66
  %v245 = vunpack.c.h.b16 %v66
  %v246 = vunpack.c.l.b16 %v67
  %v247 = vunpack.c.h.b16 %v67
  %v248 = vunpack.c.l.b16 %v68
  %v249 = vunpack.c.l.b16 %v69
  %v250 = vunpack.c.h.b16 %v69
  %v251 = vunpack.c.l.b16 %v70
  %v252 = vunpack.c.h.b16 %v70
  %v253 = vunpack.c.l.b16 %v71
  %v254 = vunpack.c.l.b16 %v72
  %v255 = vunpack.c.h.b16 %v72
  %v256 = vunpack.c.l.b16 %v73
  %v257 = vunpack.c.h.b16 %v73
  %v258 = vunpack.c.l.b16 %v74
  %v259 = vunpack.c.l.b16 %v75
  %v260 = vunpack.c.h.b16 %v75
  %v261 = vunpack.c.l.b16 %v76
  %v262 = vunpack.c.h.b16 %v76
  %v263 = vunpack.c.l.b16 %v77
  %v264 = vunpack.c.l.b16 %v78
  %v265 = vunpack.c.h.b16 %v78
  %v266 = vunpack.c.l.b16 %v79
  %v267 = vunpack.c.h.b16 %v79
  %v268 = vunpack.c.l.b16 %v80
  %v269 = vunpack.c.l.b16 %v81
  %v270 = vunpack.c.h.b16 %v81
  %v271 = vunpack.c.l.b16 %v82
  %v272 = vunpack.c.h.b16 %v82
  %v273 = vunpack.c.l.b16 %v83
  %v274 = vunpack.c.l.b16 %v84
  %v275 = vunpack.c.h.b16 %v84
  %v276 = vunpack.c.l.b16 %v85
  %v277 = vunpack.c.h.b16 %v85
  %v278 = vunpack.c.l.b16 %v86
  %v279 = vunpack.c.l.b16 %v87
  %v280 = vunpack.c.h.b16 %v87
  %v281 = vunpack.c.l.b16 %v88
  %v282 = vunpack.c.h.b16 %v88
  %v283 = vunpack.c.l.b16 %v89
  %v284 = vunpack.c.l.b16 %v90
  %v285 = vunpack.c.h.b16 %v90
  %v286 = vunpack.c.l.b16 %v91
  %v287 = vunpack.c.h.b16 %v91
  %v288 = vunpack.c.l.b16 %v92
  %v289 = vunpack.c.l.b16 %v93
  %v290 = vunpack.c.h.b16 %v93
  %v291 = vunpack.c.l.b16 %v94
  %v292 = vunpack.c.h.b16 %v94
  %v293 = vunpack.c.l.b16 %v95
  %v294 = vunpack.c.l.b16 %v96
  %v295 = vunpack.c.h.b16 %v96
  %v296 = vunpack.c.l.b16 %v97
  %v297 = vunpack.c.h.b16 %v97
  %v298 = vunpack.c.l.b16 %v98
  %v299 = vpack.c.b16 %v224, %v219
  %v300 = vpack.c.b16 %v225, %v220
  %v301 = vpack.c.b16 %v226, %v221
  %v302 = vpack.c.b16 %v227, %v222
  %v303 = vpack.c.b16 %v228, %v223
  %v304 = vpack.c.b16 %v234, %v229
  %v305 = vpack.c.b16 %v235, %v230
  %v306 = vpack.c.b16 %v236, %v231
  %v307 = vpack.c.b16 %v237, %v232
  %v308 = vpack.c.b16 %v238, %v233
  %v309 = vpack.c.b16 %v244, %v239
  %v310 = vpack.c.b16 %v245, %v240
  %v311 = vpack.c.b16 %v246, %v241
  %v312 = vpack.c.b16 %v247, %v242
  %v313 = vpack.c.b16 %v248, %v243
  %v314 = vpack.c.b16 %v254, %v249
  %v315 = vpack.c.b16 %v255, %v250
  %v316 = vpack.c.b16 %v256, %v251
  %v317 = vpack.c.b16 %v257, %v252
  %v318 = vpack.c.b16 %v258, %v253
  %v319 = vpack.c.b16 %v264, %v259
  %v320 = vpack.c.b16 %v265, %v260
  %v321 = vpack.c.b16 %v266, %v261
  %v322 = vpack.c.b16 %v267, %v262
  %v323 = vpack.c.b16 %v268, %v263
  %v324 = vpack.c.b16 %v274, %v269
  %v325 = vpack.c.b16 %v275, %v270
  %v326 = vpack.c.b16 %v276, %v271
  %v327 = vpack.c.b16 %v277, %v272
  %v328 = vpack.c.b16 %v278, %v273
  %v329 = vpack.c.b16 %v284, %v279
  %v330 = vpack.c.b16 %v285, %v280
  %v331 = vpack.c.b16 %v286, %v281
  %v332 = vpack.c.b16 %v287, %v282
  %v333 = vpack.c.b16 %v288, %v283
  %v334 = vpack.c.b16 %v294, %v289
  %v335 = vpack.c.b16 %v295, %v290
  %v336 = vpack.c.b16 %v296, %v291
  %v337 = vpack.c.b16 %v297, %v292
  %v338 = vpack.c.b16 %v298, %v293
  %v443 = vunpack.c.l.b16 %v99
  %v444 = vunpack.c.l.b16 %v100
  %v445 = vunpack.c.l.b16 %v101
  %v446 = vunpack.c.l.b16 %v102
  %v447 = vunpack.c.l.b16 %v103
  %v448 = vunpack.c.l.b16 %v104
  %v449 = vunpack.c.l.b16 %v105
  %v450 = vunpack.c.l.b16 %v106
  %v451 = vunpack.c.l.b16 %v107
  %v452 = vunpack.c.l.b16 %v108
  %v453 = vunpack.c.l.b16 %v109
  %v454 = vunpack.c.l.b16 %v110
  %v455 = vunpack.c.l.b16 %v111
  %v456 = vunpack.c.l.b16 %v112
  %v457 = vunpack.c.l.b16 %v113
  %v458 = vunpack.c.l.b16 %v114
  %v459 = vunpack.c.l.b16 %v115
  %v460 = vunpack.c.l.b16 %v116
  %v461 = vunpack.c.l.b16 %v117
  %v462 = vunpack.c.l.b16 %v118
  %v463 = vunpack.c.l.b16 %v119
  %v464 = vunpack.c.l.b16 %v120
  %v465 = vunpack.c.l.b16 %v121
  %v466 = vunpack.c.l.b16 %v122
  %v467 = vunpack.c.l.b16 %v123
  %v468 = vunpack.c.l.b16 %v124
  %v469 = vunpack.c.l.b16 %v125
  %v470 = vunpack.c.l.b16 %v126
  %v471 = vunpack.c.l.b16 %v127
  %v472 = vunpack.c.l.b16 %v128
  %v473 = vunpack.c.l.b16 %v129
  %v474 = vunpack.c.l.b16 %v130
  %v475 = vunpack.c.l.b16 %v131
  %v476 = vunpack.c.l.b16 %v132
  %v477 = vunpack.c.l.b16 %v133
  %v478 = vunpack.c.l.b16 %v134
  %v479 = vunpack.c.l.b16 %v135
  %v480 = vunpack.c.l.b16 %v136
  %v481 = vunpack.c.l.b16 %v137
  %v482 = vunpack.c.l.b16 %v138
  %v483 = vunpack.c.l.b16 %v139
  %v484 = vunpack.c.l.b16 %v140
  %v485 = vunpack.c.l.b16 %v141
  %v486 = vunpack.c.l.b16 %v142
  %v487 = vunpack.c.l.b16 %v143
  %v488 = vunpack.c.l.b16 %v144
  %v489 = vunpack.c.l.b16 %v145
  %v490 = vunpack.c.l.b16 %v146
  %v491 = vunpack.c.l.b16 %v147
  %v492 = vunpack.c.l.b16 %v148
  %v493 = vunpack.c.l.b16 %v149
  %v494 = vunpack.c.l.b16 %v150
  %v495 = vunpack.c.l.b16 %v151
  %v496 = vunpack.c.l.b16 %v152
  %v497 = vunpack.c.l.b16 %v153
  %v498 = vunpack.c.l.b16 %v154
  %v499 = vunpack.c.l.b16 %v155
  %v500 = vunpack.c.l.b16 %v156
  %v501 = vunpack.c.l.b16 %v157
  %v502 = vunpack.c.l.b16 %v158
  %v503 = vunpack.c.l.b16 %v159
  %v504 = vunpack.c.l.b16 %v160
  %v505 = vunpack.c.l.b16 %v161
  %v506 = vunpack.c.l.b16 %v162
  %v507 = vunpack.c.l.b16 %v163
  %v508 = vunpack.c.l.b16 %v164
  %v509 = vunpack.c.l.b16 %v165
  %v510 = vunpack.c.l.b16 %v166
  %v511 = vunpack.c.l.b16 %v167
  %v512 = vunpack.c.l.b16 %v168
  %v513 = vunpack.c.l.b16 %v169
  %v514 = vunpack.c.l.b16 %v170
  %v515 = vpack.c.b16 %v444, %v443
  %v516 = vpack.c.b16 %v446, %v445
  %v517 = vpack.c.b16 %v448, %v447
  %v518 = vpack.c.b16 %v450, %v449
  %v519 = vpack.c.b16 %v452, %v451
  %v520 = vpack.c.b16 %v454, %v453
  %v521 = vpack.c.b16 %v456, %v455
  %v522 = vpack.c.b16 %v458, %v457
  %v523 = vpack.c.b16 %v460, %v459
  %v524 = vpack.c.b16 %v462, %v461
  %v525 = vpack.c.b16 %v464, %v463
  %v526 = vpack.c.b16 %v466, %v465
  %v527 = vpack.c.b16 %v468, %v467
  %v528 = vpack.c.b16 %v470, %v469
  %v529 = vpack.c.b16 %v472, %v471
  %v530 = vpack.c.b16 %v474, %v473
  %v531 = vpack.c.b16 %v476, %v475
  %v532 = vpack.c.b16 %v478, %v477
  %v533 = vpack.c.b16 %v480, %v479
  %v534 = vpack.c.b16 %v482, %v481
  %v535 = vpack.c.b16 %v484, %v483
  %v536 = vpack.c.b16 %v486, %v485
  %v537 = vpack.c.b16 %v488, %v487
  %v538 = vpack.c.b16 %v490, %v489
  %v539 = vpack.c.b16 %v492, %v491
  %v540 = vpack.c.b16 %v494, %v493
  %v541 = vpack.c.b16 %v496, %v495
  %v542 = vpack.c.b16 %v498, %v497
  %v543 = vpack.c.b16 %v500, %v499
  %v544 = vpack.c.b16 %v502, %v501
  %v545 = vpack.c.b16 %v504, %v503
  %v546 = vpack.c.b16 %v506, %v505
  %v547 = vpack.c.b16 %v508, %v507
  %v548 = vpack.c.b16 %v510, %v509
  %v549 = vpack.c.b16 %v512, %v511
  %v550 = vpack.c.b16 %v514, %v513
  %vm587 = vcmask 523264
  %v589 = vsel %vm587, %v303, 0
  %v592 = vsel %vm587, %v308, 0
  %v595 = vsel %vm587, %v313, 0
  %v598 = vsel %vm587, %v318, 0
  %v601 = vsel %vm587, %v323, 0
  %v604 = vsel %vm587, %v328, 0
  %v607 = vsel %vm587, %v333, 0
  %v610 = vsel %vm587, %v338, 0
  %612 = vmatprep.subr.bf16.mxu0 0
  %613 = vmatpush1.bf16.msra.mxu0 %v522
  %614 = vmatprep.subr.bf16.mxu0 0
  %615 = vmatpush1.bf16.msra.mxu0 %v521
  %616 = vmatprep.subr.bf16.mxu0 0
  %617 = vmatpush1.bf16.msra.mxu0 %v520
  %618 = vmatprep.subr.bf16.mxu0 0
  %619 = vmatpush1.bf16.msra.mxu0 %v519
  %620 = vmatprep.subr.bf16.mxu0 0
  %621 = vmatpush1.bf16.msra.mxu0 %v518
  %622 = vmatprep.subr.bf16.mxu0 0
  %623 = vmatpush1.bf16.msra.mxu0 %v517
  %624 = vmatprep.subr.bf16.mxu0 0
  %625 = vmatpush1.bf16.msra.mxu0 %v516
  %626 = vmatprep.subr.bf16.mxu0 0
  %627 = vmatpush1.bf16.msra.mxu0 %v515
  %628 = vmatprep.subr.bf16.mxu0 0
  %629 = vmatpush2.bf16.msra.mxu0 %v530
  %630 = vmatprep.subr.bf16.mxu0 0
  %631 = vmatpush2.bf16.msra.mxu0 %v529
  %632 = vmatprep.subr.bf16.mxu0 0
  %633 = vmatpush2.bf16.msra.mxu0 %v528
  %634 = vmatprep.subr.bf16.mxu0 0
  %635 = vmatpush2.bf16.msra.mxu0 %v527
  %636 = vmatprep.subr.bf16.mxu0 0
  %637 = vmatpush2.bf16.msra.mxu0 %v526
  %638 = vmatprep.subr.bf16.mxu0 0
  %639 = vmatpush2.bf16.msra.mxu0 %v525
  %640 = vmatprep.subr.bf16.mxu0 0
  %641 = vmatpush2.bf16.msra.mxu0 %v524
  %642 = vmatprep.subr.bf16.mxu0 0
  %643 = vmatpush2.bf16.msra.mxu0 %v523
  %644 = vmatprep.mubr.bf16.mxu0 %v300
  %645 = vmatmul.mubr.bf16.gmra.mxu0 %v299
  %v646 = vpop.f32.mrf.mxu0
  %v647 = vadd.f32 0.0, %v646
  %v648 = vpop.f32.mrf.mxu0
  %v649 = vpop.f32.mrf.mxu0
  %v650 = vadd.f32 0.0, %v649
  %v651 = vpop.f32.mrf.mxu0
  %652 = vmatprep.mubr.bf16.mxu0 %v305
  %653 = vmatmul.mubr.bf16.gmra.mxu0 %v304
  %v654 = vpop.f32.mrf.mxu0
  %v655 = vadd.f32 0.0, %v654
  %v656 = vpop.f32.mrf.mxu0
  %v657 = vpop.f32.mrf.mxu0
  %v658 = vadd.f32 0.0, %v657
  %v659 = vpop.f32.mrf.mxu0
  %660 = vmatprep.mubr.bf16.mxu0 %v310
  %661 = vmatmul.mubr.bf16.gmra.mxu0 %v309
  %v662 = vpop.f32.mrf.mxu0
  %v663 = vadd.f32 0.0, %v662
  %v664 = vpop.f32.mrf.mxu0
  %v665 = vpop.f32.mrf.mxu0
  %v666 = vadd.f32 0.0, %v665
  %v667 = vpop.f32.mrf.mxu0
  %668 = vmatprep.mubr.bf16.mxu0 %v315
  %669 = vmatmul.mubr.bf16.gmra.mxu0 %v314
  %v670 = vpop.f32.mrf.mxu0
  %v671 = vadd.f32 0.0, %v670
  %v672 = vpop.f32.mrf.mxu0
  %v673 = vpop.f32.mrf.mxu0
  %v674 = vadd.f32 0.0, %v673
  %v675 = vpop.f32.mrf.mxu0
  %676 = vmatprep.mubr.bf16.mxu0 %v320
  %677 = vmatmul.mubr.bf16.gmra.mxu0 %v319
  %v678 = vpop.f32.mrf.mxu0
  %v679 = vadd.f32 0.0, %v678
  %v680 = vpop.f32.mrf.mxu0
  %v681 = vpop.f32.mrf.mxu0
  %v682 = vadd.f32 0.0, %v681
  %v683 = vpop.f32.mrf.mxu0
  %684 = vmatprep.mubr.bf16.mxu0 %v325
  %685 = vmatmul.mubr.bf16.gmra.mxu0 %v324
  %v686 = vpop.f32.mrf.mxu0
  %v687 = vadd.f32 0.0, %v686
  %v688 = vpop.f32.mrf.mxu0
  %v689 = vpop.f32.mrf.mxu0
  %v690 = vadd.f32 0.0, %v689
  %v691 = vpop.f32.mrf.mxu0
  %692 = vmatprep.mubr.bf16.mxu0 %v330
  %693 = vmatmul.mubr.bf16.gmra.mxu0 %v329
  %v694 = vpop.f32.mrf.mxu0
  %v695 = vadd.f32 0.0, %v694
  %v696 = vpop.f32.mrf.mxu0
  %v697 = vpop.f32.mrf.mxu0
  %v698 = vadd.f32 0.0, %v697
  %v699 = vpop.f32.mrf.mxu0
  %700 = vmatprep.mubr.bf16.mxu0 %v335
  %701 = vmatmul.mubr.bf16.gmra.mxu0 %v334
  %v702 = vpop.f32.mrf.mxu0
  %v703 = vadd.f32 0.0, %v702
  %v704 = vpop.f32.mrf.mxu0
  %v705 = vpop.f32.mrf.mxu0
  %v706 = vadd.f32 0.0, %v705
  %v707 = vpop.f32.mrf.mxu0
  %708 = vdwg.mxu0
  %709 = vmatprep.subr.bf16.mxu0 0
  %710 = vmatpush1.bf16.msra.mxu0 %v538
  %711 = vmatprep.subr.bf16.mxu0 0
  %712 = vmatpush1.bf16.msra.mxu0 %v537
  %713 = vmatprep.subr.bf16.mxu0 0
  %714 = vmatpush1.bf16.msra.mxu0 %v536
  %715 = vmatprep.subr.bf16.mxu0 0
  %716 = vmatpush1.bf16.msra.mxu0 %v535
  %717 = vmatprep.subr.bf16.mxu0 0
  %718 = vmatpush1.bf16.msra.mxu0 %v534
  %719 = vmatprep.subr.bf16.mxu0 0
  %720 = vmatpush1.bf16.msra.mxu0 %v533
  %721 = vmatprep.subr.bf16.mxu0 0
  %722 = vmatpush1.bf16.msra.mxu0 %v532
  %723 = vmatprep.subr.bf16.mxu0 0
  %724 = vmatpush1.bf16.msra.mxu0 %v531
  %725 = vmatprep.subr.bf16.mxu0 0
  %726 = vmatpush2.bf16.msra.mxu0 %v546
  %727 = vmatprep.subr.bf16.mxu0 0
  %728 = vmatpush2.bf16.msra.mxu0 %v545
  %729 = vmatprep.subr.bf16.mxu0 0
  %730 = vmatpush2.bf16.msra.mxu0 %v544
  %731 = vmatprep.subr.bf16.mxu0 0
  %732 = vmatpush2.bf16.msra.mxu0 %v543
  %733 = vmatprep.subr.bf16.mxu0 0
  %734 = vmatpush2.bf16.msra.mxu0 %v542
  %735 = vmatprep.subr.bf16.mxu0 0
  %736 = vmatpush2.bf16.msra.mxu0 %v541
  %737 = vmatprep.subr.bf16.mxu0 0
  %738 = vmatpush2.bf16.msra.mxu0 %v540
  %739 = vmatprep.subr.bf16.mxu0 0
  %740 = vmatpush2.bf16.msra.mxu0 %v539
  %741 = vmatprep.mubr.bf16.mxu0 %v302
  %742 = vmatmul.mubr.bf16.gmra.mxu0 %v301
  %v743 = vpop.f32.mrf.mxu0
  %v744 = vadd.f32 %v647, %v743
  %v745 = vpop.f32.mrf.mxu0
  %v746 = vpop.f32.mrf.mxu0
  %v747 = vadd.f32 %v650, %v746
  %v748 = vpop.f32.mrf.mxu0
  %749 = vmatprep.mubr.bf16.mxu0 %v307
  %750 = vmatmul.mubr.bf16.gmra.mxu0 %v306
  %v751 = vpop.f32.mrf.mxu0
  %v752 = vadd.f32 %v655, %v751
  %v753 = vpop.f32.mrf.mxu0
  %v754 = vpop.f32.mrf.mxu0
  %v755 = vadd.f32 %v658, %v754
  %v756 = vpop.f32.mrf.mxu0
  %757 = vmatprep.mubr.bf16.mxu0 %v312
  %758 = vmatmul.mubr.bf16.gmra.mxu0 %v311
  %v759 = vpop.f32.mrf.mxu0
  %v760 = vadd.f32 %v663, %v759
  %v761 = vpop.f32.mrf.mxu0
  %v762 = vpop.f32.mrf.mxu0
  %v763 = vadd.f32 %v666, %v762
  %v764 = vpop.f32.mrf.mxu0
  %765 = vmatprep.mubr.bf16.mxu0 %v317
  %766 = vmatmul.mubr.bf16.gmra.mxu0 %v316
  %v767 = vpop.f32.mrf.mxu0
  %v768 = vadd.f32 %v671, %v767
  %v769 = vpop.f32.mrf.mxu0
  %v770 = vpop.f32.mrf.mxu0
  %v771 = vadd.f32 %v674, %v770
  %v772 = vpop.f32.mrf.mxu0
  %773 = vmatprep.mubr.bf16.mxu0 %v322
  %774 = vmatmul.mubr.bf16.gmra.mxu0 %v321
  %v775 = vpop.f32.mrf.mxu0
  %v776 = vadd.f32 %v679, %v775
  %v777 = vpop.f32.mrf.mxu0
  %v778 = vpop.f32.mrf.mxu0
  %v779 = vadd.f32 %v682, %v778
  %v780 = vpop.f32.mrf.mxu0
  %781 = vmatprep.mubr.bf16.mxu0 %v327
  %782 = vmatmul.mubr.bf16.gmra.mxu0 %v326
  %v783 = vpop.f32.mrf.mxu0
  %v784 = vadd.f32 %v687, %v783
  %v785 = vpop.f32.mrf.mxu0
  %v786 = vpop.f32.mrf.mxu0
  %v787 = vadd.f32 %v690, %v786
  %v788 = vpop.f32.mrf.mxu0
  %789 = vmatprep.mubr.bf16.mxu0 %v332
  %790 = vmatmul.mubr.bf16.gmra.mxu0 %v331
  %v791 = vpop.f32.mrf.mxu0
  %v792 = vadd.f32 %v695, %v791
  %v793 = vpop.f32.mrf.mxu0
  %v794 = vpop.f32.mrf.mxu0
  %v795 = vadd.f32 %v698, %v794
  %v796 = vpop.f32.mrf.mxu0
  %797 = vmatprep.mubr.bf16.mxu0 %v337
  %798 = vmatmul.mubr.bf16.gmra.mxu0 %v336
  %v799 = vpop.f32.mrf.mxu0
  %v800 = vadd.f32 %v703, %v799
  %v801 = vpop.f32.mrf.mxu0
  %v802 = vpop.f32.mrf.mxu0
  %v803 = vadd.f32 %v706, %v802
  %v804 = vpop.f32.mrf.mxu0
  %805 = vdwg.mxu0
  %806 = vmatprep.subr.bf16.mxu0 0
  %807 = vmatpush1.bf16.msra.mxu0 0
  %808 = vmatprep.subr.bf16.mxu0 0
  %809 = vmatpush1.bf16.msra.mxu0 0
  %810 = vmatprep.subr.bf16.mxu0 0
  %811 = vmatpush1.bf16.msra.mxu0 0
  %812 = vmatprep.subr.bf16.mxu0 0
  %813 = vmatpush1.bf16.msra.mxu0 0
  %814 = vmatprep.subr.bf16.mxu0 0
  %815 = vmatpush1.bf16.msra.mxu0 %v550
  %816 = vmatprep.subr.bf16.mxu0 0
  %817 = vmatpush1.bf16.msra.mxu0 %v549
  %818 = vmatprep.subr.bf16.mxu0 0
  %819 = vmatpush1.bf16.msra.mxu0 %v548
  %820 = vmatprep.subr.bf16.mxu0 0
  %821 = vmatpush1.bf16.msra.mxu0 %v547
  %822 = vmatprep.subr.bf16.mxu0 0
  %823 = vmatpush2.bf16.msra.mxu0 0
  %824 = vmatprep.subr.bf16.mxu0 0
  %825 = vmatpush2.bf16.msra.mxu0 0
  %826 = vmatprep.subr.bf16.mxu0 0
  %827 = vmatpush2.bf16.msra.mxu0 0
  %828 = vmatprep.subr.bf16.mxu0 0
  %829 = vmatpush2.bf16.msra.mxu0 0
  %830 = vmatprep.subr.bf16.mxu0 0
  %831 = vmatpush2.bf16.msra.mxu0 0
  %832 = vmatprep.subr.bf16.mxu0 0
  %833 = vmatpush2.bf16.msra.mxu0 0
  %834 = vmatprep.subr.bf16.mxu0 0
  %835 = vmatpush2.bf16.msra.mxu0 0
  %836 = vmatprep.subr.bf16.mxu0 0
  %837 = vmatpush2.bf16.msra.mxu0 0
  %838 = vmatprep.mubr.bf16.mxu0 0
  %839 = vmatmul.mubr.bf16.gmra.mxu0 %v589
  %v840 = vpop.f32.mrf.mxu0
  %v841 = vadd.f32 %v744, %v840
  %v842 = vpop.f32.mrf.mxu0
  %v843 = vpop.f32.mrf.mxu0
  %v844 = vadd.f32 %v747, %v843
  %v845 = vpop.f32.mrf.mxu0
  %846 = vmatprep.mubr.bf16.mxu0 0
  %847 = vmatmul.mubr.bf16.gmra.mxu0 %v592
  %v848 = vpop.f32.mrf.mxu0
  %v849 = vadd.f32 %v752, %v848
  %v850 = vpop.f32.mrf.mxu0
  %v851 = vpop.f32.mrf.mxu0
  %v852 = vadd.f32 %v755, %v851
  %v853 = vpop.f32.mrf.mxu0
  %854 = vmatprep.mubr.bf16.mxu0 0
  %855 = vmatmul.mubr.bf16.gmra.mxu0 %v595
  %v856 = vpop.f32.mrf.mxu0
  %v857 = vadd.f32 %v760, %v856
  %v858 = vpop.f32.mrf.mxu0
  %v859 = vpop.f32.mrf.mxu0
  %v860 = vadd.f32 %v763, %v859
  %v861 = vpop.f32.mrf.mxu0
  %862 = vmatprep.mubr.bf16.mxu0 0
  %863 = vmatmul.mubr.bf16.gmra.mxu0 %v598
  %v864 = vpop.f32.mrf.mxu0
  %v865 = vadd.f32 %v768, %v864
  %v866 = vpop.f32.mrf.mxu0
  %v867 = vpop.f32.mrf.mxu0
  %v868 = vadd.f32 %v771, %v867
  %v869 = vpop.f32.mrf.mxu0
  %870 = vmatprep.mubr.bf16.mxu0 0
  %871 = vmatmul.mubr.bf16.gmra.mxu0 %v601
  %v872 = vpop.f32.mrf.mxu0
  %v873 = vadd.f32 %v776, %v872
  %v874 = vpop.f32.mrf.mxu0
  %v875 = vpop.f32.mrf.mxu0
  %v876 = vadd.f32 %v779, %v875
  %v877 = vpop.f32.mrf.mxu0
  %878 = vmatprep.mubr.bf16.mxu0 0
  %879 = vmatmul.mubr.bf16.gmra.mxu0 %v604
  %v880 = vpop.f32.mrf.mxu0
  %v881 = vadd.f32 %v784, %v880
  %v882 = vpop.f32.mrf.mxu0
  %v883 = vpop.f32.mrf.mxu0
  %v884 = vadd.f32 %v787, %v883
  %v885 = vpop.f32.mrf.mxu0
  %886 = vmatprep.mubr.bf16.mxu0 0
  %887 = vmatmul.mubr.bf16.gmra.mxu0 %v607
  %v888 = vpop.f32.mrf.mxu0
  %v889 = vadd.f32 %v792, %v888
  %v890 = vpop.f32.mrf.mxu0
  %v891 = vpop.f32.mrf.mxu0
  %v892 = vadd.f32 %v795, %v891
  %v893 = vpop.f32.mrf.mxu0
  %894 = vmatprep.mubr.bf16.mxu0 0
  %895 = vmatmul.mubr.bf16.gmra.mxu0 %v610
  %v896 = vpop.f32.mrf.mxu0
  %v897 = vadd.f32 %v800, %v896
  %v898 = vpop.f32.mrf.mxu0
  %v899 = vpop.f32.mrf.mxu0
  %v900 = vadd.f32 %v803, %v899
  %v901 = vpop.f32.mrf.mxu0
  %902 = vdwg.mxu0
  %v903 = vadd.f32 %v35, %v841
  %v904 = vadd.f32 %v36, %v844
  %v905 = vadd.f32 %v37, %v849
  %v906 = vadd.f32 %v38, %v852
  %v907 = vadd.f32 %v39, %v857
  %v908 = vadd.f32 %v40, %v860
  %v909 = vadd.f32 %v41, %v865
  %v910 = vadd.f32 %v42, %v868
  %v911 = vadd.f32 %v43, %v873
  %v912 = vadd.f32 %v44, %v876
  %v913 = vadd.f32 %v45, %v881
  %v914 = vadd.f32 %v46, %v884
  %v915 = vadd.f32 %v47, %v889
  %v916 = vadd.f32 %v48, %v892
  %v917 = vadd.f32 %v49, %v897
  %v918 = vadd.f32 %v50, %v900
  %919 = vst [vmem:[#allocation2] sm:$0xff] %v903
  %920 = vst [vmem:[#allocation2 + $0x8] sm:$0xff] %v904
  %921 = vst [vmem:[#allocation2 + $0x10] sm:$0xff] %v905
  %922 = vst [vmem:[#allocation2 + $0x18] sm:$0xff] %v906
  %923 = vst [vmem:[#allocation2 + $0x20] sm:$0xff] %v907
  %924 = vst [vmem:[#allocation2 + $0x28] sm:$0xff] %v908
  %925 = vst [vmem:[#allocation2 + $0x30] sm:$0xff] %v909
  %926 = vst [vmem:[#allocation2 + $0x38] sm:$0xff] %v910
  %927 = vst [vmem:[#allocation2 + $0x40] sm:$0xff] %v911
  %928 = vst [vmem:[#allocation2 + $0x48] sm:$0xff] %v912
  %929 = vst [vmem:[#allocation2 + $0x50] sm:$0xff] %v913
  %930 = vst [vmem:[#allocation2 + $0x58] sm:$0xff] %v914
  %931 = vst [vmem:[#allocation2 + $0x60] sm:$0xff] %v915
  %932 = vst [vmem:[#allocation2 + $0x68] sm:$0xff] %v916
  %933 = vst [vmem:[#allocation2 + $0x70] sm:$0xff] %v917
  %934 = vst [vmem:[#allocation2 + $0x78] sm:$0xff] %v918
  // Predicated region
  $region18: #{_forward.11} parent=0 // pred_check
    %p935 = pneg %p15
  $region19: #{_forward.11} parent=0 // pred_check_branch
    %937 = sbr.rel (%p935) target = $region21
  $region20: #{_forward.11} parent=0 // pred_region
    %v938 = vld [vmem:[#allocation2] sm:$0xff]
    %v939 = vld [vmem:[#allocation2 + $0x8] sm:$0xff]
    %v940 = vld [vmem:[#allocation2 + $0x10] sm:$0xff]
    %v941 = vld [vmem:[#allocation2 + $0x18] sm:$0xff]
    %v942 = vld [vmem:[#allocation2 + $0x20] sm:$0xff]
    %v943 = vld [vmem:[#allocation2 + $0x28] sm:$0xff]
    %v944 = vld [vmem:[#allocation2 + $0x30] sm:$0xff]
    %v945 = vld [vmem:[#allocation2 + $0x38] sm:$0xff]
    %v946 = vld [vmem:[#allocation2 + $0x40] sm:$0xff]
    %v947 = vld [vmem:[#allocation2 + $0x48] sm:$0xff]
    %v948 = vld [vmem:[#allocation2 + $0x50] sm:$0xff]
    %v949 = vld [vmem:[#allocation2 + $0x58] sm:$0xff]
    %v950 = vld [vmem:[#allocation2 + $0x60] sm:$0xff]
    %v951 = vld [vmem:[#allocation2 + $0x68] sm:$0xff]
    %v952 = vld [vmem:[#allocation2 + $0x70] sm:$0xff]
    %v953 = vld [vmem:[#allocation2 + $0x78] sm:$0xff]
    %v954 = vld [vmem:[%s2] sm:$0x1]
    %v956 = vlaneseq
    %v957 = vshrl.u32 %v956, 7
    %v958 = vsub.s32 0, %v957
    %v959 = vrot.slane %v954, %v958
    %v961 = vadd.f32 %v938, %v959
    %v962 = vadd.f32 %v939, %v959
    %v963 = vadd.f32 %v940, %v959
    %v964 = vadd.f32 %v941, %v959
    %v965 = vadd.f32 %v942, %v959
    %v966 = vadd.f32 %v943, %v959
    %v967 = vadd.f32 %v944, %v959
    %v968 = vadd.f32 %v945, %v959
    %v969 = vadd.f32 %v946, %v959
    %v970 = vadd.f32 %v947, %v959
    %v971 = vadd.f32 %v948, %v959
    %v972 = vadd.f32 %v949, %v959
    %v973 = vadd.f32 %v950, %v959
    %v974 = vadd.f32 %v951, %v959
    %v975 = vadd.f32 %v952, %v959
    %v976 = vadd.f32 %v953, %v959
    %v977 = vsub.f32 0.0, %v961
    %v978 = vsub.f32 0.0, %v962
    %v979 = vsub.f32 0.0, %v963
    %v980 = vsub.f32 0.0, %v964
    %v981 = vsub.f32 0.0, %v965
    %v982 = vsub.f32 0.0, %v966
    %v983 = vsub.f32 0.0, %v967
    %v984 = vsub.f32 0.0, %v968
    %v985 = vsub.f32 0.0, %v969
    %v986 = vsub.f32 0.0, %v970
    %v987 = vsub.f32 0.0, %v971
    %v988 = vsub.f32 0.0, %v972
    %v989 = vsub.f32 0.0, %v973
    %v990 = vsub.f32 0.0, %v974
    %v991 = vsub.f32 0.0, %v975
    %v992 = vsub.f32 0.0, %v976
    %v993 = vmul.f32 %v977, 1.442695
    %v994 = vpow.pop %v993
    %v995 = vmul.f32 %v978, 1.442695
    %v996 = vpow.pop %v995
    %v997 = vmul.f32 %v979, 1.442695
    %v998 = vpow.pop %v997
    %v999 = vmul.f32 %v980, 1.442695
    %v1000 = vpow.pop %v999
    %v1001 = vmul.f32 %v981, 1.442695
    %v1002 = vpow.pop %v1001
    %v1003 = vmul.f32 %v982, 1.442695
    %v1004 = vpow.pop %v1003
    %v1005 = vmul.f32 %v983, 1.442695
    %v1006 = vpow.pop %v1005
    %v1007 = vmul.f32 %v984, 1.442695
    %v1008 = vpow.pop %v1007
    %v1009 = vmul.f32 %v985, 1.442695
    %v1010 = vpow.pop %v1009
    %v1011 = vmul.f32 %v986, 1.442695
    %v1012 = vpow.pop %v1011
    %v1013 = vmul.f32 %v987, 1.442695
    %v1014 = vpow.pop %v1013
    %v1015 = vmul.f32 %v988, 1.442695
    %v1016 = vpow.pop %v1015
    %v1017 = vmul.f32 %v989, 1.442695
    %v1018 = vpow.pop %v1017
    %v1019 = vmul.f32 %v990, 1.442695
    %v1020 = vpow.pop %v1019
    %v1021 = vmul.f32 %v991, 1.442695
    %v1022 = vpow.pop %v1021
    %v1023 = vmul.f32 %v992, 1.442695
    %v1024 = vpow.pop %v1023
    %v1025 = vadd.f32 %v994, 1.0
    %v1026 = vadd.f32 %v996, 1.0
    %v1027 = vadd.f32 %v998, 1.0
    %v1028 = vadd.f32 %v1000, 1.0
    %v1029 = vadd.f32 %v1002, 1.0
    %v1030 = vadd.f32 %v1004, 1.0
    %v1031 = vadd.f32 %v1006, 1.0
    %v1032 = vadd.f32 %v1008, 1.0
    %v1033 = vadd.f32 %v1010, 1.0
    %v1034 = vadd.f32 %v1012, 1.0
    %v1035 = vadd.f32 %v1014, 1.0
    %v1036 = vadd.f32 %v1016, 1.0
    %v1037 = vadd.f32 %v1018, 1.0
    %v1038 = vadd.f32 %v1020, 1.0
    %v1039 = vadd.f32 %v1022, 1.0
    %v1040 = vadd.f32 %v1024, 1.0
    %v1041 = vrcp.pop %v1025
    %v1042 = vmul.f32 1.0, %v1041
    %v1043 = vrcp.pop %v1026
    %v1044 = vmul.f32 1.0, %v1043
    %v1045 = vrcp.pop %v1027
    %v1046 = vmul.f32 1.0, %v1045
    %v1047 = vrcp.pop %v1028
    %v1048 = vmul.f32 1.0, %v1047
    %v1049 = vrcp.pop %v1029
    %v1050 = vmul.f32 1.0, %v1049
    %v1051 = vrcp.pop %v1030
    %v1052 = vmul.f32 1.0, %v1051
    %v1053 = vrcp.pop %v1031
    %v1054 = vmul.f32 1.0, %v1053
    %v1055 = vrcp.pop %v1032
    %v1056 = vmul.f32 1.0, %v1055
    %v1057 = vrcp.pop %v1033
    %v1058 = vmul.f32 1.0, %v1057
    %v1059 = vrcp.pop %v1034
    %v1060 = vmul.f32 1.0, %v1059
    %v1061 = vrcp.pop %v1035
    %v1062 = vmul.f32 1.0, %v1061
    %v1063 = vrcp.pop %v1036
    %v1064 = vmul.f32 1.0, %v1063
    %v1065 = vrcp.pop %v1037
    %v1066 = vmul.f32 1.0, %v1065
    %v1067 = vrcp.pop %v1038
    %v1068 = vmul.f32 1.0, %v1067
    %v1069 = vrcp.pop %v1039
    %v1070 = vmul.f32 1.0, %v1069
    %v1071 = vrcp.pop %v1040
    %v1072 = vmul.f32 1.0, %v1071
    %1073 = vst [vmem:[%s3] sm:$0xff] %v1042
    %1074 = vst [vmem:[%s3 + $0x8] sm:$0xff] %v1044
    %1075 = vst [vmem:[%s3 + $0x10] sm:$0xff] %v1046
    %1076 = vst [vmem:[%s3 + $0x18] sm:$0xff] %v1048
    %1077 = vst [vmem:[%s3 + $0x20] sm:$0xff] %v1050
    %1078 = vst [vmem:[%s3 + $0x28] sm:$0xff] %v1052
    %1079 = vst [vmem:[%s3 + $0x30] sm:$0xff] %v1054
    %1080 = vst [vmem:[%s3 + $0x38] sm:$0xff] %v1056
    %1081 = vst [vmem:[%s3 + $0x40] sm:$0xff] %v1058
    %1082 = vst [vmem:[%s3 + $0x48] sm:$0xff] %v1060
    %1083 = vst [vmem:[%s3 + $0x50] sm:$0xff] %v1062
    %1084 = vst [vmem:[%s3 + $0x58] sm:$0xff] %v1064
    %1085 = vst [vmem:[%s3 + $0x60] sm:$0xff] %v1066
    %1086 = vst [vmem:[%s3 + $0x68] sm:$0xff] %v1068
    %1087 = vst [vmem:[%s3 + $0x70] sm:$0xff] %v1070
    %1088 = vst [vmem:[%s3 + $0x78] sm:$0xff] %v1072
  $region21: #{_forward.11} parent=0 // pred_fallthru
    _
  // Predicated region
  $region22: #{_forward.11} parent=0 // pred_check
    _
  $region23: #{_forward.11} parent=0 // pred_check_branch
    %1090 = sbr.rel (0) target = $region25
  $region24: #{_forward.11} parent=0 // pred_region
    _
  $region25: #{_forward.11} parent=0 // pred_fallthru
    _
  // Predicated region
  $region26: #{_forward.11} parent=0 // pred_check
    _
  $region27: #{_forward.11} parent=0 // pred_check_branch
    %1092 = sbr.rel (0) target = $region29
  $region28: #{_forward.11} parent=0 // pred_region
    _
  $region29: #{_forward.11} parent=0 // pred_fallthru
    _

</llo_original>
